<compile_context>
chip_gen: v5e
topology: v5e:2x2
jax: 0.10.0
libtpu: 0.0.40
codegen_flags: <defaults>
</compile_context>

<pallas_src>
import functools

import jax
import jax.numpy as jnp
from jax.experimental import pallas as pl
from jax.experimental.pallas import tpu as pltpu

_BN_EPS = 1e-5
_C_PAD = 128  # lane-dense channel width carried between layers


def _pick_tm(M):
    """Largest-tile-first tiling of the M (rows) axis.

    For M <= 256 one full block (always a legal block shape). For larger M
    prefer 256 so the 'parallel' grid has >= 2 steps (v7x has 2 TensorCores),
    falling back to any divisor that is a multiple of 8, else one full block.
    """
    if M <= 256:
        return M
    for tm in (256, 512, 128, 64, 32, 16, 8):
        if M % tm == 0:
            return tm
    return M


# ----------------------------------------------------------------------------
# Pallas kernels: fused (im2col-matmul conv) + folded-BN bias + residual + ReLU
# ----------------------------------------------------------------------------
def _conv_kernel(x_ref, w_ref, b_ref, o_ref, *, relu):
    acc = jnp.dot(x_ref[...], w_ref[...], preferred_element_type=jnp.float32)
    y = acc + b_ref[...]
    if relu:
        y = jnp.maximum(y, 0.0)
    o_ref[...] = y.astype(o_ref.dtype)


def _conv_res_kernel(x_ref, w_ref, b_ref, res_ref, o_ref, *, relu):
    acc = jnp.dot(x_ref[...], w_ref[...], preferred_element_type=jnp.float32)
    y = acc + b_ref[...] + res_ref[...]
    if relu:
        y = jnp.maximum(y, 0.0)
    o_ref[...] = y.astype(o_ref.dtype)


def _conv_dual_kernel(x_ref, w_ref, b_ref, wd_ref, bd_ref, o_ref, od_ref, *,
                      center, cpad):
    """conv1 (3x3, +BN+ReLU) and 1x1 downsample (+BN) from shared patches.

    The 1x1 stride-s conv reads exactly the center-tap (kh=1,kw=1) columns of
    the 3x3/pad-1/stride-s im2col rows, so no second im2col or pallas_call is
    needed.
    """
    x = x_ref[...]
    acc = jnp.dot(x, w_ref[...], preferred_element_type=jnp.float32)
    o_ref[...] = jnp.maximum(acc + b_ref[...], 0.0).astype(o_ref.dtype)
    xd = x[:, center:center + cpad]  # 128-lane-aligned static slice
    accd = jnp.dot(xd, wd_ref[...], preferred_element_type=jnp.float32)
    od_ref[...] = (accd + bd_ref[...]).astype(od_ref.dtype)


# ----------------------------------------------------------------------------
# pallas_call wrappers
# ----------------------------------------------------------------------------
def fused_conv(x2d, w2d, bias, residual=None, relu=True):
    """x2d:(M,K) bf16, w2d:(K,Cp) bf16, bias:(1,Cp) f32, residual:(M,Cp) f32|None."""
    M, K = x2d.shape
    Cp = w2d.shape[1]
    tm = _pick_tm(M)

    in_specs = [
        pl.BlockSpec((tm, K), lambda i: (i, 0)),
        pl.BlockSpec((K, Cp), lambda i: (0, 0)),
        pl.BlockSpec((1, Cp), lambda i: (0, 0)),
    ]
    args = [x2d, w2d, bias]
    res_bytes = 0
    if residual is None:
        kernel = functools.partial(_conv_kernel, relu=relu)
    else:
        kernel = functools.partial(_conv_res_kernel, relu=relu)
        in_specs.append(pl.BlockSpec((tm, Cp), lambda i: (i, 0)))
        args.append(residual)
        res_bytes = residual.size * residual.dtype.itemsize

    cost = pl.CostEstimate(
        flops=2 * M * K * Cp,
        transcendentals=0,
        bytes_accessed=(x2d.size * x2d.dtype.itemsize
                        + w2d.size * w2d.dtype.itemsize
                        + bias.size * 4 + res_bytes + M * Cp * 4),
    )
    return pl.pallas_call(
        kernel,
        out_shape=jax.ShapeDtypeStruct((M, Cp), jnp.float32),
        grid_spec=pltpu.PrefetchScalarGridSpec(
            num_scalar_prefetch=0,
            grid=(M // tm,),
            in_specs=in_specs,
            out_specs=pl.BlockSpec((tm, Cp), lambda i: (i, 0)),
        ),
        compiler_params=pltpu.CompilerParams(
            dimension_semantics=("parallel",)),
        cost_estimate=cost,
    )(*args)


def fused_conv_dual(x2d, w2d, bias, wd2d, biasd, center):
    """One call producing conv1(+BN+ReLU) output and 1x1-downsample(+BN) output."""
    M, K = x2d.shape
    Cp = w2d.shape[1]
    Kd = wd2d.shape[0]
    tm = _pick_tm(M)
    kernel = functools.partial(_conv_dual_kernel, center=center, cpad=Kd)
    cost = pl.CostEstimate(
        flops=2 * M * K * Cp + 2 * M * Kd * Cp,
        transcendentals=0,
        bytes_accessed=(x2d.size * x2d.dtype.itemsize
                        + (w2d.size + wd2d.size) * 2
                        + (bias.size + biasd.size) * 4 + 2 * M * Cp * 4),
    )
    return pl.pallas_call(
        kernel,
        out_shape=(jax.ShapeDtypeStruct((M, Cp), jnp.float32),
                   jax.ShapeDtypeStruct((M, Cp), jnp.float32)),
        grid_spec=pltpu.PrefetchScalarGridSpec(
            num_scalar_prefetch=0,
            grid=(M // tm,),
            in_specs=[
                pl.BlockSpec((tm, K), lambda i: (i, 0)),
                pl.BlockSpec((K, Cp), lambda i: (0, 0)),
                pl.BlockSpec((1, Cp), lambda i: (0, 0)),
                pl.BlockSpec((Kd, Cp), lambda i: (0, 0)),
                pl.BlockSpec((1, Cp), lambda i: (0, 0)),
            ],
            out_specs=(pl.BlockSpec((tm, Cp), lambda i: (i, 0)),
                       pl.BlockSpec((tm, Cp), lambda i: (i, 0))),
        ),
        compiler_params=pltpu.CompilerParams(
            dimension_semantics=("parallel",)),
        cost_estimate=cost,
    )(x2d, w2d, bias, wd2d, biasd)


# ----------------------------------------------------------------------------
# Glue: im2col patch extraction + BN folding / channel padding (layout only)
# ----------------------------------------------------------------------------
def _im2col(x_nhwc, k, stride, pad):
    N, H, W, C = x_nhwc.shape
    Hout = (H + 2 * pad - k) // stride + 1
    Wout = (W + 2 * pad - k) // stride + 1
    xp = (jnp.pad(x_nhwc, ((0, 0), (pad, pad), (pad, pad), (0, 0)))
          if pad else x_nhwc)
    cols = []
    for kh in range(k):
        for kw in range(k):
            cols.append(
                xp[:,
                   kh:kh + (Hout - 1) * stride + 1:stride,
                   kw:kw + (Wout - 1) * stride + 1:stride, :])
    patches = jnp.concatenate(cols, axis=-1)  # (N, Hout, Wout, k*k*C)
    return patches.reshape(N * Hout * Wout, k * k * C), (N, Hout, Wout)


def _prep_conv_bn(w_hwio, bn, cin_pad, cout_pad=_C_PAD):
    """Fold eval-mode BN scale into the conv weights; zero-pad channel dims."""
    kh, kw, cin, cout = w_hwio.shape
    scale = bn["gamma"] / jnp.sqrt(bn["var"] + _BN_EPS)       # (cout,)
    bias = bn["beta"] - bn["mean"] * scale                    # (cout,)
    w = w_hwio * scale                                        # fold gamma/std
    w = jnp.pad(w, ((0, 0), (0, 0), (0, cin_pad - cin), (0, cout_pad - cout)))
    w2d = w.reshape(kh * kw * cin_pad, cout_pad).astype(jnp.bfloat16)
    b2d = jnp.pad(bias, (0, cout_pad - cout)).reshape(1, cout_pad)
    return w2d, b2d.astype(jnp.float32)


def conv_bn(x_nhwc, w_hwio, bn, stride, relu, residual=None):
    """Conv(k,k,pad=k//2,no bias) + eval-mode BN + (residual) + (ReLU)."""
    k = w_hwio.shape[0]
    cin_pad = x_nhwc.shape[-1]
    w2d, bias = _prep_conv_bn(w_hwio, bn, cin_pad)
    cols, (N, Hout, Wout) = _im2col(x_nhwc, k, stride, k // 2)
    cols = cols.astype(jnp.bfloat16)
    res2d = None
    if residual is not None:
        res2d = residual.reshape(N * Hout * Wout, _C_PAD)
    out = fused_conv(cols, w2d, bias, res2d, relu)
    return out.reshape(N, Hout, Wout, _C_PAD)


# ----------------------------------------------------------------------------
# Parameters (deterministic synthetic init)
# ----------------------------------------------------------------------------
def _init_conv(key, kh, kw, cin, cout):
    fan_in = kh * kw * cin
    return jax.random.normal(key, (kh, kw, cin, cout), jnp.float32) / jnp.sqrt(
        float(fan_in))


def _init_bn(key, c):
    k1, k2, k3, k4 = jax.random.split(key, 4)
    return dict(
        gamma=jax.random.uniform(k1, (c,), minval=0.5, maxval=1.5),
        beta=jax.random.normal(k2, (c,)) * 0.1,
        mean=jax.random.normal(k3, (c,)) * 0.1,
        var=jax.random.uniform(k4, (c,), minval=0.5, maxval=1.5),
    )


def _init_basic_block(key, inplanes, planes, stride):
    ks = jax.random.split(key, 6)
    p = dict(
        stride=stride,
        conv1=_init_conv(ks[0], 3, 3, inplanes, planes),
        bn1=_init_bn(ks[1], planes),
        conv2=_init_conv(ks[2], 3, 3, planes, planes),
        bn2=_init_bn(ks[3], planes),
    )
    if stride != 1 or inplanes != planes:  # BasicBlock.expansion == 1
        p["down_w"] = _init_conv(ks[4], 1, 1, inplanes, planes)
        p["down_bn"] = _init_bn(ks[5], planes)
    return p


def init_resnet_features(key, n_blocks=(1, 1, 1), n_planes=(8, 16, 32)):
    """CIFAR variant: conv1 = 3x3 stride 1, maxpool = Identity."""
    keys = jax.random.split(key, 2 + sum(n_blocks))
    params = dict(
        conv1=_init_conv(keys[0], 3, 3, 3, n_planes[0]),
        bn1=_init_bn(keys[1], n_planes[0]),
    )
    ki = 2
    inplanes = n_planes[0]
    for stage_idx, (nb, planes) in enumerate(zip(n_blocks, n_planes)):
        stage = []
        stride = 1 if stage_idx == 0 else 2
        for _ in range(nb):
            stage.append(_init_basic_block(keys[ki], inplanes, planes, stride))
            ki += 1
            inplanes = planes
            stride = 1
        params["layer%d" % (stage_idx + 1)] = stage
    return params


# ----------------------------------------------------------------------------
# Forward pass
# ----------------------------------------------------------------------------
def _basic_block_fwd(x, p):
    stride = p["stride"]
    if "down_w" in p:
        # conv1(+BN+ReLU) and the 1x1 downsample(+BN) fused into ONE
        # pallas_call sharing the same 3x3 im2col patches.
        cin_pad = x.shape[-1]
        w1, b1 = _prep_conv_bn(p["conv1"], p["bn1"], cin_pad)
        wd, bd = _prep_conv_bn(p["down_w"], p["down_bn"], cin_pad)
        cols, (N, Hout, Wout) = _im2col(x, 3, stride, 1)
        cols = cols.astype(jnp.bfloat16)
        center = 4 * cin_pad  # columns of the (kh=1, kw=1) tap
        out2d, id2d = fused_conv_dual(cols, w1, b1, wd, bd, center)
        out = out2d.reshape(N, Hout, Wout, _C_PAD)
        identity = id2d.reshape(N, Hout, Wout, _C_PAD)
    else:
        out = conv_bn(x, p["conv1"], p["bn1"], stride, relu=True)
        identity = x
    # conv2 fuses BN + residual add + final ReLU inside the Pallas kernel.
    return conv_bn(out, p["conv2"], p["bn2"], 1, relu=True, residual=identity)


def resnet_features_forward(x_nchw, params, masks=None):
    # TODO(synk): per-sample residual `masks` gating is block_fn-specific and
    # undefined in the provided module; only the masks=None path is reproduced.
    assert masks is None
    x = jnp.transpose(x_nchw, (0, 2, 3, 1)).astype(jnp.float32)  # NCHW -> NHWC
    x = conv_bn(x, params["conv1"], params["bn1"], stride=1, relu=True)
    # maxpool is nn.Identity() for the CIFAR variant.
    for stage_name in ("layer1", "layer2", "layer3"):
        for block_params in params[stage_name]:
            x = _basic_block_fwd(x, block_params)
    cout = params["layer3"][-1]["conv2"].shape[-1]
    x = x[..., :cout]                            # drop lane padding once
    return jnp.transpose(x, (0, 3, 1, 2))        # NHWC -> NCHW


# ----------------------------------------------------------------------------
# Pure-JAX reference (f32, lax.conv) for a loose numerical check
# ----------------------------------------------------------------------------
def _ref_conv_bn(x, w, bn, stride, relu, residual=None):
    pad = w.shape[0] // 2
    y = jax.lax.conv_general_dilated(
        x, w, window_strides=(stride, stride),
        padding=((pad, pad), (pad, pad)),
        dimension_numbers=("NHWC", "HWIO", "NHWC"),
        precision=jax.lax.Precision.HIGHEST)
    scale = bn["gamma"] / jnp.sqrt(bn["var"] + _BN_EPS)
    y = y * scale + (bn["beta"] - bn["mean"] * scale)
    if residual is not None:
        y = y + residual
    return jnp.maximum(y, 0.0) if relu else y


def reference_forward(x_nchw, params):
    x = jnp.transpose(x_nchw, (0, 2, 3, 1)).astype(jnp.float32)
    x = _ref_conv_bn(x, params["conv1"], params["bn1"], 1, True)
    for stage_name in ("layer1", "layer2", "layer3"):
        for p in params[stage_name]:
            identity = x
            out = _ref_conv_bn(x, p["conv1"], p["bn1"], p["stride"], True)
            if "down_w" in p:
                identity = _ref_conv_bn(x, p["down_w"], p["down_bn"],
                                        p["stride"], False)
            x = _ref_conv_bn(out, p["conv2"], p["bn2"], 1, True,
                             residual=identity)
    return jnp.transpose(x, (0, 3, 1, 2))


# ----------------------------------------------------------------------------
if __name__ == "__main__":
    key = jax.random.PRNGKey(0)
    kx, kp = jax.random.split(key)

    x = jax.random.normal(kx, (2, 3, 16, 16), jnp.float32)  # NCHW like torch
    params = init_resnet_features(kp, n_blocks=(1, 1, 1), n_planes=(8, 16, 32))

    fwd = jax.jit(lambda inp: resnet_features_forward(inp, params))
    out = jax.block_until_ready(fwd(x))

    expected_shape = (2, 32, 4, 4)  # n_planes[-1], spatial /4 via two stride-2 stages
    assert out.shape == expected_shape, (out.shape, expected_shape)
    assert bool(jnp.all(jnp.isfinite(out)))

    ref = jax.block_until_ready(
        jax.jit(lambda inp: reference_forward(inp, params))(x))
    rel_err = float(jnp.max(jnp.abs(out - ref)) /
                    (jnp.max(jnp.abs(ref)) + 1e-6))
    assert rel_err < 0.1, rel_err  # bf16 MXU inputs, f32 accumulation

    print("KERNEL_OK")
</pallas_src>

<mosaic_0001>
module attributes {stable_mosaic.version = 11 : i64} {
  func.func @_conv_kernel(%arg0: i32, %arg1: memref<256x27xbf16, #tpu.memory_space<vmem>>, %arg2: memref<27x128xbf16, #tpu.memory_space<vmem>>, %arg3: memref<1x128xf32, #tpu.memory_space<vmem>>, %arg4: memref<256x128xf32, #tpu.memory_space<vmem>>) attributes {dimension_semantics = [#tpu.dimension_semantics<parallel>], iteration_bounds = array<i64: 2>, scalar_prefetch = 0 : i64, scratch_operands = 0 : i64, tpu.core_type = #tpu.core_type<tc>, window_params = [{transform_indices = @transform_0, window_bounds = array<i64: 256, 27>}, {pipeline_mode = #tpu.pipeline_mode<synchronous>, transform_indices = @transform_1, window_bounds = array<i64: 27, 128>}, {pipeline_mode = #tpu.pipeline_mode<synchronous>, transform_indices = @transform_2, window_bounds = array<i64: 1, 128>}, {transform_indices = @transform_3, window_bounds = array<i64: 256, 128>}]} {
    %c0 = arith.constant 0 : index
    %c0_0 = arith.constant 0 : index
    %0 = vector.load %arg1[%c0, %c0_0] : memref<256x27xbf16, #tpu.memory_space<vmem>>, vector<256x27xbf16>
    %c0_1 = arith.constant 0 : index
    %c0_2 = arith.constant 0 : index
    %1 = vector.load %arg2[%c0_1, %c0_2] : memref<27x128xbf16, #tpu.memory_space<vmem>>, vector<27x128xbf16>
    %cst = arith.constant dense<0.000000e+00> : vector<256x128xf32>
    %2 = tpu.matmul %0, %1, %cst {dimension_numbers = #tpu.dot_dimension_numbers<[1], [0], [0], [1], [0, 0, 1, 1], [], []>} : vector<256x27xbf16>, vector<27x128xbf16>, vector<256x128xf32> -> vector<256x128xf32>
    %c0_3 = arith.constant 0 : index
    %c0_4 = arith.constant 0 : index
    %3 = vector.load %arg3[%c0_3, %c0_4] : memref<1x128xf32, #tpu.memory_space<vmem>>, vector<1x128xf32>
    %4 = vector.broadcast %3 : vector<1x128xf32> to vector<256x128xf32>
    %5 = arith.addf %2, %4 : vector<256x128xf32>
    %cst_5 = arith.constant 0.000000e+00 : f32
    %6 = vector.broadcast %cst_5 : f32 to vector<256x128xf32>
    %7 = arith.maximumf %5, %6 : vector<256x128xf32>
    %c0_6 = arith.constant 0 : index
    %c0_7 = arith.constant 0 : index
    %8 = vector.load %arg4[%c0_6, %c0_7] : memref<256x128xf32, #tpu.memory_space<vmem>>, vector<256x128xf32>
    tpu.vector_store %arg4[%c0_6, %c0_7], %7 {strides = array<i32>} : memref<256x128xf32, #tpu.memory_space<vmem>>, vector<256x128xf32>,
    return
  }
  func.func @transform_0(%arg0: i32) -> (i32, i32) {
    %c0_i32 = arith.constant 0 : i32
    %c0_i32_0 = arith.constant 0 : i32
    return %arg0, %c0_i32 : i32, i32
  }
  func.func @transform_1(%arg0: i32) -> (i32, i32) {
    %c0_i32 = arith.constant 0 : i32
    %c0_i32_0 = arith.constant 0 : i32
    %c0_i32_1 = arith.constant 0 : i32
    return %c0_i32, %c0_i32_0 : i32, i32
  }
  func.func @transform_2(%arg0: i32) -> (i32, i32) {
    %c0_i32 = arith.constant 0 : i32
    %c0_i32_0 = arith.constant 0 : i32
    %c0_i32_1 = arith.constant 0 : i32
    return %c0_i32, %c0_i32_0 : i32, i32
  }
  func.func @transform_3(%arg0: i32) -> (i32, i32) {
    %c0_i32 = arith.constant 0 : i32
    %c0_i32_0 = arith.constant 0 : i32
    return %arg0, %c0_i32 : i32, i32
  }
}

module attributes {stable_mosaic.version = 11 : i64} {
  func.func @_conv_res_kernel(%arg0: i32, %arg1: memref<256x1152xbf16, #tpu.memory_space<vmem>>, %arg2: memref<1152x128xbf16, #tpu.memory_space<vmem>>, %arg3: memref<1x128xf32, #tpu.memory_space<vmem>>, %arg4: memref<256x128xf32, #tpu.memory_space<vmem>>, %arg5: memref<256x128xf32, #tpu.memory_space<vmem>>) attributes {dimension_semantics = [#tpu.dimension_semantics<parallel>], iteration_bounds = array<i64: 2>, scalar_prefetch = 0 : i64, scratch_operands = 0 : i64, tpu.core_type = #tpu.core_type<tc>, window_params = [{transform_indices = @transform_0, window_bounds = array<i64: 256, 1152>}, {pipeline_mode = #tpu.pipeline_mode<synchronous>, transform_indices = @transform_1, window_bounds = array<i64: 1152, 128>}, {pipeline_mode = #tpu.pipeline_mode<synchronous>, transform_indices = @transform_2, window_bounds = array<i64: 1, 128>}, {transform_indices = @transform_3, window_bounds = array<i64: 256, 128>}, {transform_indices = @transform_4, window_bounds = array<i64: 256, 128>}]} {
    %c0 = arith.constant 0 : index
    %c0_0 = arith.constant 0 : index
    %0 = vector.load %arg1[%c0, %c0_0] : memref<256x1152xbf16, #tpu.memory_space<vmem>>, vector<256x1152xbf16>
    %c0_1 = arith.constant 0 : index
    %c0_2 = arith.constant 0 : index
    %1 = vector.load %arg2[%c0_1, %c0_2] : memref<1152x128xbf16, #tpu.memory_space<vmem>>, vector<1152x128xbf16>
    %cst = arith.constant dense<0.000000e+00> : vector<256x128xf32>
    %2 = tpu.matmul %0, %1, %cst {dimension_numbers = #tpu.dot_dimension_numbers<[1], [0], [0], [1], [0, 0, 1, 1], [], []>} : vector<256x1152xbf16>, vector<1152x128xbf16>, vector<256x128xf32> -> vector<256x128xf32>
    %c0_3 = arith.constant 0 : index
    %c0_4 = arith.constant 0 : index
    %3 = vector.load %arg3[%c0_3, %c0_4] : memref<1x128xf32, #tpu.memory_space<vmem>>, vector<1x128xf32>
    %4 = vector.broadcast %3 : vector<1x128xf32> to vector<256x128xf32>
    %5 = arith.addf %2, %4 : vector<256x128xf32>
    %c0_5 = arith.constant 0 : index
    %c0_6 = arith.constant 0 : index
    %6 = vector.load %arg4[%c0_5, %c0_6] : memref<256x128xf32, #tpu.memory_space<vmem>>, vector<256x128xf32>
    %7 = arith.addf %5, %6 : vector<256x128xf32>
    %cst_7 = arith.constant 0.000000e+00 : f32
    %8 = vector.broadcast %cst_7 : f32 to vector<256x128xf32>
    %9 = arith.maximumf %7, %8 : vector<256x128xf32>
    %c0_8 = arith.constant 0 : index
    %c0_9 = arith.constant 0 : index
    %10 = vector.load %arg5[%c0_8, %c0_9] : memref<256x128xf32, #tpu.memory_space<vmem>>, vector<256x128xf32>
    tpu.vector_store %arg5[%c0_8, %c0_9], %9 {strides = array<i32>} : memref<256x128xf32, #tpu.memory_space<vmem>>, vector<256x128xf32>,
    return
  }
  func.func @transform_0(%arg0: i32) -> (i32, i32) {
    %c0_i32 = arith.constant 0 : i32
    %c0_i32_0 = arith.constant 0 : i32
    return %arg0, %c0_i32 : i32, i32
  }
  func.func @transform_1(%arg0: i32) -> (i32, i32) {
    %c0_i32 = arith.constant 0 : i32
    %c0_i32_0 = arith.constant 0 : i32
    %c0_i32_1 = arith.constant 0 : i32
    return %c0_i32, %c0_i32_0 : i32, i32
  }
  func.func @transform_2(%arg0: i32) -> (i32, i32) {
    %c0_i32 = arith.constant 0 : i32
    %c0_i32_0 = arith.constant 0 : i32
    %c0_i32_1 = arith.constant 0 : i32
    return %c0_i32, %c0_i32_0 : i32, i32
  }
  func.func @transform_3(%arg0: i32) -> (i32, i32) {
    %c0_i32 = arith.constant 0 : i32
    %c0_i32_0 = arith.constant 0 : i32
    return %arg0, %c0_i32 : i32, i32
  }
  func.func @transform_4(%arg0: i32) -> (i32, i32) {
    %c0_i32 = arith.constant 0 : i32
    %c0_i32_0 = arith.constant 0 : i32
    return %arg0, %c0_i32 : i32, i32
  }
}

module attributes {stable_mosaic.version = 11 : i64} {
  func.func @_conv_kernel(%arg0: i32, %arg1: memref<256x1152xbf16, #tpu.memory_space<vmem>>, %arg2: memref<1152x128xbf16, #tpu.memory_space<vmem>>, %arg3: memref<1x128xf32, #tpu.memory_space<vmem>>, %arg4: memref<256x128xf32, #tpu.memory_space<vmem>>) attributes {dimension_semantics = [#tpu.dimension_semantics<parallel>], iteration_bounds = array<i64: 2>, scalar_prefetch = 0 : i64, scratch_operands = 0 : i64, tpu.core_type = #tpu.core_type<tc>, window_params = [{transform_indices = @transform_0, window_bounds = array<i64: 256, 1152>}, {pipeline_mode = #tpu.pipeline_mode<synchronous>, transform_indices = @transform_1, window_bounds = array<i64: 1152, 128>}, {pipeline_mode = #tpu.pipeline_mode<synchronous>, transform_indices = @transform_2, window_bounds = array<i64: 1, 128>}, {transform_indices = @transform_3, window_bounds = array<i64: 256, 128>}]} {
    %c0 = arith.constant 0 : index
    %c0_0 = arith.constant 0 : index
    %0 = vector.load %arg1[%c0, %c0_0] : memref<256x1152xbf16, #tpu.memory_space<vmem>>, vector<256x1152xbf16>
    %c0_1 = arith.constant 0 : index
    %c0_2 = arith.constant 0 : index
    %1 = vector.load %arg2[%c0_1, %c0_2] : memref<1152x128xbf16, #tpu.memory_space<vmem>>, vector<1152x128xbf16>
    %cst = arith.constant dense<0.000000e+00> : vector<256x128xf32>
    %2 = tpu.matmul %0, %1, %cst {dimension_numbers = #tpu.dot_dimension_numbers<[1], [0], [0], [1], [0, 0, 1, 1], [], []>} : vector<256x1152xbf16>, vector<1152x128xbf16>, vector<256x128xf32> -> vector<256x128xf32>
    %c0_3 = arith.constant 0 : index
    %c0_4 = arith.constant 0 : index
    %3 = vector.load %arg3[%c0_3, %c0_4] : memref<1x128xf32, #tpu.memory_space<vmem>>, vector<1x128xf32>
    %4 = vector.broadcast %3 : vector<1x128xf32> to vector<256x128xf32>
    %5 = arith.addf %2, %4 : vector<256x128xf32>
    %cst_5 = arith.constant 0.000000e+00 : f32
    %6 = vector.broadcast %cst_5 : f32 to vector<256x128xf32>
    %7 = arith.maximumf %5, %6 : vector<256x128xf32>
    %c0_6 = arith.constant 0 : index
    %c0_7 = arith.constant 0 : index
    %8 = vector.load %arg4[%c0_6, %c0_7] : memref<256x128xf32, #tpu.memory_space<vmem>>, vector<256x128xf32>
    tpu.vector_store %arg4[%c0_6, %c0_7], %7 {strides = array<i32>} : memref<256x128xf32, #tpu.memory_space<vmem>>, vector<256x128xf32>,
    return
  }
  func.func @transform_0(%arg0: i32) -> (i32, i32) {
    %c0_i32 = arith.constant 0 : i32
    %c0_i32_0 = arith.constant 0 : i32
    return %arg0, %c0_i32 : i32, i32
  }
  func.func @transform_1(%arg0: i32) -> (i32, i32) {
    %c0_i32 = arith.constant 0 : i32
    %c0_i32_0 = arith.constant 0 : i32
    %c0_i32_1 = arith.constant 0 : i32
    return %c0_i32, %c0_i32_0 : i32, i32
  }
  func.func @transform_2(%arg0: i32) -> (i32, i32) {
    %c0_i32 = arith.constant 0 : i32
    %c0_i32_0 = arith.constant 0 : i32
    %c0_i32_1 = arith.constant 0 : i32
    return %c0_i32, %c0_i32_0 : i32, i32
  }
  func.func @transform_3(%arg0: i32) -> (i32, i32) {
    %c0_i32 = arith.constant 0 : i32
    %c0_i32_0 = arith.constant 0 : i32
    return %arg0, %c0_i32 : i32, i32
  }
}

module attributes {stable_mosaic.version = 11 : i64} {
  func.func @_conv_dual_kernel(%arg0: i32, %arg1: memref<128x1152xbf16, #tpu.memory_space<vmem>>, %arg2: memref<1152x128xbf16, #tpu.memory_space<vmem>>, %arg3: memref<1x128xf32, #tpu.memory_space<vmem>>, %arg4: memref<128x128xbf16, #tpu.memory_space<vmem>>, %arg5: memref<1x128xf32, #tpu.memory_space<vmem>>, %arg6: memref<128x128xf32, #tpu.memory_space<vmem>>, %arg7: memref<128x128xf32, #tpu.memory_space<vmem>>) attributes {dimension_semantics = [#tpu.dimension_semantics<parallel>], iteration_bounds = array<i64: 1>, scalar_prefetch = 0 : i64, scratch_operands = 0 : i64, tpu.core_type = #tpu.core_type<tc>, window_params = [{transform_indices = @transform_0, window_bounds = array<i64: 128, 1152>}, {pipeline_mode = #tpu.pipeline_mode<synchronous>, transform_indices = @transform_1, window_bounds = array<i64: 1152, 128>}, {pipeline_mode = #tpu.pipeline_mode<synchronous>, transform_indices = @transform_2, window_bounds = array<i64: 1, 128>}, {pipeline_mode = #tpu.pipeline_mode<synchronous>, transform_indices = @transform_3, window_bounds = array<i64: 128, 128>}, {pipeline_mode = #tpu.pipeline_mode<synchronous>, transform_indices = @transform_4, window_bounds = array<i64: 1, 128>}, {transform_indices = @transform_5, window_bounds = array<i64: 128, 128>}, {transform_indices = @transform_6, window_bounds = array<i64: 128, 128>}]} {
    %c0 = arith.constant 0 : index
    %c0_0 = arith.constant 0 : index
    %0 = vector.load %arg1[%c0, %c0_0] : memref<128x1152xbf16, #tpu.memory_space<vmem>>, vector<128x1152xbf16>
    %c0_1 = arith.constant 0 : index
    %c0_2 = arith.constant 0 : index
    %1 = vector.load %arg2[%c0_1, %c0_2] : memref<1152x128xbf16, #tpu.memory_space<vmem>>, vector<1152x128xbf16>
    %cst = arith.constant dense<0.000000e+00> : vector<128x128xf32>
    %2 = tpu.matmul %0, %1, %cst {dimension_numbers = #tpu.dot_dimension_numbers<[1], [0], [0], [1], [0, 0, 1, 1], [], []>} : vector<128x1152xbf16>, vector<1152x128xbf16>, vector<128x128xf32> -> vector<128x128xf32>
    %c0_3 = arith.constant 0 : index
    %c0_4 = arith.constant 0 : index
    %3 = vector.load %arg3[%c0_3, %c0_4] : memref<1x128xf32, #tpu.memory_space<vmem>>, vector<1x128xf32>
    %4 = vector.broadcast %3 : vector<1x128xf32> to vector<128x128xf32>
    %5 = arith.addf %2, %4 : vector<128x128xf32>
    %cst_5 = arith.constant 0.000000e+00 : f32
    %6 = vector.broadcast %cst_5 : f32 to vector<128x128xf32>
    %7 = arith.maximumf %5, %6 : vector<128x128xf32>
    %c0_6 = arith.constant 0 : index
    %c0_7 = arith.constant 0 : index
    %8 = vector.load %arg6[%c0_6, %c0_7] : memref<128x128xf32, #tpu.memory_space<vmem>>, vector<128x128xf32>
    tpu.vector_store %arg6[%c0_6, %c0_7], %7 {strides = array<i32>} : memref<128x128xf32, #tpu.memory_space<vmem>>, vector<128x128xf32>,
    %9 = vector.extract_strided_slice %0 {offsets = [0, 512], sizes = [128, 128], strides = [1, 1]} : vector<128x1152xbf16> to vector<128x128xbf16>
    %c0_8 = arith.constant 0 : index
    %c0_9 = arith.constant 0 : index
    %10 = vector.load %arg4[%c0_8, %c0_9] : memref<128x128xbf16, #tpu.memory_space<vmem>>, vector<128x128xbf16>
    %cst_10 = arith.constant dense<0.000000e+00> : vector<128x128xf32>
    %11 = tpu.matmul %9, %10, %cst_10 {dimension_numbers = #tpu.dot_dimension_numbers<[1], [0], [0], [1], [0, 0, 1, 1], [], []>} : vector<128x128xbf16>, vector<128x128xbf16>, vector<128x128xf32> -> vector<128x128xf32>
    %c0_11 = arith.constant 0 : index
    %c0_12 = arith.constant 0 : index
    %12 = vector.load %arg5[%c0_11, %c0_12] : memref<1x128xf32, #tpu.memory_space<vmem>>, vector<1x128xf32>
    %13 = vector.broadcast %12 : vector<1x128xf32> to vector<128x128xf32>
    %14 = arith.addf %11, %13 : vector<128x128xf32>
    %c0_13 = arith.constant 0 : index
    %c0_14 = arith.constant 0 : index
    %15 = vector.load %arg7[%c0_13, %c0_14] : memref<128x128xf32, #tpu.memory_space<vmem>>, vector<128x128xf32>
    tpu.vector_store %arg7[%c0_13, %c0_14], %14 {strides = array<i32>} : memref<128x128xf32, #tpu.memory_space<vmem>>, vector<128x128xf32>,
    return
  }
  func.func @transform_0(%arg0: i32) -> (i32, i32) {
    %c0_i32 = arith.constant 0 : i32
    %c0_i32_0 = arith.constant 0 : i32
    return %arg0, %c0_i32 : i32, i32
  }
  func.func @transform_1(%arg0: i32) -> (i32, i32) {
    %c0_i32 = arith.constant 0 : i32
    %c0_i32_0 = arith.constant 0 : i32
    %c0_i32_1 = arith.constant 0 : i32
    return %c0_i32, %c0_i32_0 : i32, i32
  }
  func.func @transform_2(%arg0: i32) -> (i32, i32) {
    %c0_i32 = arith.constant 0 : i32
    %c0_i32_0 = arith.constant 0 : i32
    %c0_i32_1 = arith.constant 0 : i32
    return %c0_i32, %c0_i32_0 : i32, i32
  }
  func.func @transform_3(%arg0: i32) -> (i32, i32) {
    %c0_i32 = arith.constant 0 : i32
    %c0_i32_0 = arith.constant 0 : i32
    %c0_i32_1 = arith.constant 0 : i32
    return %c0_i32, %c0_i32_0 : i32, i32
  }
  func.func @transform_4(%arg0: i32) -> (i32, i32) {
    %c0_i32 = arith.constant 0 : i32
    %c0_i32_0 = arith.constant 0 : i32
    %c0_i32_1 = arith.constant 0 : i32
    return %c0_i32, %c0_i32_0 : i32, i32
  }
  func.func @transform_5(%arg0: i32) -> (i32, i32) {
    %c0_i32 = arith.constant 0 : i32
    %c0_i32_0 = arith.constant 0 : i32
    return %arg0, %c0_i32 : i32, i32
  }
  func.func @transform_6(%arg0: i32) -> (i32, i32) {
    %c0_i32 = arith.constant 0 : i32
    %c0_i32_0 = arith.constant 0 : i32
    return %arg0, %c0_i32 : i32, i32
  }
}

module attributes {stable_mosaic.version = 11 : i64} {
  func.func @_conv_res_kernel(%arg0: i32, %arg1: memref<128x1152xbf16, #tpu.memory_space<vmem>>, %arg2: memref<1152x128xbf16, #tpu.memory_space<vmem>>, %arg3: memref<1x128xf32, #tpu.memory_space<vmem>>, %arg4: memref<128x128xf32, #tpu.memory_space<vmem>>, %arg5: memref<128x128xf32, #tpu.memory_space<vmem>>) attributes {dimension_semantics = [#tpu.dimension_semantics<parallel>], iteration_bounds = array<i64: 1>, scalar_prefetch = 0 : i64, scratch_operands = 0 : i64, tpu.core_type = #tpu.core_type<tc>, window_params = [{transform_indices = @transform_0, window_bounds = array<i64: 128, 1152>}, {pipeline_mode = #tpu.pipeline_mode<synchronous>, transform_indices = @transform_1, window_bounds = array<i64: 1152, 128>}, {pipeline_mode = #tpu.pipeline_mode<synchronous>, transform_indices = @transform_2, window_bounds = array<i64: 1, 128>}, {transform_indices = @transform_3, window_bounds = array<i64: 128, 128>}, {transform_indices = @transform_4, window_bounds = array<i64: 128, 128>}]} {
    %c0 = arith.constant 0 : index
    %c0_0 = arith.constant 0 : index
    %0 = vector.load %arg1[%c0, %c0_0] : memref<128x1152xbf16, #tpu.memory_space<vmem>>, vector<128x1152xbf16>
    %c0_1 = arith.constant 0 : index
    %c0_2 = arith.constant 0 : index
    %1 = vector.load %arg2[%c0_1, %c0_2] : memref<1152x128xbf16, #tpu.memory_space<vmem>>, vector<1152x128xbf16>
    %cst = arith.constant dense<0.000000e+00> : vector<128x128xf32>
    %2 = tpu.matmul %0, %1, %cst {dimension_numbers = #tpu.dot_dimension_numbers<[1], [0], [0], [1], [0, 0, 1, 1], [], []>} : vector<128x1152xbf16>, vector<1152x128xbf16>, vector<128x128xf32> -> vector<128x128xf32>
    %c0_3 = arith.constant 0 : index
    %c0_4 = arith.constant 0 : index
    %3 = vector.load %arg3[%c0_3, %c0_4] : memref<1x128xf32, #tpu.memory_space<vmem>>, vector<1x128xf32>
    %4 = vector.broadcast %3 : vector<1x128xf32> to vector<128x128xf32>
    %5 = arith.addf %2, %4 : vector<128x128xf32>
    %c0_5 = arith.constant 0 : index
    %c0_6 = arith.constant 0 : index
    %6 = vector.load %arg4[%c0_5, %c0_6] : memref<128x128xf32, #tpu.memory_space<vmem>>, vector<128x128xf32>
    %7 = arith.addf %5, %6 : vector<128x128xf32>
    %cst_7 = arith.constant 0.000000e+00 : f32
    %8 = vector.broadcast %cst_7 : f32 to vector<128x128xf32>
    %9 = arith.maximumf %7, %8 : vector<128x128xf32>
    %c0_8 = arith.constant 0 : index
    %c0_9 = arith.constant 0 : index
    %10 = vector.load %arg5[%c0_8, %c0_9] : memref<128x128xf32, #tpu.memory_space<vmem>>, vector<128x128xf32>
    tpu.vector_store %arg5[%c0_8, %c0_9], %9 {strides = array<i32>} : memref<128x128xf32, #tpu.memory_space<vmem>>, vector<128x128xf32>,
    return
  }
  func.func @transform_0(%arg0: i32) -> (i32, i32) {
    %c0_i32 = arith.constant 0 : i32
    %c0_i32_0 = arith.constant 0 : i32
    return %arg0, %c0_i32 : i32, i32
  }
  func.func @transform_1(%arg0: i32) -> (i32, i32) {
    %c0_i32 = arith.constant 0 : i32
    %c0_i32_0 = arith.constant 0 : i32
    %c0_i32_1 = arith.constant 0 : i32
    return %c0_i32, %c0_i32_0 : i32, i32
  }
  func.func @transform_2(%arg0: i32) -> (i32, i32) {
    %c0_i32 = arith.constant 0 : i32
    %c0_i32_0 = arith.constant 0 : i32
    %c0_i32_1 = arith.constant 0 : i32
    return %c0_i32, %c0_i32_0 : i32, i32
  }
  func.func @transform_3(%arg0: i32) -> (i32, i32) {
    %c0_i32 = arith.constant 0 : i32
    %c0_i32_0 = arith.constant 0 : i32
    return %arg0, %c0_i32 : i32, i32
  }
  func.func @transform_4(%arg0: i32) -> (i32, i32) {
    %c0_i32 = arith.constant 0 : i32
    %c0_i32_0 = arith.constant 0 : i32
    return %arg0, %c0_i32 : i32, i32
  }
}

module attributes {stable_mosaic.version = 11 : i64} {
  func.func @_conv_dual_kernel(%arg0: i32, %arg1: memref<32x1152xbf16, #tpu.memory_space<vmem>>, %arg2: memref<1152x128xbf16, #tpu.memory_space<vmem>>, %arg3: memref<1x128xf32, #tpu.memory_space<vmem>>, %arg4: memref<128x128xbf16, #tpu.memory_space<vmem>>, %arg5: memref<1x128xf32, #tpu.memory_space<vmem>>, %arg6: memref<32x128xf32, #tpu.memory_space<vmem>>, %arg7: memref<32x128xf32, #tpu.memory_space<vmem>>) attributes {dimension_semantics = [#tpu.dimension_semantics<parallel>], iteration_bounds = array<i64: 1>, scalar_prefetch = 0 : i64, scratch_operands = 0 : i64, tpu.core_type = #tpu.core_type<tc>, window_params = [{transform_indices = @transform_0, window_bounds = array<i64: 32, 1152>}, {pipeline_mode = #tpu.pipeline_mode<synchronous>, transform_indices = @transform_1, window_bounds = array<i64: 1152, 128>}, {pipeline_mode = #tpu.pipeline_mode<synchronous>, transform_indices = @transform_2, window_bounds = array<i64: 1, 128>}, {pipeline_mode = #tpu.pipeline_mode<synchronous>, transform_indices = @transform_3, window_bounds = array<i64: 128, 128>}, {pipeline_mode = #tpu.pipeline_mode<synchronous>, transform_indices = @transform_4, window_bounds = array<i64: 1, 128>}, {transform_indices = @transform_5, window_bounds = array<i64: 32, 128>}, {transform_indices = @transform_6, window_bounds = array<i64: 32, 128>}]} {
    %c0 = arith.constant 0 : index
    %c0_0 = arith.constant 0 : index
    %0 = vector.load %arg1[%c0, %c0_0] : memref<32x1152xbf16, #tpu.memory_space<vmem>>, vector<32x1152xbf16>
    %c0_1 = arith.constant 0 : index
    %c0_2 = arith.constant 0 : index
    %1 = vector.load %arg2[%c0_1, %c0_2] : memref<1152x128xbf16, #tpu.memory_space<vmem>>, vector<1152x128xbf16>
    %cst = arith.constant dense<0.000000e+00> : vector<32x128xf32>
    %2 = tpu.matmul %0, %1, %cst {dimension_numbers = #tpu.dot_dimension_numbers<[1], [0], [0], [1], [0, 0, 1, 1], [], []>} : vector<32x1152xbf16>, vector<1152x128xbf16>, vector<32x128xf32> -> vector<32x128xf32>
    %c0_3 = arith.constant 0 : index
    %c0_4 = arith.constant 0 : index
    %3 = vector.load %arg3[%c0_3, %c0_4] : memref<1x128xf32, #tpu.memory_space<vmem>>, vector<1x128xf32>
    %4 = vector.broadcast %3 : vector<1x128xf32> to vector<32x128xf32>
    %5 = arith.addf %2, %4 : vector<32x128xf32>
    %cst_5 = arith.constant 0.000000e+00 : f32
    %6 = vector.broadcast %cst_5 : f32 to vector<32x128xf32>
    %7 = arith.maximumf %5, %6 : vector<32x128xf32>
    %c0_6 = arith.constant 0 : index
    %c0_7 = arith.constant 0 : index
    %8 = vector.load %arg6[%c0_6, %c0_7] : memref<32x128xf32, #tpu.memory_space<vmem>>, vector<32x128xf32>
    tpu.vector_store %arg6[%c0_6, %c0_7], %7 {strides = array<i32>} : memref<32x128xf32, #tpu.memory_space<vmem>>, vector<32x128xf32>,
    %9 = vector.extract_strided_slice %0 {offsets = [0, 512], sizes = [32, 128], strides = [1, 1]} : vector<32x1152xbf16> to vector<32x128xbf16>
    %c0_8 = arith.constant 0 : index
    %c0_9 = arith.constant 0 : index
    %10 = vector.load %arg4[%c0_8, %c0_9] : memref<128x128xbf16, #tpu.memory_space<vmem>>, vector<128x128xbf16>
    %cst_10 = arith.constant dense<0.000000e+00> : vector<32x128xf32>
    %11 = tpu.matmul %9, %10, %cst_10 {dimension_numbers = #tpu.dot_dimension_numbers<[1], [0], [0], [1], [0, 0, 1, 1], [], []>} : vector<32x128xbf16>, vector<128x128xbf16>, vector<32x128xf32> -> vector<32x128xf32>
    %c0_11 = arith.constant 0 : index
    %c0_12 = arith.constant 0 : index
    %12 = vector.load %arg5[%c0_11, %c0_12] : memref<1x128xf32, #tpu.memory_space<vmem>>, vector<1x128xf32>
    %13 = vector.broadcast %12 : vector<1x128xf32> to vector<32x128xf32>
    %14 = arith.addf %11, %13 : vector<32x128xf32>
    %c0_13 = arith.constant 0 : index
    %c0_14 = arith.constant 0 : index
    %15 = vector.load %arg7[%c0_13, %c0_14] : memref<32x128xf32, #tpu.memory_space<vmem>>, vector<32x128xf32>
    tpu.vector_store %arg7[%c0_13, %c0_14], %14 {strides = array<i32>} : memref<32x128xf32, #tpu.memory_space<vmem>>, vector<32x128xf32>,
    return
  }
  func.func @transform_0(%arg0: i32) -> (i32, i32) {
    %c0_i32 = arith.constant 0 : i32
    %c0_i32_0 = arith.constant 0 : i32
    return %arg0, %c0_i32 : i32, i32
  }
  func.func @transform_1(%arg0: i32) -> (i32, i32) {
    %c0_i32 = arith.constant 0 : i32
    %c0_i32_0 = arith.constant 0 : i32
    %c0_i32_1 = arith.constant 0 : i32
    return %c0_i32, %c0_i32_0 : i32, i32
  }
  func.func @transform_2(%arg0: i32) -> (i32, i32) {
    %c0_i32 = arith.constant 0 : i32
    %c0_i32_0 = arith.constant 0 : i32
    %c0_i32_1 = arith.constant 0 : i32
    return %c0_i32, %c0_i32_0 : i32, i32
  }
  func.func @transform_3(%arg0: i32) -> (i32, i32) {
    %c0_i32 = arith.constant 0 : i32
    %c0_i32_0 = arith.constant 0 : i32
    %c0_i32_1 = arith.constant 0 : i32
    return %c0_i32, %c0_i32_0 : i32, i32
  }
  func.func @transform_4(%arg0: i32) -> (i32, i32) {
    %c0_i32 = arith.constant 0 : i32
    %c0_i32_0 = arith.constant 0 : i32
    %c0_i32_1 = arith.constant 0 : i32
    return %c0_i32, %c0_i32_0 : i32, i32
  }
  func.func @transform_5(%arg0: i32) -> (i32, i32) {
    %c0_i32 = arith.constant 0 : i32
    %c0_i32_0 = arith.constant 0 : i32
    return %arg0, %c0_i32 : i32, i32
  }
  func.func @transform_6(%arg0: i32) -> (i32, i32) {
    %c0_i32 = arith.constant 0 : i32
    %c0_i32_0 = arith.constant 0 : i32
    return %arg0, %c0_i32 : i32, i32
  }
}

module attributes {stable_mosaic.version = 11 : i64} {
  func.func @_conv_res_kernel(%arg0: i32, %arg1: memref<32x1152xbf16, #tpu.memory_space<vmem>>, %arg2: memref<1152x128xbf16, #tpu.memory_space<vmem>>, %arg3: memref<1x128xf32, #tpu.memory_space<vmem>>, %arg4: memref<32x128xf32, #tpu.memory_space<vmem>>, %arg5: memref<32x128xf32, #tpu.memory_space<vmem>>) attributes {dimension_semantics = [#tpu.dimension_semantics<parallel>], iteration_bounds = array<i64: 1>, scalar_prefetch = 0 : i64, scratch_operands = 0 : i64, tpu.core_type = #tpu.core_type<tc>, window_params = [{transform_indices = @transform_0, window_bounds = array<i64: 32, 1152>}, {pipeline_mode = #tpu.pipeline_mode<synchronous>, transform_indices = @transform_1, window_bounds = array<i64: 1152, 128>}, {pipeline_mode = #tpu.pipeline_mode<synchronous>, transform_indices = @transform_2, window_bounds = array<i64: 1, 128>}, {transform_indices = @transform_3, window_bounds = array<i64: 32, 128>}, {transform_indices = @transform_4, window_bounds = array<i64: 32, 128>}]} {
    %c0 = arith.constant 0 : index
    %c0_0 = arith.constant 0 : index
    %0 = vector.load %arg1[%c0, %c0_0] : memref<32x1152xbf16, #tpu.memory_space<vmem>>, vector<32x1152xbf16>
    %c0_1 = arith.constant 0 : index
    %c0_2 = arith.constant 0 : index
    %1 = vector.load %arg2[%c0_1, %c0_2] : memref<1152x128xbf16, #tpu.memory_space<vmem>>, vector<1152x128xbf16>
    %cst = arith.constant dense<0.000000e+00> : vector<32x128xf32>
    %2 = tpu.matmul %0, %1, %cst {dimension_numbers = #tpu.dot_dimension_numbers<[1], [0], [0], [1], [0, 0, 1, 1], [], []>} : vector<32x1152xbf16>, vector<1152x128xbf16>, vector<32x128xf32> -> vector<32x128xf32>
    %c0_3 = arith.constant 0 : index
    %c0_4 = arith.constant 0 : index
    %3 = vector.load %arg3[%c0_3, %c0_4] : memref<1x128xf32, #tpu.memory_space<vmem>>, vector<1x128xf32>
    %4 = vector.broadcast %3 : vector<1x128xf32> to vector<32x128xf32>
    %5 = arith.addf %2, %4 : vector<32x128xf32>
    %c0_5 = arith.constant 0 : index
    %c0_6 = arith.constant 0 : index
    %6 = vector.load %arg4[%c0_5, %c0_6] : memref<32x128xf32, #tpu.memory_space<vmem>>, vector<32x128xf32>
    %7 = arith.addf %5, %6 : vector<32x128xf32>
    %cst_7 = arith.constant 0.000000e+00 : f32
    %8 = vector.broadcast %cst_7 : f32 to vector<32x128xf32>
    %9 = arith.maximumf %7, %8 : vector<32x128xf32>
    %c0_8 = arith.constant 0 : index
    %c0_9 = arith.constant 0 : index
    %10 = vector.load %arg5[%c0_8, %c0_9] : memref<32x128xf32, #tpu.memory_space<vmem>>, vector<32x128xf32>
    tpu.vector_store %arg5[%c0_8, %c0_9], %9 {strides = array<i32>} : memref<32x128xf32, #tpu.memory_space<vmem>>, vector<32x128xf32>,
    return
  }
  func.func @transform_0(%arg0: i32) -> (i32, i32) {
    %c0_i32 = arith.constant 0 : i32
    %c0_i32_0 = arith.constant 0 : i32
    return %arg0, %c0_i32 : i32, i32
  }
  func.func @transform_1(%arg0: i32) -> (i32, i32) {
    %c0_i32 = arith.constant 0 : i32
    %c0_i32_0 = arith.constant 0 : i32
    %c0_i32_1 = arith.constant 0 : i32
    return %c0_i32, %c0_i32_0 : i32, i32
  }
  func.func @transform_2(%arg0: i32) -> (i32, i32) {
    %c0_i32 = arith.constant 0 : i32
    %c0_i32_0 = arith.constant 0 : i32
    %c0_i32_1 = arith.constant 0 : i32
    return %c0_i32, %c0_i32_0 : i32, i32
  }
  func.func @transform_3(%arg0: i32) -> (i32, i32) {
    %c0_i32 = arith.constant 0 : i32
    %c0_i32_0 = arith.constant 0 : i32
    return %arg0, %c0_i32 : i32, i32
  }
  func.func @transform_4(%arg0: i32) -> (i32, i32) {
    %c0_i32 = arith.constant 0 : i32
    %c0_i32_0 = arith.constant 0 : i32
    return %arg0, %c0_i32 : i32, i32
  }
}

</mosaic_0001>

<llo_original>
// kernel: _lambda_.7
$region0: #{_lambda_.7}
  #allocation0 [shape = 'u32[]', space=smem, size = 0x4, offset = 0x4, fixed_abs, tag = 'smem constant byte address 0x4 - core index']
  #allocation1 [shape = 'u32[72,128]{1,0:T(1,128)}', space=vmem, size = 0x9000, scoped, tag = 'internal scratch']
  %s0 = inlined_call_operand.vmem [shape: bf16[512,27], index: 0, kind: input, shape index: {}]
  %s1 = inlined_call_operand.hbm [shape: bf16[27,128], index: 1, kind: input, shape index: {}]
  %s2 = inlined_call_operand.hbm [shape: f32[1,128], index: 2, kind: input, shape index: {}]
  %s3 = inlined_call_operand.vmem [shape: f32[512,128], index: 3, kind: output, shape index: {}]
  %s4 = sld [smem:[#allocation0]]
  $region53: #{_lambda_.7} parent=0
    _
  %s6 = ssub.s32 1, %s4
  %s7 = scalar_select 0, %s6, %s4
  $region1: #{_lambda_.7} parent=0
    #allocation2 [shape = 'u8[8192]{0}', space=vmem, size = 0x2000, scoped, tag = 'input window, operand 1, single buffered']
    #allocation3 [shape = 's32[2]{0}', space=sflag, size = 0x8, scoped, tag = 'scoped memory for _lambda_.7']
    #allocation4 [shape = 'u8[512]{0}', space=vmem, size = 0x400, scoped, tag = 'input window, operand 2, single buffered']
    #allocation5 [shape = 's32[1]{0}', space=sflag, size = 0x4, scoped, tag = 'scoped memory for _lambda_.7']
    %8 = vsyncpa [#allocation3], 0
    %9 = vsyncpa [#allocation5], 0
    loop: start=0, step=1, limit=4
    $region2: #{_lambda_.7} parent=1 // loop_pre_header
      _
    $region3: #{_lambda_.7} parent=1 // loop_header
      %s11 = sphi 0, %s15
      %p12 = scmp.ge.s32.totalorder %s11, 4
      %s21 = sphi 0, %s23
      %s24 = sphi 0, %s21
      %s25 = sphi 0, %s24
      %s41 = sphi 0, %s25
      %s45 = sphi 0, %s45
      %s47 = sphi 0, %s45
      %s48 = sphi 0, %s47
      %s62 = sphi 0, %s48
      %s66 = sphi 0, %s66
      %s68 = sphi 0, %s66
      %s69 = sphi 0, %s68
      %s83 = sphi 0, %s69
      %s89 = sphi 0, %s91
      %s92 = sphi 0, %s89
      %s93 = sphi 0, %s92
      %s109 = sphi 0, %s93
    $region4: #{_lambda_.7} parent=1 // loop_header_branch
      %14 = sbr.rel (%p12) target = $region8
    $region5: #{_lambda_.7} parent=1 // loop_body
      %s16 = ssub.s32 %s11, 1
      %s17 = ssub.s32 %s11, 2
      %s18 = sadd.s32 %s11, 1
      %s19 = ssub.s32 %s11, %s18
      %p20 = scmp.eq.s32.totalorder %s19, 0
      %s22 = sadd.s32 %s21, 1
      %s23 = scalar_select %p20, %s21, %s22
      %p26 = pneg %p20
      %p27 = scmp.eq.s32.totalorder %s11, 1
      %p28 = por %p26, %p27
      %p29 = scmp.ne.s32.totalorder %s21, %s24
      %p30 = scmp.eq.s32.totalorder %s11, 0
      %p31 = por %p29, %p30
      %p32 = scmp.ne.s32.totalorder %s21, %s24
      %p33 = scmp.eq.s32.totalorder %s16, 1
      %p34 = por %p32, %p33
      %p35 = scmp.ne.s32.totalorder %s24, %s25
      %p36 = scmp.eq.s32.totalorder %s16, 0
      %p37 = por %p35, %p36
      %p38 = scmp.ne.s32.totalorder %s24, %s25
      %p39 = scmp.eq.s32.totalorder %s17, 1
      %p40 = por %p38, %p39
      %p42 = scmp.ne.s32.totalorder %s25, %s41
      %p43 = scmp.eq.s32.totalorder %s17, 0
      %p44 = por %p42, %p43
      %s46 = sadd.s32 %s45, 1
      %p49 = scmp.eq.s32.totalorder %s11, 1
      %p50 = scmp.ne.s32.totalorder %s45, %s47
      %p51 = scmp.eq.s32.totalorder %s11, 0
      %p52 = por %p50, %p51
      %p53 = scmp.ne.s32.totalorder %s45, %s47
      %p54 = scmp.eq.s32.totalorder %s16, 1
      %p55 = por %p53, %p54
      %p56 = scmp.ne.s32.totalorder %s47, %s48
      %p57 = scmp.eq.s32.totalorder %s16, 0
      %p58 = por %p56, %p57
      %p59 = scmp.ne.s32.totalorder %s47, %s48
      %p60 = scmp.eq.s32.totalorder %s17, 1
      %p61 = por %p59, %p60
      %p63 = scmp.ne.s32.totalorder %s48, %s62
      %p64 = scmp.eq.s32.totalorder %s17, 0
      %p65 = por %p63, %p64
      %s67 = sadd.s32 %s66, 1
      %p70 = scmp.eq.s32.totalorder %s11, 1
      %p71 = scmp.ne.s32.totalorder %s66, %s68
      %p72 = scmp.eq.s32.totalorder %s11, 0
      %p73 = por %p71, %p72
      %p74 = scmp.ne.s32.totalorder %s66, %s68
      %p75 = scmp.eq.s32.totalorder %s16, 1
      %p76 = por %p74, %p75
      %p77 = scmp.ne.s32.totalorder %s68, %s69
      %p78 = scmp.eq.s32.totalorder %s16, 0
      %p79 = por %p77, %p78
      %p80 = scmp.ne.s32.totalorder %s68, %s69
      %p81 = scmp.eq.s32.totalorder %s17, 1
      %p82 = por %p80, %p81
      %p84 = scmp.ne.s32.totalorder %s69, %s83
      %p85 = scmp.eq.s32.totalorder %s17, 0
      %p86 = por %p84, %p85
      %s87 = ssub.s32 %s11, %s18
      %p88 = scmp.eq.s32.totalorder %s87, 0
      %s90 = sadd.s32 %s89, 1
      %s91 = scalar_select %p88, %s89, %s90
      %p94 = pneg %p88
      %p95 = scmp.eq.s32.totalorder %s11, 1
      %p96 = por %p94, %p95
      %p97 = scmp.ne.s32.totalorder %s89, %s92
      %p98 = scmp.eq.s32.totalorder %s11, 0
      %p99 = por %p97, %p98
      %p100 = scmp.ne.s32.totalorder %s89, %s92
      %p101 = scmp.eq.s32.totalorder %s16, 1
      %p102 = por %p100, %p101
      %p103 = scmp.ne.s32.totalorder %s92, %s93
      %p104 = scmp.eq.s32.totalorder %s16, 0
      %p105 = por %p103, %p104
      %p106 = scmp.ne.s32.totalorder %s92, %s93
      %p107 = scmp.eq.s32.totalorder %s17, 1
      %p108 = por %p106, %p107
      %p110 = scmp.ne.s32.totalorder %s93, %s109
      %p111 = scmp.eq.s32.totalorder %s17, 0
      %p112 = por %p110, %p111
      %p113 = scmp.le.s32.totalorder 1, %s11
      %p114 = scmp.lt.s32.totalorder %s11, 3
      %p115 = pnand %p113, %p114
      %p116 = pneg %p115
      // Predicated region
      $region9: #{_lambda_.7} parent=5 // pred_check
        _
      $region10: #{_lambda_.7} parent=5 // pred_check_branch
        %118 = sbr.rel (%p115) target = $region12
      $region11: #{_lambda_.7} parent=5 // pred_region
        %s119 = ssub.s32 %s11, 1
        // Predicated region
        $region13: #{_lambda_.7} parent=11 // pred_check
          %p120 = pneg %p58
        $region14: #{_lambda_.7} parent=11 // pred_check_branch
          %122 = sbr.rel (%p120) target = $region16
        $region15: #{_lambda_.7} parent=11 // pred_region
          %124 = vsyncadd [#allocation3], 0
          %s125 = sshll.u32 %s1, 4
          %s126 = int_to_ptr.hbm [resolvable:$true] %s125
          %s127 = sshll.u32 [#allocation2], 4
          %s128 = int_to_ptr.vmem [resolvable:$true] %s127
          %133 = dma.hbm_to_vmem [thread:$0]  %s126, 256, %s128, [#allocation3], 64, 64, 4
        $region16: #{_lambda_.7} parent=11 // pred_fallthru
          _
        // Predicated region
        $region17: #{_lambda_.7} parent=11 // pred_check
          %p134 = pneg %p79
        $region18: #{_lambda_.7} parent=11 // pred_check_branch
          %136 = sbr.rel (%p134) target = $region20
        $region19: #{_lambda_.7} parent=11 // pred_region
          %138 = vsyncadd [#allocation5], 0
          %s140 = sshll.u32 %s2, 4
          %s141 = int_to_ptr.hbm [resolvable:$true] %s140
          %s142 = sshll.u32 [#allocation4], 4
          %s143 = int_to_ptr.vmem [resolvable:$true] %s142
          %145 = dma.hbm_to_vmem [thread:$0]  %s141, 16, %s143, [#allocation5]
        $region20: #{_lambda_.7} parent=11 // pred_fallthru
          _
      $region12: #{_lambda_.7} parent=5 // pred_fallthru
        _
      %p146 = scmp.lt.s32.totalorder %s11, 2
      // Predicated region
      $region21: #{_lambda_.7} parent=5 // pred_check
        %p147 = pneg %p146
      $region22: #{_lambda_.7} parent=5 // pred_check_branch
        %149 = sbr.rel (%p147) target = $region24
      $region23: #{_lambda_.7} parent=5 // pred_region
        // Predicated region
        $region25: #{_lambda_.7} parent=23 // pred_check
          %p150 = pneg %p31
        $region26: #{_lambda_.7} parent=23 // pred_check_branch
          %152 = sbr.rel (%p150) target = $region28
        $region27: #{_lambda_.7} parent=23 // pred_region
          %s153 = smul.u32 32, %s11
          %p154 = scmp.lt.s32.totalorder %s153, 63
          %s155 = scalar_select %p154, %s153, 63
          %s156 = smul.addr %s155, 4
          %s157 = scalar_lea.vmem %s0, %s156
          %s158 = smul.u32 32, %s11
        $region28: #{_lambda_.7} parent=23 // pred_fallthru
          _
      $region24: #{_lambda_.7} parent=5 // pred_fallthru
        _
      %p159 = scmp.le.s32.totalorder 1, %s11
      %p160 = scmp.lt.s32.totalorder %s11, 3
      %p161 = pnand %p159, %p160
      %p162 = pneg %p161
      // Predicated region
      $region29: #{_lambda_.7} parent=5 // pred_check
        _
      $region30: #{_lambda_.7} parent=5 // pred_check_branch
        %164 = sbr.rel (%p161) target = $region32
      $region31: #{_lambda_.7} parent=5 // pred_region
        %s165 = ssub.s32 %s11, 1
        // Predicated region
        $region33: #{_lambda_.7} parent=31 // pred_check
          %p166 = pneg %p58
        $region34: #{_lambda_.7} parent=31 // pred_check_branch
          %168 = sbr.rel (%p166) target = $region36
        $region35: #{_lambda_.7} parent=31 // pred_region
          %170 = dma.done [#allocation3], 256
        $region36: #{_lambda_.7} parent=31 // pred_fallthru
          _
        // Predicated region
        $region37: #{_lambda_.7} parent=31 // pred_check
          %p171 = pneg %p79
        $region38: #{_lambda_.7} parent=31 // pred_check_branch
          %173 = sbr.rel (%p171) target = $region40
        $region39: #{_lambda_.7} parent=31 // pred_region
          %175 = dma.done [#allocation5], 16
        $region40: #{_lambda_.7} parent=31 // pred_fallthru
          _
        %s176 = smul.u32 32, %s16
        %p177 = scmp.lt.s32.totalorder %s176, 63
        %s178 = scalar_select %p177, %s176, 63
        %s179 = smul.addr %s178, 4
        %s180 = scalar_lea.vmem %s0, %s179
        %p181 = pneg %p37
        %p182 = pneg %p34
        %p183 = pneg %p58
        %p184 = pneg %p55
        %p185 = pneg %p79
        %p186 = pneg %p76
        %p187 = pneg %p105
        %p188 = pneg %p102
        %s189 = smul.u32 32, %s16
        %p190 = scmp.lt.s32.totalorder %s189, 63
        %s191 = scalar_select %p190, %s189, 63
        %s192 = smul.addr %s191, 8
        %s193 = scalar_lea.vmem %s3, %s192
        %s194 = smul.u32 32, %s16
        %p195 = scmp.lt.s32.totalorder %s194, 63
        %s196 = scalar_select %p195, %s194, 63
        %s197 = smul.addr %s196, 4
        %s198 = scalar_lea.vmem %s0, %s197
        %s199 = smul.u32 32, %s16
        %s200 = smul.u32 32, %s16
        %p201 = scmp.lt.s32.totalorder %s200, 63
        %s202 = scalar_select %p201, %s200, 63
        %s203 = smul.addr %s202, 8
        %s204 = scalar_lea.vmem %s3, %s203
        %s205 = smul.u32 32, %s16
        %v207 = vld [vmem:[%s198] sm:$0xf]
        %v208 = vld [vmem:[%s198 + $0x4] sm:$0xf]
        %v209 = vld [vmem:[%s198 + $0x8] sm:$0xf]
        %v210 = vld [vmem:[%s198 + $0xc] sm:$0xf]
        %v211 = vld [vmem:[%s198 + $0x10] sm:$0xf]
        %v212 = vld [vmem:[%s198 + $0x14] sm:$0xf]
        %v213 = vld [vmem:[%s198 + $0x18] sm:$0xf]
        %v214 = vld [vmem:[%s198 + $0x1c] sm:$0xf]
        %v215 = vld [vmem:[%s198 + $0x20] sm:$0xf]
        %v216 = vld [vmem:[%s198 + $0x24] sm:$0xf]
        %v217 = vld [vmem:[%s198 + $0x28] sm:$0xf]
        %v218 = vld [vmem:[%s198 + $0x2c] sm:$0xf]
        %v219 = vld [vmem:[%s198 + $0x30] sm:$0xf]
        %v220 = vld [vmem:[%s198 + $0x34] sm:$0xf]
        %v221 = vld [vmem:[%s198 + $0x38] sm:$0xf]
        %v222 = vld [vmem:[%s198 + $0x3c] sm:$0xf]
        %v223 = vld [vmem:[%s198 + $0x40] sm:$0xf]
        %v224 = vld [vmem:[%s198 + $0x44] sm:$0xf]
        %v225 = vld [vmem:[%s198 + $0x48] sm:$0xf]
        %v226 = vld [vmem:[%s198 + $0x4c] sm:$0xf]
        %v227 = vld [vmem:[%s198 + $0x50] sm:$0xf]
        %v228 = vld [vmem:[%s198 + $0x54] sm:$0xf]
        %v229 = vld [vmem:[%s198 + $0x58] sm:$0xf]
        %v230 = vld [vmem:[%s198 + $0x5c] sm:$0xf]
        %v231 = vld [vmem:[%s198 + $0x60] sm:$0xf]
        %v232 = vld [vmem:[%s198 + $0x64] sm:$0xf]
        %v233 = vld [vmem:[%s198 + $0x68] sm:$0xf]
        %v234 = vld [vmem:[%s198 + $0x6c] sm:$0xf]
        %v235 = vld [vmem:[%s198 + $0x70] sm:$0xf]
        %v236 = vld [vmem:[%s198 + $0x74] sm:$0xf]
        %v237 = vld [vmem:[%s198 + $0x78] sm:$0xf]
        %v238 = vld [vmem:[%s198 + $0x7c] sm:$0xf]
        %v239 = vld [vmem:[#allocation2] sm:$0xf]
        %v240 = vld [vmem:[#allocation2 + $0x4] sm:$0xf]
        %v241 = vld [vmem:[#allocation2 + $0x8] sm:$0xf]
        %v242 = vld [vmem:[#allocation2 + $0xc] sm:$0x3]
        %v243 = vld [vmem:[#allocation4] sm:$0x1]
        %v245 = vperm.slane %v243, 0
        %v279 = vunpack.c.l.b16 %v207
        %v280 = vunpack.c.l.b16 %v208
        %v281 = vunpack.c.l.b16 %v209
        %v282 = vunpack.c.l.b16 %v210
        %v283 = vunpack.c.l.b16 %v211
        %v284 = vunpack.c.l.b16 %v212
        %v285 = vunpack.c.l.b16 %v213
        %v286 = vunpack.c.l.b16 %v214
        %v287 = vunpack.c.l.b16 %v215
        %v288 = vunpack.c.l.b16 %v216
        %v289 = vunpack.c.l.b16 %v217
        %v290 = vunpack.c.l.b16 %v218
        %v291 = vunpack.c.l.b16 %v219
        %v292 = vunpack.c.l.b16 %v220
        %v293 = vunpack.c.l.b16 %v221
        %v294 = vunpack.c.l.b16 %v222
        %v295 = vunpack.c.l.b16 %v223
        %v296 = vunpack.c.l.b16 %v224
        %v297 = vunpack.c.l.b16 %v225
        %v298 = vunpack.c.l.b16 %v226
        %v299 = vunpack.c.l.b16 %v227
        %v300 = vunpack.c.l.b16 %v228
        %v301 = vunpack.c.l.b16 %v229
        %v302 = vunpack.c.l.b16 %v230
        %v303 = vunpack.c.l.b16 %v231
        %v304 = vunpack.c.l.b16 %v232
        %v305 = vunpack.c.l.b16 %v233
        %v306 = vunpack.c.l.b16 %v234
        %v307 = vunpack.c.l.b16 %v235
        %v308 = vunpack.c.l.b16 %v236
        %v309 = vunpack.c.l.b16 %v237
        %v310 = vunpack.c.l.b16 %v238
        %v311 = vpack.c.b16 %v280, %v279
        %v312 = vpack.c.b16 %v282, %v281
        %v313 = vpack.c.b16 %v284, %v283
        %v314 = vpack.c.b16 %v286, %v285
        %v315 = vpack.c.b16 %v288, %v287
        %v316 = vpack.c.b16 %v290, %v289
        %v317 = vpack.c.b16 %v292, %v291
        %v318 = vpack.c.b16 %v294, %v293
        %v319 = vpack.c.b16 %v296, %v295
        %v320 = vpack.c.b16 %v298, %v297
        %v321 = vpack.c.b16 %v300, %v299
        %v322 = vpack.c.b16 %v302, %v301
        %v323 = vpack.c.b16 %v304, %v303
        %v324 = vpack.c.b16 %v306, %v305
        %v325 = vpack.c.b16 %v308, %v307
        %v326 = vpack.c.b16 %v310, %v309
        %v331 = vunpack.c.l.b16 %v239
        %v332 = vunpack.c.l.b16 %v240
        %v333 = vunpack.c.l.b16 %v241
        %v334 = vunpack.c.l.b16 %v242
        %v335 = vpack.c.b16 %v332, %v331
        %v336 = vpack.c.b16 %v334, %v333
        %vm338 = vcmask 220160
        %v340 = vsel %vm338, %v311, 0
        %v343 = vsel %vm338, %v312, 0
        %v346 = vsel %vm338, %v313, 0
        %v349 = vsel %vm338, %v314, 0
        %v352 = vsel %vm338, %v315, 0
        %v355 = vsel %vm338, %v316, 0
        %v358 = vsel %vm338, %v317, 0
        %v361 = vsel %vm338, %v318, 0
        %v364 = vsel %vm338, %v319, 0
        %v367 = vsel %vm338, %v320, 0
        %v370 = vsel %vm338, %v321, 0
        %v373 = vsel %vm338, %v322, 0
        %v376 = vsel %vm338, %v323, 0
        %v379 = vsel %vm338, %v324, 0
        %v382 = vsel %vm338, %v325, 0
        %v385 = vsel %vm338, %v326, 0
        %vm387 = vcmask 1044480
        %vm388 = vcmask 1045504
        %v389 = vsel %vm387, 4294967295, 65535
        %v390 = vsel %vm388, %v389, 0
        %v392 = vand.u32 %v336, %v390
        %394 = vmatpush.bf16.msra.mxu0 0
        %395 = vmatpush.bf16.msra.mxu0 0
        %396 = vmatpush.bf16.msra.mxu0 0
        %397 = vmatpush.bf16.msra.mxu0 0
        %398 = vmatpush.bf16.msra.mxu0 0
        %399 = vmatpush.bf16.msra.mxu0 0
        %400 = vmatpush.bf16.msra.mxu0 %v392
        %401 = vmatpush.bf16.msra.mxu0 %v335
        %402 = vmatmul.bf16.gmra.mxu0 %v340
        %v403 = vpop.f32.mrf.mxu0
        %v404 = vadd.f32 %v245, %v403
        %v405 = vpop.f32.mrf.mxu0
        %v406 = vadd.f32 %v245, %v405
        %407 = vmatmul.bf16.gmra.mxu0 %v343
        %v408 = vpop.f32.mrf.mxu0
        %v409 = vadd.f32 %v245, %v408
        %v410 = vpop.f32.mrf.mxu0
        %v411 = vadd.f32 %v245, %v410
        %412 = vmatmul.bf16.gmra.mxu0 %v346
        %v413 = vpop.f32.mrf.mxu0
        %v414 = vadd.f32 %v245, %v413
        %v415 = vpop.f32.mrf.mxu0
        %v416 = vadd.f32 %v245, %v415
        %417 = vmatmul.bf16.gmra.mxu0 %v349
        %v418 = vpop.f32.mrf.mxu0
        %v419 = vadd.f32 %v245, %v418
        %v420 = vpop.f32.mrf.mxu0
        %v421 = vadd.f32 %v245, %v420
        %422 = vmatmul.bf16.gmra.mxu0 %v352
        %v423 = vpop.f32.mrf.mxu0
        %v424 = vadd.f32 %v245, %v423
        %v425 = vpop.f32.mrf.mxu0
        %v426 = vadd.f32 %v245, %v425
        %427 = vmatmul.bf16.gmra.mxu0 %v355
        %v428 = vpop.f32.mrf.mxu0
        %v429 = vadd.f32 %v245, %v428
        %v430 = vpop.f32.mrf.mxu0
        %v431 = vadd.f32 %v245, %v430
        %432 = vmatmul.bf16.gmra.mxu0 %v358
        %v433 = vpop.f32.mrf.mxu0
        %v434 = vadd.f32 %v245, %v433
        %v435 = vpop.f32.mrf.mxu0
        %v436 = vadd.f32 %v245, %v435
        %437 = vmatmul.bf16.gmra.mxu0 %v361
        %v438 = vpop.f32.mrf.mxu0
        %v439 = vadd.f32 %v245, %v438
        %v440 = vpop.f32.mrf.mxu0
        %v441 = vadd.f32 %v245, %v440
        %442 = vmatmul.bf16.gmra.mxu0 %v364
        %v443 = vpop.f32.mrf.mxu0
        %v444 = vadd.f32 %v245, %v443
        %v445 = vpop.f32.mrf.mxu0
        %v446 = vadd.f32 %v245, %v445
        %447 = vmatmul.bf16.gmra.mxu0 %v367
        %v448 = vpop.f32.mrf.mxu0
        %v449 = vadd.f32 %v245, %v448
        %v450 = vpop.f32.mrf.mxu0
        %v451 = vadd.f32 %v245, %v450
        %452 = vmatmul.bf16.gmra.mxu0 %v370
        %v453 = vpop.f32.mrf.mxu0
        %v454 = vadd.f32 %v245, %v453
        %v455 = vpop.f32.mrf.mxu0
        %v456 = vadd.f32 %v245, %v455
        %457 = vmatmul.bf16.gmra.mxu0 %v373
        %v458 = vpop.f32.mrf.mxu0
        %v459 = vadd.f32 %v245, %v458
        %v460 = vpop.f32.mrf.mxu0
        %v461 = vadd.f32 %v245, %v460
        %462 = vmatmul.bf16.gmra.mxu0 %v376
        %v463 = vpop.f32.mrf.mxu0
        %v464 = vadd.f32 %v245, %v463
        %v465 = vpop.f32.mrf.mxu0
        %v466 = vadd.f32 %v245, %v465
        %467 = vmatmul.bf16.gmra.mxu0 %v379
        %v468 = vpop.f32.mrf.mxu0
        %v469 = vadd.f32 %v245, %v468
        %v470 = vpop.f32.mrf.mxu0
        %v471 = vadd.f32 %v245, %v470
        %472 = vmatmul.bf16.gmra.mxu0 %v382
        %v473 = vpop.f32.mrf.mxu0
        %v474 = vadd.f32 %v245, %v473
        %v475 = vpop.f32.mrf.mxu0
        %v476 = vadd.f32 %v245, %v475
        %477 = vmatmul.bf16.gmra.mxu0 %v385
        %v478 = vpop.f32.mrf.mxu0
        %v479 = vadd.f32 %v245, %v478
        %v480 = vpop.f32.mrf.mxu0
        %v481 = vadd.f32 %v245, %v480
        %482 = vdwg.mxu0
        %v483 = vmax.f32 %v404, 0.0
        %v484 = vmax.f32 %v406, 0.0
        %v485 = vmax.f32 %v409, 0.0
        %v486 = vmax.f32 %v411, 0.0
        %v487 = vmax.f32 %v414, 0.0
        %v488 = vmax.f32 %v416, 0.0
        %v489 = vmax.f32 %v419, 0.0
        %v490 = vmax.f32 %v421, 0.0
        %v491 = vmax.f32 %v424, 0.0
        %v492 = vmax.f32 %v426, 0.0
        %v493 = vmax.f32 %v429, 0.0
        %v494 = vmax.f32 %v431, 0.0
        %v495 = vmax.f32 %v434, 0.0
        %v496 = vmax.f32 %v436, 0.0
        %v497 = vmax.f32 %v439, 0.0
        %v498 = vmax.f32 %v441, 0.0
        %v499 = vmax.f32 %v444, 0.0
        %v500 = vmax.f32 %v446, 0.0
        %v501 = vmax.f32 %v449, 0.0
        %v502 = vmax.f32 %v451, 0.0
        %v503 = vmax.f32 %v454, 0.0
        %v504 = vmax.f32 %v456, 0.0
        %v505 = vmax.f32 %v459, 0.0
        %v506 = vmax.f32 %v461, 0.0
        %v507 = vmax.f32 %v464, 0.0
        %v508 = vmax.f32 %v466, 0.0
        %v509 = vmax.f32 %v469, 0.0
        %v510 = vmax.f32 %v471, 0.0
        %v511 = vmax.f32 %v474, 0.0
        %v512 = vmax.f32 %v476, 0.0
        %v513 = vmax.f32 %v479, 0.0
        %v514 = vmax.f32 %v481, 0.0
        %515 = vst [vmem:[%s204] sm:$0xff] %v483
        %516 = vst [vmem:[%s204 + $0x8] sm:$0xff] %v484
        %517 = vst [vmem:[%s204 + $0x10] sm:$0xff] %v485
        %518 = vst [vmem:[%s204 + $0x18] sm:$0xff] %v486
        %519 = vst [vmem:[%s204 + $0x20] sm:$0xff] %v487
        %520 = vst [vmem:[%s204 + $0x28] sm:$0xff] %v488
        %521 = vst [vmem:[%s204 + $0x30] sm:$0xff] %v489
        %522 = vst [vmem:[%s204 + $0x38] sm:$0xff] %v490
        %523 = vst [vmem:[%s204 + $0x40] sm:$0xff] %v491
        %524 = vst [vmem:[%s204 + $0x48] sm:$0xff] %v492
        %525 = vst [vmem:[%s204 + $0x50] sm:$0xff] %v493
        %526 = vst [vmem:[%s204 + $0x58] sm:$0xff] %v494
        %527 = vst [vmem:[%s204 + $0x60] sm:$0xff] %v495
        %528 = vst [vmem:[%s204 + $0x68] sm:$0xff] %v496
        %529 = vst [vmem:[%s204 + $0x70] sm:$0xff] %v497
        %530 = vst [vmem:[%s204 + $0x78] sm:$0xff] %v498
        %531 = vst [vmem:[%s204 + $0x80] sm:$0xff] %v499
        %532 = vst [vmem:[%s204 + $0x88] sm:$0xff] %v500
        %533 = vst [vmem:[%s204 + $0x90] sm:$0xff] %v501
        %534 = vst [vmem:[%s204 + $0x98] sm:$0xff] %v502
        %535 = vst [vmem:[%s204 + $0xa0] sm:$0xff] %v503
        %536 = vst [vmem:[%s204 + $0xa8] sm:$0xff] %v504
        %537 = vst [vmem:[%s204 + $0xb0] sm:$0xff] %v505
        %538 = vst [vmem:[%s204 + $0xb8] sm:$0xff] %v506
        %539 = vst [vmem:[%s204 + $0xc0] sm:$0xff] %v507
        %540 = vst [vmem:[%s204 + $0xc8] sm:$0xff] %v508
        %541 = vst [vmem:[%s204 + $0xd0] sm:$0xff] %v509
        %542 = vst [vmem:[%s204 + $0xd8] sm:$0xff] %v510
        %543 = vst [vmem:[%s204 + $0xe0] sm:$0xff] %v511
        %544 = vst [vmem:[%s204 + $0xe8] sm:$0xff] %v512
        %545 = vst [vmem:[%s204 + $0xf0] sm:$0xff] %v513
        %546 = vst [vmem:[%s204 + $0xf8] sm:$0xff] %v514
        %s547 = smul.u32 32, %s16
        %p548 = scmp.lt.s32.totalorder %s547, 63
        %s549 = scalar_select %p548, %s547, 63
        %s550 = smul.addr %s549, 8
        %s551 = scalar_lea.vmem %s3, %s550
        // Predicated region
        $region41: #{_lambda_.7} parent=31 // pred_check
          %p552 = pneg %p102
        $region42: #{_lambda_.7} parent=31 // pred_check_branch
          %554 = sbr.rel (%p552) target = $region44
        $region43: #{_lambda_.7} parent=31 // pred_region
          %s555 = smul.u32 32, %s16
        $region44: #{_lambda_.7} parent=31 // pred_fallthru
          _
      $region32: #{_lambda_.7} parent=5 // pred_fallthru
        _
      %p556 = scmp.le.s32.totalorder 2, %s11
      // Predicated region
      $region45: #{_lambda_.7} parent=5 // pred_check
        %p557 = pneg %p556
      $region46: #{_lambda_.7} parent=5 // pred_check_branch
        %559 = sbr.rel (%p557) target = $region48
      $region47: #{_lambda_.7} parent=5 // pred_region
        %s560 = ssub.s32 %s11, 2
        // Predicated region
        $region49: #{_lambda_.7} parent=47 // pred_check
          %p561 = pneg %p108
        $region50: #{_lambda_.7} parent=47 // pred_check_branch
          %563 = sbr.rel (%p561) target = $region52
        $region51: #{_lambda_.7} parent=47 // pred_region
          %s564 = smul.u32 32, %s17
          %p565 = scmp.lt.s32.totalorder %s564, 63
          %s566 = scalar_select %p565, %s564, 63
          %s567 = smul.addr %s566, 8
          %s568 = scalar_lea.vmem %s3, %s567
        $region52: #{_lambda_.7} parent=47 // pred_fallthru
          _
      $region48: #{_lambda_.7} parent=5 // pred_fallthru
        _
    $region6: #{_lambda_.7} parent=1 // loop_footer
      %s15 = sadd.s32 1, %s11
    $region7: #{_lambda_.7} parent=1 // loop_footer_branch
      %10 = sbr.rel target = $region3
    $region8: #{_lambda_.7} parent=1 // loop_exit
      _
    %569 = vsyncpa [#allocation3], 1
    %s570 = scalar_lea.sflag [#allocation3], 1
    %571 = vsyncpa %s570, 1
    %572 = vsyncpa [#allocation5], 1

// kernel: _lambda_.9
$region0: #{_lambda_.9}
  #allocation0 [shape = 'u32[]', space=smem, size = 0x4, offset = 0x4, fixed_abs, tag = 'smem constant byte address 0x4 - core index']
  #allocation1 [shape = 'u32[72,128]{1,0:T(1,128)}', space=vmem, size = 0x9000, scoped, tag = 'internal scratch']
  %s0 = inlined_call_operand.vmem [shape: bf16[512,1152], index: 0, kind: input, shape index: {}]
  %s1 = inlined_call_operand.vmem [shape: bf16[1152,128], index: 1, kind: input, shape index: {}]
  %s2 = inlined_call_operand.vmem [shape: f32[1,128], index: 2, kind: input, shape index: {}]
  %s3 = inlined_call_operand.vmem [shape: f32[512,128], index: 3, kind: input, shape index: {}]
  %s4 = inlined_call_operand.vmem [shape: f32[512,128], index: 4, kind: output, shape index: {}]
  %s5 = sld [smem:[#allocation0]]
  $region49: #{_lambda_.9} parent=0
    _
  %s7 = ssub.s32 1, %s5
  %s8 = scalar_select 0, %s7, %s5
  loop: start=0, step=1, limit=4
  $region2: #{_lambda_.9} parent=0 // loop_pre_header
    _
  $region3: #{_lambda_.9} parent=0 // loop_header
    %s10 = sphi 0, %s14
    %p11 = scmp.ge.s32.totalorder %s10, 4
    %s20 = sphi 0, %s22
    %s23 = sphi 0, %s20
    %s24 = sphi 0, %s23
    %s40 = sphi 0, %s24
    %s44 = sphi 0, %s44
    %s46 = sphi 0, %s44
    %s47 = sphi 0, %s46
    %s61 = sphi 0, %s47
    %s65 = sphi 0, %s65
    %s67 = sphi 0, %s65
    %s68 = sphi 0, %s67
    %s82 = sphi 0, %s68
    %s88 = sphi 0, %s90
    %s91 = sphi 0, %s88
    %s92 = sphi 0, %s91
    %s108 = sphi 0, %s92
    %s114 = sphi 0, %s116
    %s117 = sphi 0, %s114
    %s118 = sphi 0, %s117
    %s134 = sphi 0, %s118
  $region4: #{_lambda_.9} parent=0 // loop_header_branch
    %13 = sbr.rel (%p11) target = $region8
  $region5: #{_lambda_.9} parent=0 // loop_body
    %s15 = ssub.s32 %s10, 1
    %s16 = ssub.s32 %s10, 2
    %s17 = sadd.s32 %s10, 1
    %s18 = ssub.s32 %s10, %s17
    %p19 = scmp.eq.s32.totalorder %s18, 0
    %s21 = sadd.s32 %s20, 1
    %s22 = scalar_select %p19, %s20, %s21
    %p25 = pneg %p19
    %p26 = scmp.eq.s32.totalorder %s10, 1
    %p27 = por %p25, %p26
    %p28 = scmp.ne.s32.totalorder %s20, %s23
    %p29 = scmp.eq.s32.totalorder %s10, 0
    %p30 = por %p28, %p29
    %p31 = scmp.ne.s32.totalorder %s20, %s23
    %p32 = scmp.eq.s32.totalorder %s15, 1
    %p33 = por %p31, %p32
    %p34 = scmp.ne.s32.totalorder %s23, %s24
    %p35 = scmp.eq.s32.totalorder %s15, 0
    %p36 = por %p34, %p35
    %p37 = scmp.ne.s32.totalorder %s23, %s24
    %p38 = scmp.eq.s32.totalorder %s16, 1
    %p39 = por %p37, %p38
    %p41 = scmp.ne.s32.totalorder %s24, %s40
    %p42 = scmp.eq.s32.totalorder %s16, 0
    %p43 = por %p41, %p42
    %s45 = sadd.s32 %s44, 1
    %p48 = scmp.eq.s32.totalorder %s10, 1
    %p49 = scmp.ne.s32.totalorder %s44, %s46
    %p50 = scmp.eq.s32.totalorder %s10, 0
    %p51 = por %p49, %p50
    %p52 = scmp.ne.s32.totalorder %s44, %s46
    %p53 = scmp.eq.s32.totalorder %s15, 1
    %p54 = por %p52, %p53
    %p55 = scmp.ne.s32.totalorder %s46, %s47
    %p56 = scmp.eq.s32.totalorder %s15, 0
    %p57 = por %p55, %p56
    %p58 = scmp.ne.s32.totalorder %s46, %s47
    %p59 = scmp.eq.s32.totalorder %s16, 1
    %p60 = por %p58, %p59
    %p62 = scmp.ne.s32.totalorder %s47, %s61
    %p63 = scmp.eq.s32.totalorder %s16, 0
    %p64 = por %p62, %p63
    %s66 = sadd.s32 %s65, 1
    %p69 = scmp.eq.s32.totalorder %s10, 1
    %p70 = scmp.ne.s32.totalorder %s65, %s67
    %p71 = scmp.eq.s32.totalorder %s10, 0
    %p72 = por %p70, %p71
    %p73 = scmp.ne.s32.totalorder %s65, %s67
    %p74 = scmp.eq.s32.totalorder %s15, 1
    %p75 = por %p73, %p74
    %p76 = scmp.ne.s32.totalorder %s67, %s68
    %p77 = scmp.eq.s32.totalorder %s15, 0
    %p78 = por %p76, %p77
    %p79 = scmp.ne.s32.totalorder %s67, %s68
    %p80 = scmp.eq.s32.totalorder %s16, 1
    %p81 = por %p79, %p80
    %p83 = scmp.ne.s32.totalorder %s68, %s82
    %p84 = scmp.eq.s32.totalorder %s16, 0
    %p85 = por %p83, %p84
    %s86 = ssub.s32 %s10, %s17
    %p87 = scmp.eq.s32.totalorder %s86, 0
    %s89 = sadd.s32 %s88, 1
    %s90 = scalar_select %p87, %s88, %s89
    %p93 = pneg %p87
    %p94 = scmp.eq.s32.totalorder %s10, 1
    %p95 = por %p93, %p94
    %p96 = scmp.ne.s32.totalorder %s88, %s91
    %p97 = scmp.eq.s32.totalorder %s10, 0
    %p98 = por %p96, %p97
    %p99 = scmp.ne.s32.totalorder %s88, %s91
    %p100 = scmp.eq.s32.totalorder %s15, 1
    %p101 = por %p99, %p100
    %p102 = scmp.ne.s32.totalorder %s91, %s92
    %p103 = scmp.eq.s32.totalorder %s15, 0
    %p104 = por %p102, %p103
    %p105 = scmp.ne.s32.totalorder %s91, %s92
    %p106 = scmp.eq.s32.totalorder %s16, 1
    %p107 = por %p105, %p106
    %p109 = scmp.ne.s32.totalorder %s92, %s108
    %p110 = scmp.eq.s32.totalorder %s16, 0
    %p111 = por %p109, %p110
    %s112 = ssub.s32 %s10, %s17
    %p113 = scmp.eq.s32.totalorder %s112, 0
    %s115 = sadd.s32 %s114, 1
    %s116 = scalar_select %p113, %s114, %s115
    %p119 = pneg %p113
    %p120 = scmp.eq.s32.totalorder %s10, 1
    %p121 = por %p119, %p120
    %p122 = scmp.ne.s32.totalorder %s114, %s117
    %p123 = scmp.eq.s32.totalorder %s10, 0
    %p124 = por %p122, %p123
    %p125 = scmp.ne.s32.totalorder %s114, %s117
    %p126 = scmp.eq.s32.totalorder %s15, 1
    %p127 = por %p125, %p126
    %p128 = scmp.ne.s32.totalorder %s117, %s118
    %p129 = scmp.eq.s32.totalorder %s15, 0
    %p130 = por %p128, %p129
    %p131 = scmp.ne.s32.totalorder %s117, %s118
    %p132 = scmp.eq.s32.totalorder %s16, 1
    %p133 = por %p131, %p132
    %p135 = scmp.ne.s32.totalorder %s118, %s134
    %p136 = scmp.eq.s32.totalorder %s16, 0
    %p137 = por %p135, %p136
    %p138 = scmp.le.s32.totalorder 1, %s10
    %p139 = scmp.lt.s32.totalorder %s10, 3
    %p140 = pnand %p138, %p139
    %p141 = pneg %p140
    // Predicated region
    $region9: #{_lambda_.9} parent=5 // pred_check
      _
    $region10: #{_lambda_.9} parent=5 // pred_check_branch
      %143 = sbr.rel (%p140) target = $region12
    $region11: #{_lambda_.9} parent=5 // pred_region
      %s144 = ssub.s32 %s10, 1
      // Predicated region
      $region13: #{_lambda_.9} parent=11 // pred_check
        %p145 = pneg %p57
      $region14: #{_lambda_.9} parent=11 // pred_check_branch
        %147 = sbr.rel (%p145) target = $region16
      $region15: #{_lambda_.9} parent=11 // pred_region
        _
      $region16: #{_lambda_.9} parent=11 // pred_fallthru
        _
      // Predicated region
      $region17: #{_lambda_.9} parent=11 // pred_check
        %p148 = pneg %p78
      $region18: #{_lambda_.9} parent=11 // pred_check_branch
        %150 = sbr.rel (%p148) target = $region20
      $region19: #{_lambda_.9} parent=11 // pred_region
        _
      $region20: #{_lambda_.9} parent=11 // pred_fallthru
        _
    $region12: #{_lambda_.9} parent=5 // pred_fallthru
      _
    %p151 = scmp.lt.s32.totalorder %s10, 2
    // Predicated region
    $region21: #{_lambda_.9} parent=5 // pred_check
      %p152 = pneg %p151
    $region22: #{_lambda_.9} parent=5 // pred_check_branch
      %154 = sbr.rel (%p152) target = $region24
    $region23: #{_lambda_.9} parent=5 // pred_region
      // Predicated region
      $region25: #{_lambda_.9} parent=23 // pred_check
        %p155 = pneg %p30
      $region26: #{_lambda_.9} parent=23 // pred_check_branch
        %157 = sbr.rel (%p155) target = $region28
      $region27: #{_lambda_.9} parent=23 // pred_region
        %s158 = smul.u32 32, %s10
        %p159 = scmp.lt.s32.totalorder %s158, 63
        %s160 = scalar_select %p159, %s158, 63
        %s161 = smul.addr %s160, 9
        %s162 = smul.addr %s161, 4
        %s163 = scalar_lea.vmem %s0, %s162
        %s164 = smul.u32 32, %s10
      $region28: #{_lambda_.9} parent=23 // pred_fallthru
        _
      // Predicated region
      $region29: #{_lambda_.9} parent=23 // pred_check
        %p165 = pneg %p98
      $region30: #{_lambda_.9} parent=23 // pred_check_branch
        %167 = sbr.rel (%p165) target = $region32
      $region31: #{_lambda_.9} parent=23 // pred_region
        %s168 = smul.u32 32, %s10
        %p169 = scmp.lt.s32.totalorder %s168, 63
        %s170 = scalar_select %p169, %s168, 63
        %s171 = smul.addr %s170, 8
        %s172 = scalar_lea.vmem %s3, %s171
        %s173 = smul.u32 32, %s10
      $region32: #{_lambda_.9} parent=23 // pred_fallthru
        _
    $region24: #{_lambda_.9} parent=5 // pred_fallthru
      _
    %p174 = scmp.le.s32.totalorder 1, %s10
    %p175 = scmp.lt.s32.totalorder %s10, 3
    %p176 = pnand %p174, %p175
    %p177 = pneg %p176
    // Predicated region
    $region33: #{_lambda_.9} parent=5 // pred_check
      _
    $region34: #{_lambda_.9} parent=5 // pred_check_branch
      %179 = sbr.rel (%p176) target = $region36
    $region35: #{_lambda_.9} parent=5 // pred_region
      %s180 = ssub.s32 %s10, 1
      %s181 = smul.u32 32, %s15
      %p182 = scmp.lt.s32.totalorder %s181, 63
      %s183 = scalar_select %p182, %s181, 63
      %s184 = smul.addr %s183, 9
      %s185 = smul.addr %s184, 4
      %s186 = scalar_lea.vmem %s0, %s185
      %p187 = pneg %p36
      %p188 = pneg %p33
      %p189 = pneg %p57
      %p190 = pneg %p54
      %p191 = pneg %p78
      %p192 = pneg %p75
      %s193 = smul.u32 32, %s15
      %p194 = scmp.lt.s32.totalorder %s193, 63
      %s195 = scalar_select %p194, %s193, 63
      %s196 = smul.addr %s195, 8
      %s197 = scalar_lea.vmem %s3, %s196
      %p198 = pneg %p104
      %p199 = pneg %p101
      %p200 = pneg %p130
      %p201 = pneg %p127
      %s202 = smul.u32 32, %s15
      %p203 = scmp.lt.s32.totalorder %s202, 63
      %s204 = scalar_select %p203, %s202, 63
      %s205 = smul.addr %s204, 8
      %s206 = scalar_lea.vmem %s4, %s205
      %s207 = smul.u32 32, %s15
      %p208 = scmp.lt.s32.totalorder %s207, 63
      %s209 = scalar_select %p208, %s207, 63
      %s210 = smul.addr %s209, 9
      %s211 = smul.addr %s210, 4
      %s212 = scalar_lea.vmem %s0, %s211
      %s213 = smul.u32 32, %s15
      %s214 = smul.u32 32, %s15
      %p215 = scmp.lt.s32.totalorder %s214, 63
      %s216 = scalar_select %p215, %s214, 63
      %s217 = smul.addr %s216, 8
      %s218 = scalar_lea.vmem %s3, %s217
      %s219 = smul.u32 32, %s15
      %s220 = smul.u32 32, %s15
      %p221 = scmp.lt.s32.totalorder %s220, 63
      %s222 = scalar_select %p221, %s220, 63
      %s223 = smul.addr %s222, 8
      %s224 = scalar_lea.vmem %s4, %s223
      %s225 = smul.u32 32, %s15
      %v226 = vld [vmem:[%s212] sm:$0xff]
      %v227 = vld [vmem:[%s212 + $0x8] sm:$0xff]
      %v228 = vld [vmem:[%s212 + $0x10] sm:$0xff]
      %v229 = vld [vmem:[%s212 + $0x18] sm:$0xff]
      %v230 = vld [vmem:[%s212 + $0x20] sm:$0xf]
      %v231 = vld [vmem:[%s212 + $0x24] sm:$0xff]
      %v232 = vld [vmem:[%s212 + $0x2c] sm:$0xff]
      %v233 = vld [vmem:[%s212 + $0x34] sm:$0xff]
      %v234 = vld [vmem:[%s212 + $0x3c] sm:$0xff]
      %v235 = vld [vmem:[%s212 + $0x44] sm:$0xf]
      %v236 = vld [vmem:[%s212 + $0x48] sm:$0xff]
      %v237 = vld [vmem:[%s212 + $0x50] sm:$0xff]
      %v238 = vld [vmem:[%s212 + $0x58] sm:$0xff]
      %v239 = vld [vmem:[%s212 + $0x60] sm:$0xff]
      %v240 = vld [vmem:[%s212 + $0x68] sm:$0xf]
      %v241 = vld [vmem:[%s212 + $0x6c] sm:$0xff]
      %v242 = vld [vmem:[%s212 + $0x74] sm:$0xff]
      %v243 = vld [vmem:[%s212 + $0x7c] sm:$0xff]
      %v244 = vld [vmem:[%s212 + $0x84] sm:$0xff]
      %v245 = vld [vmem:[%s212 + $0x8c] sm:$0xf]
      %v246 = vld [vmem:[%s212 + $0x90] sm:$0xff]
      %v247 = vld [vmem:[%s212 + $0x98] sm:$0xff]
      %v248 = vld [vmem:[%s212 + $0xa0] sm:$0xff]
      %v249 = vld [vmem:[%s212 + $0xa8] sm:$0xff]
      %v250 = vld [vmem:[%s212 + $0xb0] sm:$0xf]
      %v251 = vld [vmem:[%s212 + $0xb4] sm:$0xff]
      %v252 = vld [vmem:[%s212 + $0xbc] sm:$0xff]
      %v253 = vld [vmem:[%s212 + $0xc4] sm:$0xff]
      %v254 = vld [vmem:[%s212 + $0xcc] sm:$0xff]
      %v255 = vld [vmem:[%s212 + $0xd4] sm:$0xf]
      %v256 = vld [vmem:[%s212 + $0xd8] sm:$0xff]
      %v257 = vld [vmem:[%s212 + $0xe0] sm:$0xff]
      %v258 = vld [vmem:[%s212 + $0xe8] sm:$0xff]
      %v259 = vld [vmem:[%s212 + $0xf0] sm:$0xff]
      %v260 = vld [vmem:[%s212 + $0xf8] sm:$0xf]
      %v261 = vld [vmem:[%s212 + $0xfc] sm:$0xff]
      %v262 = vld [vmem:[%s212 + $0x104] sm:$0xff]
      %v263 = vld [vmem:[%s212 + $0x10c] sm:$0xff]
      %v264 = vld [vmem:[%s212 + $0x114] sm:$0xff]
      %v265 = vld [vmem:[%s212 + $0x11c] sm:$0xf]
      %v266 = vld [vmem:[%s212 + $0x120] sm:$0xff]
      %v267 = vld [vmem:[%s212 + $0x128] sm:$0xff]
      %v268 = vld [vmem:[%s212 + $0x130] sm:$0xff]
      %v269 = vld [vmem:[%s212 + $0x138] sm:$0xff]
      %v270 = vld [vmem:[%s212 + $0x140] sm:$0xf]
      %v271 = vld [vmem:[%s212 + $0x144] sm:$0xff]
      %v272 = vld [vmem:[%s212 + $0x14c] sm:$0xff]
      %v273 = vld [vmem:[%s212 + $0x154] sm:$0xff]
      %v274 = vld [vmem:[%s212 + $0x15c] sm:$0xff]
      %v275 = vld [vmem:[%s212 + $0x164] sm:$0xf]
      %v276 = vld [vmem:[%s212 + $0x168] sm:$0xff]
      %v277 = vld [vmem:[%s212 + $0x170] sm:$0xff]
      %v278 = vld [vmem:[%s212 + $0x178] sm:$0xff]
      %v279 = vld [vmem:[%s212 + $0x180] sm:$0xff]
      %v280 = vld [vmem:[%s212 + $0x188] sm:$0xf]
      %v281 = vld [vmem:[%s212 + $0x18c] sm:$0xff]
      %v282 = vld [vmem:[%s212 + $0x194] sm:$0xff]
      %v283 = vld [vmem:[%s212 + $0x19c] sm:$0xff]
      %v284 = vld [vmem:[%s212 + $0x1a4] sm:$0xff]
      %v285 = vld [vmem:[%s212 + $0x1ac] sm:$0xf]
      %v286 = vld [vmem:[%s212 + $0x1b0] sm:$0xff]
      %v287 = vld [vmem:[%s212 + $0x1b8] sm:$0xff]
      %v288 = vld [vmem:[%s212 + $0x1c0] sm:$0xff]
      %v289 = vld [vmem:[%s212 + $0x1c8] sm:$0xff]
      %v290 = vld [vmem:[%s212 + $0x1d0] sm:$0xf]
      %v291 = vld [vmem:[%s212 + $0x1d4] sm:$0xff]
      %v292 = vld [vmem:[%s212 + $0x1dc] sm:$0xff]
      %v293 = vld [vmem:[%s212 + $0x1e4] sm:$0xff]
      %v294 = vld [vmem:[%s212 + $0x1ec] sm:$0xff]
      %v295 = vld [vmem:[%s212 + $0x1f4] sm:$0xf]
      %v296 = vld [vmem:[%s212 + $0x1f8] sm:$0xff]
      %v297 = vld [vmem:[%s212 + $0x200] sm:$0xff]
      %v298 = vld [vmem:[%s212 + $0x208] sm:$0xff]
      %v299 = vld [vmem:[%s212 + $0x210] sm:$0xff]
      %v300 = vld [vmem:[%s212 + $0x218] sm:$0xf]
      %v301 = vld [vmem:[%s212 + $0x21c] sm:$0xff]
      %v302 = vld [vmem:[%s212 + $0x224] sm:$0xff]
      %v303 = vld [vmem:[%s212 + $0x22c] sm:$0xff]
      %v304 = vld [vmem:[%s212 + $0x234] sm:$0xff]
      %v305 = vld [vmem:[%s212 + $0x23c] sm:$0xf]
      %v306 = vld [vmem:[%s212 + $0x240] sm:$0xff]
      %v307 = vld [vmem:[%s212 + $0x248] sm:$0xff]
      %v308 = vld [vmem:[%s212 + $0x250] sm:$0xff]
      %v309 = vld [vmem:[%s212 + $0x258] sm:$0xff]
      %v310 = vld [vmem:[%s212 + $0x260] sm:$0xf]
      %v311 = vld [vmem:[%s212 + $0x264] sm:$0xff]
      %v312 = vld [vmem:[%s212 + $0x26c] sm:$0xff]
      %v313 = vld [vmem:[%s212 + $0x274] sm:$0xff]
      %v314 = vld [vmem:[%s212 + $0x27c] sm:$0xff]
      %v315 = vld [vmem:[%s212 + $0x284] sm:$0xf]
      %v316 = vld [vmem:[%s212 + $0x288] sm:$0xff]
      %v317 = vld [vmem:[%s212 + $0x290] sm:$0xff]
      %v318 = vld [vmem:[%s212 + $0x298] sm:$0xff]
      %v319 = vld [vmem:[%s212 + $0x2a0] sm:$0xff]
      %v320 = vld [vmem:[%s212 + $0x2a8] sm:$0xf]
      %v321 = vld [vmem:[%s212 + $0x2ac] sm:$0xff]
      %v322 = vld [vmem:[%s212 + $0x2b4] sm:$0xff]
      %v323 = vld [vmem:[%s212 + $0x2bc] sm:$0xff]
      %v324 = vld [vmem:[%s212 + $0x2c4] sm:$0xff]
      %v325 = vld [vmem:[%s212 + $0x2cc] sm:$0xf]
      %v326 = vld [vmem:[%s212 + $0x2d0] sm:$0xff]
      %v327 = vld [vmem:[%s212 + $0x2d8] sm:$0xff]
      %v328 = vld [vmem:[%s212 + $0x2e0] sm:$0xff]
      %v329 = vld [vmem:[%s212 + $0x2e8] sm:$0xff]
      %v330 = vld [vmem:[%s212 + $0x2f0] sm:$0xf]
      %v331 = vld [vmem:[%s212 + $0x2f4] sm:$0xff]
      %v332 = vld [vmem:[%s212 + $0x2fc] sm:$0xff]
      %v333 = vld [vmem:[%s212 + $0x304] sm:$0xff]
      %v334 = vld [vmem:[%s212 + $0x30c] sm:$0xff]
      %v335 = vld [vmem:[%s212 + $0x314] sm:$0xf]
      %v336 = vld [vmem:[%s212 + $0x318] sm:$0xff]
      %v337 = vld [vmem:[%s212 + $0x320] sm:$0xff]
      %v338 = vld [vmem:[%s212 + $0x328] sm:$0xff]
      %v339 = vld [vmem:[%s212 + $0x330] sm:$0xff]
      %v340 = vld [vmem:[%s212 + $0x338] sm:$0xf]
      %v341 = vld [vmem:[%s212 + $0x33c] sm:$0xff]
      %v342 = vld [vmem:[%s212 + $0x344] sm:$0xff]
      %v343 = vld [vmem:[%s212 + $0x34c] sm:$0xff]
      %v344 = vld [vmem:[%s212 + $0x354] sm:$0xff]
      %v345 = vld [vmem:[%s212 + $0x35c] sm:$0xf]
      %v346 = vld [vmem:[%s212 + $0x360] sm:$0xff]
      %v347 = vld [vmem:[%s212 + $0x368] sm:$0xff]
      %v348 = vld [vmem:[%s212 + $0x370] sm:$0xff]
      %v349 = vld [vmem:[%s212 + $0x378] sm:$0xff]
      %v350 = vld [vmem:[%s212 + $0x380] sm:$0xf]
      %v351 = vld [vmem:[%s212 + $0x384] sm:$0xff]
      %v352 = vld [vmem:[%s212 + $0x38c] sm:$0xff]
      %v353 = vld [vmem:[%s212 + $0x394] sm:$0xff]
      %v354 = vld [vmem:[%s212 + $0x39c] sm:$0xff]
      %v355 = vld [vmem:[%s212 + $0x3a4] sm:$0xf]
      %v356 = vld [vmem:[%s212 + $0x3a8] sm:$0xff]
      %v357 = vld [vmem:[%s212 + $0x3b0] sm:$0xff]
      %v358 = vld [vmem:[%s212 + $0x3b8] sm:$0xff]
      %v359 = vld [vmem:[%s212 + $0x3c0] sm:$0xff]
      %v360 = vld [vmem:[%s212 + $0x3c8] sm:$0xf]
      %v361 = vld [vmem:[%s212 + $0x3cc] sm:$0xff]
      %v362 = vld [vmem:[%s212 + $0x3d4] sm:$0xff]
      %v363 = vld [vmem:[%s212 + $0x3dc] sm:$0xff]
      %v364 = vld [vmem:[%s212 + $0x3e4] sm:$0xff]
      %v365 = vld [vmem:[%s212 + $0x3ec] sm:$0xf]
      %v366 = vld [vmem:[%s212 + $0x3f0] sm:$0xff]
      %v367 = vld [vmem:[%s212 + $0x3f8] sm:$0xff]
      %v368 = vld [vmem:[%s212 + $0x400] sm:$0xff]
      %v369 = vld [vmem:[%s212 + $0x408] sm:$0xff]
      %v370 = vld [vmem:[%s212 + $0x410] sm:$0xf]
      %v371 = vld [vmem:[%s212 + $0x414] sm:$0xff]
      %v372 = vld [vmem:[%s212 + $0x41c] sm:$0xff]
      %v373 = vld [vmem:[%s212 + $0x424] sm:$0xff]
      %v374 = vld [vmem:[%s212 + $0x42c] sm:$0xff]
      %v375 = vld [vmem:[%s212 + $0x434] sm:$0xf]
      %v376 = vld [vmem:[%s212 + $0x438] sm:$0xff]
      %v377 = vld [vmem:[%s212 + $0x440] sm:$0xff]
      %v378 = vld [vmem:[%s212 + $0x448] sm:$0xff]
      %v379 = vld [vmem:[%s212 + $0x450] sm:$0xff]
      %v380 = vld [vmem:[%s212 + $0x458] sm:$0xf]
      %v381 = vld [vmem:[%s212 + $0x45c] sm:$0xff]
      %v382 = vld [vmem:[%s212 + $0x464] sm:$0xff]
      %v383 = vld [vmem:[%s212 + $0x46c] sm:$0xff]
      %v384 = vld [vmem:[%s212 + $0x474] sm:$0xff]
      %v385 = vld [vmem:[%s212 + $0x47c] sm:$0xf]
      %v386 = vld [vmem:[%s1] sm:$0xf]
      %v387 = vld [vmem:[%s1 + $0x4] sm:$0xf]
      %v388 = vld [vmem:[%s1 + $0x8] sm:$0xf]
      %v389 = vld [vmem:[%s1 + $0xc] sm:$0xf]
      %v390 = vld [vmem:[%s1 + $0x10] sm:$0xf]
      %v391 = vld [vmem:[%s1 + $0x14] sm:$0xf]
      %v392 = vld [vmem:[%s1 + $0x18] sm:$0xf]
      %v393 = vld [vmem:[%s1 + $0x1c] sm:$0xf]
      %v394 = vld [vmem:[%s1 + $0x20] sm:$0xf]
      %v395 = vld [vmem:[%s1 + $0x24] sm:$0xf]
      %v396 = vld [vmem:[%s1 + $0x28] sm:$0xf]
      %v397 = vld [vmem:[%s1 + $0x2c] sm:$0xf]
      %v398 = vld [vmem:[%s1 + $0x30] sm:$0xf]
      %v399 = vld [vmem:[%s1 + $0x34] sm:$0xf]
      %v400 = vld [vmem:[%s1 + $0x38] sm:$0xf]
      %v401 = vld [vmem:[%s1 + $0x3c] sm:$0xf]
      %v402 = vld [vmem:[%s1 + $0x40] sm:$0xf]
      %v403 = vld [vmem:[%s1 + $0x44] sm:$0xf]
      %v404 = vld [vmem:[%s1 + $0x48] sm:$0xf]
      %v405 = vld [vmem:[%s1 + $0x4c] sm:$0xf]
      %v406 = vld [vmem:[%s1 + $0x50] sm:$0xf]
      %v407 = vld [vmem:[%s1 + $0x54] sm:$0xf]
      %v408 = vld [vmem:[%s1 + $0x58] sm:$0xf]
      %v409 = vld [vmem:[%s1 + $0x5c] sm:$0xf]
      %v410 = vld [vmem:[%s1 + $0x60] sm:$0xf]
      %v411 = vld [vmem:[%s1 + $0x64] sm:$0xf]
      %v412 = vld [vmem:[%s1 + $0x68] sm:$0xf]
      %v413 = vld [vmem:[%s1 + $0x6c] sm:$0xf]
      %v414 = vld [vmem:[%s1 + $0x70] sm:$0xf]
      %v415 = vld [vmem:[%s1 + $0x74] sm:$0xf]
      %v416 = vld [vmem:[%s1 + $0x78] sm:$0xf]
      %v417 = vld [vmem:[%s1 + $0x7c] sm:$0xf]
      %v418 = vld [vmem:[%s1 + $0x80] sm:$0xf]
      %v419 = vld [vmem:[%s1 + $0x84] sm:$0xf]
      %v420 = vld [vmem:[%s1 + $0x88] sm:$0xf]
      %v421 = vld [vmem:[%s1 + $0x8c] sm:$0xf]
      %v422 = vld [vmem:[%s1 + $0x90] sm:$0xf]
      %v423 = vld [vmem:[%s1 + $0x94] sm:$0xf]
      %v424 = vld [vmem:[%s1 + $0x98] sm:$0xf]
      %v425 = vld [vmem:[%s1 + $0x9c] sm:$0xf]
      %v426 = vld [vmem:[%s1 + $0xa0] sm:$0xf]
      %v427 = vld [vmem:[%s1 + $0xa4] sm:$0xf]
      %v428 = vld [vmem:[%s1 + $0xa8] sm:$0xf]
      %v429 = vld [vmem:[%s1 + $0xac] sm:$0xf]
      %v430 = vld [vmem:[%s1 + $0xb0] sm:$0xf]
      %v431 = vld [vmem:[%s1 + $0xb4] sm:$0xf]
      %v432 = vld [vmem:[%s1 + $0xb8] sm:$0xf]
      %v433 = vld [vmem:[%s1 + $0xbc] sm:$0xf]
      %v434 = vld [vmem:[%s1 + $0xc0] sm:$0xf]
      %v435 = vld [vmem:[%s1 + $0xc4] sm:$0xf]
      %v436 = vld [vmem:[%s1 + $0xc8] sm:$0xf]
      %v437 = vld [vmem:[%s1 + $0xcc] sm:$0xf]
      %v438 = vld [vmem:[%s1 + $0xd0] sm:$0xf]
      %v439 = vld [vmem:[%s1 + $0xd4] sm:$0xf]
      %v440 = vld [vmem:[%s1 + $0xd8] sm:$0xf]
      %v441 = vld [vmem:[%s1 + $0xdc] sm:$0xf]
      %v442 = vld [vmem:[%s1 + $0xe0] sm:$0xf]
      %v443 = vld [vmem:[%s1 + $0xe4] sm:$0xf]
      %v444 = vld [vmem:[%s1 + $0xe8] sm:$0xf]
      %v445 = vld [vmem:[%s1 + $0xec] sm:$0xf]
      %v446 = vld [vmem:[%s1 + $0xf0] sm:$0xf]
      %v447 = vld [vmem:[%s1 + $0xf4] sm:$0xf]
      %v448 = vld [vmem:[%s1 + $0xf8] sm:$0xf]
      %v449 = vld [vmem:[%s1 + $0xfc] sm:$0xf]
      %v450 = vld [vmem:[%s1 + $0x100] sm:$0xf]
      %v451 = vld [vmem:[%s1 + $0x104] sm:$0xf]
      %v452 = vld [vmem:[%s1 + $0x108] sm:$0xf]
      %v453 = vld [vmem:[%s1 + $0x10c] sm:$0xf]
      %v454 = vld [vmem:[%s1 + $0x110] sm:$0xf]
      %v455 = vld [vmem:[%s1 + $0x114] sm:$0xf]
      %v456 = vld [vmem:[%s1 + $0x118] sm:$0xf]
      %v457 = vld [vmem:[%s1 + $0x11c] sm:$0xf]
      %v458 = vld [vmem:[%s1 + $0x120] sm:$0xf]
      %v459 = vld [vmem:[%s1 + $0x124] sm:$0xf]
      %v460 = vld [vmem:[%s1 + $0x128] sm:$0xf]
      %v461 = vld [vmem:[%s1 + $0x12c] sm:$0xf]
      %v462 = vld [vmem:[%s1 + $0x130] sm:$0xf]
      %v463 = vld [vmem:[%s1 + $0x134] sm:$0xf]
      %v464 = vld [vmem:[%s1 + $0x138] sm:$0xf]
      %v465 = vld [vmem:[%s1 + $0x13c] sm:$0xf]
      %v466 = vld [vmem:[%s1 + $0x140] sm:$0xf]
      %v467 = vld [vmem:[%s1 + $0x144] sm:$0xf]
      %v468 = vld [vmem:[%s1 + $0x148] sm:$0xf]
      %v469 = vld [vmem:[%s1 + $0x14c] sm:$0xf]
      %v470 = vld [vmem:[%s1 + $0x150] sm:$0xf]
      %v471 = vld [vmem:[%s1 + $0x154] sm:$0xf]
      %v472 = vld [vmem:[%s1 + $0x158] sm:$0xf]
      %v473 = vld [vmem:[%s1 + $0x15c] sm:$0xf]
      %v474 = vld [vmem:[%s1 + $0x160] sm:$0xf]
      %v475 = vld [vmem:[%s1 + $0x164] sm:$0xf]
      %v476 = vld [vmem:[%s1 + $0x168] sm:$0xf]
      %v477 = vld [vmem:[%s1 + $0x16c] sm:$0xf]
      %v478 = vld [vmem:[%s1 + $0x170] sm:$0xf]
      %v479 = vld [vmem:[%s1 + $0x174] sm:$0xf]
      %v480 = vld [vmem:[%s1 + $0x178] sm:$0xf]
      %v481 = vld [vmem:[%s1 + $0x17c] sm:$0xf]
      %v482 = vld [vmem:[%s1 + $0x180] sm:$0xf]
      %v483 = vld [vmem:[%s1 + $0x184] sm:$0xf]
      %v484 = vld [vmem:[%s1 + $0x188] sm:$0xf]
      %v485 = vld [vmem:[%s1 + $0x18c] sm:$0xf]
      %v486 = vld [vmem:[%s1 + $0x190] sm:$0xf]
      %v487 = vld [vmem:[%s1 + $0x194] sm:$0xf]
      %v488 = vld [vmem:[%s1 + $0x198] sm:$0xf]
      %v489 = vld [vmem:[%s1 + $0x19c] sm:$0xf]
      %v490 = vld [vmem:[%s1 + $0x1a0] sm:$0xf]
      %v491 = vld [vmem:[%s1 + $0x1a4] sm:$0xf]
      %v492 = vld [vmem:[%s1 + $0x1a8] sm:$0xf]
      %v493 = vld [vmem:[%s1 + $0x1ac] sm:$0xf]
      %v494 = vld [vmem:[%s1 + $0x1b0] sm:$0xf]
      %v495 = vld [vmem:[%s1 + $0x1b4] sm:$0xf]
      %v496 = vld [vmem:[%s1 + $0x1b8] sm:$0xf]
      %v497 = vld [vmem:[%s1 + $0x1bc] sm:$0xf]
      %v498 = vld [vmem:[%s1 + $0x1c0] sm:$0xf]
      %v499 = vld [vmem:[%s1 + $0x1c4] sm:$0xf]
      %v500 = vld [vmem:[%s1 + $0x1c8] sm:$0xf]
      %v501 = vld [vmem:[%s1 + $0x1cc] sm:$0xf]
      %v502 = vld [vmem:[%s1 + $0x1d0] sm:$0xf]
      %v503 = vld [vmem:[%s1 + $0x1d4] sm:$0xf]
      %v504 = vld [vmem:[%s1 + $0x1d8] sm:$0xf]
      %v505 = vld [vmem:[%s1 + $0x1dc] sm:$0xf]
      %v506 = vld [vmem:[%s1 + $0x1e0] sm:$0xf]
      %v507 = vld [vmem:[%s1 + $0x1e4] sm:$0xf]
      %v508 = vld [vmem:[%s1 + $0x1e8] sm:$0xf]
      %v509 = vld [vmem:[%s1 + $0x1ec] sm:$0xf]
      %v510 = vld [vmem:[%s1 + $0x1f0] sm:$0xf]
      %v511 = vld [vmem:[%s1 + $0x1f4] sm:$0xf]
      %v512 = vld [vmem:[%s1 + $0x1f8] sm:$0xf]
      %v513 = vld [vmem:[%s1 + $0x1fc] sm:$0xf]
      %v514 = vld [vmem:[%s1 + $0x200] sm:$0xf]
      %v515 = vld [vmem:[%s1 + $0x204] sm:$0xf]
      %v516 = vld [vmem:[%s1 + $0x208] sm:$0xf]
      %v517 = vld [vmem:[%s1 + $0x20c] sm:$0xf]
      %v518 = vld [vmem:[%s1 + $0x210] sm:$0xf]
      %v519 = vld [vmem:[%s1 + $0x214] sm:$0xf]
      %v520 = vld [vmem:[%s1 + $0x218] sm:$0xf]
      %v521 = vld [vmem:[%s1 + $0x21c] sm:$0xf]
      %v522 = vld [vmem:[%s1 + $0x220] sm:$0xf]
      %v523 = vld [vmem:[%s1 + $0x224] sm:$0xf]
      %v524 = vld [vmem:[%s1 + $0x228] sm:$0xf]
      %v525 = vld [vmem:[%s1 + $0x22c] sm:$0xf]
      %v526 = vld [vmem:[%s1 + $0x230] sm:$0xf]
      %v527 = vld [vmem:[%s1 + $0x234] sm:$0xf]
      %v528 = vld [vmem:[%s1 + $0x238] sm:$0xf]
      %v529 = vld [vmem:[%s1 + $0x23c] sm:$0xf]
      %v530 = vld [vmem:[%s2] sm:$0x1]
      %v532 = vperm.slane %v530, 0
      %v694 = vunpack.c.l.b16 %v226
      %v695 = vunpack.c.h.b16 %v226
      %v696 = vunpack.c.l.b16 %v227
      %v697 = vunpack.c.h.b16 %v227
      %v698 = vunpack.c.l.b16 %v228
      %v699 = vunpack.c.h.b16 %v228
      %v700 = vunpack.c.l.b16 %v229
      %v701 = vunpack.c.h.b16 %v229
      %v702 = vunpack.c.l.b16 %v230
      %v703 = vunpack.c.l.b16 %v231
      %v704 = vunpack.c.h.b16 %v231
      %v705 = vunpack.c.l.b16 %v232
      %v706 = vunpack.c.h.b16 %v232
      %v707 = vunpack.c.l.b16 %v233
      %v708 = vunpack.c.h.b16 %v233
      %v709 = vunpack.c.l.b16 %v234
      %v710 = vunpack.c.h.b16 %v234
      %v711 = vunpack.c.l.b16 %v235
      %v712 = vunpack.c.l.b16 %v236
      %v713 = vunpack.c.h.b16 %v236
      %v714 = vunpack.c.l.b16 %v237
      %v715 = vunpack.c.h.b16 %v237
      %v716 = vunpack.c.l.b16 %v238
      %v717 = vunpack.c.h.b16 %v238
      %v718 = vunpack.c.l.b16 %v239
      %v719 = vunpack.c.h.b16 %v239
      %v720 = vunpack.c.l.b16 %v240
      %v721 = vunpack.c.l.b16 %v241
      %v722 = vunpack.c.h.b16 %v241
      %v723 = vunpack.c.l.b16 %v242
      %v724 = vunpack.c.h.b16 %v242
      %v725 = vunpack.c.l.b16 %v243
      %v726 = vunpack.c.h.b16 %v243
      %v727 = vunpack.c.l.b16 %v244
      %v728 = vunpack.c.h.b16 %v244
      %v729 = vunpack.c.l.b16 %v245
      %v730 = vunpack.c.l.b16 %v246
      %v731 = vunpack.c.h.b16 %v246
      %v732 = vunpack.c.l.b16 %v247
      %v733 = vunpack.c.h.b16 %v247
      %v734 = vunpack.c.l.b16 %v248
      %v735 = vunpack.c.h.b16 %v248
      %v736 = vunpack.c.l.b16 %v249
      %v737 = vunpack.c.h.b16 %v249
      %v738 = vunpack.c.l.b16 %v250
      %v739 = vunpack.c.l.b16 %v251
      %v740 = vunpack.c.h.b16 %v251
      %v741 = vunpack.c.l.b16 %v252
      %v742 = vunpack.c.h.b16 %v252
      %v743 = vunpack.c.l.b16 %v253
      %v744 = vunpack.c.h.b16 %v253
      %v745 = vunpack.c.l.b16 %v254
      %v746 = vunpack.c.h.b16 %v254
      %v747 = vunpack.c.l.b16 %v255
      %v748 = vunpack.c.l.b16 %v256
      %v749 = vunpack.c.h.b16 %v256
      %v750 = vunpack.c.l.b16 %v257
      %v751 = vunpack.c.h.b16 %v257
      %v752 = vunpack.c.l.b16 %v258
      %v753 = vunpack.c.h.b16 %v258
      %v754 = vunpack.c.l.b16 %v259
      %v755 = vunpack.c.h.b16 %v259
      %v756 = vunpack.c.l.b16 %v260
      %v757 = vunpack.c.l.b16 %v261
      %v758 = vunpack.c.h.b16 %v261
      %v759 = vunpack.c.l.b16 %v262
      %v760 = vunpack.c.h.b16 %v262
      %v761 = vunpack.c.l.b16 %v263
      %v762 = vunpack.c.h.b16 %v263
      %v763 = vunpack.c.l.b16 %v264
      %v764 = vunpack.c.h.b16 %v264
      %v765 = vunpack.c.l.b16 %v265
      %v766 = vunpack.c.l.b16 %v266
      %v767 = vunpack.c.h.b16 %v266
      %v768 = vunpack.c.l.b16 %v267
      %v769 = vunpack.c.h.b16 %v267
      %v770 = vunpack.c.l.b16 %v268
      %v771 = vunpack.c.h.b16 %v268
      %v772 = vunpack.c.l.b16 %v269
      %v773 = vunpack.c.h.b16 %v269
      %v774 = vunpack.c.l.b16 %v270
      %v775 = vunpack.c.l.b16 %v271
      %v776 = vunpack.c.h.b16 %v271
      %v777 = vunpack.c.l.b16 %v272
      %v778 = vunpack.c.h.b16 %v272
      %v779 = vunpack.c.l.b16 %v273
      %v780 = vunpack.c.h.b16 %v273
      %v781 = vunpack.c.l.b16 %v274
      %v782 = vunpack.c.h.b16 %v274
      %v783 = vunpack.c.l.b16 %v275
      %v784 = vunpack.c.l.b16 %v276
      %v785 = vunpack.c.h.b16 %v276
      %v786 = vunpack.c.l.b16 %v277
      %v787 = vunpack.c.h.b16 %v277
      %v788 = vunpack.c.l.b16 %v278
      %v789 = vunpack.c.h.b16 %v278
      %v790 = vunpack.c.l.b16 %v279
      %v791 = vunpack.c.h.b16 %v279
      %v792 = vunpack.c.l.b16 %v280
      %v793 = vunpack.c.l.b16 %v281
      %v794 = vunpack.c.h.b16 %v281
      %v795 = vunpack.c.l.b16 %v282
      %v796 = vunpack.c.h.b16 %v282
      %v797 = vunpack.c.l.b16 %v283
      %v798 = vunpack.c.h.b16 %v283
      %v799 = vunpack.c.l.b16 %v284
      %v800 = vunpack.c.h.b16 %v284
      %v801 = vunpack.c.l.b16 %v285
      %v802 = vunpack.c.l.b16 %v286
      %v803 = vunpack.c.h.b16 %v286
      %v804 = vunpack.c.l.b16 %v287
      %v805 = vunpack.c.h.b16 %v287
      %v806 = vunpack.c.l.b16 %v288
      %v807 = vunpack.c.h.b16 %v288
      %v808 = vunpack.c.l.b16 %v289
      %v809 = vunpack.c.h.b16 %v289
      %v810 = vunpack.c.l.b16 %v290
      %v811 = vunpack.c.l.b16 %v291
      %v812 = vunpack.c.h.b16 %v291
      %v813 = vunpack.c.l.b16 %v292
      %v814 = vunpack.c.h.b16 %v292
      %v815 = vunpack.c.l.b16 %v293
      %v816 = vunpack.c.h.b16 %v293
      %v817 = vunpack.c.l.b16 %v294
      %v818 = vunpack.c.h.b16 %v294
      %v819 = vunpack.c.l.b16 %v295
      %v820 = vunpack.c.l.b16 %v296
      %v821 = vunpack.c.h.b16 %v296
      %v822 = vunpack.c.l.b16 %v297
      %v823 = vunpack.c.h.b16 %v297
      %v824 = vunpack.c.l.b16 %v298
      %v825 = vunpack.c.h.b16 %v298
      %v826 = vunpack.c.l.b16 %v299
      %v827 = vunpack.c.h.b16 %v299
      %v828 = vunpack.c.l.b16 %v300
      %v829 = vunpack.c.l.b16 %v301
      %v830 = vunpack.c.h.b16 %v301
      %v831 = vunpack.c.l.b16 %v302
      %v832 = vunpack.c.h.b16 %v302
      %v833 = vunpack.c.l.b16 %v303
      %v834 = vunpack.c.h.b16 %v303
      %v835 = vunpack.c.l.b16 %v304
      %v836 = vunpack.c.h.b16 %v304
      %v837 = vunpack.c.l.b16 %v305
      %v838 = vunpack.c.l.b16 %v306
      %v839 = vunpack.c.h.b16 %v306
      %v840 = vunpack.c.l.b16 %v307
      %v841 = vunpack.c.h.b16 %v307
      %v842 = vunpack.c.l.b16 %v308
      %v843 = vunpack.c.h.b16 %v308
      %v844 = vunpack.c.l.b16 %v309
      %v845 = vunpack.c.h.b16 %v309
      %v846 = vunpack.c.l.b16 %v310
      %v847 = vunpack.c.l.b16 %v311
      %v848 = vunpack.c.h.b16 %v311
      %v849 = vunpack.c.l.b16 %v312
      %v850 = vunpack.c.h.b16 %v312
      %v851 = vunpack.c.l.b16 %v313
      %v852 = vunpack.c.h.b16 %v313
      %v853 = vunpack.c.l.b16 %v314
      %v854 = vunpack.c.h.b16 %v314
      %v855 = vunpack.c.l.b16 %v315
      %v856 = vunpack.c.l.b16 %v316
      %v857 = vunpack.c.h.b16 %v316
      %v858 = vunpack.c.l.b16 %v317
      %v859 = vunpack.c.h.b16 %v317
      %v860 = vunpack.c.l.b16 %v318
      %v861 = vunpack.c.h.b16 %v318
      %v862 = vunpack.c.l.b16 %v319
      %v863 = vunpack.c.h.b16 %v319
      %v864 = vunpack.c.l.b16 %v320
      %v865 = vunpack.c.l.b16 %v321
      %v866 = vunpack.c.h.b16 %v321
      %v867 = vunpack.c.l.b16 %v322
      %v868 = vunpack.c.h.b16 %v322
      %v869 = vunpack.c.l.b16 %v323
      %v870 = vunpack.c.h.b16 %v323
      %v871 = vunpack.c.l.b16 %v324
      %v872 = vunpack.c.h.b16 %v324
      %v873 = vunpack.c.l.b16 %v325
      %v874 = vunpack.c.l.b16 %v326
      %v875 = vunpack.c.h.b16 %v326
      %v876 = vunpack.c.l.b16 %v327
      %v877 = vunpack.c.h.b16 %v327
      %v878 = vunpack.c.l.b16 %v328
      %v879 = vunpack.c.h.b16 %v328
      %v880 = vunpack.c.l.b16 %v329
      %v881 = vunpack.c.h.b16 %v329
      %v882 = vunpack.c.l.b16 %v330
      %v883 = vunpack.c.l.b16 %v331
      %v884 = vunpack.c.h.b16 %v331
      %v885 = vunpack.c.l.b16 %v332
      %v886 = vunpack.c.h.b16 %v332
      %v887 = vunpack.c.l.b16 %v333
      %v888 = vunpack.c.h.b16 %v333
      %v889 = vunpack.c.l.b16 %v334
      %v890 = vunpack.c.h.b16 %v334
      %v891 = vunpack.c.l.b16 %v335
      %v892 = vunpack.c.l.b16 %v336
      %v893 = vunpack.c.h.b16 %v336
      %v894 = vunpack.c.l.b16 %v337
      %v895 = vunpack.c.h.b16 %v337
      %v896 = vunpack.c.l.b16 %v338
      %v897 = vunpack.c.h.b16 %v338
      %v898 = vunpack.c.l.b16 %v339
      %v899 = vunpack.c.h.b16 %v339
      %v900 = vunpack.c.l.b16 %v340
      %v901 = vunpack.c.l.b16 %v341
      %v902 = vunpack.c.h.b16 %v341
      %v903 = vunpack.c.l.b16 %v342
      %v904 = vunpack.c.h.b16 %v342
      %v905 = vunpack.c.l.b16 %v343
      %v906 = vunpack.c.h.b16 %v343
      %v907 = vunpack.c.l.b16 %v344
      %v908 = vunpack.c.h.b16 %v344
      %v909 = vunpack.c.l.b16 %v345
      %v910 = vunpack.c.l.b16 %v346
      %v911 = vunpack.c.h.b16 %v346
      %v912 = vunpack.c.l.b16 %v347
      %v913 = vunpack.c.h.b16 %v347
      %v914 = vunpack.c.l.b16 %v348
      %v915 = vunpack.c.h.b16 %v348
      %v916 = vunpack.c.l.b16 %v349
      %v917 = vunpack.c.h.b16 %v349
      %v918 = vunpack.c.l.b16 %v350
      %v919 = vunpack.c.l.b16 %v351
      %v920 = vunpack.c.h.b16 %v351
      %v921 = vunpack.c.l.b16 %v352
      %v922 = vunpack.c.h.b16 %v352
      %v923 = vunpack.c.l.b16 %v353
      %v924 = vunpack.c.h.b16 %v353
      %v925 = vunpack.c.l.b16 %v354
      %v926 = vunpack.c.h.b16 %v354
      %v927 = vunpack.c.l.b16 %v355
      %v928 = vunpack.c.l.b16 %v356
      %v929 = vunpack.c.h.b16 %v356
      %v930 = vunpack.c.l.b16 %v357
      %v931 = vunpack.c.h.b16 %v357
      %v932 = vunpack.c.l.b16 %v358
      %v933 = vunpack.c.h.b16 %v358
      %v934 = vunpack.c.l.b16 %v359
      %v935 = vunpack.c.h.b16 %v359
      %v936 = vunpack.c.l.b16 %v360
      %v937 = vunpack.c.l.b16 %v361
      %v938 = vunpack.c.h.b16 %v361
      %v939 = vunpack.c.l.b16 %v362
      %v940 = vunpack.c.h.b16 %v362
      %v941 = vunpack.c.l.b16 %v363
      %v942 = vunpack.c.h.b16 %v363
      %v943 = vunpack.c.l.b16 %v364
      %v944 = vunpack.c.h.b16 %v364
      %v945 = vunpack.c.l.b16 %v365
      %v946 = vunpack.c.l.b16 %v366
      %v947 = vunpack.c.h.b16 %v366
      %v948 = vunpack.c.l.b16 %v367
      %v949 = vunpack.c.h.b16 %v367
      %v950 = vunpack.c.l.b16 %v368
      %v951 = vunpack.c.h.b16 %v368
      %v952 = vunpack.c.l.b16 %v369
      %v953 = vunpack.c.h.b16 %v369
      %v954 = vunpack.c.l.b16 %v370
      %v955 = vunpack.c.l.b16 %v371
      %v956 = vunpack.c.h.b16 %v371
      %v957 = vunpack.c.l.b16 %v372
      %v958 = vunpack.c.h.b16 %v372
      %v959 = vunpack.c.l.b16 %v373
      %v960 = vunpack.c.h.b16 %v373
      %v961 = vunpack.c.l.b16 %v374
      %v962 = vunpack.c.h.b16 %v374
      %v963 = vunpack.c.l.b16 %v375
      %v964 = vunpack.c.l.b16 %v376
      %v965 = vunpack.c.h.b16 %v376
      %v966 = vunpack.c.l.b16 %v377
      %v967 = vunpack.c.h.b16 %v377
      %v968 = vunpack.c.l.b16 %v378
      %v969 = vunpack.c.h.b16 %v378
      %v970 = vunpack.c.l.b16 %v379
      %v971 = vunpack.c.h.b16 %v379
      %v972 = vunpack.c.l.b16 %v380
      %v973 = vunpack.c.l.b16 %v381
      %v974 = vunpack.c.h.b16 %v381
      %v975 = vunpack.c.l.b16 %v382
      %v976 = vunpack.c.h.b16 %v382
      %v977 = vunpack.c.l.b16 %v383
      %v978 = vunpack.c.h.b16 %v383
      %v979 = vunpack.c.l.b16 %v384
      %v980 = vunpack.c.h.b16 %v384
      %v981 = vunpack.c.l.b16 %v385
      %v982 = vpack.c.b16 %v703, %v694
      %v983 = vpack.c.b16 %v704, %v695
      %v984 = vpack.c.b16 %v705, %v696
      %v985 = vpack.c.b16 %v706, %v697
      %v986 = vpack.c.b16 %v707, %v698
      %v987 = vpack.c.b16 %v708, %v699
      %v988 = vpack.c.b16 %v709, %v700
      %v989 = vpack.c.b16 %v710, %v701
      %v990 = vpack.c.b16 %v711, %v702
      %v991 = vpack.c.b16 %v721, %v712
      %v992 = vpack.c.b16 %v722, %v713
      %v993 = vpack.c.b16 %v723, %v714
      %v994 = vpack.c.b16 %v724, %v715
      %v995 = vpack.c.b16 %v725, %v716
      %v996 = vpack.c.b16 %v726, %v717
      %v997 = vpack.c.b16 %v727, %v718
      %v998 = vpack.c.b16 %v728, %v719
      %v999 = vpack.c.b16 %v729, %v720
      %v1000 = vpack.c.b16 %v739, %v730
      %v1001 = vpack.c.b16 %v740, %v731
      %v1002 = vpack.c.b16 %v741, %v732
      %v1003 = vpack.c.b16 %v742, %v733
      %v1004 = vpack.c.b16 %v743, %v734
      %v1005 = vpack.c.b16 %v744, %v735
      %v1006 = vpack.c.b16 %v745, %v736
      %v1007 = vpack.c.b16 %v746, %v737
      %v1008 = vpack.c.b16 %v747, %v738
      %v1009 = vpack.c.b16 %v757, %v748
      %v1010 = vpack.c.b16 %v758, %v749
      %v1011 = vpack.c.b16 %v759, %v750
      %v1012 = vpack.c.b16 %v760, %v751
      %v1013 = vpack.c.b16 %v761, %v752
      %v1014 = vpack.c.b16 %v762, %v753
      %v1015 = vpack.c.b16 %v763, %v754
      %v1016 = vpack.c.b16 %v764, %v755
      %v1017 = vpack.c.b16 %v765, %v756
      %v1018 = vpack.c.b16 %v775, %v766
      %v1019 = vpack.c.b16 %v776, %v767
      %v1020 = vpack.c.b16 %v777, %v768
      %v1021 = vpack.c.b16 %v778, %v769
      %v1022 = vpack.c.b16 %v779, %v770
      %v1023 = vpack.c.b16 %v780, %v771
      %v1024 = vpack.c.b16 %v781, %v772
      %v1025 = vpack.c.b16 %v782, %v773
      %v1026 = vpack.c.b16 %v783, %v774
      %v1027 = vpack.c.b16 %v793, %v784
      %v1028 = vpack.c.b16 %v794, %v785
      %v1029 = vpack.c.b16 %v795, %v786
      %v1030 = vpack.c.b16 %v796, %v787
      %v1031 = vpack.c.b16 %v797, %v788
      %v1032 = vpack.c.b16 %v798, %v789
      %v1033 = vpack.c.b16 %v799, %v790
      %v1034 = vpack.c.b16 %v800, %v791
      %v1035 = vpack.c.b16 %v801, %v792
      %v1036 = vpack.c.b16 %v811, %v802
      %v1037 = vpack.c.b16 %v812, %v803
      %v1038 = vpack.c.b16 %v813, %v804
      %v1039 = vpack.c.b16 %v814, %v805
      %v1040 = vpack.c.b16 %v815, %v806
      %v1041 = vpack.c.b16 %v816, %v807
      %v1042 = vpack.c.b16 %v817, %v808
      %v1043 = vpack.c.b16 %v818, %v809
      %v1044 = vpack.c.b16 %v819, %v810
      %v1045 = vpack.c.b16 %v829, %v820
      %v1046 = vpack.c.b16 %v830, %v821
      %v1047 = vpack.c.b16 %v831, %v822
      %v1048 = vpack.c.b16 %v832, %v823
      %v1049 = vpack.c.b16 %v833, %v824
      %v1050 = vpack.c.b16 %v834, %v825
      %v1051 = vpack.c.b16 %v835, %v826
      %v1052 = vpack.c.b16 %v836, %v827
      %v1053 = vpack.c.b16 %v837, %v828
      %v1054 = vpack.c.b16 %v847, %v838
      %v1055 = vpack.c.b16 %v848, %v839
      %v1056 = vpack.c.b16 %v849, %v840
      %v1057 = vpack.c.b16 %v850, %v841
      %v1058 = vpack.c.b16 %v851, %v842
      %v1059 = vpack.c.b16 %v852, %v843
      %v1060 = vpack.c.b16 %v853, %v844
      %v1061 = vpack.c.b16 %v854, %v845
      %v1062 = vpack.c.b16 %v855, %v846
      %v1063 = vpack.c.b16 %v865, %v856
      %v1064 = vpack.c.b16 %v866, %v857
      %v1065 = vpack.c.b16 %v867, %v858
      %v1066 = vpack.c.b16 %v868, %v859
      %v1067 = vpack.c.b16 %v869, %v860
      %v1068 = vpack.c.b16 %v870, %v861
      %v1069 = vpack.c.b16 %v871, %v862
      %v1070 = vpack.c.b16 %v872, %v863
      %v1071 = vpack.c.b16 %v873, %v864
      %v1072 = vpack.c.b16 %v883, %v874
      %v1073 = vpack.c.b16 %v884, %v875
      %v1074 = vpack.c.b16 %v885, %v876
      %v1075 = vpack.c.b16 %v886, %v877
      %v1076 = vpack.c.b16 %v887, %v878
      %v1077 = vpack.c.b16 %v888, %v879
      %v1078 = vpack.c.b16 %v889, %v880
      %v1079 = vpack.c.b16 %v890, %v881
      %v1080 = vpack.c.b16 %v891, %v882
      %v1081 = vpack.c.b16 %v901, %v892
      %v1082 = vpack.c.b16 %v902, %v893
      %v1083 = vpack.c.b16 %v903, %v894
      %v1084 = vpack.c.b16 %v904, %v895
      %v1085 = vpack.c.b16 %v905, %v896
      %v1086 = vpack.c.b16 %v906, %v897
      %v1087 = vpack.c.b16 %v907, %v898
      %v1088 = vpack.c.b16 %v908, %v899
      %v1089 = vpack.c.b16 %v909, %v900
      %v1090 = vpack.c.b16 %v919, %v910
      %v1091 = vpack.c.b16 %v920, %v911
      %v1092 = vpack.c.b16 %v921, %v912
      %v1093 = vpack.c.b16 %v922, %v913
      %v1094 = vpack.c.b16 %v923, %v914
      %v1095 = vpack.c.b16 %v924, %v915
      %v1096 = vpack.c.b16 %v925, %v916
      %v1097 = vpack.c.b16 %v926, %v917
      %v1098 = vpack.c.b16 %v927, %v918
      %v1099 = vpack.c.b16 %v937, %v928
      %v1100 = vpack.c.b16 %v938, %v929
      %v1101 = vpack.c.b16 %v939, %v930
      %v1102 = vpack.c.b16 %v940, %v931
      %v1103 = vpack.c.b16 %v941, %v932
      %v1104 = vpack.c.b16 %v942, %v933
      %v1105 = vpack.c.b16 %v943, %v934
      %v1106 = vpack.c.b16 %v944, %v935
      %v1107 = vpack.c.b16 %v945, %v936
      %v1108 = vpack.c.b16 %v955, %v946
      %v1109 = vpack.c.b16 %v956, %v947
      %v1110 = vpack.c.b16 %v957, %v948
      %v1111 = vpack.c.b16 %v958, %v949
      %v1112 = vpack.c.b16 %v959, %v950
      %v1113 = vpack.c.b16 %v960, %v951
      %v1114 = vpack.c.b16 %v961, %v952
      %v1115 = vpack.c.b16 %v962, %v953
      %v1116 = vpack.c.b16 %v963, %v954
      %v1117 = vpack.c.b16 %v973, %v964
      %v1118 = vpack.c.b16 %v974, %v965
      %v1119 = vpack.c.b16 %v975, %v966
      %v1120 = vpack.c.b16 %v976, %v967
      %v1121 = vpack.c.b16 %v977, %v968
      %v1122 = vpack.c.b16 %v978, %v969
      %v1123 = vpack.c.b16 %v979, %v970
      %v1124 = vpack.c.b16 %v980, %v971
      %v1125 = vpack.c.b16 %v981, %v972
      %v1414 = vunpack.c.l.b16 %v386
      %v1415 = vunpack.c.l.b16 %v387
      %v1416 = vunpack.c.l.b16 %v388
      %v1417 = vunpack.c.l.b16 %v389
      %v1418 = vunpack.c.l.b16 %v390
      %v1419 = vunpack.c.l.b16 %v391
      %v1420 = vunpack.c.l.b16 %v392
      %v1421 = vunpack.c.l.b16 %v393
      %v1422 = vunpack.c.l.b16 %v394
      %v1423 = vunpack.c.l.b16 %v395
      %v1424 = vunpack.c.l.b16 %v396
      %v1425 = vunpack.c.l.b16 %v397
      %v1426 = vunpack.c.l.b16 %v398
      %v1427 = vunpack.c.l.b16 %v399
      %v1428 = vunpack.c.l.b16 %v400
      %v1429 = vunpack.c.l.b16 %v401
      %v1430 = vunpack.c.l.b16 %v402
      %v1431 = vunpack.c.l.b16 %v403
      %v1432 = vunpack.c.l.b16 %v404
      %v1433 = vunpack.c.l.b16 %v405
      %v1434 = vunpack.c.l.b16 %v406
      %v1435 = vunpack.c.l.b16 %v407
      %v1436 = vunpack.c.l.b16 %v408
      %v1437 = vunpack.c.l.b16 %v409
      %v1438 = vunpack.c.l.b16 %v410
      %v1439 = vunpack.c.l.b16 %v411
      %v1440 = vunpack.c.l.b16 %v412
      %v1441 = vunpack.c.l.b16 %v413
      %v1442 = vunpack.c.l.b16 %v414
      %v1443 = vunpack.c.l.b16 %v415
      %v1444 = vunpack.c.l.b16 %v416
      %v1445 = vunpack.c.l.b16 %v417
      %v1446 = vunpack.c.l.b16 %v418
      %v1447 = vunpack.c.l.b16 %v419
      %v1448 = vunpack.c.l.b16 %v420
      %v1449 = vunpack.c.l.b16 %v421
      %v1450 = vunpack.c.l.b16 %v422
      %v1451 = vunpack.c.l.b16 %v423
      %v1452 = vunpack.c.l.b16 %v424
      %v1453 = vunpack.c.l.b16 %v425
      %v1454 = vunpack.c.l.b16 %v426
      %v1455 = vunpack.c.l.b16 %v427
      %v1456 = vunpack.c.l.b16 %v428
      %v1457 = vunpack.c.l.b16 %v429
      %v1458 = vunpack.c.l.b16 %v430
      %v1459 = vunpack.c.l.b16 %v431
      %v1460 = vunpack.c.l.b16 %v432
      %v1461 = vunpack.c.l.b16 %v433
      %v1462 = vunpack.c.l.b16 %v434
      %v1463 = vunpack.c.l.b16 %v435
      %v1464 = vunpack.c.l.b16 %v436
      %v1465 = vunpack.c.l.b16 %v437
      %v1466 = vunpack.c.l.b16 %v438
      %v1467 = vunpack.c.l.b16 %v439
      %v1468 = vunpack.c.l.b16 %v440
      %v1469 = vunpack.c.l.b16 %v441
      %v1470 = vunpack.c.l.b16 %v442
      %v1471 = vunpack.c.l.b16 %v443
      %v1472 = vunpack.c.l.b16 %v444
      %v1473 = vunpack.c.l.b16 %v445
      %v1474 = vunpack.c.l.b16 %v446
      %v1475 = vunpack.c.l.b16 %v447
      %v1476 = vunpack.c.l.b16 %v448
      %v1477 = vunpack.c.l.b16 %v449
      %v1478 = vunpack.c.l.b16 %v450
      %v1479 = vunpack.c.l.b16 %v451
      %v1480 = vunpack.c.l.b16 %v452
      %v1481 = vunpack.c.l.b16 %v453
      %v1482 = vunpack.c.l.b16 %v454
      %v1483 = vunpack.c.l.b16 %v455
      %v1484 = vunpack.c.l.b16 %v456
      %v1485 = vunpack.c.l.b16 %v457
      %v1486 = vunpack.c.l.b16 %v458
      %v1487 = vunpack.c.l.b16 %v459
      %v1488 = vunpack.c.l.b16 %v460
      %v1489 = vunpack.c.l.b16 %v461
      %v1490 = vunpack.c.l.b16 %v462
      %v1491 = vunpack.c.l.b16 %v463
      %v1492 = vunpack.c.l.b16 %v464
      %v1493 = vunpack.c.l.b16 %v465
      %v1494 = vunpack.c.l.b16 %v466
      %v1495 = vunpack.c.l.b16 %v467
      %v1496 = vunpack.c.l.b16 %v468
      %v1497 = vunpack.c.l.b16 %v469
      %v1498 = vunpack.c.l.b16 %v470
      %v1499 = vunpack.c.l.b16 %v471
      %v1500 = vunpack.c.l.b16 %v472
      %v1501 = vunpack.c.l.b16 %v473
      %v1502 = vunpack.c.l.b16 %v474
      %v1503 = vunpack.c.l.b16 %v475
      %v1504 = vunpack.c.l.b16 %v476
      %v1505 = vunpack.c.l.b16 %v477
      %v1506 = vunpack.c.l.b16 %v478
      %v1507 = vunpack.c.l.b16 %v479
      %v1508 = vunpack.c.l.b16 %v480
      %v1509 = vunpack.c.l.b16 %v481
      %v1510 = vunpack.c.l.b16 %v482
      %v1511 = vunpack.c.l.b16 %v483
      %v1512 = vunpack.c.l.b16 %v484
      %v1513 = vunpack.c.l.b16 %v485
      %v1514 = vunpack.c.l.b16 %v486
      %v1515 = vunpack.c.l.b16 %v487
      %v1516 = vunpack.c.l.b16 %v488
      %v1517 = vunpack.c.l.b16 %v489
      %v1518 = vunpack.c.l.b16 %v490
      %v1519 = vunpack.c.l.b16 %v491
      %v1520 = vunpack.c.l.b16 %v492
      %v1521 = vunpack.c.l.b16 %v493
      %v1522 = vunpack.c.l.b16 %v494
      %v1523 = vunpack.c.l.b16 %v495
      %v1524 = vunpack.c.l.b16 %v496
      %v1525 = vunpack.c.l.b16 %v497
      %v1526 = vunpack.c.l.b16 %v498
      %v1527 = vunpack.c.l.b16 %v499
      %v1528 = vunpack.c.l.b16 %v500
      %v1529 = vunpack.c.l.b16 %v501
      %v1530 = vunpack.c.l.b16 %v502
      %v1531 = vunpack.c.l.b16 %v503
      %v1532 = vunpack.c.l.b16 %v504
      %v1533 = vunpack.c.l.b16 %v505
      %v1534 = vunpack.c.l.b16 %v506
      %v1535 = vunpack.c.l.b16 %v507
      %v1536 = vunpack.c.l.b16 %v508
      %v1537 = vunpack.c.l.b16 %v509
      %v1538 = vunpack.c.l.b16 %v510
      %v1539 = vunpack.c.l.b16 %v511
      %v1540 = vunpack.c.l.b16 %v512
      %v1541 = vunpack.c.l.b16 %v513
      %v1542 = vunpack.c.l.b16 %v514
      %v1543 = vunpack.c.l.b16 %v515
      %v1544 = vunpack.c.l.b16 %v516
      %v1545 = vunpack.c.l.b16 %v517
      %v1546 = vunpack.c.l.b16 %v518
      %v1547 = vunpack.c.l.b16 %v519
      %v1548 = vunpack.c.l.b16 %v520
      %v1549 = vunpack.c.l.b16 %v521
      %v1550 = vunpack.c.l.b16 %v522
      %v1551 = vunpack.c.l.b16 %v523
      %v1552 = vunpack.c.l.b16 %v524
      %v1553 = vunpack.c.l.b16 %v525
      %v1554 = vunpack.c.l.b16 %v526
      %v1555 = vunpack.c.l.b16 %v527
      %v1556 = vunpack.c.l.b16 %v528
      %v1557 = vunpack.c.l.b16 %v529
      %v1558 = vpack.c.b16 %v1415, %v1414
      %v1559 = vpack.c.b16 %v1417, %v1416
      %v1560 = vpack.c.b16 %v1419, %v1418
      %v1561 = vpack.c.b16 %v1421, %v1420
      %v1562 = vpack.c.b16 %v1423, %v1422
      %v1563 = vpack.c.b16 %v1425, %v1424
      %v1564 = vpack.c.b16 %v1427, %v1426
      %v1565 = vpack.c.b16 %v1429, %v1428
      %v1566 = vpack.c.b16 %v1431, %v1430
      %v1567 = vpack.c.b16 %v1433, %v1432
      %v1568 = vpack.c.b16 %v1435, %v1434
      %v1569 = vpack.c.b16 %v1437, %v1436
      %v1570 = vpack.c.b16 %v1439, %v1438
      %v1571 = vpack.c.b16 %v1441, %v1440
      %v1572 = vpack.c.b16 %v1443, %v1442
      %v1573 = vpack.c.b16 %v1445, %v1444
      %v1574 = vpack.c.b16 %v1447, %v1446
      %v1575 = vpack.c.b16 %v1449, %v1448
      %v1576 = vpack.c.b16 %v1451, %v1450
      %v1577 = vpack.c.b16 %v1453, %v1452
      %v1578 = vpack.c.b16 %v1455, %v1454
      %v1579 = vpack.c.b16 %v1457, %v1456
      %v1580 = vpack.c.b16 %v1459, %v1458
      %v1581 = vpack.c.b16 %v1461, %v1460
      %v1582 = vpack.c.b16 %v1463, %v1462
      %v1583 = vpack.c.b16 %v1465, %v1464
      %v1584 = vpack.c.b16 %v1467, %v1466
      %v1585 = vpack.c.b16 %v1469, %v1468
      %v1586 = vpack.c.b16 %v1471, %v1470
      %v1587 = vpack.c.b16 %v1473, %v1472
      %v1588 = vpack.c.b16 %v1475, %v1474
      %v1589 = vpack.c.b16 %v1477, %v1476
      %v1590 = vpack.c.b16 %v1479, %v1478
      %v1591 = vpack.c.b16 %v1481, %v1480
      %v1592 = vpack.c.b16 %v1483, %v1482
      %v1593 = vpack.c.b16 %v1485, %v1484
      %v1594 = vpack.c.b16 %v1487, %v1486
      %v1595 = vpack.c.b16 %v1489, %v1488
      %v1596 = vpack.c.b16 %v1491, %v1490
      %v1597 = vpack.c.b16 %v1493, %v1492
      %v1598 = vpack.c.b16 %v1495, %v1494
      %v1599 = vpack.c.b16 %v1497, %v1496
      %v1600 = vpack.c.b16 %v1499, %v1498
      %v1601 = vpack.c.b16 %v1501, %v1500
      %v1602 = vpack.c.b16 %v1503, %v1502
      %v1603 = vpack.c.b16 %v1505, %v1504
      %v1604 = vpack.c.b16 %v1507, %v1506
      %v1605 = vpack.c.b16 %v1509, %v1508
      %v1606 = vpack.c.b16 %v1511, %v1510
      %v1607 = vpack.c.b16 %v1513, %v1512
      %v1608 = vpack.c.b16 %v1515, %v1514
      %v1609 = vpack.c.b16 %v1517, %v1516
      %v1610 = vpack.c.b16 %v1519, %v1518
      %v1611 = vpack.c.b16 %v1521, %v1520
      %v1612 = vpack.c.b16 %v1523, %v1522
      %v1613 = vpack.c.b16 %v1525, %v1524
      %v1614 = vpack.c.b16 %v1527, %v1526
      %v1615 = vpack.c.b16 %v1529, %v1528
      %v1616 = vpack.c.b16 %v1531, %v1530
      %v1617 = vpack.c.b16 %v1533, %v1532
      %v1618 = vpack.c.b16 %v1535, %v1534
      %v1619 = vpack.c.b16 %v1537, %v1536
      %v1620 = vpack.c.b16 %v1539, %v1538
      %v1621 = vpack.c.b16 %v1541, %v1540
      %v1622 = vpack.c.b16 %v1543, %v1542
      %v1623 = vpack.c.b16 %v1545, %v1544
      %v1624 = vpack.c.b16 %v1547, %v1546
      %v1625 = vpack.c.b16 %v1549, %v1548
      %v1626 = vpack.c.b16 %v1551, %v1550
      %v1627 = vpack.c.b16 %v1553, %v1552
      %v1628 = vpack.c.b16 %v1555, %v1554
      %v1629 = vpack.c.b16 %v1557, %v1556
      %1702 = vmatpush.bf16.msra.mxu0 %v1565
      %1703 = vmatpush.bf16.msra.mxu0 %v1564
      %1704 = vmatpush.bf16.msra.mxu0 %v1563
      %1705 = vmatpush.bf16.msra.mxu0 %v1562
      %1706 = vmatpush.bf16.msra.mxu0 %v1561
      %1707 = vmatpush.bf16.msra.mxu0 %v1560
      %1708 = vmatpush.bf16.msra.mxu0 %v1559
      %1709 = vmatpush.bf16.msra.mxu0 %v1558
      %1710 = vmatmul.bf16.gmra.mxu0 %v982
      %v1711 = vpop.f32.mrf.mxu0
      %v1712 = vadd.f32 %v532, %v1711
      %v1713 = vpop.f32.mrf.mxu0
      %v1714 = vadd.f32 %v532, %v1713
      %1715 = vmatmul.bf16.gmra.mxu0 %v991
      %v1716 = vpop.f32.mrf.mxu0
      %v1717 = vadd.f32 %v532, %v1716
      %v1718 = vpop.f32.mrf.mxu0
      %v1719 = vadd.f32 %v532, %v1718
      %1720 = vmatmul.bf16.gmra.mxu0 %v1000
      %v1721 = vpop.f32.mrf.mxu0
      %v1722 = vadd.f32 %v532, %v1721
      %v1723 = vpop.f32.mrf.mxu0
      %v1724 = vadd.f32 %v532, %v1723
      %1725 = vmatmul.bf16.gmra.mxu0 %v1009
      %v1726 = vpop.f32.mrf.mxu0
      %v1727 = vadd.f32 %v532, %v1726
      %v1728 = vpop.f32.mrf.mxu0
      %v1729 = vadd.f32 %v532, %v1728
      %1730 = vmatmul.bf16.gmra.mxu0 %v1018
      %v1731 = vpop.f32.mrf.mxu0
      %v1732 = vadd.f32 %v532, %v1731
      %v1733 = vpop.f32.mrf.mxu0
      %v1734 = vadd.f32 %v532, %v1733
      %1735 = vmatmul.bf16.gmra.mxu0 %v1027
      %v1736 = vpop.f32.mrf.mxu0
      %v1737 = vadd.f32 %v532, %v1736
      %v1738 = vpop.f32.mrf.mxu0
      %v1739 = vadd.f32 %v532, %v1738
      %1740 = vmatmul.bf16.gmra.mxu0 %v1036
      %v1741 = vpop.f32.mrf.mxu0
      %v1742 = vadd.f32 %v532, %v1741
      %v1743 = vpop.f32.mrf.mxu0
      %v1744 = vadd.f32 %v532, %v1743
      %1745 = vmatmul.bf16.gmra.mxu0 %v1045
      %v1746 = vpop.f32.mrf.mxu0
      %v1747 = vadd.f32 %v532, %v1746
      %v1748 = vpop.f32.mrf.mxu0
      %v1749 = vadd.f32 %v532, %v1748
      %1750 = vmatmul.bf16.gmra.mxu0 %v1054
      %v1751 = vpop.f32.mrf.mxu0
      %v1752 = vadd.f32 %v532, %v1751
      %v1753 = vpop.f32.mrf.mxu0
      %v1754 = vadd.f32 %v532, %v1753
      %1755 = vmatmul.bf16.gmra.mxu0 %v1063
      %v1756 = vpop.f32.mrf.mxu0
      %v1757 = vadd.f32 %v532, %v1756
      %v1758 = vpop.f32.mrf.mxu0
      %v1759 = vadd.f32 %v532, %v1758
      %1760 = vmatmul.bf16.gmra.mxu0 %v1072
      %v1761 = vpop.f32.mrf.mxu0
      %v1762 = vadd.f32 %v532, %v1761
      %v1763 = vpop.f32.mrf.mxu0
      %v1764 = vadd.f32 %v532, %v1763
      %1765 = vmatmul.bf16.gmra.mxu0 %v1081
      %v1766 = vpop.f32.mrf.mxu0
      %v1767 = vadd.f32 %v532, %v1766
      %v1768 = vpop.f32.mrf.mxu0
      %v1769 = vadd.f32 %v532, %v1768
      %1770 = vmatmul.bf16.gmra.mxu0 %v1090
      %v1771 = vpop.f32.mrf.mxu0
      %v1772 = vadd.f32 %v532, %v1771
      %v1773 = vpop.f32.mrf.mxu0
      %v1774 = vadd.f32 %v532, %v1773
      %1775 = vmatmul.bf16.gmra.mxu0 %v1099
      %v1776 = vpop.f32.mrf.mxu0
      %v1777 = vadd.f32 %v532, %v1776
      %v1778 = vpop.f32.mrf.mxu0
      %v1779 = vadd.f32 %v532, %v1778
      %1780 = vmatmul.bf16.gmra.mxu0 %v1108
      %v1781 = vpop.f32.mrf.mxu0
      %v1782 = vadd.f32 %v532, %v1781
      %v1783 = vpop.f32.mrf.mxu0
      %v1784 = vadd.f32 %v532, %v1783
      %1785 = vmatmul.bf16.gmra.mxu0 %v1117
      %v1786 = vpop.f32.mrf.mxu0
      %v1787 = vadd.f32 %v532, %v1786
      %v1788 = vpop.f32.mrf.mxu0
      %v1789 = vadd.f32 %v532, %v1788
      %1790 = vdwg.mxu0
      %1791 = vmatpush.bf16.msra.mxu0 %v1573
      %1792 = vmatpush.bf16.msra.mxu0 %v1572
      %1793 = vmatpush.bf16.msra.mxu0 %v1571
      %1794 = vmatpush.bf16.msra.mxu0 %v1570
      %1795 = vmatpush.bf16.msra.mxu0 %v1569
      %1796 = vmatpush.bf16.msra.mxu0 %v1568
      %1797 = vmatpush.bf16.msra.mxu0 %v1567
      %1798 = vmatpush.bf16.msra.mxu0 %v1566
      %1799 = vmatmul.bf16.gmra.mxu0 %v983
      %v1800 = vpop.f32.mrf.mxu0
      %v1801 = vadd.f32 %v1712, %v1800
      %v1802 = vpop.f32.mrf.mxu0
      %v1803 = vadd.f32 %v1714, %v1802
      %1804 = vmatmul.bf16.gmra.mxu0 %v992
      %v1805 = vpop.f32.mrf.mxu0
      %v1806 = vadd.f32 %v1717, %v1805
      %v1807 = vpop.f32.mrf.mxu0
      %v1808 = vadd.f32 %v1719, %v1807
      %1809 = vmatmul.bf16.gmra.mxu0 %v1001
      %v1810 = vpop.f32.mrf.mxu0
      %v1811 = vadd.f32 %v1722, %v1810
      %v1812 = vpop.f32.mrf.mxu0
      %v1813 = vadd.f32 %v1724, %v1812
      %1814 = vmatmul.bf16.gmra.mxu0 %v1010
      %v1815 = vpop.f32.mrf.mxu0
      %v1816 = vadd.f32 %v1727, %v1815
      %v1817 = vpop.f32.mrf.mxu0
      %v1818 = vadd.f32 %v1729, %v1817
      %1819 = vmatmul.bf16.gmra.mxu0 %v1019
      %v1820 = vpop.f32.mrf.mxu0
      %v1821 = vadd.f32 %v1732, %v1820
      %v1822 = vpop.f32.mrf.mxu0
      %v1823 = vadd.f32 %v1734, %v1822
      %1824 = vmatmul.bf16.gmra.mxu0 %v1028
      %v1825 = vpop.f32.mrf.mxu0
      %v1826 = vadd.f32 %v1737, %v1825
      %v1827 = vpop.f32.mrf.mxu0
      %v1828 = vadd.f32 %v1739, %v1827
      %1829 = vmatmul.bf16.gmra.mxu0 %v1037
      %v1830 = vpop.f32.mrf.mxu0
      %v1831 = vadd.f32 %v1742, %v1830
      %v1832 = vpop.f32.mrf.mxu0
      %v1833 = vadd.f32 %v1744, %v1832
      %1834 = vmatmul.bf16.gmra.mxu0 %v1046
      %v1835 = vpop.f32.mrf.mxu0
      %v1836 = vadd.f32 %v1747, %v1835
      %v1837 = vpop.f32.mrf.mxu0
      %v1838 = vadd.f32 %v1749, %v1837
      %1839 = vmatmul.bf16.gmra.mxu0 %v1055
      %v1840 = vpop.f32.mrf.mxu0
      %v1841 = vadd.f32 %v1752, %v1840
      %v1842 = vpop.f32.mrf.mxu0
      %v1843 = vadd.f32 %v1754, %v1842
      %1844 = vmatmul.bf16.gmra.mxu0 %v1064
      %v1845 = vpop.f32.mrf.mxu0
      %v1846 = vadd.f32 %v1757, %v1845
      %v1847 = vpop.f32.mrf.mxu0
      %v1848 = vadd.f32 %v1759, %v1847
      %1849 = vmatmul.bf16.gmra.mxu0 %v1073
      %v1850 = vpop.f32.mrf.mxu0
      %v1851 = vadd.f32 %v1762, %v1850
      %v1852 = vpop.f32.mrf.mxu0
      %v1853 = vadd.f32 %v1764, %v1852
      %1854 = vmatmul.bf16.gmra.mxu0 %v1082
      %v1855 = vpop.f32.mrf.mxu0
      %v1856 = vadd.f32 %v1767, %v1855
      %v1857 = vpop.f32.mrf.mxu0
      %v1858 = vadd.f32 %v1769, %v1857
      %1859 = vmatmul.bf16.gmra.mxu0 %v1091
      %v1860 = vpop.f32.mrf.mxu0
      %v1861 = vadd.f32 %v1772, %v1860
      %v1862 = vpop.f32.mrf.mxu0
      %v1863 = vadd.f32 %v1774, %v1862
      %1864 = vmatmul.bf16.gmra.mxu0 %v1100
      %v1865 = vpop.f32.mrf.mxu0
      %v1866 = vadd.f32 %v1777, %v1865
      %v1867 = vpop.f32.mrf.mxu0
      %v1868 = vadd.f32 %v1779, %v1867
      %1869 = vmatmul.bf16.gmra.mxu0 %v1109
      %v1870 = vpop.f32.mrf.mxu0
      %v1871 = vadd.f32 %v1782, %v1870
      %v1872 = vpop.f32.mrf.mxu0
      %v1873 = vadd.f32 %v1784, %v1872
      %1874 = vmatmul.bf16.gmra.mxu0 %v1118
      %v1875 = vpop.f32.mrf.mxu0
      %v1876 = vadd.f32 %v1787, %v1875
      %v1877 = vpop.f32.mrf.mxu0
      %v1878 = vadd.f32 %v1789, %v1877
      %1879 = vdwg.mxu0
      %1880 = vmatpush.bf16.msra.mxu0 %v1581
      %1881 = vmatpush.bf16.msra.mxu0 %v1580
      %1882 = vmatpush.bf16.msra.mxu0 %v1579
      %1883 = vmatpush.bf16.msra.mxu0 %v1578
      %1884 = vmatpush.bf16.msra.mxu0 %v1577
      %1885 = vmatpush.bf16.msra.mxu0 %v1576
      %1886 = vmatpush.bf16.msra.mxu0 %v1575
      %1887 = vmatpush.bf16.msra.mxu0 %v1574
      %1888 = vmatmul.bf16.gmra.mxu0 %v984
      %v1889 = vpop.f32.mrf.mxu0
      %v1890 = vadd.f32 %v1801, %v1889
      %v1891 = vpop.f32.mrf.mxu0
      %v1892 = vadd.f32 %v1803, %v1891
      %1893 = vmatmul.bf16.gmra.mxu0 %v993
      %v1894 = vpop.f32.mrf.mxu0
      %v1895 = vadd.f32 %v1806, %v1894
      %v1896 = vpop.f32.mrf.mxu0
      %v1897 = vadd.f32 %v1808, %v1896
      %1898 = vmatmul.bf16.gmra.mxu0 %v1002
      %v1899 = vpop.f32.mrf.mxu0
      %v1900 = vadd.f32 %v1811, %v1899
      %v1901 = vpop.f32.mrf.mxu0
      %v1902 = vadd.f32 %v1813, %v1901
      %1903 = vmatmul.bf16.gmra.mxu0 %v1011
      %v1904 = vpop.f32.mrf.mxu0
      %v1905 = vadd.f32 %v1816, %v1904
      %v1906 = vpop.f32.mrf.mxu0
      %v1907 = vadd.f32 %v1818, %v1906
      %1908 = vmatmul.bf16.gmra.mxu0 %v1020
      %v1909 = vpop.f32.mrf.mxu0
      %v1910 = vadd.f32 %v1821, %v1909
      %v1911 = vpop.f32.mrf.mxu0
      %v1912 = vadd.f32 %v1823, %v1911
      %1913 = vmatmul.bf16.gmra.mxu0 %v1029
      %v1914 = vpop.f32.mrf.mxu0
      %v1915 = vadd.f32 %v1826, %v1914
      %v1916 = vpop.f32.mrf.mxu0
      %v1917 = vadd.f32 %v1828, %v1916
      %1918 = vmatmul.bf16.gmra.mxu0 %v1038
      %v1919 = vpop.f32.mrf.mxu0
      %v1920 = vadd.f32 %v1831, %v1919
      %v1921 = vpop.f32.mrf.mxu0
      %v1922 = vadd.f32 %v1833, %v1921
      %1923 = vmatmul.bf16.gmra.mxu0 %v1047
      %v1924 = vpop.f32.mrf.mxu0
      %v1925 = vadd.f32 %v1836, %v1924
      %v1926 = vpop.f32.mrf.mxu0
      %v1927 = vadd.f32 %v1838, %v1926
      %1928 = vmatmul.bf16.gmra.mxu0 %v1056
      %v1929 = vpop.f32.mrf.mxu0
      %v1930 = vadd.f32 %v1841, %v1929
      %v1931 = vpop.f32.mrf.mxu0
      %v1932 = vadd.f32 %v1843, %v1931
      %1933 = vmatmul.bf16.gmra.mxu0 %v1065
      %v1934 = vpop.f32.mrf.mxu0
      %v1935 = vadd.f32 %v1846, %v1934
      %v1936 = vpop.f32.mrf.mxu0
      %v1937 = vadd.f32 %v1848, %v1936
      %1938 = vmatmul.bf16.gmra.mxu0 %v1074
      %v1939 = vpop.f32.mrf.mxu0
      %v1940 = vadd.f32 %v1851, %v1939
      %v1941 = vpop.f32.mrf.mxu0
      %v1942 = vadd.f32 %v1853, %v1941
      %1943 = vmatmul.bf16.gmra.mxu0 %v1083
      %v1944 = vpop.f32.mrf.mxu0
      %v1945 = vadd.f32 %v1856, %v1944
      %v1946 = vpop.f32.mrf.mxu0
      %v1947 = vadd.f32 %v1858, %v1946
      %1948 = vmatmul.bf16.gmra.mxu0 %v1092
      %v1949 = vpop.f32.mrf.mxu0
      %v1950 = vadd.f32 %v1861, %v1949
      %v1951 = vpop.f32.mrf.mxu0
      %v1952 = vadd.f32 %v1863, %v1951
      %1953 = vmatmul.bf16.gmra.mxu0 %v1101
      %v1954 = vpop.f32.mrf.mxu0
      %v1955 = vadd.f32 %v1866, %v1954
      %v1956 = vpop.f32.mrf.mxu0
      %v1957 = vadd.f32 %v1868, %v1956
      %1958 = vmatmul.bf16.gmra.mxu0 %v1110
      %v1959 = vpop.f32.mrf.mxu0
      %v1960 = vadd.f32 %v1871, %v1959
      %v1961 = vpop.f32.mrf.mxu0
      %v1962 = vadd.f32 %v1873, %v1961
      %1963 = vmatmul.bf16.gmra.mxu0 %v1119
      %v1964 = vpop.f32.mrf.mxu0
      %v1965 = vadd.f32 %v1876, %v1964
      %v1966 = vpop.f32.mrf.mxu0
      %v1967 = vadd.f32 %v1878, %v1966
      %1968 = vdwg.mxu0
      %1969 = vmatpush.bf16.msra.mxu0 %v1589
      %1970 = vmatpush.bf16.msra.mxu0 %v1588
      %1971 = vmatpush.bf16.msra.mxu0 %v1587
      %1972 = vmatpush.bf16.msra.mxu0 %v1586
      %1973 = vmatpush.bf16.msra.mxu0 %v1585
      %1974 = vmatpush.bf16.msra.mxu0 %v1584
      %1975 = vmatpush.bf16.msra.mxu0 %v1583
      %1976 = vmatpush.bf16.msra.mxu0 %v1582
      %1977 = vmatmul.bf16.gmra.mxu0 %v985
      %v1978 = vpop.f32.mrf.mxu0
      %v1979 = vadd.f32 %v1890, %v1978
      %v1980 = vpop.f32.mrf.mxu0
      %v1981 = vadd.f32 %v1892, %v1980
      %1982 = vmatmul.bf16.gmra.mxu0 %v994
      %v1983 = vpop.f32.mrf.mxu0
      %v1984 = vadd.f32 %v1895, %v1983
      %v1985 = vpop.f32.mrf.mxu0
      %v1986 = vadd.f32 %v1897, %v1985
      %1987 = vmatmul.bf16.gmra.mxu0 %v1003
      %v1988 = vpop.f32.mrf.mxu0
      %v1989 = vadd.f32 %v1900, %v1988
      %v1990 = vpop.f32.mrf.mxu0
      %v1991 = vadd.f32 %v1902, %v1990
      %1992 = vmatmul.bf16.gmra.mxu0 %v1012
      %v1993 = vpop.f32.mrf.mxu0
      %v1994 = vadd.f32 %v1905, %v1993
      %v1995 = vpop.f32.mrf.mxu0
      %v1996 = vadd.f32 %v1907, %v1995
      %1997 = vmatmul.bf16.gmra.mxu0 %v1021
      %v1998 = vpop.f32.mrf.mxu0
      %v1999 = vadd.f32 %v1910, %v1998
      %v2000 = vpop.f32.mrf.mxu0
      %v2001 = vadd.f32 %v1912, %v2000
      %2002 = vmatmul.bf16.gmra.mxu0 %v1030
      %v2003 = vpop.f32.mrf.mxu0
      %v2004 = vadd.f32 %v1915, %v2003
      %v2005 = vpop.f32.mrf.mxu0
      %v2006 = vadd.f32 %v1917, %v2005
      %2007 = vmatmul.bf16.gmra.mxu0 %v1039
      %v2008 = vpop.f32.mrf.mxu0
      %v2009 = vadd.f32 %v1920, %v2008
      %v2010 = vpop.f32.mrf.mxu0
      %v2011 = vadd.f32 %v1922, %v2010
      %2012 = vmatmul.bf16.gmra.mxu0 %v1048
      %v2013 = vpop.f32.mrf.mxu0
      %v2014 = vadd.f32 %v1925, %v2013
      %v2015 = vpop.f32.mrf.mxu0
      %v2016 = vadd.f32 %v1927, %v2015
      %2017 = vmatmul.bf16.gmra.mxu0 %v1057
      %v2018 = vpop.f32.mrf.mxu0
      %v2019 = vadd.f32 %v1930, %v2018
      %v2020 = vpop.f32.mrf.mxu0
      %v2021 = vadd.f32 %v1932, %v2020
      %2022 = vmatmul.bf16.gmra.mxu0 %v1066
      %v2023 = vpop.f32.mrf.mxu0
      %v2024 = vadd.f32 %v1935, %v2023
      %v2025 = vpop.f32.mrf.mxu0
      %v2026 = vadd.f32 %v1937, %v2025
      %2027 = vmatmul.bf16.gmra.mxu0 %v1075
      %v2028 = vpop.f32.mrf.mxu0
      %v2029 = vadd.f32 %v1940, %v2028
      %v2030 = vpop.f32.mrf.mxu0
      %v2031 = vadd.f32 %v1942, %v2030
      %2032 = vmatmul.bf16.gmra.mxu0 %v1084
      %v2033 = vpop.f32.mrf.mxu0
      %v2034 = vadd.f32 %v1945, %v2033
      %v2035 = vpop.f32.mrf.mxu0
      %v2036 = vadd.f32 %v1947, %v2035
      %2037 = vmatmul.bf16.gmra.mxu0 %v1093
      %v2038 = vpop.f32.mrf.mxu0
      %v2039 = vadd.f32 %v1950, %v2038
      %v2040 = vpop.f32.mrf.mxu0
      %v2041 = vadd.f32 %v1952, %v2040
      %2042 = vmatmul.bf16.gmra.mxu0 %v1102
      %v2043 = vpop.f32.mrf.mxu0
      %v2044 = vadd.f32 %v1955, %v2043
      %v2045 = vpop.f32.mrf.mxu0
      %v2046 = vadd.f32 %v1957, %v2045
      %2047 = vmatmul.bf16.gmra.mxu0 %v1111
      %v2048 = vpop.f32.mrf.mxu0
      %v2049 = vadd.f32 %v1960, %v2048
      %v2050 = vpop.f32.mrf.mxu0
      %v2051 = vadd.f32 %v1962, %v2050
      %2052 = vmatmul.bf16.gmra.mxu0 %v1120
      %v2053 = vpop.f32.mrf.mxu0
      %v2054 = vadd.f32 %v1965, %v2053
      %v2055 = vpop.f32.mrf.mxu0
      %v2056 = vadd.f32 %v1967, %v2055
      %2057 = vdwg.mxu0
      %2058 = vmatpush.bf16.msra.mxu0 %v1597
      %2059 = vmatpush.bf16.msra.mxu0 %v1596
      %2060 = vmatpush.bf16.msra.mxu0 %v1595
      %2061 = vmatpush.bf16.msra.mxu0 %v1594
      %2062 = vmatpush.bf16.msra.mxu0 %v1593
      %2063 = vmatpush.bf16.msra.mxu0 %v1592
      %2064 = vmatpush.bf16.msra.mxu0 %v1591
      %2065 = vmatpush.bf16.msra.mxu0 %v1590
      %2066 = vmatmul.bf16.gmra.mxu0 %v986
      %v2067 = vpop.f32.mrf.mxu0
      %v2068 = vadd.f32 %v1979, %v2067
      %v2069 = vpop.f32.mrf.mxu0
      %v2070 = vadd.f32 %v1981, %v2069
      %2071 = vmatmul.bf16.gmra.mxu0 %v995
      %v2072 = vpop.f32.mrf.mxu0
      %v2073 = vadd.f32 %v1984, %v2072
      %v2074 = vpop.f32.mrf.mxu0
      %v2075 = vadd.f32 %v1986, %v2074
      %2076 = vmatmul.bf16.gmra.mxu0 %v1004
      %v2077 = vpop.f32.mrf.mxu0
      %v2078 = vadd.f32 %v1989, %v2077
      %v2079 = vpop.f32.mrf.mxu0
      %v2080 = vadd.f32 %v1991, %v2079
      %2081 = vmatmul.bf16.gmra.mxu0 %v1013
      %v2082 = vpop.f32.mrf.mxu0
      %v2083 = vadd.f32 %v1994, %v2082
      %v2084 = vpop.f32.mrf.mxu0
      %v2085 = vadd.f32 %v1996, %v2084
      %2086 = vmatmul.bf16.gmra.mxu0 %v1022
      %v2087 = vpop.f32.mrf.mxu0
      %v2088 = vadd.f32 %v1999, %v2087
      %v2089 = vpop.f32.mrf.mxu0
      %v2090 = vadd.f32 %v2001, %v2089
      %2091 = vmatmul.bf16.gmra.mxu0 %v1031
      %v2092 = vpop.f32.mrf.mxu0
      %v2093 = vadd.f32 %v2004, %v2092
      %v2094 = vpop.f32.mrf.mxu0
      %v2095 = vadd.f32 %v2006, %v2094
      %2096 = vmatmul.bf16.gmra.mxu0 %v1040
      %v2097 = vpop.f32.mrf.mxu0
      %v2098 = vadd.f32 %v2009, %v2097
      %v2099 = vpop.f32.mrf.mxu0
      %v2100 = vadd.f32 %v2011, %v2099
      %2101 = vmatmul.bf16.gmra.mxu0 %v1049
      %v2102 = vpop.f32.mrf.mxu0
      %v2103 = vadd.f32 %v2014, %v2102
      %v2104 = vpop.f32.mrf.mxu0
      %v2105 = vadd.f32 %v2016, %v2104
      %2106 = vmatmul.bf16.gmra.mxu0 %v1058
      %v2107 = vpop.f32.mrf.mxu0
      %v2108 = vadd.f32 %v2019, %v2107
      %v2109 = vpop.f32.mrf.mxu0
      %v2110 = vadd.f32 %v2021, %v2109
      %2111 = vmatmul.bf16.gmra.mxu0 %v1067
      %v2112 = vpop.f32.mrf.mxu0
      %v2113 = vadd.f32 %v2024, %v2112
      %v2114 = vpop.f32.mrf.mxu0
      %v2115 = vadd.f32 %v2026, %v2114
      %2116 = vmatmul.bf16.gmra.mxu0 %v1076
      %v2117 = vpop.f32.mrf.mxu0
      %v2118 = vadd.f32 %v2029, %v2117
      %v2119 = vpop.f32.mrf.mxu0
      %v2120 = vadd.f32 %v2031, %v2119
      %2121 = vmatmul.bf16.gmra.mxu0 %v1085
      %v2122 = vpop.f32.mrf.mxu0
      %v2123 = vadd.f32 %v2034, %v2122
      %v2124 = vpop.f32.mrf.mxu0
      %v2125 = vadd.f32 %v2036, %v2124
      %2126 = vmatmul.bf16.gmra.mxu0 %v1094
      %v2127 = vpop.f32.mrf.mxu0
      %v2128 = vadd.f32 %v2039, %v2127
      %v2129 = vpop.f32.mrf.mxu0
      %v2130 = vadd.f32 %v2041, %v2129
      %2131 = vmatmul.bf16.gmra.mxu0 %v1103
      %v2132 = vpop.f32.mrf.mxu0
      %v2133 = vadd.f32 %v2044, %v2132
      %v2134 = vpop.f32.mrf.mxu0
      %v2135 = vadd.f32 %v2046, %v2134
      %2136 = vmatmul.bf16.gmra.mxu0 %v1112
      %v2137 = vpop.f32.mrf.mxu0
      %v2138 = vadd.f32 %v2049, %v2137
      %v2139 = vpop.f32.mrf.mxu0
      %v2140 = vadd.f32 %v2051, %v2139
      %2141 = vmatmul.bf16.gmra.mxu0 %v1121
      %v2142 = vpop.f32.mrf.mxu0
      %v2143 = vadd.f32 %v2054, %v2142
      %v2144 = vpop.f32.mrf.mxu0
      %v2145 = vadd.f32 %v2056, %v2144
      %2146 = vdwg.mxu0
      %2147 = vmatpush.bf16.msra.mxu0 %v1605
      %2148 = vmatpush.bf16.msra.mxu0 %v1604
      %2149 = vmatpush.bf16.msra.mxu0 %v1603
      %2150 = vmatpush.bf16.msra.mxu0 %v1602
      %2151 = vmatpush.bf16.msra.mxu0 %v1601
      %2152 = vmatpush.bf16.msra.mxu0 %v1600
      %2153 = vmatpush.bf16.msra.mxu0 %v1599
      %2154 = vmatpush.bf16.msra.mxu0 %v1598
      %2155 = vmatmul.bf16.gmra.mxu0 %v987
      %v2156 = vpop.f32.mrf.mxu0
      %v2157 = vadd.f32 %v2068, %v2156
      %v2158 = vpop.f32.mrf.mxu0
      %v2159 = vadd.f32 %v2070, %v2158
      %2160 = vmatmul.bf16.gmra.mxu0 %v996
      %v2161 = vpop.f32.mrf.mxu0
      %v2162 = vadd.f32 %v2073, %v2161
      %v2163 = vpop.f32.mrf.mxu0
      %v2164 = vadd.f32 %v2075, %v2163
      %2165 = vmatmul.bf16.gmra.mxu0 %v1005
      %v2166 = vpop.f32.mrf.mxu0
      %v2167 = vadd.f32 %v2078, %v2166
      %v2168 = vpop.f32.mrf.mxu0
      %v2169 = vadd.f32 %v2080, %v2168
      %2170 = vmatmul.bf16.gmra.mxu0 %v1014
      %v2171 = vpop.f32.mrf.mxu0
      %v2172 = vadd.f32 %v2083, %v2171
      %v2173 = vpop.f32.mrf.mxu0
      %v2174 = vadd.f32 %v2085, %v2173
      %2175 = vmatmul.bf16.gmra.mxu0 %v1023
      %v2176 = vpop.f32.mrf.mxu0
      %v2177 = vadd.f32 %v2088, %v2176
      %v2178 = vpop.f32.mrf.mxu0
      %v2179 = vadd.f32 %v2090, %v2178
      %2180 = vmatmul.bf16.gmra.mxu0 %v1032
      %v2181 = vpop.f32.mrf.mxu0
      %v2182 = vadd.f32 %v2093, %v2181
      %v2183 = vpop.f32.mrf.mxu0
      %v2184 = vadd.f32 %v2095, %v2183
      %2185 = vmatmul.bf16.gmra.mxu0 %v1041
      %v2186 = vpop.f32.mrf.mxu0
      %v2187 = vadd.f32 %v2098, %v2186
      %v2188 = vpop.f32.mrf.mxu0
      %v2189 = vadd.f32 %v2100, %v2188
      %2190 = vmatmul.bf16.gmra.mxu0 %v1050
      %v2191 = vpop.f32.mrf.mxu0
      %v2192 = vadd.f32 %v2103, %v2191
      %v2193 = vpop.f32.mrf.mxu0
      %v2194 = vadd.f32 %v2105, %v2193
      %2195 = vmatmul.bf16.gmra.mxu0 %v1059
      %v2196 = vpop.f32.mrf.mxu0
      %v2197 = vadd.f32 %v2108, %v2196
      %v2198 = vpop.f32.mrf.mxu0
      %v2199 = vadd.f32 %v2110, %v2198
      %2200 = vmatmul.bf16.gmra.mxu0 %v1068
      %v2201 = vpop.f32.mrf.mxu0
      %v2202 = vadd.f32 %v2113, %v2201
      %v2203 = vpop.f32.mrf.mxu0
      %v2204 = vadd.f32 %v2115, %v2203
      %2205 = vmatmul.bf16.gmra.mxu0 %v1077
      %v2206 = vpop.f32.mrf.mxu0
      %v2207 = vadd.f32 %v2118, %v2206
      %v2208 = vpop.f32.mrf.mxu0
      %v2209 = vadd.f32 %v2120, %v2208
      %2210 = vmatmul.bf16.gmra.mxu0 %v1086
      %v2211 = vpop.f32.mrf.mxu0
      %v2212 = vadd.f32 %v2123, %v2211
      %v2213 = vpop.f32.mrf.mxu0
      %v2214 = vadd.f32 %v2125, %v2213
      %2215 = vmatmul.bf16.gmra.mxu0 %v1095
      %v2216 = vpop.f32.mrf.mxu0
      %v2217 = vadd.f32 %v2128, %v2216
      %v2218 = vpop.f32.mrf.mxu0
      %v2219 = vadd.f32 %v2130, %v2218
      %2220 = vmatmul.bf16.gmra.mxu0 %v1104
      %v2221 = vpop.f32.mrf.mxu0
      %v2222 = vadd.f32 %v2133, %v2221
      %v2223 = vpop.f32.mrf.mxu0
      %v2224 = vadd.f32 %v2135, %v2223
      %2225 = vmatmul.bf16.gmra.mxu0 %v1113
      %v2226 = vpop.f32.mrf.mxu0
      %v2227 = vadd.f32 %v2138, %v2226
      %v2228 = vpop.f32.mrf.mxu0
      %v2229 = vadd.f32 %v2140, %v2228
      %2230 = vmatmul.bf16.gmra.mxu0 %v1122
      %v2231 = vpop.f32.mrf.mxu0
      %v2232 = vadd.f32 %v2143, %v2231
      %v2233 = vpop.f32.mrf.mxu0
      %v2234 = vadd.f32 %v2145, %v2233
      %2235 = vdwg.mxu0
      %2236 = vmatpush.bf16.msra.mxu0 %v1613
      %2237 = vmatpush.bf16.msra.mxu0 %v1612
      %2238 = vmatpush.bf16.msra.mxu0 %v1611
      %2239 = vmatpush.bf16.msra.mxu0 %v1610
      %2240 = vmatpush.bf16.msra.mxu0 %v1609
      %2241 = vmatpush.bf16.msra.mxu0 %v1608
      %2242 = vmatpush.bf16.msra.mxu0 %v1607
      %2243 = vmatpush.bf16.msra.mxu0 %v1606
      %2244 = vmatmul.bf16.gmra.mxu0 %v988
      %v2245 = vpop.f32.mrf.mxu0
      %v2246 = vadd.f32 %v2157, %v2245
      %v2247 = vpop.f32.mrf.mxu0
      %v2248 = vadd.f32 %v2159, %v2247
      %2249 = vmatmul.bf16.gmra.mxu0 %v997
      %v2250 = vpop.f32.mrf.mxu0
      %v2251 = vadd.f32 %v2162, %v2250
      %v2252 = vpop.f32.mrf.mxu0
      %v2253 = vadd.f32 %v2164, %v2252
      %2254 = vmatmul.bf16.gmra.mxu0 %v1006
      %v2255 = vpop.f32.mrf.mxu0
      %v2256 = vadd.f32 %v2167, %v2255
      %v2257 = vpop.f32.mrf.mxu0
      %v2258 = vadd.f32 %v2169, %v2257
      %2259 = vmatmul.bf16.gmra.mxu0 %v1015
      %v2260 = vpop.f32.mrf.mxu0
      %v2261 = vadd.f32 %v2172, %v2260
      %v2262 = vpop.f32.mrf.mxu0
      %v2263 = vadd.f32 %v2174, %v2262
      %2264 = vmatmul.bf16.gmra.mxu0 %v1024
      %v2265 = vpop.f32.mrf.mxu0
      %v2266 = vadd.f32 %v2177, %v2265
      %v2267 = vpop.f32.mrf.mxu0
      %v2268 = vadd.f32 %v2179, %v2267
      %2269 = vmatmul.bf16.gmra.mxu0 %v1033
      %v2270 = vpop.f32.mrf.mxu0
      %v2271 = vadd.f32 %v2182, %v2270
      %v2272 = vpop.f32.mrf.mxu0
      %v2273 = vadd.f32 %v2184, %v2272
      %2274 = vmatmul.bf16.gmra.mxu0 %v1042
      %v2275 = vpop.f32.mrf.mxu0
      %v2276 = vadd.f32 %v2187, %v2275
      %v2277 = vpop.f32.mrf.mxu0
      %v2278 = vadd.f32 %v2189, %v2277
      %2279 = vmatmul.bf16.gmra.mxu0 %v1051
      %v2280 = vpop.f32.mrf.mxu0
      %v2281 = vadd.f32 %v2192, %v2280
      %v2282 = vpop.f32.mrf.mxu0
      %v2283 = vadd.f32 %v2194, %v2282
      %2284 = vmatmul.bf16.gmra.mxu0 %v1060
      %v2285 = vpop.f32.mrf.mxu0
      %v2286 = vadd.f32 %v2197, %v2285
      %v2287 = vpop.f32.mrf.mxu0
      %v2288 = vadd.f32 %v2199, %v2287
      %2289 = vmatmul.bf16.gmra.mxu0 %v1069
      %v2290 = vpop.f32.mrf.mxu0
      %v2291 = vadd.f32 %v2202, %v2290
      %v2292 = vpop.f32.mrf.mxu0
      %v2293 = vadd.f32 %v2204, %v2292
      %2294 = vmatmul.bf16.gmra.mxu0 %v1078
      %v2295 = vpop.f32.mrf.mxu0
      %v2296 = vadd.f32 %v2207, %v2295
      %v2297 = vpop.f32.mrf.mxu0
      %v2298 = vadd.f32 %v2209, %v2297
      %2299 = vmatmul.bf16.gmra.mxu0 %v1087
      %v2300 = vpop.f32.mrf.mxu0
      %v2301 = vadd.f32 %v2212, %v2300
      %v2302 = vpop.f32.mrf.mxu0
      %v2303 = vadd.f32 %v2214, %v2302
      %2304 = vmatmul.bf16.gmra.mxu0 %v1096
      %v2305 = vpop.f32.mrf.mxu0
      %v2306 = vadd.f32 %v2217, %v2305
      %v2307 = vpop.f32.mrf.mxu0
      %v2308 = vadd.f32 %v2219, %v2307
      %2309 = vmatmul.bf16.gmra.mxu0 %v1105
      %v2310 = vpop.f32.mrf.mxu0
      %v2311 = vadd.f32 %v2222, %v2310
      %v2312 = vpop.f32.mrf.mxu0
      %v2313 = vadd.f32 %v2224, %v2312
      %2314 = vmatmul.bf16.gmra.mxu0 %v1114
      %v2315 = vpop.f32.mrf.mxu0
      %v2316 = vadd.f32 %v2227, %v2315
      %v2317 = vpop.f32.mrf.mxu0
      %v2318 = vadd.f32 %v2229, %v2317
      %2319 = vmatmul.bf16.gmra.mxu0 %v1123
      %v2320 = vpop.f32.mrf.mxu0
      %v2321 = vadd.f32 %v2232, %v2320
      %v2322 = vpop.f32.mrf.mxu0
      %v2323 = vadd.f32 %v2234, %v2322
      %2324 = vdwg.mxu0
      %2325 = vmatpush.bf16.msra.mxu0 %v1621
      %2326 = vmatpush.bf16.msra.mxu0 %v1620
      %2327 = vmatpush.bf16.msra.mxu0 %v1619
      %2328 = vmatpush.bf16.msra.mxu0 %v1618
      %2329 = vmatpush.bf16.msra.mxu0 %v1617
      %2330 = vmatpush.bf16.msra.mxu0 %v1616
      %2331 = vmatpush.bf16.msra.mxu0 %v1615
      %2332 = vmatpush.bf16.msra.mxu0 %v1614
      %2333 = vmatmul.bf16.gmra.mxu0 %v989
      %v2334 = vpop.f32.mrf.mxu0
      %v2335 = vadd.f32 %v2246, %v2334
      %v2336 = vpop.f32.mrf.mxu0
      %v2337 = vadd.f32 %v2248, %v2336
      %2338 = vmatmul.bf16.gmra.mxu0 %v998
      %v2339 = vpop.f32.mrf.mxu0
      %v2340 = vadd.f32 %v2251, %v2339
      %v2341 = vpop.f32.mrf.mxu0
      %v2342 = vadd.f32 %v2253, %v2341
      %2343 = vmatmul.bf16.gmra.mxu0 %v1007
      %v2344 = vpop.f32.mrf.mxu0
      %v2345 = vadd.f32 %v2256, %v2344
      %v2346 = vpop.f32.mrf.mxu0
      %v2347 = vadd.f32 %v2258, %v2346
      %2348 = vmatmul.bf16.gmra.mxu0 %v1016
      %v2349 = vpop.f32.mrf.mxu0
      %v2350 = vadd.f32 %v2261, %v2349
      %v2351 = vpop.f32.mrf.mxu0
      %v2352 = vadd.f32 %v2263, %v2351
      %2353 = vmatmul.bf16.gmra.mxu0 %v1025
      %v2354 = vpop.f32.mrf.mxu0
      %v2355 = vadd.f32 %v2266, %v2354
      %v2356 = vpop.f32.mrf.mxu0
      %v2357 = vadd.f32 %v2268, %v2356
      %2358 = vmatmul.bf16.gmra.mxu0 %v1034
      %v2359 = vpop.f32.mrf.mxu0
      %v2360 = vadd.f32 %v2271, %v2359
      %v2361 = vpop.f32.mrf.mxu0
      %v2362 = vadd.f32 %v2273, %v2361
      %2363 = vmatmul.bf16.gmra.mxu0 %v1043
      %v2364 = vpop.f32.mrf.mxu0
      %v2365 = vadd.f32 %v2276, %v2364
      %v2366 = vpop.f32.mrf.mxu0
      %v2367 = vadd.f32 %v2278, %v2366
      %2368 = vmatmul.bf16.gmra.mxu0 %v1052
      %v2369 = vpop.f32.mrf.mxu0
      %v2370 = vadd.f32 %v2281, %v2369
      %v2371 = vpop.f32.mrf.mxu0
      %v2372 = vadd.f32 %v2283, %v2371
      %2373 = vmatmul.bf16.gmra.mxu0 %v1061
      %v2374 = vpop.f32.mrf.mxu0
      %v2375 = vadd.f32 %v2286, %v2374
      %v2376 = vpop.f32.mrf.mxu0
      %v2377 = vadd.f32 %v2288, %v2376
      %2378 = vmatmul.bf16.gmra.mxu0 %v1070
      %v2379 = vpop.f32.mrf.mxu0
      %v2380 = vadd.f32 %v2291, %v2379
      %v2381 = vpop.f32.mrf.mxu0
      %v2382 = vadd.f32 %v2293, %v2381
      %2383 = vmatmul.bf16.gmra.mxu0 %v1079
      %v2384 = vpop.f32.mrf.mxu0
      %v2385 = vadd.f32 %v2296, %v2384
      %v2386 = vpop.f32.mrf.mxu0
      %v2387 = vadd.f32 %v2298, %v2386
      %2388 = vmatmul.bf16.gmra.mxu0 %v1088
      %v2389 = vpop.f32.mrf.mxu0
      %v2390 = vadd.f32 %v2301, %v2389
      %v2391 = vpop.f32.mrf.mxu0
      %v2392 = vadd.f32 %v2303, %v2391
      %2393 = vmatmul.bf16.gmra.mxu0 %v1097
      %v2394 = vpop.f32.mrf.mxu0
      %v2395 = vadd.f32 %v2306, %v2394
      %v2396 = vpop.f32.mrf.mxu0
      %v2397 = vadd.f32 %v2308, %v2396
      %2398 = vmatmul.bf16.gmra.mxu0 %v1106
      %v2399 = vpop.f32.mrf.mxu0
      %v2400 = vadd.f32 %v2311, %v2399
      %v2401 = vpop.f32.mrf.mxu0
      %v2402 = vadd.f32 %v2313, %v2401
      %2403 = vmatmul.bf16.gmra.mxu0 %v1115
      %v2404 = vpop.f32.mrf.mxu0
      %v2405 = vadd.f32 %v2316, %v2404
      %v2406 = vpop.f32.mrf.mxu0
      %v2407 = vadd.f32 %v2318, %v2406
      %2408 = vmatmul.bf16.gmra.mxu0 %v1124
      %v2409 = vpop.f32.mrf.mxu0
      %v2410 = vadd.f32 %v2321, %v2409
      %v2411 = vpop.f32.mrf.mxu0
      %v2412 = vadd.f32 %v2323, %v2411
      %2413 = vdwg.mxu0
      %2414 = vmatpush.bf16.msra.mxu0 %v1629
      %2415 = vmatpush.bf16.msra.mxu0 %v1628
      %2416 = vmatpush.bf16.msra.mxu0 %v1627
      %2417 = vmatpush.bf16.msra.mxu0 %v1626
      %2418 = vmatpush.bf16.msra.mxu0 %v1625
      %2419 = vmatpush.bf16.msra.mxu0 %v1624
      %2420 = vmatpush.bf16.msra.mxu0 %v1623
      %2421 = vmatpush.bf16.msra.mxu0 %v1622
      %2422 = vmatmul.bf16.gmra.mxu0 %v990
      %v2423 = vpop.f32.mrf.mxu0
      %v2424 = vadd.f32 %v2335, %v2423
      %v2425 = vpop.f32.mrf.mxu0
      %v2426 = vadd.f32 %v2337, %v2425
      %2427 = vmatmul.bf16.gmra.mxu0 %v999
      %v2428 = vpop.f32.mrf.mxu0
      %v2429 = vadd.f32 %v2340, %v2428
      %v2430 = vpop.f32.mrf.mxu0
      %v2431 = vadd.f32 %v2342, %v2430
      %2432 = vmatmul.bf16.gmra.mxu0 %v1008
      %v2433 = vpop.f32.mrf.mxu0
      %v2434 = vadd.f32 %v2345, %v2433
      %v2435 = vpop.f32.mrf.mxu0
      %v2436 = vadd.f32 %v2347, %v2435
      %2437 = vmatmul.bf16.gmra.mxu0 %v1017
      %v2438 = vpop.f32.mrf.mxu0
      %v2439 = vadd.f32 %v2350, %v2438
      %v2440 = vpop.f32.mrf.mxu0
      %v2441 = vadd.f32 %v2352, %v2440
      %2442 = vmatmul.bf16.gmra.mxu0 %v1026
      %v2443 = vpop.f32.mrf.mxu0
      %v2444 = vadd.f32 %v2355, %v2443
      %v2445 = vpop.f32.mrf.mxu0
      %v2446 = vadd.f32 %v2357, %v2445
      %2447 = vmatmul.bf16.gmra.mxu0 %v1035
      %v2448 = vpop.f32.mrf.mxu0
      %v2449 = vadd.f32 %v2360, %v2448
      %v2450 = vpop.f32.mrf.mxu0
      %v2451 = vadd.f32 %v2362, %v2450
      %2452 = vmatmul.bf16.gmra.mxu0 %v1044
      %v2453 = vpop.f32.mrf.mxu0
      %v2454 = vadd.f32 %v2365, %v2453
      %v2455 = vpop.f32.mrf.mxu0
      %v2456 = vadd.f32 %v2367, %v2455
      %2457 = vmatmul.bf16.gmra.mxu0 %v1053
      %v2458 = vpop.f32.mrf.mxu0
      %v2459 = vadd.f32 %v2370, %v2458
      %v2460 = vpop.f32.mrf.mxu0
      %v2461 = vadd.f32 %v2372, %v2460
      %2462 = vmatmul.bf16.gmra.mxu0 %v1062
      %v2463 = vpop.f32.mrf.mxu0
      %v2464 = vadd.f32 %v2375, %v2463
      %v2465 = vpop.f32.mrf.mxu0
      %v2466 = vadd.f32 %v2377, %v2465
      %2467 = vmatmul.bf16.gmra.mxu0 %v1071
      %v2468 = vpop.f32.mrf.mxu0
      %v2469 = vadd.f32 %v2380, %v2468
      %v2470 = vpop.f32.mrf.mxu0
      %v2471 = vadd.f32 %v2382, %v2470
      %2472 = vmatmul.bf16.gmra.mxu0 %v1080
      %v2473 = vpop.f32.mrf.mxu0
      %v2474 = vadd.f32 %v2385, %v2473
      %v2475 = vpop.f32.mrf.mxu0
      %v2476 = vadd.f32 %v2387, %v2475
      %2477 = vmatmul.bf16.gmra.mxu0 %v1089
      %v2478 = vpop.f32.mrf.mxu0
      %v2479 = vadd.f32 %v2390, %v2478
      %v2480 = vpop.f32.mrf.mxu0
      %v2481 = vadd.f32 %v2392, %v2480
      %2482 = vmatmul.bf16.gmra.mxu0 %v1098
      %v2483 = vpop.f32.mrf.mxu0
      %v2484 = vadd.f32 %v2395, %v2483
      %v2485 = vpop.f32.mrf.mxu0
      %v2486 = vadd.f32 %v2397, %v2485
      %2487 = vmatmul.bf16.gmra.mxu0 %v1107
      %v2488 = vpop.f32.mrf.mxu0
      %v2489 = vadd.f32 %v2400, %v2488
      %v2490 = vpop.f32.mrf.mxu0
      %v2491 = vadd.f32 %v2402, %v2490
      %2492 = vmatmul.bf16.gmra.mxu0 %v1116
      %v2493 = vpop.f32.mrf.mxu0
      %v2494 = vadd.f32 %v2405, %v2493
      %v2495 = vpop.f32.mrf.mxu0
      %v2496 = vadd.f32 %v2407, %v2495
      %2497 = vmatmul.bf16.gmra.mxu0 %v1125
      %v2498 = vpop.f32.mrf.mxu0
      %v2499 = vadd.f32 %v2410, %v2498
      %v2500 = vpop.f32.mrf.mxu0
      %v2501 = vadd.f32 %v2412, %v2500
      %2502 = vdwg.mxu0
      %v2503 = vld [vmem:[%s218] sm:$0xff]
      %v2504 = vld [vmem:[%s218 + $0x8] sm:$0xff]
      %v2505 = vld [vmem:[%s218 + $0x10] sm:$0xff]
      %v2506 = vld [vmem:[%s218 + $0x18] sm:$0xff]
      %v2507 = vld [vmem:[%s218 + $0x20] sm:$0xff]
      %v2508 = vld [vmem:[%s218 + $0x28] sm:$0xff]
      %v2509 = vld [vmem:[%s218 + $0x30] sm:$0xff]
      %v2510 = vld [vmem:[%s218 + $0x38] sm:$0xff]
      %v2511 = vld [vmem:[%s218 + $0x40] sm:$0xff]
      %v2512 = vld [vmem:[%s218 + $0x48] sm:$0xff]
      %v2513 = vld [vmem:[%s218 + $0x50] sm:$0xff]
      %v2514 = vld [vmem:[%s218 + $0x58] sm:$0xff]
      %v2515 = vld [vmem:[%s218 + $0x60] sm:$0xff]
      %v2516 = vld [vmem:[%s218 + $0x68] sm:$0xff]
      %v2517 = vld [vmem:[%s218 + $0x70] sm:$0xff]
      %v2518 = vld [vmem:[%s218 + $0x78] sm:$0xff]
      %v2519 = vld [vmem:[%s218 + $0x80] sm:$0xff]
      %v2520 = vld [vmem:[%s218 + $0x88] sm:$0xff]
      %v2521 = vld [vmem:[%s218 + $0x90] sm:$0xff]
      %v2522 = vld [vmem:[%s218 + $0x98] sm:$0xff]
      %v2523 = vld [vmem:[%s218 + $0xa0] sm:$0xff]
      %v2524 = vld [vmem:[%s218 + $0xa8] sm:$0xff]
      %v2525 = vld [vmem:[%s218 + $0xb0] sm:$0xff]
      %v2526 = vld [vmem:[%s218 + $0xb8] sm:$0xff]
      %v2527 = vld [vmem:[%s218 + $0xc0] sm:$0xff]
      %v2528 = vld [vmem:[%s218 + $0xc8] sm:$0xff]
      %v2529 = vld [vmem:[%s218 + $0xd0] sm:$0xff]
      %v2530 = vld [vmem:[%s218 + $0xd8] sm:$0xff]
      %v2531 = vld [vmem:[%s218 + $0xe0] sm:$0xff]
      %v2532 = vld [vmem:[%s218 + $0xe8] sm:$0xff]
      %v2533 = vld [vmem:[%s218 + $0xf0] sm:$0xff]
      %v2534 = vld [vmem:[%s218 + $0xf8] sm:$0xff]
      %v2535 = vadd.f32 %v2424, %v2503
      %v2536 = vadd.f32 %v2426, %v2504
      %v2537 = vadd.f32 %v2429, %v2505
      %v2538 = vadd.f32 %v2431, %v2506
      %v2539 = vadd.f32 %v2434, %v2507
      %v2540 = vadd.f32 %v2436, %v2508
      %v2541 = vadd.f32 %v2439, %v2509
      %v2542 = vadd.f32 %v2441, %v2510
      %v2543 = vadd.f32 %v2444, %v2511
      %v2544 = vadd.f32 %v2446, %v2512
      %v2545 = vadd.f32 %v2449, %v2513
      %v2546 = vadd.f32 %v2451, %v2514
      %v2547 = vadd.f32 %v2454, %v2515
      %v2548 = vadd.f32 %v2456, %v2516
      %v2549 = vadd.f32 %v2459, %v2517
      %v2550 = vadd.f32 %v2461, %v2518
      %v2551 = vadd.f32 %v2464, %v2519
      %v2552 = vadd.f32 %v2466, %v2520
      %v2553 = vadd.f32 %v2469, %v2521
      %v2554 = vadd.f32 %v2471, %v2522
      %v2555 = vadd.f32 %v2474, %v2523
      %v2556 = vadd.f32 %v2476, %v2524
      %v2557 = vadd.f32 %v2479, %v2525
      %v2558 = vadd.f32 %v2481, %v2526
      %v2559 = vadd.f32 %v2484, %v2527
      %v2560 = vadd.f32 %v2486, %v2528
      %v2561 = vadd.f32 %v2489, %v2529
      %v2562 = vadd.f32 %v2491, %v2530
      %v2563 = vadd.f32 %v2494, %v2531
      %v2564 = vadd.f32 %v2496, %v2532
      %v2565 = vadd.f32 %v2499, %v2533
      %v2566 = vadd.f32 %v2501, %v2534
      %v2567 = vmax.f32 %v2535, 0.0
      %v2568 = vmax.f32 %v2536, 0.0
      %v2569 = vmax.f32 %v2537, 0.0
      %v2570 = vmax.f32 %v2538, 0.0
      %v2571 = vmax.f32 %v2539, 0.0
      %v2572 = vmax.f32 %v2540, 0.0
      %v2573 = vmax.f32 %v2541, 0.0
      %v2574 = vmax.f32 %v2542, 0.0
      %v2575 = vmax.f32 %v2543, 0.0
      %v2576 = vmax.f32 %v2544, 0.0
      %v2577 = vmax.f32 %v2545, 0.0
      %v2578 = vmax.f32 %v2546, 0.0
      %v2579 = vmax.f32 %v2547, 0.0
      %v2580 = vmax.f32 %v2548, 0.0
      %v2581 = vmax.f32 %v2549, 0.0
      %v2582 = vmax.f32 %v2550, 0.0
      %v2583 = vmax.f32 %v2551, 0.0
      %v2584 = vmax.f32 %v2552, 0.0
      %v2585 = vmax.f32 %v2553, 0.0
      %v2586 = vmax.f32 %v2554, 0.0
      %v2587 = vmax.f32 %v2555, 0.0
      %v2588 = vmax.f32 %v2556, 0.0
      %v2589 = vmax.f32 %v2557, 0.0
      %v2590 = vmax.f32 %v2558, 0.0
      %v2591 = vmax.f32 %v2559, 0.0
      %v2592 = vmax.f32 %v2560, 0.0
      %v2593 = vmax.f32 %v2561, 0.0
      %v2594 = vmax.f32 %v2562, 0.0
      %v2595 = vmax.f32 %v2563, 0.0
      %v2596 = vmax.f32 %v2564, 0.0
      %v2597 = vmax.f32 %v2565, 0.0
      %v2598 = vmax.f32 %v2566, 0.0
      %2599 = vst [vmem:[%s224] sm:$0xff] %v2567
      %2600 = vst [vmem:[%s224 + $0x8] sm:$0xff] %v2568
      %2601 = vst [vmem:[%s224 + $0x10] sm:$0xff] %v2569
      %2602 = vst [vmem:[%s224 + $0x18] sm:$0xff] %v2570
      %2603 = vst [vmem:[%s224 + $0x20] sm:$0xff] %v2571
      %2604 = vst [vmem:[%s224 + $0x28] sm:$0xff] %v2572
      %2605 = vst [vmem:[%s224 + $0x30] sm:$0xff] %v2573
      %2606 = vst [vmem:[%s224 + $0x38] sm:$0xff] %v2574
      %2607 = vst [vmem:[%s224 + $0x40] sm:$0xff] %v2575
      %2608 = vst [vmem:[%s224 + $0x48] sm:$0xff] %v2576
      %2609 = vst [vmem:[%s224 + $0x50] sm:$0xff] %v2577
      %2610 = vst [vmem:[%s224 + $0x58] sm:$0xff] %v2578
      %2611 = vst [vmem:[%s224 + $0x60] sm:$0xff] %v2579
      %2612 = vst [vmem:[%s224 + $0x68] sm:$0xff] %v2580
      %2613 = vst [vmem:[%s224 + $0x70] sm:$0xff] %v2581
      %2614 = vst [vmem:[%s224 + $0x78] sm:$0xff] %v2582
      %2615 = vst [vmem:[%s224 + $0x80] sm:$0xff] %v2583
      %2616 = vst [vmem:[%s224 + $0x88] sm:$0xff] %v2584
      %2617 = vst [vmem:[%s224 + $0x90] sm:$0xff] %v2585
      %2618 = vst [vmem:[%s224 + $0x98] sm:$0xff] %v2586
      %2619 = vst [vmem:[%s224 + $0xa0] sm:$0xff] %v2587
      %2620 = vst [vmem:[%s224 + $0xa8] sm:$0xff] %v2588
      %2621 = vst [vmem:[%s224 + $0xb0] sm:$0xff] %v2589
      %2622 = vst [vmem:[%s224 + $0xb8] sm:$0xff] %v2590
      %2623 = vst [vmem:[%s224 + $0xc0] sm:$0xff] %v2591
      %2624 = vst [vmem:[%s224 + $0xc8] sm:$0xff] %v2592
      %2625 = vst [vmem:[%s224 + $0xd0] sm:$0xff] %v2593
      %2626 = vst [vmem:[%s224 + $0xd8] sm:$0xff] %v2594
      %2627 = vst [vmem:[%s224 + $0xe0] sm:$0xff] %v2595
      %2628 = vst [vmem:[%s224 + $0xe8] sm:$0xff] %v2596
      %2629 = vst [vmem:[%s224 + $0xf0] sm:$0xff] %v2597
      %2630 = vst [vmem:[%s224 + $0xf8] sm:$0xff] %v2598
      %s2631 = smul.u32 32, %s15
      %p2632 = scmp.lt.s32.totalorder %s2631, 63
      %s2633 = scalar_select %p2632, %s2631, 63
      %s2634 = smul.addr %s2633, 8
      %s2635 = scalar_lea.vmem %s4, %s2634
      // Predicated region
      $region37: #{_lambda_.9} parent=35 // pred_check
        %p2636 = pneg %p127
      $region38: #{_lambda_.9} parent=35 // pred_check_branch
        %2638 = sbr.rel (%p2636) target = $region40
      $region39: #{_lambda_.9} parent=35 // pred_region
        %s2639 = smul.u32 32, %s15
      $region40: #{_lambda_.9} parent=35 // pred_fallthru
        _
    $region36: #{_lambda_.9} parent=5 // pred_fallthru
      _
    %p2640 = scmp.le.s32.totalorder 2, %s10
    // Predicated region
    $region41: #{_lambda_.9} parent=5 // pred_check
      %p2641 = pneg %p2640
    $region42: #{_lambda_.9} parent=5 // pred_check_branch
      %2643 = sbr.rel (%p2641) target = $region44
    $region43: #{_lambda_.9} parent=5 // pred_region
      %s2644 = ssub.s32 %s10, 2
      // Predicated region
      $region45: #{_lambda_.9} parent=43 // pred_check
        %p2645 = pneg %p133
      $region46: #{_lambda_.9} parent=43 // pred_check_branch
        %2647 = sbr.rel (%p2645) target = $region48
      $region47: #{_lambda_.9} parent=43 // pred_region
        %s2648 = smul.u32 32, %s16
        %p2649 = scmp.lt.s32.totalorder %s2648, 63
        %s2650 = scalar_select %p2649, %s2648, 63
        %s2651 = smul.addr %s2650, 8
        %s2652 = scalar_lea.vmem %s4, %s2651
      $region48: #{_lambda_.9} parent=43 // pred_fallthru
        _
    $region44: #{_lambda_.9} parent=5 // pred_fallthru
      _
  $region6: #{_lambda_.9} parent=0 // loop_footer
    %s14 = sadd.s32 1, %s10
  $region7: #{_lambda_.9} parent=0 // loop_footer_branch
    %9 = sbr.rel target = $region3
  $region8: #{_lambda_.9} parent=0 // loop_exit
    _

// kernel: _lambda_.8
$region0: #{_lambda_.8}
  #allocation0 [shape = 'u32[]', space=smem, size = 0x4, offset = 0x4, fixed_abs, tag = 'smem constant byte address 0x4 - core index']
  #allocation1 [shape = 'u32[72,128]{1,0:T(1,128)}', space=vmem, size = 0x9000, scoped, tag = 'internal scratch']
  %s0 = inlined_call_operand.vmem [shape: bf16[512,1152], index: 0, kind: input, shape index: {}]
  %s1 = inlined_call_operand.vmem [shape: bf16[1152,128], index: 1, kind: input, shape index: {}]
  %s2 = inlined_call_operand.vmem [shape: f32[1,128], index: 2, kind: input, shape index: {}]
  %s3 = inlined_call_operand.vmem [shape: f32[512,128], index: 3, kind: output, shape index: {}]
  %s4 = sld [smem:[#allocation0]]
  $region45: #{_lambda_.8} parent=0
    _
  %s6 = ssub.s32 1, %s4
  %s7 = scalar_select 0, %s6, %s4
  loop: start=0, step=1, limit=4
  $region2: #{_lambda_.8} parent=0 // loop_pre_header
    _
  $region3: #{_lambda_.8} parent=0 // loop_header
    %s9 = sphi 0, %s13
    %p10 = scmp.ge.s32.totalorder %s9, 4
    %s19 = sphi 0, %s21
    %s22 = sphi 0, %s19
    %s23 = sphi 0, %s22
    %s39 = sphi 0, %s23
    %s43 = sphi 0, %s43
    %s45 = sphi 0, %s43
    %s46 = sphi 0, %s45
    %s60 = sphi 0, %s46
    %s64 = sphi 0, %s64
    %s66 = sphi 0, %s64
    %s67 = sphi 0, %s66
    %s81 = sphi 0, %s67
    %s87 = sphi 0, %s89
    %s90 = sphi 0, %s87
    %s91 = sphi 0, %s90
    %s107 = sphi 0, %s91
  $region4: #{_lambda_.8} parent=0 // loop_header_branch
    %12 = sbr.rel (%p10) target = $region8
  $region5: #{_lambda_.8} parent=0 // loop_body
    %s14 = ssub.s32 %s9, 1
    %s15 = ssub.s32 %s9, 2
    %s16 = sadd.s32 %s9, 1
    %s17 = ssub.s32 %s9, %s16
    %p18 = scmp.eq.s32.totalorder %s17, 0
    %s20 = sadd.s32 %s19, 1
    %s21 = scalar_select %p18, %s19, %s20
    %p24 = pneg %p18
    %p25 = scmp.eq.s32.totalorder %s9, 1
    %p26 = por %p24, %p25
    %p27 = scmp.ne.s32.totalorder %s19, %s22
    %p28 = scmp.eq.s32.totalorder %s9, 0
    %p29 = por %p27, %p28
    %p30 = scmp.ne.s32.totalorder %s19, %s22
    %p31 = scmp.eq.s32.totalorder %s14, 1
    %p32 = por %p30, %p31
    %p33 = scmp.ne.s32.totalorder %s22, %s23
    %p34 = scmp.eq.s32.totalorder %s14, 0
    %p35 = por %p33, %p34
    %p36 = scmp.ne.s32.totalorder %s22, %s23
    %p37 = scmp.eq.s32.totalorder %s15, 1
    %p38 = por %p36, %p37
    %p40 = scmp.ne.s32.totalorder %s23, %s39
    %p41 = scmp.eq.s32.totalorder %s15, 0
    %p42 = por %p40, %p41
    %s44 = sadd.s32 %s43, 1
    %p47 = scmp.eq.s32.totalorder %s9, 1
    %p48 = scmp.ne.s32.totalorder %s43, %s45
    %p49 = scmp.eq.s32.totalorder %s9, 0
    %p50 = por %p48, %p49
    %p51 = scmp.ne.s32.totalorder %s43, %s45
    %p52 = scmp.eq.s32.totalorder %s14, 1
    %p53 = por %p51, %p52
    %p54 = scmp.ne.s32.totalorder %s45, %s46
    %p55 = scmp.eq.s32.totalorder %s14, 0
    %p56 = por %p54, %p55
    %p57 = scmp.ne.s32.totalorder %s45, %s46
    %p58 = scmp.eq.s32.totalorder %s15, 1
    %p59 = por %p57, %p58
    %p61 = scmp.ne.s32.totalorder %s46, %s60
    %p62 = scmp.eq.s32.totalorder %s15, 0
    %p63 = por %p61, %p62
    %s65 = sadd.s32 %s64, 1
    %p68 = scmp.eq.s32.totalorder %s9, 1
    %p69 = scmp.ne.s32.totalorder %s64, %s66
    %p70 = scmp.eq.s32.totalorder %s9, 0
    %p71 = por %p69, %p70
    %p72 = scmp.ne.s32.totalorder %s64, %s66
    %p73 = scmp.eq.s32.totalorder %s14, 1
    %p74 = por %p72, %p73
    %p75 = scmp.ne.s32.totalorder %s66, %s67
    %p76 = scmp.eq.s32.totalorder %s14, 0
    %p77 = por %p75, %p76
    %p78 = scmp.ne.s32.totalorder %s66, %s67
    %p79 = scmp.eq.s32.totalorder %s15, 1
    %p80 = por %p78, %p79
    %p82 = scmp.ne.s32.totalorder %s67, %s81
    %p83 = scmp.eq.s32.totalorder %s15, 0
    %p84 = por %p82, %p83
    %s85 = ssub.s32 %s9, %s16
    %p86 = scmp.eq.s32.totalorder %s85, 0
    %s88 = sadd.s32 %s87, 1
    %s89 = scalar_select %p86, %s87, %s88
    %p92 = pneg %p86
    %p93 = scmp.eq.s32.totalorder %s9, 1
    %p94 = por %p92, %p93
    %p95 = scmp.ne.s32.totalorder %s87, %s90
    %p96 = scmp.eq.s32.totalorder %s9, 0
    %p97 = por %p95, %p96
    %p98 = scmp.ne.s32.totalorder %s87, %s90
    %p99 = scmp.eq.s32.totalorder %s14, 1
    %p100 = por %p98, %p99
    %p101 = scmp.ne.s32.totalorder %s90, %s91
    %p102 = scmp.eq.s32.totalorder %s14, 0
    %p103 = por %p101, %p102
    %p104 = scmp.ne.s32.totalorder %s90, %s91
    %p105 = scmp.eq.s32.totalorder %s15, 1
    %p106 = por %p104, %p105
    %p108 = scmp.ne.s32.totalorder %s91, %s107
    %p109 = scmp.eq.s32.totalorder %s15, 0
    %p110 = por %p108, %p109
    %p111 = scmp.le.s32.totalorder 1, %s9
    %p112 = scmp.lt.s32.totalorder %s9, 3
    %p113 = pnand %p111, %p112
    %p114 = pneg %p113
    // Predicated region
    $region9: #{_lambda_.8} parent=5 // pred_check
      _
    $region10: #{_lambda_.8} parent=5 // pred_check_branch
      %116 = sbr.rel (%p113) target = $region12
    $region11: #{_lambda_.8} parent=5 // pred_region
      %s117 = ssub.s32 %s9, 1
      // Predicated region
      $region13: #{_lambda_.8} parent=11 // pred_check
        %p118 = pneg %p56
      $region14: #{_lambda_.8} parent=11 // pred_check_branch
        %120 = sbr.rel (%p118) target = $region16
      $region15: #{_lambda_.8} parent=11 // pred_region
        _
      $region16: #{_lambda_.8} parent=11 // pred_fallthru
        _
      // Predicated region
      $region17: #{_lambda_.8} parent=11 // pred_check
        %p121 = pneg %p77
      $region18: #{_lambda_.8} parent=11 // pred_check_branch
        %123 = sbr.rel (%p121) target = $region20
      $region19: #{_lambda_.8} parent=11 // pred_region
        _
      $region20: #{_lambda_.8} parent=11 // pred_fallthru
        _
    $region12: #{_lambda_.8} parent=5 // pred_fallthru
      _
    %p124 = scmp.lt.s32.totalorder %s9, 2
    // Predicated region
    $region21: #{_lambda_.8} parent=5 // pred_check
      %p125 = pneg %p124
    $region22: #{_lambda_.8} parent=5 // pred_check_branch
      %127 = sbr.rel (%p125) target = $region24
    $region23: #{_lambda_.8} parent=5 // pred_region
      // Predicated region
      $region25: #{_lambda_.8} parent=23 // pred_check
        %p128 = pneg %p29
      $region26: #{_lambda_.8} parent=23 // pred_check_branch
        %130 = sbr.rel (%p128) target = $region28
      $region27: #{_lambda_.8} parent=23 // pred_region
        %s131 = smul.u32 32, %s9
        %p132 = scmp.lt.s32.totalorder %s131, 63
        %s133 = scalar_select %p132, %s131, 63
        %s134 = smul.addr %s133, 9
        %s135 = smul.addr %s134, 4
        %s136 = scalar_lea.vmem %s0, %s135
        %s137 = smul.u32 32, %s9
      $region28: #{_lambda_.8} parent=23 // pred_fallthru
        _
    $region24: #{_lambda_.8} parent=5 // pred_fallthru
      _
    %p138 = scmp.le.s32.totalorder 1, %s9
    %p139 = scmp.lt.s32.totalorder %s9, 3
    %p140 = pnand %p138, %p139
    %p141 = pneg %p140
    // Predicated region
    $region29: #{_lambda_.8} parent=5 // pred_check
      _
    $region30: #{_lambda_.8} parent=5 // pred_check_branch
      %143 = sbr.rel (%p140) target = $region32
    $region31: #{_lambda_.8} parent=5 // pred_region
      %s144 = ssub.s32 %s9, 1
      %s145 = smul.u32 32, %s14
      %p146 = scmp.lt.s32.totalorder %s145, 63
      %s147 = scalar_select %p146, %s145, 63
      %s148 = smul.addr %s147, 9
      %s149 = smul.addr %s148, 4
      %s150 = scalar_lea.vmem %s0, %s149
      %p151 = pneg %p35
      %p152 = pneg %p32
      %p153 = pneg %p56
      %p154 = pneg %p53
      %p155 = pneg %p77
      %p156 = pneg %p74
      %p157 = pneg %p103
      %p158 = pneg %p100
      %s159 = smul.u32 32, %s14
      %p160 = scmp.lt.s32.totalorder %s159, 63
      %s161 = scalar_select %p160, %s159, 63
      %s162 = smul.addr %s161, 8
      %s163 = scalar_lea.vmem %s3, %s162
      %s164 = smul.u32 32, %s14
      %p165 = scmp.lt.s32.totalorder %s164, 63
      %s166 = scalar_select %p165, %s164, 63
      %s167 = smul.addr %s166, 9
      %s168 = smul.addr %s167, 4
      %s169 = scalar_lea.vmem %s0, %s168
      %s170 = smul.u32 32, %s14
      %s171 = smul.u32 32, %s14
      %p172 = scmp.lt.s32.totalorder %s171, 63
      %s173 = scalar_select %p172, %s171, 63
      %s174 = smul.addr %s173, 8
      %s175 = scalar_lea.vmem %s3, %s174
      %s176 = smul.u32 32, %s14
      %v177 = vld [vmem:[%s169] sm:$0xff]
      %v178 = vld [vmem:[%s169 + $0x8] sm:$0xff]
      %v179 = vld [vmem:[%s169 + $0x10] sm:$0xff]
      %v180 = vld [vmem:[%s169 + $0x18] sm:$0xff]
      %v181 = vld [vmem:[%s169 + $0x20] sm:$0xf]
      %v182 = vld [vmem:[%s169 + $0x24] sm:$0xff]
      %v183 = vld [vmem:[%s169 + $0x2c] sm:$0xff]
      %v184 = vld [vmem:[%s169 + $0x34] sm:$0xff]
      %v185 = vld [vmem:[%s169 + $0x3c] sm:$0xff]
      %v186 = vld [vmem:[%s169 + $0x44] sm:$0xf]
      %v187 = vld [vmem:[%s169 + $0x48] sm:$0xff]
      %v188 = vld [vmem:[%s169 + $0x50] sm:$0xff]
      %v189 = vld [vmem:[%s169 + $0x58] sm:$0xff]
      %v190 = vld [vmem:[%s169 + $0x60] sm:$0xff]
      %v191 = vld [vmem:[%s169 + $0x68] sm:$0xf]
      %v192 = vld [vmem:[%s169 + $0x6c] sm:$0xff]
      %v193 = vld [vmem:[%s169 + $0x74] sm:$0xff]
      %v194 = vld [vmem:[%s169 + $0x7c] sm:$0xff]
      %v195 = vld [vmem:[%s169 + $0x84] sm:$0xff]
      %v196 = vld [vmem:[%s169 + $0x8c] sm:$0xf]
      %v197 = vld [vmem:[%s169 + $0x90] sm:$0xff]
      %v198 = vld [vmem:[%s169 + $0x98] sm:$0xff]
      %v199 = vld [vmem:[%s169 + $0xa0] sm:$0xff]
      %v200 = vld [vmem:[%s169 + $0xa8] sm:$0xff]
      %v201 = vld [vmem:[%s169 + $0xb0] sm:$0xf]
      %v202 = vld [vmem:[%s169 + $0xb4] sm:$0xff]
      %v203 = vld [vmem:[%s169 + $0xbc] sm:$0xff]
      %v204 = vld [vmem:[%s169 + $0xc4] sm:$0xff]
      %v205 = vld [vmem:[%s169 + $0xcc] sm:$0xff]
      %v206 = vld [vmem:[%s169 + $0xd4] sm:$0xf]
      %v207 = vld [vmem:[%s169 + $0xd8] sm:$0xff]
      %v208 = vld [vmem:[%s169 + $0xe0] sm:$0xff]
      %v209 = vld [vmem:[%s169 + $0xe8] sm:$0xff]
      %v210 = vld [vmem:[%s169 + $0xf0] sm:$0xff]
      %v211 = vld [vmem:[%s169 + $0xf8] sm:$0xf]
      %v212 = vld [vmem:[%s169 + $0xfc] sm:$0xff]
      %v213 = vld [vmem:[%s169 + $0x104] sm:$0xff]
      %v214 = vld [vmem:[%s169 + $0x10c] sm:$0xff]
      %v215 = vld [vmem:[%s169 + $0x114] sm:$0xff]
      %v216 = vld [vmem:[%s169 + $0x11c] sm:$0xf]
      %v217 = vld [vmem:[%s169 + $0x120] sm:$0xff]
      %v218 = vld [vmem:[%s169 + $0x128] sm:$0xff]
      %v219 = vld [vmem:[%s169 + $0x130] sm:$0xff]
      %v220 = vld [vmem:[%s169 + $0x138] sm:$0xff]
      %v221 = vld [vmem:[%s169 + $0x140] sm:$0xf]
      %v222 = vld [vmem:[%s169 + $0x144] sm:$0xff]
      %v223 = vld [vmem:[%s169 + $0x14c] sm:$0xff]
      %v224 = vld [vmem:[%s169 + $0x154] sm:$0xff]
      %v225 = vld [vmem:[%s169 + $0x15c] sm:$0xff]
      %v226 = vld [vmem:[%s169 + $0x164] sm:$0xf]
      %v227 = vld [vmem:[%s169 + $0x168] sm:$0xff]
      %v228 = vld [vmem:[%s169 + $0x170] sm:$0xff]
      %v229 = vld [vmem:[%s169 + $0x178] sm:$0xff]
      %v230 = vld [vmem:[%s169 + $0x180] sm:$0xff]
      %v231 = vld [vmem:[%s169 + $0x188] sm:$0xf]
      %v232 = vld [vmem:[%s169 + $0x18c] sm:$0xff]
      %v233 = vld [vmem:[%s169 + $0x194] sm:$0xff]
      %v234 = vld [vmem:[%s169 + $0x19c] sm:$0xff]
      %v235 = vld [vmem:[%s169 + $0x1a4] sm:$0xff]
      %v236 = vld [vmem:[%s169 + $0x1ac] sm:$0xf]
      %v237 = vld [vmem:[%s169 + $0x1b0] sm:$0xff]
      %v238 = vld [vmem:[%s169 + $0x1b8] sm:$0xff]
      %v239 = vld [vmem:[%s169 + $0x1c0] sm:$0xff]
      %v240 = vld [vmem:[%s169 + $0x1c8] sm:$0xff]
      %v241 = vld [vmem:[%s169 + $0x1d0] sm:$0xf]
      %v242 = vld [vmem:[%s169 + $0x1d4] sm:$0xff]
      %v243 = vld [vmem:[%s169 + $0x1dc] sm:$0xff]
      %v244 = vld [vmem:[%s169 + $0x1e4] sm:$0xff]
      %v245 = vld [vmem:[%s169 + $0x1ec] sm:$0xff]
      %v246 = vld [vmem:[%s169 + $0x1f4] sm:$0xf]
      %v247 = vld [vmem:[%s169 + $0x1f8] sm:$0xff]
      %v248 = vld [vmem:[%s169 + $0x200] sm:$0xff]
      %v249 = vld [vmem:[%s169 + $0x208] sm:$0xff]
      %v250 = vld [vmem:[%s169 + $0x210] sm:$0xff]
      %v251 = vld [vmem:[%s169 + $0x218] sm:$0xf]
      %v252 = vld [vmem:[%s169 + $0x21c] sm:$0xff]
      %v253 = vld [vmem:[%s169 + $0x224] sm:$0xff]
      %v254 = vld [vmem:[%s169 + $0x22c] sm:$0xff]
      %v255 = vld [vmem:[%s169 + $0x234] sm:$0xff]
      %v256 = vld [vmem:[%s169 + $0x23c] sm:$0xf]
      %v257 = vld [vmem:[%s169 + $0x240] sm:$0xff]
      %v258 = vld [vmem:[%s169 + $0x248] sm:$0xff]
      %v259 = vld [vmem:[%s169 + $0x250] sm:$0xff]
      %v260 = vld [vmem:[%s169 + $0x258] sm:$0xff]
      %v261 = vld [vmem:[%s169 + $0x260] sm:$0xf]
      %v262 = vld [vmem:[%s169 + $0x264] sm:$0xff]
      %v263 = vld [vmem:[%s169 + $0x26c] sm:$0xff]
      %v264 = vld [vmem:[%s169 + $0x274] sm:$0xff]
      %v265 = vld [vmem:[%s169 + $0x27c] sm:$0xff]
      %v266 = vld [vmem:[%s169 + $0x284] sm:$0xf]
      %v267 = vld [vmem:[%s169 + $0x288] sm:$0xff]
      %v268 = vld [vmem:[%s169 + $0x290] sm:$0xff]
      %v269 = vld [vmem:[%s169 + $0x298] sm:$0xff]
      %v270 = vld [vmem:[%s169 + $0x2a0] sm:$0xff]
      %v271 = vld [vmem:[%s169 + $0x2a8] sm:$0xf]
      %v272 = vld [vmem:[%s169 + $0x2ac] sm:$0xff]
      %v273 = vld [vmem:[%s169 + $0x2b4] sm:$0xff]
      %v274 = vld [vmem:[%s169 + $0x2bc] sm:$0xff]
      %v275 = vld [vmem:[%s169 + $0x2c4] sm:$0xff]
      %v276 = vld [vmem:[%s169 + $0x2cc] sm:$0xf]
      %v277 = vld [vmem:[%s169 + $0x2d0] sm:$0xff]
      %v278 = vld [vmem:[%s169 + $0x2d8] sm:$0xff]
      %v279 = vld [vmem:[%s169 + $0x2e0] sm:$0xff]
      %v280 = vld [vmem:[%s169 + $0x2e8] sm:$0xff]
      %v281 = vld [vmem:[%s169 + $0x2f0] sm:$0xf]
      %v282 = vld [vmem:[%s169 + $0x2f4] sm:$0xff]
      %v283 = vld [vmem:[%s169 + $0x2fc] sm:$0xff]
      %v284 = vld [vmem:[%s169 + $0x304] sm:$0xff]
      %v285 = vld [vmem:[%s169 + $0x30c] sm:$0xff]
      %v286 = vld [vmem:[%s169 + $0x314] sm:$0xf]
      %v287 = vld [vmem:[%s169 + $0x318] sm:$0xff]
      %v288 = vld [vmem:[%s169 + $0x320] sm:$0xff]
      %v289 = vld [vmem:[%s169 + $0x328] sm:$0xff]
      %v290 = vld [vmem:[%s169 + $0x330] sm:$0xff]
      %v291 = vld [vmem:[%s169 + $0x338] sm:$0xf]
      %v292 = vld [vmem:[%s169 + $0x33c] sm:$0xff]
      %v293 = vld [vmem:[%s169 + $0x344] sm:$0xff]
      %v294 = vld [vmem:[%s169 + $0x34c] sm:$0xff]
      %v295 = vld [vmem:[%s169 + $0x354] sm:$0xff]
      %v296 = vld [vmem:[%s169 + $0x35c] sm:$0xf]
      %v297 = vld [vmem:[%s169 + $0x360] sm:$0xff]
      %v298 = vld [vmem:[%s169 + $0x368] sm:$0xff]
      %v299 = vld [vmem:[%s169 + $0x370] sm:$0xff]
      %v300 = vld [vmem:[%s169 + $0x378] sm:$0xff]
      %v301 = vld [vmem:[%s169 + $0x380] sm:$0xf]
      %v302 = vld [vmem:[%s169 + $0x384] sm:$0xff]
      %v303 = vld [vmem:[%s169 + $0x38c] sm:$0xff]
      %v304 = vld [vmem:[%s169 + $0x394] sm:$0xff]
      %v305 = vld [vmem:[%s169 + $0x39c] sm:$0xff]
      %v306 = vld [vmem:[%s169 + $0x3a4] sm:$0xf]
      %v307 = vld [vmem:[%s169 + $0x3a8] sm:$0xff]
      %v308 = vld [vmem:[%s169 + $0x3b0] sm:$0xff]
      %v309 = vld [vmem:[%s169 + $0x3b8] sm:$0xff]
      %v310 = vld [vmem:[%s169 + $0x3c0] sm:$0xff]
      %v311 = vld [vmem:[%s169 + $0x3c8] sm:$0xf]
      %v312 = vld [vmem:[%s169 + $0x3cc] sm:$0xff]
      %v313 = vld [vmem:[%s169 + $0x3d4] sm:$0xff]
      %v314 = vld [vmem:[%s169 + $0x3dc] sm:$0xff]
      %v315 = vld [vmem:[%s169 + $0x3e4] sm:$0xff]
      %v316 = vld [vmem:[%s169 + $0x3ec] sm:$0xf]
      %v317 = vld [vmem:[%s169 + $0x3f0] sm:$0xff]
      %v318 = vld [vmem:[%s169 + $0x3f8] sm:$0xff]
      %v319 = vld [vmem:[%s169 + $0x400] sm:$0xff]
      %v320 = vld [vmem:[%s169 + $0x408] sm:$0xff]
      %v321 = vld [vmem:[%s169 + $0x410] sm:$0xf]
      %v322 = vld [vmem:[%s169 + $0x414] sm:$0xff]
      %v323 = vld [vmem:[%s169 + $0x41c] sm:$0xff]
      %v324 = vld [vmem:[%s169 + $0x424] sm:$0xff]
      %v325 = vld [vmem:[%s169 + $0x42c] sm:$0xff]
      %v326 = vld [vmem:[%s169 + $0x434] sm:$0xf]
      %v327 = vld [vmem:[%s169 + $0x438] sm:$0xff]
      %v328 = vld [vmem:[%s169 + $0x440] sm:$0xff]
      %v329 = vld [vmem:[%s169 + $0x448] sm:$0xff]
      %v330 = vld [vmem:[%s169 + $0x450] sm:$0xff]
      %v331 = vld [vmem:[%s169 + $0x458] sm:$0xf]
      %v332 = vld [vmem:[%s169 + $0x45c] sm:$0xff]
      %v333 = vld [vmem:[%s169 + $0x464] sm:$0xff]
      %v334 = vld [vmem:[%s169 + $0x46c] sm:$0xff]
      %v335 = vld [vmem:[%s169 + $0x474] sm:$0xff]
      %v336 = vld [vmem:[%s169 + $0x47c] sm:$0xf]
      %v337 = vld [vmem:[%s1] sm:$0xf]
      %v338 = vld [vmem:[%s1 + $0x4] sm:$0xf]
      %v339 = vld [vmem:[%s1 + $0x8] sm:$0xf]
      %v340 = vld [vmem:[%s1 + $0xc] sm:$0xf]
      %v341 = vld [vmem:[%s1 + $0x10] sm:$0xf]
      %v342 = vld [vmem:[%s1 + $0x14] sm:$0xf]
      %v343 = vld [vmem:[%s1 + $0x18] sm:$0xf]
      %v344 = vld [vmem:[%s1 + $0x1c] sm:$0xf]
      %v345 = vld [vmem:[%s1 + $0x20] sm:$0xf]
      %v346 = vld [vmem:[%s1 + $0x24] sm:$0xf]
      %v347 = vld [vmem:[%s1 + $0x28] sm:$0xf]
      %v348 = vld [vmem:[%s1 + $0x2c] sm:$0xf]
      %v349 = vld [vmem:[%s1 + $0x30] sm:$0xf]
      %v350 = vld [vmem:[%s1 + $0x34] sm:$0xf]
      %v351 = vld [vmem:[%s1 + $0x38] sm:$0xf]
      %v352 = vld [vmem:[%s1 + $0x3c] sm:$0xf]
      %v353 = vld [vmem:[%s1 + $0x40] sm:$0xf]
      %v354 = vld [vmem:[%s1 + $0x44] sm:$0xf]
      %v355 = vld [vmem:[%s1 + $0x48] sm:$0xf]
      %v356 = vld [vmem:[%s1 + $0x4c] sm:$0xf]
      %v357 = vld [vmem:[%s1 + $0x50] sm:$0xf]
      %v358 = vld [vmem:[%s1 + $0x54] sm:$0xf]
      %v359 = vld [vmem:[%s1 + $0x58] sm:$0xf]
      %v360 = vld [vmem:[%s1 + $0x5c] sm:$0xf]
      %v361 = vld [vmem:[%s1 + $0x60] sm:$0xf]
      %v362 = vld [vmem:[%s1 + $0x64] sm:$0xf]
      %v363 = vld [vmem:[%s1 + $0x68] sm:$0xf]
      %v364 = vld [vmem:[%s1 + $0x6c] sm:$0xf]
      %v365 = vld [vmem:[%s1 + $0x70] sm:$0xf]
      %v366 = vld [vmem:[%s1 + $0x74] sm:$0xf]
      %v367 = vld [vmem:[%s1 + $0x78] sm:$0xf]
      %v368 = vld [vmem:[%s1 + $0x7c] sm:$0xf]
      %v369 = vld [vmem:[%s1 + $0x80] sm:$0xf]
      %v370 = vld [vmem:[%s1 + $0x84] sm:$0xf]
      %v371 = vld [vmem:[%s1 + $0x88] sm:$0xf]
      %v372 = vld [vmem:[%s1 + $0x8c] sm:$0xf]
      %v373 = vld [vmem:[%s1 + $0x90] sm:$0xf]
      %v374 = vld [vmem:[%s1 + $0x94] sm:$0xf]
      %v375 = vld [vmem:[%s1 + $0x98] sm:$0xf]
      %v376 = vld [vmem:[%s1 + $0x9c] sm:$0xf]
      %v377 = vld [vmem:[%s1 + $0xa0] sm:$0xf]
      %v378 = vld [vmem:[%s1 + $0xa4] sm:$0xf]
      %v379 = vld [vmem:[%s1 + $0xa8] sm:$0xf]
      %v380 = vld [vmem:[%s1 + $0xac] sm:$0xf]
      %v381 = vld [vmem:[%s1 + $0xb0] sm:$0xf]
      %v382 = vld [vmem:[%s1 + $0xb4] sm:$0xf]
      %v383 = vld [vmem:[%s1 + $0xb8] sm:$0xf]
      %v384 = vld [vmem:[%s1 + $0xbc] sm:$0xf]
      %v385 = vld [vmem:[%s1 + $0xc0] sm:$0xf]
      %v386 = vld [vmem:[%s1 + $0xc4] sm:$0xf]
      %v387 = vld [vmem:[%s1 + $0xc8] sm:$0xf]
      %v388 = vld [vmem:[%s1 + $0xcc] sm:$0xf]
      %v389 = vld [vmem:[%s1 + $0xd0] sm:$0xf]
      %v390 = vld [vmem:[%s1 + $0xd4] sm:$0xf]
      %v391 = vld [vmem:[%s1 + $0xd8] sm:$0xf]
      %v392 = vld [vmem:[%s1 + $0xdc] sm:$0xf]
      %v393 = vld [vmem:[%s1 + $0xe0] sm:$0xf]
      %v394 = vld [vmem:[%s1 + $0xe4] sm:$0xf]
      %v395 = vld [vmem:[%s1 + $0xe8] sm:$0xf]
      %v396 = vld [vmem:[%s1 + $0xec] sm:$0xf]
      %v397 = vld [vmem:[%s1 + $0xf0] sm:$0xf]
      %v398 = vld [vmem:[%s1 + $0xf4] sm:$0xf]
      %v399 = vld [vmem:[%s1 + $0xf8] sm:$0xf]
      %v400 = vld [vmem:[%s1 + $0xfc] sm:$0xf]
      %v401 = vld [vmem:[%s1 + $0x100] sm:$0xf]
      %v402 = vld [vmem:[%s1 + $0x104] sm:$0xf]
      %v403 = vld [vmem:[%s1 + $0x108] sm:$0xf]
      %v404 = vld [vmem:[%s1 + $0x10c] sm:$0xf]
      %v405 = vld [vmem:[%s1 + $0x110] sm:$0xf]
      %v406 = vld [vmem:[%s1 + $0x114] sm:$0xf]
      %v407 = vld [vmem:[%s1 + $0x118] sm:$0xf]
      %v408 = vld [vmem:[%s1 + $0x11c] sm:$0xf]
      %v409 = vld [vmem:[%s1 + $0x120] sm:$0xf]
      %v410 = vld [vmem:[%s1 + $0x124] sm:$0xf]
      %v411 = vld [vmem:[%s1 + $0x128] sm:$0xf]
      %v412 = vld [vmem:[%s1 + $0x12c] sm:$0xf]
      %v413 = vld [vmem:[%s1 + $0x130] sm:$0xf]
      %v414 = vld [vmem:[%s1 + $0x134] sm:$0xf]
      %v415 = vld [vmem:[%s1 + $0x138] sm:$0xf]
      %v416 = vld [vmem:[%s1 + $0x13c] sm:$0xf]
      %v417 = vld [vmem:[%s1 + $0x140] sm:$0xf]
      %v418 = vld [vmem:[%s1 + $0x144] sm:$0xf]
      %v419 = vld [vmem:[%s1 + $0x148] sm:$0xf]
      %v420 = vld [vmem:[%s1 + $0x14c] sm:$0xf]
      %v421 = vld [vmem:[%s1 + $0x150] sm:$0xf]
      %v422 = vld [vmem:[%s1 + $0x154] sm:$0xf]
      %v423 = vld [vmem:[%s1 + $0x158] sm:$0xf]
      %v424 = vld [vmem:[%s1 + $0x15c] sm:$0xf]
      %v425 = vld [vmem:[%s1 + $0x160] sm:$0xf]
      %v426 = vld [vmem:[%s1 + $0x164] sm:$0xf]
      %v427 = vld [vmem:[%s1 + $0x168] sm:$0xf]
      %v428 = vld [vmem:[%s1 + $0x16c] sm:$0xf]
      %v429 = vld [vmem:[%s1 + $0x170] sm:$0xf]
      %v430 = vld [vmem:[%s1 + $0x174] sm:$0xf]
      %v431 = vld [vmem:[%s1 + $0x178] sm:$0xf]
      %v432 = vld [vmem:[%s1 + $0x17c] sm:$0xf]
      %v433 = vld [vmem:[%s1 + $0x180] sm:$0xf]
      %v434 = vld [vmem:[%s1 + $0x184] sm:$0xf]
      %v435 = vld [vmem:[%s1 + $0x188] sm:$0xf]
      %v436 = vld [vmem:[%s1 + $0x18c] sm:$0xf]
      %v437 = vld [vmem:[%s1 + $0x190] sm:$0xf]
      %v438 = vld [vmem:[%s1 + $0x194] sm:$0xf]
      %v439 = vld [vmem:[%s1 + $0x198] sm:$0xf]
      %v440 = vld [vmem:[%s1 + $0x19c] sm:$0xf]
      %v441 = vld [vmem:[%s1 + $0x1a0] sm:$0xf]
      %v442 = vld [vmem:[%s1 + $0x1a4] sm:$0xf]
      %v443 = vld [vmem:[%s1 + $0x1a8] sm:$0xf]
      %v444 = vld [vmem:[%s1 + $0x1ac] sm:$0xf]
      %v445 = vld [vmem:[%s1 + $0x1b0] sm:$0xf]
      %v446 = vld [vmem:[%s1 + $0x1b4] sm:$0xf]
      %v447 = vld [vmem:[%s1 + $0x1b8] sm:$0xf]
      %v448 = vld [vmem:[%s1 + $0x1bc] sm:$0xf]
      %v449 = vld [vmem:[%s1 + $0x1c0] sm:$0xf]
      %v450 = vld [vmem:[%s1 + $0x1c4] sm:$0xf]
      %v451 = vld [vmem:[%s1 + $0x1c8] sm:$0xf]
      %v452 = vld [vmem:[%s1 + $0x1cc] sm:$0xf]
      %v453 = vld [vmem:[%s1 + $0x1d0] sm:$0xf]
      %v454 = vld [vmem:[%s1 + $0x1d4] sm:$0xf]
      %v455 = vld [vmem:[%s1 + $0x1d8] sm:$0xf]
      %v456 = vld [vmem:[%s1 + $0x1dc] sm:$0xf]
      %v457 = vld [vmem:[%s1 + $0x1e0] sm:$0xf]
      %v458 = vld [vmem:[%s1 + $0x1e4] sm:$0xf]
      %v459 = vld [vmem:[%s1 + $0x1e8] sm:$0xf]
      %v460 = vld [vmem:[%s1 + $0x1ec] sm:$0xf]
      %v461 = vld [vmem:[%s1 + $0x1f0] sm:$0xf]
      %v462 = vld [vmem:[%s1 + $0x1f4] sm:$0xf]
      %v463 = vld [vmem:[%s1 + $0x1f8] sm:$0xf]
      %v464 = vld [vmem:[%s1 + $0x1fc] sm:$0xf]
      %v465 = vld [vmem:[%s1 + $0x200] sm:$0xf]
      %v466 = vld [vmem:[%s1 + $0x204] sm:$0xf]
      %v467 = vld [vmem:[%s1 + $0x208] sm:$0xf]
      %v468 = vld [vmem:[%s1 + $0x20c] sm:$0xf]
      %v469 = vld [vmem:[%s1 + $0x210] sm:$0xf]
      %v470 = vld [vmem:[%s1 + $0x214] sm:$0xf]
      %v471 = vld [vmem:[%s1 + $0x218] sm:$0xf]
      %v472 = vld [vmem:[%s1 + $0x21c] sm:$0xf]
      %v473 = vld [vmem:[%s1 + $0x220] sm:$0xf]
      %v474 = vld [vmem:[%s1 + $0x224] sm:$0xf]
      %v475 = vld [vmem:[%s1 + $0x228] sm:$0xf]
      %v476 = vld [vmem:[%s1 + $0x22c] sm:$0xf]
      %v477 = vld [vmem:[%s1 + $0x230] sm:$0xf]
      %v478 = vld [vmem:[%s1 + $0x234] sm:$0xf]
      %v479 = vld [vmem:[%s1 + $0x238] sm:$0xf]
      %v480 = vld [vmem:[%s1 + $0x23c] sm:$0xf]
      %v481 = vld [vmem:[%s2] sm:$0x1]
      %v483 = vperm.slane %v481, 0
      %v645 = vunpack.c.l.b16 %v177
      %v646 = vunpack.c.h.b16 %v177
      %v647 = vunpack.c.l.b16 %v178
      %v648 = vunpack.c.h.b16 %v178
      %v649 = vunpack.c.l.b16 %v179
      %v650 = vunpack.c.h.b16 %v179
      %v651 = vunpack.c.l.b16 %v180
      %v652 = vunpack.c.h.b16 %v180
      %v653 = vunpack.c.l.b16 %v181
      %v654 = vunpack.c.l.b16 %v182
      %v655 = vunpack.c.h.b16 %v182
      %v656 = vunpack.c.l.b16 %v183
      %v657 = vunpack.c.h.b16 %v183
      %v658 = vunpack.c.l.b16 %v184
      %v659 = vunpack.c.h.b16 %v184
      %v660 = vunpack.c.l.b16 %v185
      %v661 = vunpack.c.h.b16 %v185
      %v662 = vunpack.c.l.b16 %v186
      %v663 = vunpack.c.l.b16 %v187
      %v664 = vunpack.c.h.b16 %v187
      %v665 = vunpack.c.l.b16 %v188
      %v666 = vunpack.c.h.b16 %v188
      %v667 = vunpack.c.l.b16 %v189
      %v668 = vunpack.c.h.b16 %v189
      %v669 = vunpack.c.l.b16 %v190
      %v670 = vunpack.c.h.b16 %v190
      %v671 = vunpack.c.l.b16 %v191
      %v672 = vunpack.c.l.b16 %v192
      %v673 = vunpack.c.h.b16 %v192
      %v674 = vunpack.c.l.b16 %v193
      %v675 = vunpack.c.h.b16 %v193
      %v676 = vunpack.c.l.b16 %v194
      %v677 = vunpack.c.h.b16 %v194
      %v678 = vunpack.c.l.b16 %v195
      %v679 = vunpack.c.h.b16 %v195
      %v680 = vunpack.c.l.b16 %v196
      %v681 = vunpack.c.l.b16 %v197
      %v682 = vunpack.c.h.b16 %v197
      %v683 = vunpack.c.l.b16 %v198
      %v684 = vunpack.c.h.b16 %v198
      %v685 = vunpack.c.l.b16 %v199
      %v686 = vunpack.c.h.b16 %v199
      %v687 = vunpack.c.l.b16 %v200
      %v688 = vunpack.c.h.b16 %v200
      %v689 = vunpack.c.l.b16 %v201
      %v690 = vunpack.c.l.b16 %v202
      %v691 = vunpack.c.h.b16 %v202
      %v692 = vunpack.c.l.b16 %v203
      %v693 = vunpack.c.h.b16 %v203
      %v694 = vunpack.c.l.b16 %v204
      %v695 = vunpack.c.h.b16 %v204
      %v696 = vunpack.c.l.b16 %v205
      %v697 = vunpack.c.h.b16 %v205
      %v698 = vunpack.c.l.b16 %v206
      %v699 = vunpack.c.l.b16 %v207
      %v700 = vunpack.c.h.b16 %v207
      %v701 = vunpack.c.l.b16 %v208
      %v702 = vunpack.c.h.b16 %v208
      %v703 = vunpack.c.l.b16 %v209
      %v704 = vunpack.c.h.b16 %v209
      %v705 = vunpack.c.l.b16 %v210
      %v706 = vunpack.c.h.b16 %v210
      %v707 = vunpack.c.l.b16 %v211
      %v708 = vunpack.c.l.b16 %v212
      %v709 = vunpack.c.h.b16 %v212
      %v710 = vunpack.c.l.b16 %v213
      %v711 = vunpack.c.h.b16 %v213
      %v712 = vunpack.c.l.b16 %v214
      %v713 = vunpack.c.h.b16 %v214
      %v714 = vunpack.c.l.b16 %v215
      %v715 = vunpack.c.h.b16 %v215
      %v716 = vunpack.c.l.b16 %v216
      %v717 = vunpack.c.l.b16 %v217
      %v718 = vunpack.c.h.b16 %v217
      %v719 = vunpack.c.l.b16 %v218
      %v720 = vunpack.c.h.b16 %v218
      %v721 = vunpack.c.l.b16 %v219
      %v722 = vunpack.c.h.b16 %v219
      %v723 = vunpack.c.l.b16 %v220
      %v724 = vunpack.c.h.b16 %v220
      %v725 = vunpack.c.l.b16 %v221
      %v726 = vunpack.c.l.b16 %v222
      %v727 = vunpack.c.h.b16 %v222
      %v728 = vunpack.c.l.b16 %v223
      %v729 = vunpack.c.h.b16 %v223
      %v730 = vunpack.c.l.b16 %v224
      %v731 = vunpack.c.h.b16 %v224
      %v732 = vunpack.c.l.b16 %v225
      %v733 = vunpack.c.h.b16 %v225
      %v734 = vunpack.c.l.b16 %v226
      %v735 = vunpack.c.l.b16 %v227
      %v736 = vunpack.c.h.b16 %v227
      %v737 = vunpack.c.l.b16 %v228
      %v738 = vunpack.c.h.b16 %v228
      %v739 = vunpack.c.l.b16 %v229
      %v740 = vunpack.c.h.b16 %v229
      %v741 = vunpack.c.l.b16 %v230
      %v742 = vunpack.c.h.b16 %v230
      %v743 = vunpack.c.l.b16 %v231
      %v744 = vunpack.c.l.b16 %v232
      %v745 = vunpack.c.h.b16 %v232
      %v746 = vunpack.c.l.b16 %v233
      %v747 = vunpack.c.h.b16 %v233
      %v748 = vunpack.c.l.b16 %v234
      %v749 = vunpack.c.h.b16 %v234
      %v750 = vunpack.c.l.b16 %v235
      %v751 = vunpack.c.h.b16 %v235
      %v752 = vunpack.c.l.b16 %v236
      %v753 = vunpack.c.l.b16 %v237
      %v754 = vunpack.c.h.b16 %v237
      %v755 = vunpack.c.l.b16 %v238
      %v756 = vunpack.c.h.b16 %v238
      %v757 = vunpack.c.l.b16 %v239
      %v758 = vunpack.c.h.b16 %v239
      %v759 = vunpack.c.l.b16 %v240
      %v760 = vunpack.c.h.b16 %v240
      %v761 = vunpack.c.l.b16 %v241
      %v762 = vunpack.c.l.b16 %v242
      %v763 = vunpack.c.h.b16 %v242
      %v764 = vunpack.c.l.b16 %v243
      %v765 = vunpack.c.h.b16 %v243
      %v766 = vunpack.c.l.b16 %v244
      %v767 = vunpack.c.h.b16 %v244
      %v768 = vunpack.c.l.b16 %v245
      %v769 = vunpack.c.h.b16 %v245
      %v770 = vunpack.c.l.b16 %v246
      %v771 = vunpack.c.l.b16 %v247
      %v772 = vunpack.c.h.b16 %v247
      %v773 = vunpack.c.l.b16 %v248
      %v774 = vunpack.c.h.b16 %v248
      %v775 = vunpack.c.l.b16 %v249
      %v776 = vunpack.c.h.b16 %v249
      %v777 = vunpack.c.l.b16 %v250
      %v778 = vunpack.c.h.b16 %v250
      %v779 = vunpack.c.l.b16 %v251
      %v780 = vunpack.c.l.b16 %v252
      %v781 = vunpack.c.h.b16 %v252
      %v782 = vunpack.c.l.b16 %v253
      %v783 = vunpack.c.h.b16 %v253
      %v784 = vunpack.c.l.b16 %v254
      %v785 = vunpack.c.h.b16 %v254
      %v786 = vunpack.c.l.b16 %v255
      %v787 = vunpack.c.h.b16 %v255
      %v788 = vunpack.c.l.b16 %v256
      %v789 = vunpack.c.l.b16 %v257
      %v790 = vunpack.c.h.b16 %v257
      %v791 = vunpack.c.l.b16 %v258
      %v792 = vunpack.c.h.b16 %v258
      %v793 = vunpack.c.l.b16 %v259
      %v794 = vunpack.c.h.b16 %v259
      %v795 = vunpack.c.l.b16 %v260
      %v796 = vunpack.c.h.b16 %v260
      %v797 = vunpack.c.l.b16 %v261
      %v798 = vunpack.c.l.b16 %v262
      %v799 = vunpack.c.h.b16 %v262
      %v800 = vunpack.c.l.b16 %v263
      %v801 = vunpack.c.h.b16 %v263
      %v802 = vunpack.c.l.b16 %v264
      %v803 = vunpack.c.h.b16 %v264
      %v804 = vunpack.c.l.b16 %v265
      %v805 = vunpack.c.h.b16 %v265
      %v806 = vunpack.c.l.b16 %v266
      %v807 = vunpack.c.l.b16 %v267
      %v808 = vunpack.c.h.b16 %v267
      %v809 = vunpack.c.l.b16 %v268
      %v810 = vunpack.c.h.b16 %v268
      %v811 = vunpack.c.l.b16 %v269
      %v812 = vunpack.c.h.b16 %v269
      %v813 = vunpack.c.l.b16 %v270
      %v814 = vunpack.c.h.b16 %v270
      %v815 = vunpack.c.l.b16 %v271
      %v816 = vunpack.c.l.b16 %v272
      %v817 = vunpack.c.h.b16 %v272
      %v818 = vunpack.c.l.b16 %v273
      %v819 = vunpack.c.h.b16 %v273
      %v820 = vunpack.c.l.b16 %v274
      %v821 = vunpack.c.h.b16 %v274
      %v822 = vunpack.c.l.b16 %v275
      %v823 = vunpack.c.h.b16 %v275
      %v824 = vunpack.c.l.b16 %v276
      %v825 = vunpack.c.l.b16 %v277
      %v826 = vunpack.c.h.b16 %v277
      %v827 = vunpack.c.l.b16 %v278
      %v828 = vunpack.c.h.b16 %v278
      %v829 = vunpack.c.l.b16 %v279
      %v830 = vunpack.c.h.b16 %v279
      %v831 = vunpack.c.l.b16 %v280
      %v832 = vunpack.c.h.b16 %v280
      %v833 = vunpack.c.l.b16 %v281
      %v834 = vunpack.c.l.b16 %v282
      %v835 = vunpack.c.h.b16 %v282
      %v836 = vunpack.c.l.b16 %v283
      %v837 = vunpack.c.h.b16 %v283
      %v838 = vunpack.c.l.b16 %v284
      %v839 = vunpack.c.h.b16 %v284
      %v840 = vunpack.c.l.b16 %v285
      %v841 = vunpack.c.h.b16 %v285
      %v842 = vunpack.c.l.b16 %v286
      %v843 = vunpack.c.l.b16 %v287
      %v844 = vunpack.c.h.b16 %v287
      %v845 = vunpack.c.l.b16 %v288
      %v846 = vunpack.c.h.b16 %v288
      %v847 = vunpack.c.l.b16 %v289
      %v848 = vunpack.c.h.b16 %v289
      %v849 = vunpack.c.l.b16 %v290
      %v850 = vunpack.c.h.b16 %v290
      %v851 = vunpack.c.l.b16 %v291
      %v852 = vunpack.c.l.b16 %v292
      %v853 = vunpack.c.h.b16 %v292
      %v854 = vunpack.c.l.b16 %v293
      %v855 = vunpack.c.h.b16 %v293
      %v856 = vunpack.c.l.b16 %v294
      %v857 = vunpack.c.h.b16 %v294
      %v858 = vunpack.c.l.b16 %v295
      %v859 = vunpack.c.h.b16 %v295
      %v860 = vunpack.c.l.b16 %v296
      %v861 = vunpack.c.l.b16 %v297
      %v862 = vunpack.c.h.b16 %v297
      %v863 = vunpack.c.l.b16 %v298
      %v864 = vunpack.c.h.b16 %v298
      %v865 = vunpack.c.l.b16 %v299
      %v866 = vunpack.c.h.b16 %v299
      %v867 = vunpack.c.l.b16 %v300
      %v868 = vunpack.c.h.b16 %v300
      %v869 = vunpack.c.l.b16 %v301
      %v870 = vunpack.c.l.b16 %v302
      %v871 = vunpack.c.h.b16 %v302
      %v872 = vunpack.c.l.b16 %v303
      %v873 = vunpack.c.h.b16 %v303
      %v874 = vunpack.c.l.b16 %v304
      %v875 = vunpack.c.h.b16 %v304
      %v876 = vunpack.c.l.b16 %v305
      %v877 = vunpack.c.h.b16 %v305
      %v878 = vunpack.c.l.b16 %v306
      %v879 = vunpack.c.l.b16 %v307
      %v880 = vunpack.c.h.b16 %v307
      %v881 = vunpack.c.l.b16 %v308
      %v882 = vunpack.c.h.b16 %v308
      %v883 = vunpack.c.l.b16 %v309
      %v884 = vunpack.c.h.b16 %v309
      %v885 = vunpack.c.l.b16 %v310
      %v886 = vunpack.c.h.b16 %v310
      %v887 = vunpack.c.l.b16 %v311
      %v888 = vunpack.c.l.b16 %v312
      %v889 = vunpack.c.h.b16 %v312
      %v890 = vunpack.c.l.b16 %v313
      %v891 = vunpack.c.h.b16 %v313
      %v892 = vunpack.c.l.b16 %v314
      %v893 = vunpack.c.h.b16 %v314
      %v894 = vunpack.c.l.b16 %v315
      %v895 = vunpack.c.h.b16 %v315
      %v896 = vunpack.c.l.b16 %v316
      %v897 = vunpack.c.l.b16 %v317
      %v898 = vunpack.c.h.b16 %v317
      %v899 = vunpack.c.l.b16 %v318
      %v900 = vunpack.c.h.b16 %v318
      %v901 = vunpack.c.l.b16 %v319
      %v902 = vunpack.c.h.b16 %v319
      %v903 = vunpack.c.l.b16 %v320
      %v904 = vunpack.c.h.b16 %v320
      %v905 = vunpack.c.l.b16 %v321
      %v906 = vunpack.c.l.b16 %v322
      %v907 = vunpack.c.h.b16 %v322
      %v908 = vunpack.c.l.b16 %v323
      %v909 = vunpack.c.h.b16 %v323
      %v910 = vunpack.c.l.b16 %v324
      %v911 = vunpack.c.h.b16 %v324
      %v912 = vunpack.c.l.b16 %v325
      %v913 = vunpack.c.h.b16 %v325
      %v914 = vunpack.c.l.b16 %v326
      %v915 = vunpack.c.l.b16 %v327
      %v916 = vunpack.c.h.b16 %v327
      %v917 = vunpack.c.l.b16 %v328
      %v918 = vunpack.c.h.b16 %v328
      %v919 = vunpack.c.l.b16 %v329
      %v920 = vunpack.c.h.b16 %v329
      %v921 = vunpack.c.l.b16 %v330
      %v922 = vunpack.c.h.b16 %v330
      %v923 = vunpack.c.l.b16 %v331
      %v924 = vunpack.c.l.b16 %v332
      %v925 = vunpack.c.h.b16 %v332
      %v926 = vunpack.c.l.b16 %v333
      %v927 = vunpack.c.h.b16 %v333
      %v928 = vunpack.c.l.b16 %v334
      %v929 = vunpack.c.h.b16 %v334
      %v930 = vunpack.c.l.b16 %v335
      %v931 = vunpack.c.h.b16 %v335
      %v932 = vunpack.c.l.b16 %v336
      %v933 = vpack.c.b16 %v654, %v645
      %v934 = vpack.c.b16 %v655, %v646
      %v935 = vpack.c.b16 %v656, %v647
      %v936 = vpack.c.b16 %v657, %v648
      %v937 = vpack.c.b16 %v658, %v649
      %v938 = vpack.c.b16 %v659, %v650
      %v939 = vpack.c.b16 %v660, %v651
      %v940 = vpack.c.b16 %v661, %v652
      %v941 = vpack.c.b16 %v662, %v653
      %v942 = vpack.c.b16 %v672, %v663
      %v943 = vpack.c.b16 %v673, %v664
      %v944 = vpack.c.b16 %v674, %v665
      %v945 = vpack.c.b16 %v675, %v666
      %v946 = vpack.c.b16 %v676, %v667
      %v947 = vpack.c.b16 %v677, %v668
      %v948 = vpack.c.b16 %v678, %v669
      %v949 = vpack.c.b16 %v679, %v670
      %v950 = vpack.c.b16 %v680, %v671
      %v951 = vpack.c.b16 %v690, %v681
      %v952 = vpack.c.b16 %v691, %v682
      %v953 = vpack.c.b16 %v692, %v683
      %v954 = vpack.c.b16 %v693, %v684
      %v955 = vpack.c.b16 %v694, %v685
      %v956 = vpack.c.b16 %v695, %v686
      %v957 = vpack.c.b16 %v696, %v687
      %v958 = vpack.c.b16 %v697, %v688
      %v959 = vpack.c.b16 %v698, %v689
      %v960 = vpack.c.b16 %v708, %v699
      %v961 = vpack.c.b16 %v709, %v700
      %v962 = vpack.c.b16 %v710, %v701
      %v963 = vpack.c.b16 %v711, %v702
      %v964 = vpack.c.b16 %v712, %v703
      %v965 = vpack.c.b16 %v713, %v704
      %v966 = vpack.c.b16 %v714, %v705
      %v967 = vpack.c.b16 %v715, %v706
      %v968 = vpack.c.b16 %v716, %v707
      %v969 = vpack.c.b16 %v726, %v717
      %v970 = vpack.c.b16 %v727, %v718
      %v971 = vpack.c.b16 %v728, %v719
      %v972 = vpack.c.b16 %v729, %v720
      %v973 = vpack.c.b16 %v730, %v721
      %v974 = vpack.c.b16 %v731, %v722
      %v975 = vpack.c.b16 %v732, %v723
      %v976 = vpack.c.b16 %v733, %v724
      %v977 = vpack.c.b16 %v734, %v725
      %v978 = vpack.c.b16 %v744, %v735
      %v979 = vpack.c.b16 %v745, %v736
      %v980 = vpack.c.b16 %v746, %v737
      %v981 = vpack.c.b16 %v747, %v738
      %v982 = vpack.c.b16 %v748, %v739
      %v983 = vpack.c.b16 %v749, %v740
      %v984 = vpack.c.b16 %v750, %v741
      %v985 = vpack.c.b16 %v751, %v742
      %v986 = vpack.c.b16 %v752, %v743
      %v987 = vpack.c.b16 %v762, %v753
      %v988 = vpack.c.b16 %v763, %v754
      %v989 = vpack.c.b16 %v764, %v755
      %v990 = vpack.c.b16 %v765, %v756
      %v991 = vpack.c.b16 %v766, %v757
      %v992 = vpack.c.b16 %v767, %v758
      %v993 = vpack.c.b16 %v768, %v759
      %v994 = vpack.c.b16 %v769, %v760
      %v995 = vpack.c.b16 %v770, %v761
      %v996 = vpack.c.b16 %v780, %v771
      %v997 = vpack.c.b16 %v781, %v772
      %v998 = vpack.c.b16 %v782, %v773
      %v999 = vpack.c.b16 %v783, %v774
      %v1000 = vpack.c.b16 %v784, %v775
      %v1001 = vpack.c.b16 %v785, %v776
      %v1002 = vpack.c.b16 %v786, %v777
      %v1003 = vpack.c.b16 %v787, %v778
      %v1004 = vpack.c.b16 %v788, %v779
      %v1005 = vpack.c.b16 %v798, %v789
      %v1006 = vpack.c.b16 %v799, %v790
      %v1007 = vpack.c.b16 %v800, %v791
      %v1008 = vpack.c.b16 %v801, %v792
      %v1009 = vpack.c.b16 %v802, %v793
      %v1010 = vpack.c.b16 %v803, %v794
      %v1011 = vpack.c.b16 %v804, %v795
      %v1012 = vpack.c.b16 %v805, %v796
      %v1013 = vpack.c.b16 %v806, %v797
      %v1014 = vpack.c.b16 %v816, %v807
      %v1015 = vpack.c.b16 %v817, %v808
      %v1016 = vpack.c.b16 %v818, %v809
      %v1017 = vpack.c.b16 %v819, %v810
      %v1018 = vpack.c.b16 %v820, %v811
      %v1019 = vpack.c.b16 %v821, %v812
      %v1020 = vpack.c.b16 %v822, %v813
      %v1021 = vpack.c.b16 %v823, %v814
      %v1022 = vpack.c.b16 %v824, %v815
      %v1023 = vpack.c.b16 %v834, %v825
      %v1024 = vpack.c.b16 %v835, %v826
      %v1025 = vpack.c.b16 %v836, %v827
      %v1026 = vpack.c.b16 %v837, %v828
      %v1027 = vpack.c.b16 %v838, %v829
      %v1028 = vpack.c.b16 %v839, %v830
      %v1029 = vpack.c.b16 %v840, %v831
      %v1030 = vpack.c.b16 %v841, %v832
      %v1031 = vpack.c.b16 %v842, %v833
      %v1032 = vpack.c.b16 %v852, %v843
      %v1033 = vpack.c.b16 %v853, %v844
      %v1034 = vpack.c.b16 %v854, %v845
      %v1035 = vpack.c.b16 %v855, %v846
      %v1036 = vpack.c.b16 %v856, %v847
      %v1037 = vpack.c.b16 %v857, %v848
      %v1038 = vpack.c.b16 %v858, %v849
      %v1039 = vpack.c.b16 %v859, %v850
      %v1040 = vpack.c.b16 %v860, %v851
      %v1041 = vpack.c.b16 %v870, %v861
      %v1042 = vpack.c.b16 %v871, %v862
      %v1043 = vpack.c.b16 %v872, %v863
      %v1044 = vpack.c.b16 %v873, %v864
      %v1045 = vpack.c.b16 %v874, %v865
      %v1046 = vpack.c.b16 %v875, %v866
      %v1047 = vpack.c.b16 %v876, %v867
      %v1048 = vpack.c.b16 %v877, %v868
      %v1049 = vpack.c.b16 %v878, %v869
      %v1050 = vpack.c.b16 %v888, %v879
      %v1051 = vpack.c.b16 %v889, %v880
      %v1052 = vpack.c.b16 %v890, %v881
      %v1053 = vpack.c.b16 %v891, %v882
      %v1054 = vpack.c.b16 %v892, %v883
      %v1055 = vpack.c.b16 %v893, %v884
      %v1056 = vpack.c.b16 %v894, %v885
      %v1057 = vpack.c.b16 %v895, %v886
      %v1058 = vpack.c.b16 %v896, %v887
      %v1059 = vpack.c.b16 %v906, %v897
      %v1060 = vpack.c.b16 %v907, %v898
      %v1061 = vpack.c.b16 %v908, %v899
      %v1062 = vpack.c.b16 %v909, %v900
      %v1063 = vpack.c.b16 %v910, %v901
      %v1064 = vpack.c.b16 %v911, %v902
      %v1065 = vpack.c.b16 %v912, %v903
      %v1066 = vpack.c.b16 %v913, %v904
      %v1067 = vpack.c.b16 %v914, %v905
      %v1068 = vpack.c.b16 %v924, %v915
      %v1069 = vpack.c.b16 %v925, %v916
      %v1070 = vpack.c.b16 %v926, %v917
      %v1071 = vpack.c.b16 %v927, %v918
      %v1072 = vpack.c.b16 %v928, %v919
      %v1073 = vpack.c.b16 %v929, %v920
      %v1074 = vpack.c.b16 %v930, %v921
      %v1075 = vpack.c.b16 %v931, %v922
      %v1076 = vpack.c.b16 %v932, %v923
      %v1365 = vunpack.c.l.b16 %v337
      %v1366 = vunpack.c.l.b16 %v338
      %v1367 = vunpack.c.l.b16 %v339
      %v1368 = vunpack.c.l.b16 %v340
      %v1369 = vunpack.c.l.b16 %v341
      %v1370 = vunpack.c.l.b16 %v342
      %v1371 = vunpack.c.l.b16 %v343
      %v1372 = vunpack.c.l.b16 %v344
      %v1373 = vunpack.c.l.b16 %v345
      %v1374 = vunpack.c.l.b16 %v346
      %v1375 = vunpack.c.l.b16 %v347
      %v1376 = vunpack.c.l.b16 %v348
      %v1377 = vunpack.c.l.b16 %v349
      %v1378 = vunpack.c.l.b16 %v350
      %v1379 = vunpack.c.l.b16 %v351
      %v1380 = vunpack.c.l.b16 %v352
      %v1381 = vunpack.c.l.b16 %v353
      %v1382 = vunpack.c.l.b16 %v354
      %v1383 = vunpack.c.l.b16 %v355
      %v1384 = vunpack.c.l.b16 %v356
      %v1385 = vunpack.c.l.b16 %v357
      %v1386 = vunpack.c.l.b16 %v358
      %v1387 = vunpack.c.l.b16 %v359
      %v1388 = vunpack.c.l.b16 %v360
      %v1389 = vunpack.c.l.b16 %v361
      %v1390 = vunpack.c.l.b16 %v362
      %v1391 = vunpack.c.l.b16 %v363
      %v1392 = vunpack.c.l.b16 %v364
      %v1393 = vunpack.c.l.b16 %v365
      %v1394 = vunpack.c.l.b16 %v366
      %v1395 = vunpack.c.l.b16 %v367
      %v1396 = vunpack.c.l.b16 %v368
      %v1397 = vunpack.c.l.b16 %v369
      %v1398 = vunpack.c.l.b16 %v370
      %v1399 = vunpack.c.l.b16 %v371
      %v1400 = vunpack.c.l.b16 %v372
      %v1401 = vunpack.c.l.b16 %v373
      %v1402 = vunpack.c.l.b16 %v374
      %v1403 = vunpack.c.l.b16 %v375
      %v1404 = vunpack.c.l.b16 %v376
      %v1405 = vunpack.c.l.b16 %v377
      %v1406 = vunpack.c.l.b16 %v378
      %v1407 = vunpack.c.l.b16 %v379
      %v1408 = vunpack.c.l.b16 %v380
      %v1409 = vunpack.c.l.b16 %v381
      %v1410 = vunpack.c.l.b16 %v382
      %v1411 = vunpack.c.l.b16 %v383
      %v1412 = vunpack.c.l.b16 %v384
      %v1413 = vunpack.c.l.b16 %v385
      %v1414 = vunpack.c.l.b16 %v386
      %v1415 = vunpack.c.l.b16 %v387
      %v1416 = vunpack.c.l.b16 %v388
      %v1417 = vunpack.c.l.b16 %v389
      %v1418 = vunpack.c.l.b16 %v390
      %v1419 = vunpack.c.l.b16 %v391
      %v1420 = vunpack.c.l.b16 %v392
      %v1421 = vunpack.c.l.b16 %v393
      %v1422 = vunpack.c.l.b16 %v394
      %v1423 = vunpack.c.l.b16 %v395
      %v1424 = vunpack.c.l.b16 %v396
      %v1425 = vunpack.c.l.b16 %v397
      %v1426 = vunpack.c.l.b16 %v398
      %v1427 = vunpack.c.l.b16 %v399
      %v1428 = vunpack.c.l.b16 %v400
      %v1429 = vunpack.c.l.b16 %v401
      %v1430 = vunpack.c.l.b16 %v402
      %v1431 = vunpack.c.l.b16 %v403
      %v1432 = vunpack.c.l.b16 %v404
      %v1433 = vunpack.c.l.b16 %v405
      %v1434 = vunpack.c.l.b16 %v406
      %v1435 = vunpack.c.l.b16 %v407
      %v1436 = vunpack.c.l.b16 %v408
      %v1437 = vunpack.c.l.b16 %v409
      %v1438 = vunpack.c.l.b16 %v410
      %v1439 = vunpack.c.l.b16 %v411
      %v1440 = vunpack.c.l.b16 %v412
      %v1441 = vunpack.c.l.b16 %v413
      %v1442 = vunpack.c.l.b16 %v414
      %v1443 = vunpack.c.l.b16 %v415
      %v1444 = vunpack.c.l.b16 %v416
      %v1445 = vunpack.c.l.b16 %v417
      %v1446 = vunpack.c.l.b16 %v418
      %v1447 = vunpack.c.l.b16 %v419
      %v1448 = vunpack.c.l.b16 %v420
      %v1449 = vunpack.c.l.b16 %v421
      %v1450 = vunpack.c.l.b16 %v422
      %v1451 = vunpack.c.l.b16 %v423
      %v1452 = vunpack.c.l.b16 %v424
      %v1453 = vunpack.c.l.b16 %v425
      %v1454 = vunpack.c.l.b16 %v426
      %v1455 = vunpack.c.l.b16 %v427
      %v1456 = vunpack.c.l.b16 %v428
      %v1457 = vunpack.c.l.b16 %v429
      %v1458 = vunpack.c.l.b16 %v430
      %v1459 = vunpack.c.l.b16 %v431
      %v1460 = vunpack.c.l.b16 %v432
      %v1461 = vunpack.c.l.b16 %v433
      %v1462 = vunpack.c.l.b16 %v434
      %v1463 = vunpack.c.l.b16 %v435
      %v1464 = vunpack.c.l.b16 %v436
      %v1465 = vunpack.c.l.b16 %v437
      %v1466 = vunpack.c.l.b16 %v438
      %v1467 = vunpack.c.l.b16 %v439
      %v1468 = vunpack.c.l.b16 %v440
      %v1469 = vunpack.c.l.b16 %v441
      %v1470 = vunpack.c.l.b16 %v442
      %v1471 = vunpack.c.l.b16 %v443
      %v1472 = vunpack.c.l.b16 %v444
      %v1473 = vunpack.c.l.b16 %v445
      %v1474 = vunpack.c.l.b16 %v446
      %v1475 = vunpack.c.l.b16 %v447
      %v1476 = vunpack.c.l.b16 %v448
      %v1477 = vunpack.c.l.b16 %v449
      %v1478 = vunpack.c.l.b16 %v450
      %v1479 = vunpack.c.l.b16 %v451
      %v1480 = vunpack.c.l.b16 %v452
      %v1481 = vunpack.c.l.b16 %v453
      %v1482 = vunpack.c.l.b16 %v454
      %v1483 = vunpack.c.l.b16 %v455
      %v1484 = vunpack.c.l.b16 %v456
      %v1485 = vunpack.c.l.b16 %v457
      %v1486 = vunpack.c.l.b16 %v458
      %v1487 = vunpack.c.l.b16 %v459
      %v1488 = vunpack.c.l.b16 %v460
      %v1489 = vunpack.c.l.b16 %v461
      %v1490 = vunpack.c.l.b16 %v462
      %v1491 = vunpack.c.l.b16 %v463
      %v1492 = vunpack.c.l.b16 %v464
      %v1493 = vunpack.c.l.b16 %v465
      %v1494 = vunpack.c.l.b16 %v466
      %v1495 = vunpack.c.l.b16 %v467
      %v1496 = vunpack.c.l.b16 %v468
      %v1497 = vunpack.c.l.b16 %v469
      %v1498 = vunpack.c.l.b16 %v470
      %v1499 = vunpack.c.l.b16 %v471
      %v1500 = vunpack.c.l.b16 %v472
      %v1501 = vunpack.c.l.b16 %v473
      %v1502 = vunpack.c.l.b16 %v474
      %v1503 = vunpack.c.l.b16 %v475
      %v1504 = vunpack.c.l.b16 %v476
      %v1505 = vunpack.c.l.b16 %v477
      %v1506 = vunpack.c.l.b16 %v478
      %v1507 = vunpack.c.l.b16 %v479
      %v1508 = vunpack.c.l.b16 %v480
      %v1509 = vpack.c.b16 %v1366, %v1365
      %v1510 = vpack.c.b16 %v1368, %v1367
      %v1511 = vpack.c.b16 %v1370, %v1369
      %v1512 = vpack.c.b16 %v1372, %v1371
      %v1513 = vpack.c.b16 %v1374, %v1373
      %v1514 = vpack.c.b16 %v1376, %v1375
      %v1515 = vpack.c.b16 %v1378, %v1377
      %v1516 = vpack.c.b16 %v1380, %v1379
      %v1517 = vpack.c.b16 %v1382, %v1381
      %v1518 = vpack.c.b16 %v1384, %v1383
      %v1519 = vpack.c.b16 %v1386, %v1385
      %v1520 = vpack.c.b16 %v1388, %v1387
      %v1521 = vpack.c.b16 %v1390, %v1389
      %v1522 = vpack.c.b16 %v1392, %v1391
      %v1523 = vpack.c.b16 %v1394, %v1393
      %v1524 = vpack.c.b16 %v1396, %v1395
      %v1525 = vpack.c.b16 %v1398, %v1397
      %v1526 = vpack.c.b16 %v1400, %v1399
      %v1527 = vpack.c.b16 %v1402, %v1401
      %v1528 = vpack.c.b16 %v1404, %v1403
      %v1529 = vpack.c.b16 %v1406, %v1405
      %v1530 = vpack.c.b16 %v1408, %v1407
      %v1531 = vpack.c.b16 %v1410, %v1409
      %v1532 = vpack.c.b16 %v1412, %v1411
      %v1533 = vpack.c.b16 %v1414, %v1413
      %v1534 = vpack.c.b16 %v1416, %v1415
      %v1535 = vpack.c.b16 %v1418, %v1417
      %v1536 = vpack.c.b16 %v1420, %v1419
      %v1537 = vpack.c.b16 %v1422, %v1421
      %v1538 = vpack.c.b16 %v1424, %v1423
      %v1539 = vpack.c.b16 %v1426, %v1425
      %v1540 = vpack.c.b16 %v1428, %v1427
      %v1541 = vpack.c.b16 %v1430, %v1429
      %v1542 = vpack.c.b16 %v1432, %v1431
      %v1543 = vpack.c.b16 %v1434, %v1433
      %v1544 = vpack.c.b16 %v1436, %v1435
      %v1545 = vpack.c.b16 %v1438, %v1437
      %v1546 = vpack.c.b16 %v1440, %v1439
      %v1547 = vpack.c.b16 %v1442, %v1441
      %v1548 = vpack.c.b16 %v1444, %v1443
      %v1549 = vpack.c.b16 %v1446, %v1445
      %v1550 = vpack.c.b16 %v1448, %v1447
      %v1551 = vpack.c.b16 %v1450, %v1449
      %v1552 = vpack.c.b16 %v1452, %v1451
      %v1553 = vpack.c.b16 %v1454, %v1453
      %v1554 = vpack.c.b16 %v1456, %v1455
      %v1555 = vpack.c.b16 %v1458, %v1457
      %v1556 = vpack.c.b16 %v1460, %v1459
      %v1557 = vpack.c.b16 %v1462, %v1461
      %v1558 = vpack.c.b16 %v1464, %v1463
      %v1559 = vpack.c.b16 %v1466, %v1465
      %v1560 = vpack.c.b16 %v1468, %v1467
      %v1561 = vpack.c.b16 %v1470, %v1469
      %v1562 = vpack.c.b16 %v1472, %v1471
      %v1563 = vpack.c.b16 %v1474, %v1473
      %v1564 = vpack.c.b16 %v1476, %v1475
      %v1565 = vpack.c.b16 %v1478, %v1477
      %v1566 = vpack.c.b16 %v1480, %v1479
      %v1567 = vpack.c.b16 %v1482, %v1481
      %v1568 = vpack.c.b16 %v1484, %v1483
      %v1569 = vpack.c.b16 %v1486, %v1485
      %v1570 = vpack.c.b16 %v1488, %v1487
      %v1571 = vpack.c.b16 %v1490, %v1489
      %v1572 = vpack.c.b16 %v1492, %v1491
      %v1573 = vpack.c.b16 %v1494, %v1493
      %v1574 = vpack.c.b16 %v1496, %v1495
      %v1575 = vpack.c.b16 %v1498, %v1497
      %v1576 = vpack.c.b16 %v1500, %v1499
      %v1577 = vpack.c.b16 %v1502, %v1501
      %v1578 = vpack.c.b16 %v1504, %v1503
      %v1579 = vpack.c.b16 %v1506, %v1505
      %v1580 = vpack.c.b16 %v1508, %v1507
      %1653 = vmatpush.bf16.msra.mxu0 %v1516
      %1654 = vmatpush.bf16.msra.mxu0 %v1515
      %1655 = vmatpush.bf16.msra.mxu0 %v1514
      %1656 = vmatpush.bf16.msra.mxu0 %v1513
      %1657 = vmatpush.bf16.msra.mxu0 %v1512
      %1658 = vmatpush.bf16.msra.mxu0 %v1511
      %1659 = vmatpush.bf16.msra.mxu0 %v1510
      %1660 = vmatpush.bf16.msra.mxu0 %v1509
      %1661 = vmatmul.bf16.gmra.mxu0 %v933
      %v1662 = vpop.f32.mrf.mxu0
      %v1663 = vadd.f32 %v483, %v1662
      %v1664 = vpop.f32.mrf.mxu0
      %v1665 = vadd.f32 %v483, %v1664
      %1666 = vmatmul.bf16.gmra.mxu0 %v942
      %v1667 = vpop.f32.mrf.mxu0
      %v1668 = vadd.f32 %v483, %v1667
      %v1669 = vpop.f32.mrf.mxu0
      %v1670 = vadd.f32 %v483, %v1669
      %1671 = vmatmul.bf16.gmra.mxu0 %v951
      %v1672 = vpop.f32.mrf.mxu0
      %v1673 = vadd.f32 %v483, %v1672
      %v1674 = vpop.f32.mrf.mxu0
      %v1675 = vadd.f32 %v483, %v1674
      %1676 = vmatmul.bf16.gmra.mxu0 %v960
      %v1677 = vpop.f32.mrf.mxu0
      %v1678 = vadd.f32 %v483, %v1677
      %v1679 = vpop.f32.mrf.mxu0
      %v1680 = vadd.f32 %v483, %v1679
      %1681 = vmatmul.bf16.gmra.mxu0 %v969
      %v1682 = vpop.f32.mrf.mxu0
      %v1683 = vadd.f32 %v483, %v1682
      %v1684 = vpop.f32.mrf.mxu0
      %v1685 = vadd.f32 %v483, %v1684
      %1686 = vmatmul.bf16.gmra.mxu0 %v978
      %v1687 = vpop.f32.mrf.mxu0
      %v1688 = vadd.f32 %v483, %v1687
      %v1689 = vpop.f32.mrf.mxu0
      %v1690 = vadd.f32 %v483, %v1689
      %1691 = vmatmul.bf16.gmra.mxu0 %v987
      %v1692 = vpop.f32.mrf.mxu0
      %v1693 = vadd.f32 %v483, %v1692
      %v1694 = vpop.f32.mrf.mxu0
      %v1695 = vadd.f32 %v483, %v1694
      %1696 = vmatmul.bf16.gmra.mxu0 %v996
      %v1697 = vpop.f32.mrf.mxu0
      %v1698 = vadd.f32 %v483, %v1697
      %v1699 = vpop.f32.mrf.mxu0
      %v1700 = vadd.f32 %v483, %v1699
      %1701 = vmatmul.bf16.gmra.mxu0 %v1005
      %v1702 = vpop.f32.mrf.mxu0
      %v1703 = vadd.f32 %v483, %v1702
      %v1704 = vpop.f32.mrf.mxu0
      %v1705 = vadd.f32 %v483, %v1704
      %1706 = vmatmul.bf16.gmra.mxu0 %v1014
      %v1707 = vpop.f32.mrf.mxu0
      %v1708 = vadd.f32 %v483, %v1707
      %v1709 = vpop.f32.mrf.mxu0
      %v1710 = vadd.f32 %v483, %v1709
      %1711 = vmatmul.bf16.gmra.mxu0 %v1023
      %v1712 = vpop.f32.mrf.mxu0
      %v1713 = vadd.f32 %v483, %v1712
      %v1714 = vpop.f32.mrf.mxu0
      %v1715 = vadd.f32 %v483, %v1714
      %1716 = vmatmul.bf16.gmra.mxu0 %v1032
      %v1717 = vpop.f32.mrf.mxu0
      %v1718 = vadd.f32 %v483, %v1717
      %v1719 = vpop.f32.mrf.mxu0
      %v1720 = vadd.f32 %v483, %v1719
      %1721 = vmatmul.bf16.gmra.mxu0 %v1041
      %v1722 = vpop.f32.mrf.mxu0
      %v1723 = vadd.f32 %v483, %v1722
      %v1724 = vpop.f32.mrf.mxu0
      %v1725 = vadd.f32 %v483, %v1724
      %1726 = vmatmul.bf16.gmra.mxu0 %v1050
      %v1727 = vpop.f32.mrf.mxu0
      %v1728 = vadd.f32 %v483, %v1727
      %v1729 = vpop.f32.mrf.mxu0
      %v1730 = vadd.f32 %v483, %v1729
      %1731 = vmatmul.bf16.gmra.mxu0 %v1059
      %v1732 = vpop.f32.mrf.mxu0
      %v1733 = vadd.f32 %v483, %v1732
      %v1734 = vpop.f32.mrf.mxu0
      %v1735 = vadd.f32 %v483, %v1734
      %1736 = vmatmul.bf16.gmra.mxu0 %v1068
      %v1737 = vpop.f32.mrf.mxu0
      %v1738 = vadd.f32 %v483, %v1737
      %v1739 = vpop.f32.mrf.mxu0
      %v1740 = vadd.f32 %v483, %v1739
      %1741 = vdwg.mxu0
      %1742 = vmatpush.bf16.msra.mxu0 %v1524
      %1743 = vmatpush.bf16.msra.mxu0 %v1523
      %1744 = vmatpush.bf16.msra.mxu0 %v1522
      %1745 = vmatpush.bf16.msra.mxu0 %v1521
      %1746 = vmatpush.bf16.msra.mxu0 %v1520
      %1747 = vmatpush.bf16.msra.mxu0 %v1519
      %1748 = vmatpush.bf16.msra.mxu0 %v1518
      %1749 = vmatpush.bf16.msra.mxu0 %v1517
      %1750 = vmatmul.bf16.gmra.mxu0 %v934
      %v1751 = vpop.f32.mrf.mxu0
      %v1752 = vadd.f32 %v1663, %v1751
      %v1753 = vpop.f32.mrf.mxu0
      %v1754 = vadd.f32 %v1665, %v1753
      %1755 = vmatmul.bf16.gmra.mxu0 %v943
      %v1756 = vpop.f32.mrf.mxu0
      %v1757 = vadd.f32 %v1668, %v1756
      %v1758 = vpop.f32.mrf.mxu0
      %v1759 = vadd.f32 %v1670, %v1758
      %1760 = vmatmul.bf16.gmra.mxu0 %v952
      %v1761 = vpop.f32.mrf.mxu0
      %v1762 = vadd.f32 %v1673, %v1761
      %v1763 = vpop.f32.mrf.mxu0
      %v1764 = vadd.f32 %v1675, %v1763
      %1765 = vmatmul.bf16.gmra.mxu0 %v961
      %v1766 = vpop.f32.mrf.mxu0
      %v1767 = vadd.f32 %v1678, %v1766
      %v1768 = vpop.f32.mrf.mxu0
      %v1769 = vadd.f32 %v1680, %v1768
      %1770 = vmatmul.bf16.gmra.mxu0 %v970
      %v1771 = vpop.f32.mrf.mxu0
      %v1772 = vadd.f32 %v1683, %v1771
      %v1773 = vpop.f32.mrf.mxu0
      %v1774 = vadd.f32 %v1685, %v1773
      %1775 = vmatmul.bf16.gmra.mxu0 %v979
      %v1776 = vpop.f32.mrf.mxu0
      %v1777 = vadd.f32 %v1688, %v1776
      %v1778 = vpop.f32.mrf.mxu0
      %v1779 = vadd.f32 %v1690, %v1778
      %1780 = vmatmul.bf16.gmra.mxu0 %v988
      %v1781 = vpop.f32.mrf.mxu0
      %v1782 = vadd.f32 %v1693, %v1781
      %v1783 = vpop.f32.mrf.mxu0
      %v1784 = vadd.f32 %v1695, %v1783
      %1785 = vmatmul.bf16.gmra.mxu0 %v997
      %v1786 = vpop.f32.mrf.mxu0
      %v1787 = vadd.f32 %v1698, %v1786
      %v1788 = vpop.f32.mrf.mxu0
      %v1789 = vadd.f32 %v1700, %v1788
      %1790 = vmatmul.bf16.gmra.mxu0 %v1006
      %v1791 = vpop.f32.mrf.mxu0
      %v1792 = vadd.f32 %v1703, %v1791
      %v1793 = vpop.f32.mrf.mxu0
      %v1794 = vadd.f32 %v1705, %v1793
      %1795 = vmatmul.bf16.gmra.mxu0 %v1015
      %v1796 = vpop.f32.mrf.mxu0
      %v1797 = vadd.f32 %v1708, %v1796
      %v1798 = vpop.f32.mrf.mxu0
      %v1799 = vadd.f32 %v1710, %v1798
      %1800 = vmatmul.bf16.gmra.mxu0 %v1024
      %v1801 = vpop.f32.mrf.mxu0
      %v1802 = vadd.f32 %v1713, %v1801
      %v1803 = vpop.f32.mrf.mxu0
      %v1804 = vadd.f32 %v1715, %v1803
      %1805 = vmatmul.bf16.gmra.mxu0 %v1033
      %v1806 = vpop.f32.mrf.mxu0
      %v1807 = vadd.f32 %v1718, %v1806
      %v1808 = vpop.f32.mrf.mxu0
      %v1809 = vadd.f32 %v1720, %v1808
      %1810 = vmatmul.bf16.gmra.mxu0 %v1042
      %v1811 = vpop.f32.mrf.mxu0
      %v1812 = vadd.f32 %v1723, %v1811
      %v1813 = vpop.f32.mrf.mxu0
      %v1814 = vadd.f32 %v1725, %v1813
      %1815 = vmatmul.bf16.gmra.mxu0 %v1051
      %v1816 = vpop.f32.mrf.mxu0
      %v1817 = vadd.f32 %v1728, %v1816
      %v1818 = vpop.f32.mrf.mxu0
      %v1819 = vadd.f32 %v1730, %v1818
      %1820 = vmatmul.bf16.gmra.mxu0 %v1060
      %v1821 = vpop.f32.mrf.mxu0
      %v1822 = vadd.f32 %v1733, %v1821
      %v1823 = vpop.f32.mrf.mxu0
      %v1824 = vadd.f32 %v1735, %v1823
      %1825 = vmatmul.bf16.gmra.mxu0 %v1069
      %v1826 = vpop.f32.mrf.mxu0
      %v1827 = vadd.f32 %v1738, %v1826
      %v1828 = vpop.f32.mrf.mxu0
      %v1829 = vadd.f32 %v1740, %v1828
      %1830 = vdwg.mxu0
      %1831 = vmatpush.bf16.msra.mxu0 %v1532
      %1832 = vmatpush.bf16.msra.mxu0 %v1531
      %1833 = vmatpush.bf16.msra.mxu0 %v1530
      %1834 = vmatpush.bf16.msra.mxu0 %v1529
      %1835 = vmatpush.bf16.msra.mxu0 %v1528
      %1836 = vmatpush.bf16.msra.mxu0 %v1527
      %1837 = vmatpush.bf16.msra.mxu0 %v1526
      %1838 = vmatpush.bf16.msra.mxu0 %v1525
      %1839 = vmatmul.bf16.gmra.mxu0 %v935
      %v1840 = vpop.f32.mrf.mxu0
      %v1841 = vadd.f32 %v1752, %v1840
      %v1842 = vpop.f32.mrf.mxu0
      %v1843 = vadd.f32 %v1754, %v1842
      %1844 = vmatmul.bf16.gmra.mxu0 %v944
      %v1845 = vpop.f32.mrf.mxu0
      %v1846 = vadd.f32 %v1757, %v1845
      %v1847 = vpop.f32.mrf.mxu0
      %v1848 = vadd.f32 %v1759, %v1847
      %1849 = vmatmul.bf16.gmra.mxu0 %v953
      %v1850 = vpop.f32.mrf.mxu0
      %v1851 = vadd.f32 %v1762, %v1850
      %v1852 = vpop.f32.mrf.mxu0
      %v1853 = vadd.f32 %v1764, %v1852
      %1854 = vmatmul.bf16.gmra.mxu0 %v962
      %v1855 = vpop.f32.mrf.mxu0
      %v1856 = vadd.f32 %v1767, %v1855
      %v1857 = vpop.f32.mrf.mxu0
      %v1858 = vadd.f32 %v1769, %v1857
      %1859 = vmatmul.bf16.gmra.mxu0 %v971
      %v1860 = vpop.f32.mrf.mxu0
      %v1861 = vadd.f32 %v1772, %v1860
      %v1862 = vpop.f32.mrf.mxu0
      %v1863 = vadd.f32 %v1774, %v1862
      %1864 = vmatmul.bf16.gmra.mxu0 %v980
      %v1865 = vpop.f32.mrf.mxu0
      %v1866 = vadd.f32 %v1777, %v1865
      %v1867 = vpop.f32.mrf.mxu0
      %v1868 = vadd.f32 %v1779, %v1867
      %1869 = vmatmul.bf16.gmra.mxu0 %v989
      %v1870 = vpop.f32.mrf.mxu0
      %v1871 = vadd.f32 %v1782, %v1870
      %v1872 = vpop.f32.mrf.mxu0
      %v1873 = vadd.f32 %v1784, %v1872
      %1874 = vmatmul.bf16.gmra.mxu0 %v998
      %v1875 = vpop.f32.mrf.mxu0
      %v1876 = vadd.f32 %v1787, %v1875
      %v1877 = vpop.f32.mrf.mxu0
      %v1878 = vadd.f32 %v1789, %v1877
      %1879 = vmatmul.bf16.gmra.mxu0 %v1007
      %v1880 = vpop.f32.mrf.mxu0
      %v1881 = vadd.f32 %v1792, %v1880
      %v1882 = vpop.f32.mrf.mxu0
      %v1883 = vadd.f32 %v1794, %v1882
      %1884 = vmatmul.bf16.gmra.mxu0 %v1016
      %v1885 = vpop.f32.mrf.mxu0
      %v1886 = vadd.f32 %v1797, %v1885
      %v1887 = vpop.f32.mrf.mxu0
      %v1888 = vadd.f32 %v1799, %v1887
      %1889 = vmatmul.bf16.gmra.mxu0 %v1025
      %v1890 = vpop.f32.mrf.mxu0
      %v1891 = vadd.f32 %v1802, %v1890
      %v1892 = vpop.f32.mrf.mxu0
      %v1893 = vadd.f32 %v1804, %v1892
      %1894 = vmatmul.bf16.gmra.mxu0 %v1034
      %v1895 = vpop.f32.mrf.mxu0
      %v1896 = vadd.f32 %v1807, %v1895
      %v1897 = vpop.f32.mrf.mxu0
      %v1898 = vadd.f32 %v1809, %v1897
      %1899 = vmatmul.bf16.gmra.mxu0 %v1043
      %v1900 = vpop.f32.mrf.mxu0
      %v1901 = vadd.f32 %v1812, %v1900
      %v1902 = vpop.f32.mrf.mxu0
      %v1903 = vadd.f32 %v1814, %v1902
      %1904 = vmatmul.bf16.gmra.mxu0 %v1052
      %v1905 = vpop.f32.mrf.mxu0
      %v1906 = vadd.f32 %v1817, %v1905
      %v1907 = vpop.f32.mrf.mxu0
      %v1908 = vadd.f32 %v1819, %v1907
      %1909 = vmatmul.bf16.gmra.mxu0 %v1061
      %v1910 = vpop.f32.mrf.mxu0
      %v1911 = vadd.f32 %v1822, %v1910
      %v1912 = vpop.f32.mrf.mxu0
      %v1913 = vadd.f32 %v1824, %v1912
      %1914 = vmatmul.bf16.gmra.mxu0 %v1070
      %v1915 = vpop.f32.mrf.mxu0
      %v1916 = vadd.f32 %v1827, %v1915
      %v1917 = vpop.f32.mrf.mxu0
      %v1918 = vadd.f32 %v1829, %v1917
      %1919 = vdwg.mxu0
      %1920 = vmatpush.bf16.msra.mxu0 %v1540
      %1921 = vmatpush.bf16.msra.mxu0 %v1539
      %1922 = vmatpush.bf16.msra.mxu0 %v1538
      %1923 = vmatpush.bf16.msra.mxu0 %v1537
      %1924 = vmatpush.bf16.msra.mxu0 %v1536
      %1925 = vmatpush.bf16.msra.mxu0 %v1535
      %1926 = vmatpush.bf16.msra.mxu0 %v1534
      %1927 = vmatpush.bf16.msra.mxu0 %v1533
      %1928 = vmatmul.bf16.gmra.mxu0 %v936
      %v1929 = vpop.f32.mrf.mxu0
      %v1930 = vadd.f32 %v1841, %v1929
      %v1931 = vpop.f32.mrf.mxu0
      %v1932 = vadd.f32 %v1843, %v1931
      %1933 = vmatmul.bf16.gmra.mxu0 %v945
      %v1934 = vpop.f32.mrf.mxu0
      %v1935 = vadd.f32 %v1846, %v1934
      %v1936 = vpop.f32.mrf.mxu0
      %v1937 = vadd.f32 %v1848, %v1936
      %1938 = vmatmul.bf16.gmra.mxu0 %v954
      %v1939 = vpop.f32.mrf.mxu0
      %v1940 = vadd.f32 %v1851, %v1939
      %v1941 = vpop.f32.mrf.mxu0
      %v1942 = vadd.f32 %v1853, %v1941
      %1943 = vmatmul.bf16.gmra.mxu0 %v963
      %v1944 = vpop.f32.mrf.mxu0
      %v1945 = vadd.f32 %v1856, %v1944
      %v1946 = vpop.f32.mrf.mxu0
      %v1947 = vadd.f32 %v1858, %v1946
      %1948 = vmatmul.bf16.gmra.mxu0 %v972
      %v1949 = vpop.f32.mrf.mxu0
      %v1950 = vadd.f32 %v1861, %v1949
      %v1951 = vpop.f32.mrf.mxu0
      %v1952 = vadd.f32 %v1863, %v1951
      %1953 = vmatmul.bf16.gmra.mxu0 %v981
      %v1954 = vpop.f32.mrf.mxu0
      %v1955 = vadd.f32 %v1866, %v1954
      %v1956 = vpop.f32.mrf.mxu0
      %v1957 = vadd.f32 %v1868, %v1956
      %1958 = vmatmul.bf16.gmra.mxu0 %v990
      %v1959 = vpop.f32.mrf.mxu0
      %v1960 = vadd.f32 %v1871, %v1959
      %v1961 = vpop.f32.mrf.mxu0
      %v1962 = vadd.f32 %v1873, %v1961
      %1963 = vmatmul.bf16.gmra.mxu0 %v999
      %v1964 = vpop.f32.mrf.mxu0
      %v1965 = vadd.f32 %v1876, %v1964
      %v1966 = vpop.f32.mrf.mxu0
      %v1967 = vadd.f32 %v1878, %v1966
      %1968 = vmatmul.bf16.gmra.mxu0 %v1008
      %v1969 = vpop.f32.mrf.mxu0
      %v1970 = vadd.f32 %v1881, %v1969
      %v1971 = vpop.f32.mrf.mxu0
      %v1972 = vadd.f32 %v1883, %v1971
      %1973 = vmatmul.bf16.gmra.mxu0 %v1017
      %v1974 = vpop.f32.mrf.mxu0
      %v1975 = vadd.f32 %v1886, %v1974
      %v1976 = vpop.f32.mrf.mxu0
      %v1977 = vadd.f32 %v1888, %v1976
      %1978 = vmatmul.bf16.gmra.mxu0 %v1026
      %v1979 = vpop.f32.mrf.mxu0
      %v1980 = vadd.f32 %v1891, %v1979
      %v1981 = vpop.f32.mrf.mxu0
      %v1982 = vadd.f32 %v1893, %v1981
      %1983 = vmatmul.bf16.gmra.mxu0 %v1035
      %v1984 = vpop.f32.mrf.mxu0
      %v1985 = vadd.f32 %v1896, %v1984
      %v1986 = vpop.f32.mrf.mxu0
      %v1987 = vadd.f32 %v1898, %v1986
      %1988 = vmatmul.bf16.gmra.mxu0 %v1044
      %v1989 = vpop.f32.mrf.mxu0
      %v1990 = vadd.f32 %v1901, %v1989
      %v1991 = vpop.f32.mrf.mxu0
      %v1992 = vadd.f32 %v1903, %v1991
      %1993 = vmatmul.bf16.gmra.mxu0 %v1053
      %v1994 = vpop.f32.mrf.mxu0
      %v1995 = vadd.f32 %v1906, %v1994
      %v1996 = vpop.f32.mrf.mxu0
      %v1997 = vadd.f32 %v1908, %v1996
      %1998 = vmatmul.bf16.gmra.mxu0 %v1062
      %v1999 = vpop.f32.mrf.mxu0
      %v2000 = vadd.f32 %v1911, %v1999
      %v2001 = vpop.f32.mrf.mxu0
      %v2002 = vadd.f32 %v1913, %v2001
      %2003 = vmatmul.bf16.gmra.mxu0 %v1071
      %v2004 = vpop.f32.mrf.mxu0
      %v2005 = vadd.f32 %v1916, %v2004
      %v2006 = vpop.f32.mrf.mxu0
      %v2007 = vadd.f32 %v1918, %v2006
      %2008 = vdwg.mxu0
      %2009 = vmatpush.bf16.msra.mxu0 %v1548
      %2010 = vmatpush.bf16.msra.mxu0 %v1547
      %2011 = vmatpush.bf16.msra.mxu0 %v1546
      %2012 = vmatpush.bf16.msra.mxu0 %v1545
      %2013 = vmatpush.bf16.msra.mxu0 %v1544
      %2014 = vmatpush.bf16.msra.mxu0 %v1543
      %2015 = vmatpush.bf16.msra.mxu0 %v1542
      %2016 = vmatpush.bf16.msra.mxu0 %v1541
      %2017 = vmatmul.bf16.gmra.mxu0 %v937
      %v2018 = vpop.f32.mrf.mxu0
      %v2019 = vadd.f32 %v1930, %v2018
      %v2020 = vpop.f32.mrf.mxu0
      %v2021 = vadd.f32 %v1932, %v2020
      %2022 = vmatmul.bf16.gmra.mxu0 %v946
      %v2023 = vpop.f32.mrf.mxu0
      %v2024 = vadd.f32 %v1935, %v2023
      %v2025 = vpop.f32.mrf.mxu0
      %v2026 = vadd.f32 %v1937, %v2025
      %2027 = vmatmul.bf16.gmra.mxu0 %v955
      %v2028 = vpop.f32.mrf.mxu0
      %v2029 = vadd.f32 %v1940, %v2028
      %v2030 = vpop.f32.mrf.mxu0
      %v2031 = vadd.f32 %v1942, %v2030
      %2032 = vmatmul.bf16.gmra.mxu0 %v964
      %v2033 = vpop.f32.mrf.mxu0
      %v2034 = vadd.f32 %v1945, %v2033
      %v2035 = vpop.f32.mrf.mxu0
      %v2036 = vadd.f32 %v1947, %v2035
      %2037 = vmatmul.bf16.gmra.mxu0 %v973
      %v2038 = vpop.f32.mrf.mxu0
      %v2039 = vadd.f32 %v1950, %v2038
      %v2040 = vpop.f32.mrf.mxu0
      %v2041 = vadd.f32 %v1952, %v2040
      %2042 = vmatmul.bf16.gmra.mxu0 %v982
      %v2043 = vpop.f32.mrf.mxu0
      %v2044 = vadd.f32 %v1955, %v2043
      %v2045 = vpop.f32.mrf.mxu0
      %v2046 = vadd.f32 %v1957, %v2045
      %2047 = vmatmul.bf16.gmra.mxu0 %v991
      %v2048 = vpop.f32.mrf.mxu0
      %v2049 = vadd.f32 %v1960, %v2048
      %v2050 = vpop.f32.mrf.mxu0
      %v2051 = vadd.f32 %v1962, %v2050
      %2052 = vmatmul.bf16.gmra.mxu0 %v1000
      %v2053 = vpop.f32.mrf.mxu0
      %v2054 = vadd.f32 %v1965, %v2053
      %v2055 = vpop.f32.mrf.mxu0
      %v2056 = vadd.f32 %v1967, %v2055
      %2057 = vmatmul.bf16.gmra.mxu0 %v1009
      %v2058 = vpop.f32.mrf.mxu0
      %v2059 = vadd.f32 %v1970, %v2058
      %v2060 = vpop.f32.mrf.mxu0
      %v2061 = vadd.f32 %v1972, %v2060
      %2062 = vmatmul.bf16.gmra.mxu0 %v1018
      %v2063 = vpop.f32.mrf.mxu0
      %v2064 = vadd.f32 %v1975, %v2063
      %v2065 = vpop.f32.mrf.mxu0
      %v2066 = vadd.f32 %v1977, %v2065
      %2067 = vmatmul.bf16.gmra.mxu0 %v1027
      %v2068 = vpop.f32.mrf.mxu0
      %v2069 = vadd.f32 %v1980, %v2068
      %v2070 = vpop.f32.mrf.mxu0
      %v2071 = vadd.f32 %v1982, %v2070
      %2072 = vmatmul.bf16.gmra.mxu0 %v1036
      %v2073 = vpop.f32.mrf.mxu0
      %v2074 = vadd.f32 %v1985, %v2073
      %v2075 = vpop.f32.mrf.mxu0
      %v2076 = vadd.f32 %v1987, %v2075
      %2077 = vmatmul.bf16.gmra.mxu0 %v1045
      %v2078 = vpop.f32.mrf.mxu0
      %v2079 = vadd.f32 %v1990, %v2078
      %v2080 = vpop.f32.mrf.mxu0
      %v2081 = vadd.f32 %v1992, %v2080
      %2082 = vmatmul.bf16.gmra.mxu0 %v1054
      %v2083 = vpop.f32.mrf.mxu0
      %v2084 = vadd.f32 %v1995, %v2083
      %v2085 = vpop.f32.mrf.mxu0
      %v2086 = vadd.f32 %v1997, %v2085
      %2087 = vmatmul.bf16.gmra.mxu0 %v1063
      %v2088 = vpop.f32.mrf.mxu0
      %v2089 = vadd.f32 %v2000, %v2088
      %v2090 = vpop.f32.mrf.mxu0
      %v2091 = vadd.f32 %v2002, %v2090
      %2092 = vmatmul.bf16.gmra.mxu0 %v1072
      %v2093 = vpop.f32.mrf.mxu0
      %v2094 = vadd.f32 %v2005, %v2093
      %v2095 = vpop.f32.mrf.mxu0
      %v2096 = vadd.f32 %v2007, %v2095
      %2097 = vdwg.mxu0
      %2098 = vmatpush.bf16.msra.mxu0 %v1556
      %2099 = vmatpush.bf16.msra.mxu0 %v1555
      %2100 = vmatpush.bf16.msra.mxu0 %v1554
      %2101 = vmatpush.bf16.msra.mxu0 %v1553
      %2102 = vmatpush.bf16.msra.mxu0 %v1552
      %2103 = vmatpush.bf16.msra.mxu0 %v1551
      %2104 = vmatpush.bf16.msra.mxu0 %v1550
      %2105 = vmatpush.bf16.msra.mxu0 %v1549
      %2106 = vmatmul.bf16.gmra.mxu0 %v938
      %v2107 = vpop.f32.mrf.mxu0
      %v2108 = vadd.f32 %v2019, %v2107
      %v2109 = vpop.f32.mrf.mxu0
      %v2110 = vadd.f32 %v2021, %v2109
      %2111 = vmatmul.bf16.gmra.mxu0 %v947
      %v2112 = vpop.f32.mrf.mxu0
      %v2113 = vadd.f32 %v2024, %v2112
      %v2114 = vpop.f32.mrf.mxu0
      %v2115 = vadd.f32 %v2026, %v2114
      %2116 = vmatmul.bf16.gmra.mxu0 %v956
      %v2117 = vpop.f32.mrf.mxu0
      %v2118 = vadd.f32 %v2029, %v2117
      %v2119 = vpop.f32.mrf.mxu0
      %v2120 = vadd.f32 %v2031, %v2119
      %2121 = vmatmul.bf16.gmra.mxu0 %v965
      %v2122 = vpop.f32.mrf.mxu0
      %v2123 = vadd.f32 %v2034, %v2122
      %v2124 = vpop.f32.mrf.mxu0
      %v2125 = vadd.f32 %v2036, %v2124
      %2126 = vmatmul.bf16.gmra.mxu0 %v974
      %v2127 = vpop.f32.mrf.mxu0
      %v2128 = vadd.f32 %v2039, %v2127
      %v2129 = vpop.f32.mrf.mxu0
      %v2130 = vadd.f32 %v2041, %v2129
      %2131 = vmatmul.bf16.gmra.mxu0 %v983
      %v2132 = vpop.f32.mrf.mxu0
      %v2133 = vadd.f32 %v2044, %v2132
      %v2134 = vpop.f32.mrf.mxu0
      %v2135 = vadd.f32 %v2046, %v2134
      %2136 = vmatmul.bf16.gmra.mxu0 %v992
      %v2137 = vpop.f32.mrf.mxu0
      %v2138 = vadd.f32 %v2049, %v2137
      %v2139 = vpop.f32.mrf.mxu0
      %v2140 = vadd.f32 %v2051, %v2139
      %2141 = vmatmul.bf16.gmra.mxu0 %v1001
      %v2142 = vpop.f32.mrf.mxu0
      %v2143 = vadd.f32 %v2054, %v2142
      %v2144 = vpop.f32.mrf.mxu0
      %v2145 = vadd.f32 %v2056, %v2144
      %2146 = vmatmul.bf16.gmra.mxu0 %v1010
      %v2147 = vpop.f32.mrf.mxu0
      %v2148 = vadd.f32 %v2059, %v2147
      %v2149 = vpop.f32.mrf.mxu0
      %v2150 = vadd.f32 %v2061, %v2149
      %2151 = vmatmul.bf16.gmra.mxu0 %v1019
      %v2152 = vpop.f32.mrf.mxu0
      %v2153 = vadd.f32 %v2064, %v2152
      %v2154 = vpop.f32.mrf.mxu0
      %v2155 = vadd.f32 %v2066, %v2154
      %2156 = vmatmul.bf16.gmra.mxu0 %v1028
      %v2157 = vpop.f32.mrf.mxu0
      %v2158 = vadd.f32 %v2069, %v2157
      %v2159 = vpop.f32.mrf.mxu0
      %v2160 = vadd.f32 %v2071, %v2159
      %2161 = vmatmul.bf16.gmra.mxu0 %v1037
      %v2162 = vpop.f32.mrf.mxu0
      %v2163 = vadd.f32 %v2074, %v2162
      %v2164 = vpop.f32.mrf.mxu0
      %v2165 = vadd.f32 %v2076, %v2164
      %2166 = vmatmul.bf16.gmra.mxu0 %v1046
      %v2167 = vpop.f32.mrf.mxu0
      %v2168 = vadd.f32 %v2079, %v2167
      %v2169 = vpop.f32.mrf.mxu0
      %v2170 = vadd.f32 %v2081, %v2169
      %2171 = vmatmul.bf16.gmra.mxu0 %v1055
      %v2172 = vpop.f32.mrf.mxu0
      %v2173 = vadd.f32 %v2084, %v2172
      %v2174 = vpop.f32.mrf.mxu0
      %v2175 = vadd.f32 %v2086, %v2174
      %2176 = vmatmul.bf16.gmra.mxu0 %v1064
      %v2177 = vpop.f32.mrf.mxu0
      %v2178 = vadd.f32 %v2089, %v2177
      %v2179 = vpop.f32.mrf.mxu0
      %v2180 = vadd.f32 %v2091, %v2179
      %2181 = vmatmul.bf16.gmra.mxu0 %v1073
      %v2182 = vpop.f32.mrf.mxu0
      %v2183 = vadd.f32 %v2094, %v2182
      %v2184 = vpop.f32.mrf.mxu0
      %v2185 = vadd.f32 %v2096, %v2184
      %2186 = vdwg.mxu0
      %2187 = vmatpush.bf16.msra.mxu0 %v1564
      %2188 = vmatpush.bf16.msra.mxu0 %v1563
      %2189 = vmatpush.bf16.msra.mxu0 %v1562
      %2190 = vmatpush.bf16.msra.mxu0 %v1561
      %2191 = vmatpush.bf16.msra.mxu0 %v1560
      %2192 = vmatpush.bf16.msra.mxu0 %v1559
      %2193 = vmatpush.bf16.msra.mxu0 %v1558
      %2194 = vmatpush.bf16.msra.mxu0 %v1557
      %2195 = vmatmul.bf16.gmra.mxu0 %v939
      %v2196 = vpop.f32.mrf.mxu0
      %v2197 = vadd.f32 %v2108, %v2196
      %v2198 = vpop.f32.mrf.mxu0
      %v2199 = vadd.f32 %v2110, %v2198
      %2200 = vmatmul.bf16.gmra.mxu0 %v948
      %v2201 = vpop.f32.mrf.mxu0
      %v2202 = vadd.f32 %v2113, %v2201
      %v2203 = vpop.f32.mrf.mxu0
      %v2204 = vadd.f32 %v2115, %v2203
      %2205 = vmatmul.bf16.gmra.mxu0 %v957
      %v2206 = vpop.f32.mrf.mxu0
      %v2207 = vadd.f32 %v2118, %v2206
      %v2208 = vpop.f32.mrf.mxu0
      %v2209 = vadd.f32 %v2120, %v2208
      %2210 = vmatmul.bf16.gmra.mxu0 %v966
      %v2211 = vpop.f32.mrf.mxu0
      %v2212 = vadd.f32 %v2123, %v2211
      %v2213 = vpop.f32.mrf.mxu0
      %v2214 = vadd.f32 %v2125, %v2213
      %2215 = vmatmul.bf16.gmra.mxu0 %v975
      %v2216 = vpop.f32.mrf.mxu0
      %v2217 = vadd.f32 %v2128, %v2216
      %v2218 = vpop.f32.mrf.mxu0
      %v2219 = vadd.f32 %v2130, %v2218
      %2220 = vmatmul.bf16.gmra.mxu0 %v984
      %v2221 = vpop.f32.mrf.mxu0
      %v2222 = vadd.f32 %v2133, %v2221
      %v2223 = vpop.f32.mrf.mxu0
      %v2224 = vadd.f32 %v2135, %v2223
      %2225 = vmatmul.bf16.gmra.mxu0 %v993
      %v2226 = vpop.f32.mrf.mxu0
      %v2227 = vadd.f32 %v2138, %v2226
      %v2228 = vpop.f32.mrf.mxu0
      %v2229 = vadd.f32 %v2140, %v2228
      %2230 = vmatmul.bf16.gmra.mxu0 %v1002
      %v2231 = vpop.f32.mrf.mxu0
      %v2232 = vadd.f32 %v2143, %v2231
      %v2233 = vpop.f32.mrf.mxu0
      %v2234 = vadd.f32 %v2145, %v2233
      %2235 = vmatmul.bf16.gmra.mxu0 %v1011
      %v2236 = vpop.f32.mrf.mxu0
      %v2237 = vadd.f32 %v2148, %v2236
      %v2238 = vpop.f32.mrf.mxu0
      %v2239 = vadd.f32 %v2150, %v2238
      %2240 = vmatmul.bf16.gmra.mxu0 %v1020
      %v2241 = vpop.f32.mrf.mxu0
      %v2242 = vadd.f32 %v2153, %v2241
      %v2243 = vpop.f32.mrf.mxu0
      %v2244 = vadd.f32 %v2155, %v2243
      %2245 = vmatmul.bf16.gmra.mxu0 %v1029
      %v2246 = vpop.f32.mrf.mxu0
      %v2247 = vadd.f32 %v2158, %v2246
      %v2248 = vpop.f32.mrf.mxu0
      %v2249 = vadd.f32 %v2160, %v2248
      %2250 = vmatmul.bf16.gmra.mxu0 %v1038
      %v2251 = vpop.f32.mrf.mxu0
      %v2252 = vadd.f32 %v2163, %v2251
      %v2253 = vpop.f32.mrf.mxu0
      %v2254 = vadd.f32 %v2165, %v2253
      %2255 = vmatmul.bf16.gmra.mxu0 %v1047
      %v2256 = vpop.f32.mrf.mxu0
      %v2257 = vadd.f32 %v2168, %v2256
      %v2258 = vpop.f32.mrf.mxu0
      %v2259 = vadd.f32 %v2170, %v2258
      %2260 = vmatmul.bf16.gmra.mxu0 %v1056
      %v2261 = vpop.f32.mrf.mxu0
      %v2262 = vadd.f32 %v2173, %v2261
      %v2263 = vpop.f32.mrf.mxu0
      %v2264 = vadd.f32 %v2175, %v2263
      %2265 = vmatmul.bf16.gmra.mxu0 %v1065
      %v2266 = vpop.f32.mrf.mxu0
      %v2267 = vadd.f32 %v2178, %v2266
      %v2268 = vpop.f32.mrf.mxu0
      %v2269 = vadd.f32 %v2180, %v2268
      %2270 = vmatmul.bf16.gmra.mxu0 %v1074
      %v2271 = vpop.f32.mrf.mxu0
      %v2272 = vadd.f32 %v2183, %v2271
      %v2273 = vpop.f32.mrf.mxu0
      %v2274 = vadd.f32 %v2185, %v2273
      %2275 = vdwg.mxu0
      %2276 = vmatpush.bf16.msra.mxu0 %v1572
      %2277 = vmatpush.bf16.msra.mxu0 %v1571
      %2278 = vmatpush.bf16.msra.mxu0 %v1570
      %2279 = vmatpush.bf16.msra.mxu0 %v1569
      %2280 = vmatpush.bf16.msra.mxu0 %v1568
      %2281 = vmatpush.bf16.msra.mxu0 %v1567
      %2282 = vmatpush.bf16.msra.mxu0 %v1566
      %2283 = vmatpush.bf16.msra.mxu0 %v1565
      %2284 = vmatmul.bf16.gmra.mxu0 %v940
      %v2285 = vpop.f32.mrf.mxu0
      %v2286 = vadd.f32 %v2197, %v2285
      %v2287 = vpop.f32.mrf.mxu0
      %v2288 = vadd.f32 %v2199, %v2287
      %2289 = vmatmul.bf16.gmra.mxu0 %v949
      %v2290 = vpop.f32.mrf.mxu0
      %v2291 = vadd.f32 %v2202, %v2290
      %v2292 = vpop.f32.mrf.mxu0
      %v2293 = vadd.f32 %v2204, %v2292
      %2294 = vmatmul.bf16.gmra.mxu0 %v958
      %v2295 = vpop.f32.mrf.mxu0
      %v2296 = vadd.f32 %v2207, %v2295
      %v2297 = vpop.f32.mrf.mxu0
      %v2298 = vadd.f32 %v2209, %v2297
      %2299 = vmatmul.bf16.gmra.mxu0 %v967
      %v2300 = vpop.f32.mrf.mxu0
      %v2301 = vadd.f32 %v2212, %v2300
      %v2302 = vpop.f32.mrf.mxu0
      %v2303 = vadd.f32 %v2214, %v2302
      %2304 = vmatmul.bf16.gmra.mxu0 %v976
      %v2305 = vpop.f32.mrf.mxu0
      %v2306 = vadd.f32 %v2217, %v2305
      %v2307 = vpop.f32.mrf.mxu0
      %v2308 = vadd.f32 %v2219, %v2307
      %2309 = vmatmul.bf16.gmra.mxu0 %v985
      %v2310 = vpop.f32.mrf.mxu0
      %v2311 = vadd.f32 %v2222, %v2310
      %v2312 = vpop.f32.mrf.mxu0
      %v2313 = vadd.f32 %v2224, %v2312
      %2314 = vmatmul.bf16.gmra.mxu0 %v994
      %v2315 = vpop.f32.mrf.mxu0
      %v2316 = vadd.f32 %v2227, %v2315
      %v2317 = vpop.f32.mrf.mxu0
      %v2318 = vadd.f32 %v2229, %v2317
      %2319 = vmatmul.bf16.gmra.mxu0 %v1003
      %v2320 = vpop.f32.mrf.mxu0
      %v2321 = vadd.f32 %v2232, %v2320
      %v2322 = vpop.f32.mrf.mxu0
      %v2323 = vadd.f32 %v2234, %v2322
      %2324 = vmatmul.bf16.gmra.mxu0 %v1012
      %v2325 = vpop.f32.mrf.mxu0
      %v2326 = vadd.f32 %v2237, %v2325
      %v2327 = vpop.f32.mrf.mxu0
      %v2328 = vadd.f32 %v2239, %v2327
      %2329 = vmatmul.bf16.gmra.mxu0 %v1021
      %v2330 = vpop.f32.mrf.mxu0
      %v2331 = vadd.f32 %v2242, %v2330
      %v2332 = vpop.f32.mrf.mxu0
      %v2333 = vadd.f32 %v2244, %v2332
      %2334 = vmatmul.bf16.gmra.mxu0 %v1030
      %v2335 = vpop.f32.mrf.mxu0
      %v2336 = vadd.f32 %v2247, %v2335
      %v2337 = vpop.f32.mrf.mxu0
      %v2338 = vadd.f32 %v2249, %v2337
      %2339 = vmatmul.bf16.gmra.mxu0 %v1039
      %v2340 = vpop.f32.mrf.mxu0
      %v2341 = vadd.f32 %v2252, %v2340
      %v2342 = vpop.f32.mrf.mxu0
      %v2343 = vadd.f32 %v2254, %v2342
      %2344 = vmatmul.bf16.gmra.mxu0 %v1048
      %v2345 = vpop.f32.mrf.mxu0
      %v2346 = vadd.f32 %v2257, %v2345
      %v2347 = vpop.f32.mrf.mxu0
      %v2348 = vadd.f32 %v2259, %v2347
      %2349 = vmatmul.bf16.gmra.mxu0 %v1057
      %v2350 = vpop.f32.mrf.mxu0
      %v2351 = vadd.f32 %v2262, %v2350
      %v2352 = vpop.f32.mrf.mxu0
      %v2353 = vadd.f32 %v2264, %v2352
      %2354 = vmatmul.bf16.gmra.mxu0 %v1066
      %v2355 = vpop.f32.mrf.mxu0
      %v2356 = vadd.f32 %v2267, %v2355
      %v2357 = vpop.f32.mrf.mxu0
      %v2358 = vadd.f32 %v2269, %v2357
      %2359 = vmatmul.bf16.gmra.mxu0 %v1075
      %v2360 = vpop.f32.mrf.mxu0
      %v2361 = vadd.f32 %v2272, %v2360
      %v2362 = vpop.f32.mrf.mxu0
      %v2363 = vadd.f32 %v2274, %v2362
      %2364 = vdwg.mxu0
      %2365 = vmatpush.bf16.msra.mxu0 %v1580
      %2366 = vmatpush.bf16.msra.mxu0 %v1579
      %2367 = vmatpush.bf16.msra.mxu0 %v1578
      %2368 = vmatpush.bf16.msra.mxu0 %v1577
      %2369 = vmatpush.bf16.msra.mxu0 %v1576
      %2370 = vmatpush.bf16.msra.mxu0 %v1575
      %2371 = vmatpush.bf16.msra.mxu0 %v1574
      %2372 = vmatpush.bf16.msra.mxu0 %v1573
      %2373 = vmatmul.bf16.gmra.mxu0 %v941
      %v2374 = vpop.f32.mrf.mxu0
      %v2375 = vadd.f32 %v2286, %v2374
      %v2376 = vpop.f32.mrf.mxu0
      %v2377 = vadd.f32 %v2288, %v2376
      %2378 = vmatmul.bf16.gmra.mxu0 %v950
      %v2379 = vpop.f32.mrf.mxu0
      %v2380 = vadd.f32 %v2291, %v2379
      %v2381 = vpop.f32.mrf.mxu0
      %v2382 = vadd.f32 %v2293, %v2381
      %2383 = vmatmul.bf16.gmra.mxu0 %v959
      %v2384 = vpop.f32.mrf.mxu0
      %v2385 = vadd.f32 %v2296, %v2384
      %v2386 = vpop.f32.mrf.mxu0
      %v2387 = vadd.f32 %v2298, %v2386
      %2388 = vmatmul.bf16.gmra.mxu0 %v968
      %v2389 = vpop.f32.mrf.mxu0
      %v2390 = vadd.f32 %v2301, %v2389
      %v2391 = vpop.f32.mrf.mxu0
      %v2392 = vadd.f32 %v2303, %v2391
      %2393 = vmatmul.bf16.gmra.mxu0 %v977
      %v2394 = vpop.f32.mrf.mxu0
      %v2395 = vadd.f32 %v2306, %v2394
      %v2396 = vpop.f32.mrf.mxu0
      %v2397 = vadd.f32 %v2308, %v2396
      %2398 = vmatmul.bf16.gmra.mxu0 %v986
      %v2399 = vpop.f32.mrf.mxu0
      %v2400 = vadd.f32 %v2311, %v2399
      %v2401 = vpop.f32.mrf.mxu0
      %v2402 = vadd.f32 %v2313, %v2401
      %2403 = vmatmul.bf16.gmra.mxu0 %v995
      %v2404 = vpop.f32.mrf.mxu0
      %v2405 = vadd.f32 %v2316, %v2404
      %v2406 = vpop.f32.mrf.mxu0
      %v2407 = vadd.f32 %v2318, %v2406
      %2408 = vmatmul.bf16.gmra.mxu0 %v1004
      %v2409 = vpop.f32.mrf.mxu0
      %v2410 = vadd.f32 %v2321, %v2409
      %v2411 = vpop.f32.mrf.mxu0
      %v2412 = vadd.f32 %v2323, %v2411
      %2413 = vmatmul.bf16.gmra.mxu0 %v1013
      %v2414 = vpop.f32.mrf.mxu0
      %v2415 = vadd.f32 %v2326, %v2414
      %v2416 = vpop.f32.mrf.mxu0
      %v2417 = vadd.f32 %v2328, %v2416
      %2418 = vmatmul.bf16.gmra.mxu0 %v1022
      %v2419 = vpop.f32.mrf.mxu0
      %v2420 = vadd.f32 %v2331, %v2419
      %v2421 = vpop.f32.mrf.mxu0
      %v2422 = vadd.f32 %v2333, %v2421
      %2423 = vmatmul.bf16.gmra.mxu0 %v1031
      %v2424 = vpop.f32.mrf.mxu0
      %v2425 = vadd.f32 %v2336, %v2424
      %v2426 = vpop.f32.mrf.mxu0
      %v2427 = vadd.f32 %v2338, %v2426
      %2428 = vmatmul.bf16.gmra.mxu0 %v1040
      %v2429 = vpop.f32.mrf.mxu0
      %v2430 = vadd.f32 %v2341, %v2429
      %v2431 = vpop.f32.mrf.mxu0
      %v2432 = vadd.f32 %v2343, %v2431
      %2433 = vmatmul.bf16.gmra.mxu0 %v1049
      %v2434 = vpop.f32.mrf.mxu0
      %v2435 = vadd.f32 %v2346, %v2434
      %v2436 = vpop.f32.mrf.mxu0
      %v2437 = vadd.f32 %v2348, %v2436
      %2438 = vmatmul.bf16.gmra.mxu0 %v1058
      %v2439 = vpop.f32.mrf.mxu0
      %v2440 = vadd.f32 %v2351, %v2439
      %v2441 = vpop.f32.mrf.mxu0
      %v2442 = vadd.f32 %v2353, %v2441
      %2443 = vmatmul.bf16.gmra.mxu0 %v1067
      %v2444 = vpop.f32.mrf.mxu0
      %v2445 = vadd.f32 %v2356, %v2444
      %v2446 = vpop.f32.mrf.mxu0
      %v2447 = vadd.f32 %v2358, %v2446
      %2448 = vmatmul.bf16.gmra.mxu0 %v1076
      %v2449 = vpop.f32.mrf.mxu0
      %v2450 = vadd.f32 %v2361, %v2449
      %v2451 = vpop.f32.mrf.mxu0
      %v2452 = vadd.f32 %v2363, %v2451
      %2453 = vdwg.mxu0
      %v2454 = vmax.f32 %v2375, 0.0
      %v2455 = vmax.f32 %v2377, 0.0
      %v2456 = vmax.f32 %v2380, 0.0
      %v2457 = vmax.f32 %v2382, 0.0
      %v2458 = vmax.f32 %v2385, 0.0
      %v2459 = vmax.f32 %v2387, 0.0
      %v2460 = vmax.f32 %v2390, 0.0
      %v2461 = vmax.f32 %v2392, 0.0
      %v2462 = vmax.f32 %v2395, 0.0
      %v2463 = vmax.f32 %v2397, 0.0
      %v2464 = vmax.f32 %v2400, 0.0
      %v2465 = vmax.f32 %v2402, 0.0
      %v2466 = vmax.f32 %v2405, 0.0
      %v2467 = vmax.f32 %v2407, 0.0
      %v2468 = vmax.f32 %v2410, 0.0
      %v2469 = vmax.f32 %v2412, 0.0
      %v2470 = vmax.f32 %v2415, 0.0
      %v2471 = vmax.f32 %v2417, 0.0
      %v2472 = vmax.f32 %v2420, 0.0
      %v2473 = vmax.f32 %v2422, 0.0
      %v2474 = vmax.f32 %v2425, 0.0
      %v2475 = vmax.f32 %v2427, 0.0
      %v2476 = vmax.f32 %v2430, 0.0
      %v2477 = vmax.f32 %v2432, 0.0
      %v2478 = vmax.f32 %v2435, 0.0
      %v2479 = vmax.f32 %v2437, 0.0
      %v2480 = vmax.f32 %v2440, 0.0
      %v2481 = vmax.f32 %v2442, 0.0
      %v2482 = vmax.f32 %v2445, 0.0
      %v2483 = vmax.f32 %v2447, 0.0
      %v2484 = vmax.f32 %v2450, 0.0
      %v2485 = vmax.f32 %v2452, 0.0
      %2486 = vst [vmem:[%s175] sm:$0xff] %v2454
      %2487 = vst [vmem:[%s175 + $0x8] sm:$0xff] %v2455
      %2488 = vst [vmem:[%s175 + $0x10] sm:$0xff] %v2456
      %2489 = vst [vmem:[%s175 + $0x18] sm:$0xff] %v2457
      %2490 = vst [vmem:[%s175 + $0x20] sm:$0xff] %v2458
      %2491 = vst [vmem:[%s175 + $0x28] sm:$0xff] %v2459
      %2492 = vst [vmem:[%s175 + $0x30] sm:$0xff] %v2460
      %2493 = vst [vmem:[%s175 + $0x38] sm:$0xff] %v2461
      %2494 = vst [vmem:[%s175 + $0x40] sm:$0xff] %v2462
      %2495 = vst [vmem:[%s175 + $0x48] sm:$0xff] %v2463
      %2496 = vst [vmem:[%s175 + $0x50] sm:$0xff] %v2464
      %2497 = vst [vmem:[%s175 + $0x58] sm:$0xff] %v2465
      %2498 = vst [vmem:[%s175 + $0x60] sm:$0xff] %v2466
      %2499 = vst [vmem:[%s175 + $0x68] sm:$0xff] %v2467
      %2500 = vst [vmem:[%s175 + $0x70] sm:$0xff] %v2468
      %2501 = vst [vmem:[%s175 + $0x78] sm:$0xff] %v2469
      %2502 = vst [vmem:[%s175 + $0x80] sm:$0xff] %v2470
      %2503 = vst [vmem:[%s175 + $0x88] sm:$0xff] %v2471
      %2504 = vst [vmem:[%s175 + $0x90] sm:$0xff] %v2472
      %2505 = vst [vmem:[%s175 + $0x98] sm:$0xff] %v2473
      %2506 = vst [vmem:[%s175 + $0xa0] sm:$0xff] %v2474
      %2507 = vst [vmem:[%s175 + $0xa8] sm:$0xff] %v2475
      %2508 = vst [vmem:[%s175 + $0xb0] sm:$0xff] %v2476
      %2509 = vst [vmem:[%s175 + $0xb8] sm:$0xff] %v2477
      %2510 = vst [vmem:[%s175 + $0xc0] sm:$0xff] %v2478
      %2511 = vst [vmem:[%s175 + $0xc8] sm:$0xff] %v2479
      %2512 = vst [vmem:[%s175 + $0xd0] sm:$0xff] %v2480
      %2513 = vst [vmem:[%s175 + $0xd8] sm:$0xff] %v2481
      %2514 = vst [vmem:[%s175 + $0xe0] sm:$0xff] %v2482
      %2515 = vst [vmem:[%s175 + $0xe8] sm:$0xff] %v2483
      %2516 = vst [vmem:[%s175 + $0xf0] sm:$0xff] %v2484
      %2517 = vst [vmem:[%s175 + $0xf8] sm:$0xff] %v2485
      %s2518 = smul.u32 32, %s14
      %p2519 = scmp.lt.s32.totalorder %s2518, 63
      %s2520 = scalar_select %p2519, %s2518, 63
      %s2521 = smul.addr %s2520, 8
      %s2522 = scalar_lea.vmem %s3, %s2521
      // Predicated region
      $region33: #{_lambda_.8} parent=31 // pred_check
        %p2523 = pneg %p100
      $region34: #{_lambda_.8} parent=31 // pred_check_branch
        %2525 = sbr.rel (%p2523) target = $region36
      $region35: #{_lambda_.8} parent=31 // pred_region
        %s2526 = smul.u32 32, %s14
      $region36: #{_lambda_.8} parent=31 // pred_fallthru
        _
    $region32: #{_lambda_.8} parent=5 // pred_fallthru
      _
    %p2527 = scmp.le.s32.totalorder 2, %s9
    // Predicated region
    $region37: #{_lambda_.8} parent=5 // pred_check
      %p2528 = pneg %p2527
    $region38: #{_lambda_.8} parent=5 // pred_check_branch
      %2530 = sbr.rel (%p2528) target = $region40
    $region39: #{_lambda_.8} parent=5 // pred_region
      %s2531 = ssub.s32 %s9, 2
      // Predicated region
      $region41: #{_lambda_.8} parent=39 // pred_check
        %p2532 = pneg %p106
      $region42: #{_lambda_.8} parent=39 // pred_check_branch
        %2534 = sbr.rel (%p2532) target = $region44
      $region43: #{_lambda_.8} parent=39 // pred_region
        %s2535 = smul.u32 32, %s15
        %p2536 = scmp.lt.s32.totalorder %s2535, 63
        %s2537 = scalar_select %p2536, %s2535, 63
        %s2538 = smul.addr %s2537, 8
        %s2539 = scalar_lea.vmem %s3, %s2538
      $region44: #{_lambda_.8} parent=39 // pred_fallthru
        _
    $region40: #{_lambda_.8} parent=5 // pred_fallthru
      _
  $region6: #{_lambda_.8} parent=0 // loop_footer
    %s13 = sadd.s32 1, %s9
  $region7: #{_lambda_.8} parent=0 // loop_footer_branch
    %8 = sbr.rel target = $region3
  $region8: #{_lambda_.8} parent=0 // loop_exit
    _

// kernel: _lambda_.10
$region0: #{_lambda_.10}
  #allocation0 [shape = 'u32[]', space=smem, size = 0x4, offset = 0x4, fixed_abs, tag = 'smem constant byte address 0x4 - core index']
  #allocation1 [shape = 'u32[72,128]{1,0:T(1,128)}', space=vmem, size = 0x9000, scoped, tag = 'internal scratch']
  %s0 = inlined_call_operand.vmem [shape: bf16[128,1152], index: 0, kind: input, shape index: {}]
  %s1 = inlined_call_operand.vmem [shape: bf16[1152,128], index: 1, kind: input, shape index: {}]
  %s2 = inlined_call_operand.vmem [shape: f32[1,128], index: 2, kind: input, shape index: {}]
  %s3 = inlined_call_operand.vmem [shape: bf16[128,128], index: 3, kind: input, shape index: {}]
  %s4 = inlined_call_operand.vmem [shape: f32[1,128], index: 4, kind: input, shape index: {}]
  %s5 = inlined_call_operand.vmem [shape: f32[128,128], index: 5, kind: output, shape index: {0}]
  %s6 = inlined_call_operand.vmem [shape: f32[128,128], index: 6, kind: output, shape index: {1}]
  %7 = xla_tuple %s5, %s6
  %s8 = sld [smem:[#allocation0]]
  $region38: #{_lambda_.10} parent=0
    _
  %s10 = ssub.s32 1, %s8
  %s11 = scalar_select 0, %s10, %s8
  // Predicated region
  $region2: #{_lambda_.10} parent=0 // pred_check
    _
  $region3: #{_lambda_.10} parent=0 // pred_check_branch
    %13 = sbr.rel (0) target = $region5
  $region4: #{_lambda_.10} parent=0 // pred_region
    _
  $region5: #{_lambda_.10} parent=0 // pred_fallthru
    _
  // Predicated region
  $region6: #{_lambda_.10} parent=0 // pred_check
    _
  $region7: #{_lambda_.10} parent=0 // pred_check_branch
    %15 = sbr.rel (0) target = $region9
  $region8: #{_lambda_.10} parent=0 // pred_region
    _
  $region9: #{_lambda_.10} parent=0 // pred_fallthru
    _
  // Predicated region
  $region10: #{_lambda_.10} parent=0 // pred_check
    _
  $region11: #{_lambda_.10} parent=0 // pred_check_branch
    %17 = sbr.rel (0) target = $region13
  $region12: #{_lambda_.10} parent=0 // pred_region
    _
  $region13: #{_lambda_.10} parent=0 // pred_fallthru
    _
  // Predicated region
  $region14: #{_lambda_.10} parent=0 // pred_check
    _
  $region15: #{_lambda_.10} parent=0 // pred_check_branch
    %19 = sbr.rel (0) target = $region17
  $region16: #{_lambda_.10} parent=0 // pred_region
    _
  $region17: #{_lambda_.10} parent=0 // pred_fallthru
    _
  // Predicated region
  $region18: #{_lambda_.10} parent=0 // pred_check
    _
  $region19: #{_lambda_.10} parent=0 // pred_check_branch
    %21 = sbr.rel (0) target = $region21
  $region20: #{_lambda_.10} parent=0 // pred_region
    _
  $region21: #{_lambda_.10} parent=0 // pred_fallthru
    _
  %v22 = vld [vmem:[%s0] sm:$0xff]
  %v23 = vld [vmem:[%s0 + $0x8] sm:$0xff]
  %v24 = vld [vmem:[%s0 + $0x10] sm:$0xff]
  %v25 = vld [vmem:[%s0 + $0x18] sm:$0xff]
  %v26 = vld [vmem:[%s0 + $0x20] sm:$0xf]
  %v27 = vld [vmem:[%s0 + $0x24] sm:$0xff]
  %v28 = vld [vmem:[%s0 + $0x2c] sm:$0xff]
  %v29 = vld [vmem:[%s0 + $0x34] sm:$0xff]
  %v30 = vld [vmem:[%s0 + $0x3c] sm:$0xff]
  %v31 = vld [vmem:[%s0 + $0x44] sm:$0xf]
  %v32 = vld [vmem:[%s0 + $0x48] sm:$0xff]
  %v33 = vld [vmem:[%s0 + $0x50] sm:$0xff]
  %v34 = vld [vmem:[%s0 + $0x58] sm:$0xff]
  %v35 = vld [vmem:[%s0 + $0x60] sm:$0xff]
  %v36 = vld [vmem:[%s0 + $0x68] sm:$0xf]
  %v37 = vld [vmem:[%s0 + $0x6c] sm:$0xff]
  %v38 = vld [vmem:[%s0 + $0x74] sm:$0xff]
  %v39 = vld [vmem:[%s0 + $0x7c] sm:$0xff]
  %v40 = vld [vmem:[%s0 + $0x84] sm:$0xff]
  %v41 = vld [vmem:[%s0 + $0x8c] sm:$0xf]
  %v42 = vld [vmem:[%s0 + $0x90] sm:$0xff]
  %v43 = vld [vmem:[%s0 + $0x98] sm:$0xff]
  %v44 = vld [vmem:[%s0 + $0xa0] sm:$0xff]
  %v45 = vld [vmem:[%s0 + $0xa8] sm:$0xff]
  %v46 = vld [vmem:[%s0 + $0xb0] sm:$0xf]
  %v47 = vld [vmem:[%s0 + $0xb4] sm:$0xff]
  %v48 = vld [vmem:[%s0 + $0xbc] sm:$0xff]
  %v49 = vld [vmem:[%s0 + $0xc4] sm:$0xff]
  %v50 = vld [vmem:[%s0 + $0xcc] sm:$0xff]
  %v51 = vld [vmem:[%s0 + $0xd4] sm:$0xf]
  %v52 = vld [vmem:[%s0 + $0xd8] sm:$0xff]
  %v53 = vld [vmem:[%s0 + $0xe0] sm:$0xff]
  %v54 = vld [vmem:[%s0 + $0xe8] sm:$0xff]
  %v55 = vld [vmem:[%s0 + $0xf0] sm:$0xff]
  %v56 = vld [vmem:[%s0 + $0xf8] sm:$0xf]
  %v57 = vld [vmem:[%s0 + $0xfc] sm:$0xff]
  %v58 = vld [vmem:[%s0 + $0x104] sm:$0xff]
  %v59 = vld [vmem:[%s0 + $0x10c] sm:$0xff]
  %v60 = vld [vmem:[%s0 + $0x114] sm:$0xff]
  %v61 = vld [vmem:[%s0 + $0x11c] sm:$0xf]
  %v62 = vld [vmem:[%s0 + $0x120] sm:$0xff]
  %v63 = vld [vmem:[%s0 + $0x128] sm:$0xff]
  %v64 = vld [vmem:[%s0 + $0x130] sm:$0xff]
  %v65 = vld [vmem:[%s0 + $0x138] sm:$0xff]
  %v66 = vld [vmem:[%s0 + $0x140] sm:$0xf]
  %v67 = vld [vmem:[%s0 + $0x144] sm:$0xff]
  %v68 = vld [vmem:[%s0 + $0x14c] sm:$0xff]
  %v69 = vld [vmem:[%s0 + $0x154] sm:$0xff]
  %v70 = vld [vmem:[%s0 + $0x15c] sm:$0xff]
  %v71 = vld [vmem:[%s0 + $0x164] sm:$0xf]
  %v72 = vld [vmem:[%s0 + $0x168] sm:$0xff]
  %v73 = vld [vmem:[%s0 + $0x170] sm:$0xff]
  %v74 = vld [vmem:[%s0 + $0x178] sm:$0xff]
  %v75 = vld [vmem:[%s0 + $0x180] sm:$0xff]
  %v76 = vld [vmem:[%s0 + $0x188] sm:$0xf]
  %v77 = vld [vmem:[%s0 + $0x18c] sm:$0xff]
  %v78 = vld [vmem:[%s0 + $0x194] sm:$0xff]
  %v79 = vld [vmem:[%s0 + $0x19c] sm:$0xff]
  %v80 = vld [vmem:[%s0 + $0x1a4] sm:$0xff]
  %v81 = vld [vmem:[%s0 + $0x1ac] sm:$0xf]
  %v82 = vld [vmem:[%s0 + $0x1b0] sm:$0xff]
  %v83 = vld [vmem:[%s0 + $0x1b8] sm:$0xff]
  %v84 = vld [vmem:[%s0 + $0x1c0] sm:$0xff]
  %v85 = vld [vmem:[%s0 + $0x1c8] sm:$0xff]
  %v86 = vld [vmem:[%s0 + $0x1d0] sm:$0xf]
  %v87 = vld [vmem:[%s0 + $0x1d4] sm:$0xff]
  %v88 = vld [vmem:[%s0 + $0x1dc] sm:$0xff]
  %v89 = vld [vmem:[%s0 + $0x1e4] sm:$0xff]
  %v90 = vld [vmem:[%s0 + $0x1ec] sm:$0xff]
  %v91 = vld [vmem:[%s0 + $0x1f4] sm:$0xf]
  %v92 = vld [vmem:[%s0 + $0x1f8] sm:$0xff]
  %v93 = vld [vmem:[%s0 + $0x200] sm:$0xff]
  %v94 = vld [vmem:[%s0 + $0x208] sm:$0xff]
  %v95 = vld [vmem:[%s0 + $0x210] sm:$0xff]
  %v96 = vld [vmem:[%s0 + $0x218] sm:$0xf]
  %v97 = vld [vmem:[%s0 + $0x21c] sm:$0xff]
  %v98 = vld [vmem:[%s0 + $0x224] sm:$0xff]
  %v99 = vld [vmem:[%s0 + $0x22c] sm:$0xff]
  %v100 = vld [vmem:[%s0 + $0x234] sm:$0xff]
  %v101 = vld [vmem:[%s0 + $0x23c] sm:$0xf]
  %v102 = vld [vmem:[%s1] sm:$0xf]
  %v103 = vld [vmem:[%s1 + $0x4] sm:$0xf]
  %v104 = vld [vmem:[%s1 + $0x8] sm:$0xf]
  %v105 = vld [vmem:[%s1 + $0xc] sm:$0xf]
  %v106 = vld [vmem:[%s1 + $0x10] sm:$0xf]
  %v107 = vld [vmem:[%s1 + $0x14] sm:$0xf]
  %v108 = vld [vmem:[%s1 + $0x18] sm:$0xf]
  %v109 = vld [vmem:[%s1 + $0x1c] sm:$0xf]
  %v110 = vld [vmem:[%s1 + $0x20] sm:$0xf]
  %v111 = vld [vmem:[%s1 + $0x24] sm:$0xf]
  %v112 = vld [vmem:[%s1 + $0x28] sm:$0xf]
  %v113 = vld [vmem:[%s1 + $0x2c] sm:$0xf]
  %v114 = vld [vmem:[%s1 + $0x30] sm:$0xf]
  %v115 = vld [vmem:[%s1 + $0x34] sm:$0xf]
  %v116 = vld [vmem:[%s1 + $0x38] sm:$0xf]
  %v117 = vld [vmem:[%s1 + $0x3c] sm:$0xf]
  %v118 = vld [vmem:[%s1 + $0x40] sm:$0xf]
  %v119 = vld [vmem:[%s1 + $0x44] sm:$0xf]
  %v120 = vld [vmem:[%s1 + $0x48] sm:$0xf]
  %v121 = vld [vmem:[%s1 + $0x4c] sm:$0xf]
  %v122 = vld [vmem:[%s1 + $0x50] sm:$0xf]
  %v123 = vld [vmem:[%s1 + $0x54] sm:$0xf]
  %v124 = vld [vmem:[%s1 + $0x58] sm:$0xf]
  %v125 = vld [vmem:[%s1 + $0x5c] sm:$0xf]
  %v126 = vld [vmem:[%s1 + $0x60] sm:$0xf]
  %v127 = vld [vmem:[%s1 + $0x64] sm:$0xf]
  %v128 = vld [vmem:[%s1 + $0x68] sm:$0xf]
  %v129 = vld [vmem:[%s1 + $0x6c] sm:$0xf]
  %v130 = vld [vmem:[%s1 + $0x70] sm:$0xf]
  %v131 = vld [vmem:[%s1 + $0x74] sm:$0xf]
  %v132 = vld [vmem:[%s1 + $0x78] sm:$0xf]
  %v133 = vld [vmem:[%s1 + $0x7c] sm:$0xf]
  %v134 = vld [vmem:[%s1 + $0x80] sm:$0xf]
  %v135 = vld [vmem:[%s1 + $0x84] sm:$0xf]
  %v136 = vld [vmem:[%s1 + $0x88] sm:$0xf]
  %v137 = vld [vmem:[%s1 + $0x8c] sm:$0xf]
  %v138 = vld [vmem:[%s1 + $0x90] sm:$0xf]
  %v139 = vld [vmem:[%s1 + $0x94] sm:$0xf]
  %v140 = vld [vmem:[%s1 + $0x98] sm:$0xf]
  %v141 = vld [vmem:[%s1 + $0x9c] sm:$0xf]
  %v142 = vld [vmem:[%s1 + $0xa0] sm:$0xf]
  %v143 = vld [vmem:[%s1 + $0xa4] sm:$0xf]
  %v144 = vld [vmem:[%s1 + $0xa8] sm:$0xf]
  %v145 = vld [vmem:[%s1 + $0xac] sm:$0xf]
  %v146 = vld [vmem:[%s1 + $0xb0] sm:$0xf]
  %v147 = vld [vmem:[%s1 + $0xb4] sm:$0xf]
  %v148 = vld [vmem:[%s1 + $0xb8] sm:$0xf]
  %v149 = vld [vmem:[%s1 + $0xbc] sm:$0xf]
  %v150 = vld [vmem:[%s1 + $0xc0] sm:$0xf]
  %v151 = vld [vmem:[%s1 + $0xc4] sm:$0xf]
  %v152 = vld [vmem:[%s1 + $0xc8] sm:$0xf]
  %v153 = vld [vmem:[%s1 + $0xcc] sm:$0xf]
  %v154 = vld [vmem:[%s1 + $0xd0] sm:$0xf]
  %v155 = vld [vmem:[%s1 + $0xd4] sm:$0xf]
  %v156 = vld [vmem:[%s1 + $0xd8] sm:$0xf]
  %v157 = vld [vmem:[%s1 + $0xdc] sm:$0xf]
  %v158 = vld [vmem:[%s1 + $0xe0] sm:$0xf]
  %v159 = vld [vmem:[%s1 + $0xe4] sm:$0xf]
  %v160 = vld [vmem:[%s1 + $0xe8] sm:$0xf]
  %v161 = vld [vmem:[%s1 + $0xec] sm:$0xf]
  %v162 = vld [vmem:[%s1 + $0xf0] sm:$0xf]
  %v163 = vld [vmem:[%s1 + $0xf4] sm:$0xf]
  %v164 = vld [vmem:[%s1 + $0xf8] sm:$0xf]
  %v165 = vld [vmem:[%s1 + $0xfc] sm:$0xf]
  %v166 = vld [vmem:[%s1 + $0x100] sm:$0xf]
  %v167 = vld [vmem:[%s1 + $0x104] sm:$0xf]
  %v168 = vld [vmem:[%s1 + $0x108] sm:$0xf]
  %v169 = vld [vmem:[%s1 + $0x10c] sm:$0xf]
  %v170 = vld [vmem:[%s1 + $0x110] sm:$0xf]
  %v171 = vld [vmem:[%s1 + $0x114] sm:$0xf]
  %v172 = vld [vmem:[%s1 + $0x118] sm:$0xf]
  %v173 = vld [vmem:[%s1 + $0x11c] sm:$0xf]
  %v174 = vld [vmem:[%s1 + $0x120] sm:$0xf]
  %v175 = vld [vmem:[%s1 + $0x124] sm:$0xf]
  %v176 = vld [vmem:[%s1 + $0x128] sm:$0xf]
  %v177 = vld [vmem:[%s1 + $0x12c] sm:$0xf]
  %v178 = vld [vmem:[%s1 + $0x130] sm:$0xf]
  %v179 = vld [vmem:[%s1 + $0x134] sm:$0xf]
  %v180 = vld [vmem:[%s1 + $0x138] sm:$0xf]
  %v181 = vld [vmem:[%s1 + $0x13c] sm:$0xf]
  %v182 = vld [vmem:[%s1 + $0x140] sm:$0xf]
  %v183 = vld [vmem:[%s1 + $0x144] sm:$0xf]
  %v184 = vld [vmem:[%s1 + $0x148] sm:$0xf]
  %v185 = vld [vmem:[%s1 + $0x14c] sm:$0xf]
  %v186 = vld [vmem:[%s1 + $0x150] sm:$0xf]
  %v187 = vld [vmem:[%s1 + $0x154] sm:$0xf]
  %v188 = vld [vmem:[%s1 + $0x158] sm:$0xf]
  %v189 = vld [vmem:[%s1 + $0x15c] sm:$0xf]
  %v190 = vld [vmem:[%s1 + $0x160] sm:$0xf]
  %v191 = vld [vmem:[%s1 + $0x164] sm:$0xf]
  %v192 = vld [vmem:[%s1 + $0x168] sm:$0xf]
  %v193 = vld [vmem:[%s1 + $0x16c] sm:$0xf]
  %v194 = vld [vmem:[%s1 + $0x170] sm:$0xf]
  %v195 = vld [vmem:[%s1 + $0x174] sm:$0xf]
  %v196 = vld [vmem:[%s1 + $0x178] sm:$0xf]
  %v197 = vld [vmem:[%s1 + $0x17c] sm:$0xf]
  %v198 = vld [vmem:[%s1 + $0x180] sm:$0xf]
  %v199 = vld [vmem:[%s1 + $0x184] sm:$0xf]
  %v200 = vld [vmem:[%s1 + $0x188] sm:$0xf]
  %v201 = vld [vmem:[%s1 + $0x18c] sm:$0xf]
  %v202 = vld [vmem:[%s1 + $0x190] sm:$0xf]
  %v203 = vld [vmem:[%s1 + $0x194] sm:$0xf]
  %v204 = vld [vmem:[%s1 + $0x198] sm:$0xf]
  %v205 = vld [vmem:[%s1 + $0x19c] sm:$0xf]
  %v206 = vld [vmem:[%s1 + $0x1a0] sm:$0xf]
  %v207 = vld [vmem:[%s1 + $0x1a4] sm:$0xf]
  %v208 = vld [vmem:[%s1 + $0x1a8] sm:$0xf]
  %v209 = vld [vmem:[%s1 + $0x1ac] sm:$0xf]
  %v210 = vld [vmem:[%s1 + $0x1b0] sm:$0xf]
  %v211 = vld [vmem:[%s1 + $0x1b4] sm:$0xf]
  %v212 = vld [vmem:[%s1 + $0x1b8] sm:$0xf]
  %v213 = vld [vmem:[%s1 + $0x1bc] sm:$0xf]
  %v214 = vld [vmem:[%s1 + $0x1c0] sm:$0xf]
  %v215 = vld [vmem:[%s1 + $0x1c4] sm:$0xf]
  %v216 = vld [vmem:[%s1 + $0x1c8] sm:$0xf]
  %v217 = vld [vmem:[%s1 + $0x1cc] sm:$0xf]
  %v218 = vld [vmem:[%s1 + $0x1d0] sm:$0xf]
  %v219 = vld [vmem:[%s1 + $0x1d4] sm:$0xf]
  %v220 = vld [vmem:[%s1 + $0x1d8] sm:$0xf]
  %v221 = vld [vmem:[%s1 + $0x1dc] sm:$0xf]
  %v222 = vld [vmem:[%s1 + $0x1e0] sm:$0xf]
  %v223 = vld [vmem:[%s1 + $0x1e4] sm:$0xf]
  %v224 = vld [vmem:[%s1 + $0x1e8] sm:$0xf]
  %v225 = vld [vmem:[%s1 + $0x1ec] sm:$0xf]
  %v226 = vld [vmem:[%s1 + $0x1f0] sm:$0xf]
  %v227 = vld [vmem:[%s1 + $0x1f4] sm:$0xf]
  %v228 = vld [vmem:[%s1 + $0x1f8] sm:$0xf]
  %v229 = vld [vmem:[%s1 + $0x1fc] sm:$0xf]
  %v230 = vld [vmem:[%s1 + $0x200] sm:$0xf]
  %v231 = vld [vmem:[%s1 + $0x204] sm:$0xf]
  %v232 = vld [vmem:[%s1 + $0x208] sm:$0xf]
  %v233 = vld [vmem:[%s1 + $0x20c] sm:$0xf]
  %v234 = vld [vmem:[%s1 + $0x210] sm:$0xf]
  %v235 = vld [vmem:[%s1 + $0x214] sm:$0xf]
  %v236 = vld [vmem:[%s1 + $0x218] sm:$0xf]
  %v237 = vld [vmem:[%s1 + $0x21c] sm:$0xf]
  %v238 = vld [vmem:[%s1 + $0x220] sm:$0xf]
  %v239 = vld [vmem:[%s1 + $0x224] sm:$0xf]
  %v240 = vld [vmem:[%s1 + $0x228] sm:$0xf]
  %v241 = vld [vmem:[%s1 + $0x22c] sm:$0xf]
  %v242 = vld [vmem:[%s1 + $0x230] sm:$0xf]
  %v243 = vld [vmem:[%s1 + $0x234] sm:$0xf]
  %v244 = vld [vmem:[%s1 + $0x238] sm:$0xf]
  %v245 = vld [vmem:[%s1 + $0x23c] sm:$0xf]
  %v246 = vld [vmem:[%s2] sm:$0x1]
  %v248 = vperm.slane %v246, 0
  %v330 = vunpack.c.l.b16 %v22
  %v331 = vunpack.c.h.b16 %v22
  %v332 = vunpack.c.l.b16 %v23
  %v333 = vunpack.c.h.b16 %v23
  %v334 = vunpack.c.l.b16 %v24
  %v335 = vunpack.c.h.b16 %v24
  %v336 = vunpack.c.l.b16 %v25
  %v337 = vunpack.c.h.b16 %v25
  %v338 = vunpack.c.l.b16 %v26
  %v339 = vunpack.c.l.b16 %v27
  %v340 = vunpack.c.h.b16 %v27
  %v341 = vunpack.c.l.b16 %v28
  %v342 = vunpack.c.h.b16 %v28
  %v343 = vunpack.c.l.b16 %v29
  %v344 = vunpack.c.h.b16 %v29
  %v345 = vunpack.c.l.b16 %v30
  %v346 = vunpack.c.h.b16 %v30
  %v347 = vunpack.c.l.b16 %v31
  %v348 = vunpack.c.l.b16 %v32
  %v349 = vunpack.c.h.b16 %v32
  %v350 = vunpack.c.l.b16 %v33
  %v351 = vunpack.c.h.b16 %v33
  %v352 = vunpack.c.l.b16 %v34
  %v353 = vunpack.c.h.b16 %v34
  %v354 = vunpack.c.l.b16 %v35
  %v355 = vunpack.c.h.b16 %v35
  %v356 = vunpack.c.l.b16 %v36
  %v357 = vunpack.c.l.b16 %v37
  %v358 = vunpack.c.h.b16 %v37
  %v359 = vunpack.c.l.b16 %v38
  %v360 = vunpack.c.h.b16 %v38
  %v361 = vunpack.c.l.b16 %v39
  %v362 = vunpack.c.h.b16 %v39
  %v363 = vunpack.c.l.b16 %v40
  %v364 = vunpack.c.h.b16 %v40
  %v365 = vunpack.c.l.b16 %v41
  %v366 = vunpack.c.l.b16 %v42
  %v367 = vunpack.c.h.b16 %v42
  %v368 = vunpack.c.l.b16 %v43
  %v369 = vunpack.c.h.b16 %v43
  %v370 = vunpack.c.l.b16 %v44
  %v371 = vunpack.c.h.b16 %v44
  %v372 = vunpack.c.l.b16 %v45
  %v373 = vunpack.c.h.b16 %v45
  %v374 = vunpack.c.l.b16 %v46
  %v375 = vunpack.c.l.b16 %v47
  %v376 = vunpack.c.h.b16 %v47
  %v377 = vunpack.c.l.b16 %v48
  %v378 = vunpack.c.h.b16 %v48
  %v379 = vunpack.c.l.b16 %v49
  %v380 = vunpack.c.h.b16 %v49
  %v381 = vunpack.c.l.b16 %v50
  %v382 = vunpack.c.h.b16 %v50
  %v383 = vunpack.c.l.b16 %v51
  %v384 = vunpack.c.l.b16 %v52
  %v385 = vunpack.c.h.b16 %v52
  %v386 = vunpack.c.l.b16 %v53
  %v387 = vunpack.c.h.b16 %v53
  %v388 = vunpack.c.l.b16 %v54
  %v389 = vunpack.c.h.b16 %v54
  %v390 = vunpack.c.l.b16 %v55
  %v391 = vunpack.c.h.b16 %v55
  %v392 = vunpack.c.l.b16 %v56
  %v393 = vunpack.c.l.b16 %v57
  %v394 = vunpack.c.h.b16 %v57
  %v395 = vunpack.c.l.b16 %v58
  %v396 = vunpack.c.h.b16 %v58
  %v397 = vunpack.c.l.b16 %v59
  %v398 = vunpack.c.h.b16 %v59
  %v399 = vunpack.c.l.b16 %v60
  %v400 = vunpack.c.h.b16 %v60
  %v401 = vunpack.c.l.b16 %v61
  %v402 = vunpack.c.l.b16 %v62
  %v403 = vunpack.c.h.b16 %v62
  %v404 = vunpack.c.l.b16 %v63
  %v405 = vunpack.c.h.b16 %v63
  %v406 = vunpack.c.l.b16 %v64
  %v407 = vunpack.c.h.b16 %v64
  %v408 = vunpack.c.l.b16 %v65
  %v409 = vunpack.c.h.b16 %v65
  %v410 = vunpack.c.l.b16 %v66
  %v411 = vunpack.c.l.b16 %v67
  %v412 = vunpack.c.h.b16 %v67
  %v413 = vunpack.c.l.b16 %v68
  %v414 = vunpack.c.h.b16 %v68
  %v415 = vunpack.c.l.b16 %v69
  %v416 = vunpack.c.h.b16 %v69
  %v417 = vunpack.c.l.b16 %v70
  %v418 = vunpack.c.h.b16 %v70
  %v419 = vunpack.c.l.b16 %v71
  %v420 = vunpack.c.l.b16 %v72
  %v421 = vunpack.c.h.b16 %v72
  %v422 = vunpack.c.l.b16 %v73
  %v423 = vunpack.c.h.b16 %v73
  %v424 = vunpack.c.l.b16 %v74
  %v425 = vunpack.c.h.b16 %v74
  %v426 = vunpack.c.l.b16 %v75
  %v427 = vunpack.c.h.b16 %v75
  %v428 = vunpack.c.l.b16 %v76
  %v429 = vunpack.c.l.b16 %v77
  %v430 = vunpack.c.h.b16 %v77
  %v431 = vunpack.c.l.b16 %v78
  %v432 = vunpack.c.h.b16 %v78
  %v433 = vunpack.c.l.b16 %v79
  %v434 = vunpack.c.h.b16 %v79
  %v435 = vunpack.c.l.b16 %v80
  %v436 = vunpack.c.h.b16 %v80
  %v437 = vunpack.c.l.b16 %v81
  %v438 = vunpack.c.l.b16 %v82
  %v439 = vunpack.c.h.b16 %v82
  %v440 = vunpack.c.l.b16 %v83
  %v441 = vunpack.c.h.b16 %v83
  %v442 = vunpack.c.l.b16 %v84
  %v443 = vunpack.c.h.b16 %v84
  %v444 = vunpack.c.l.b16 %v85
  %v445 = vunpack.c.h.b16 %v85
  %v446 = vunpack.c.l.b16 %v86
  %v447 = vunpack.c.l.b16 %v87
  %v448 = vunpack.c.h.b16 %v87
  %v449 = vunpack.c.l.b16 %v88
  %v450 = vunpack.c.h.b16 %v88
  %v451 = vunpack.c.l.b16 %v89
  %v452 = vunpack.c.h.b16 %v89
  %v453 = vunpack.c.l.b16 %v90
  %v454 = vunpack.c.h.b16 %v90
  %v455 = vunpack.c.l.b16 %v91
  %v456 = vunpack.c.l.b16 %v92
  %v457 = vunpack.c.h.b16 %v92
  %v458 = vunpack.c.l.b16 %v93
  %v459 = vunpack.c.h.b16 %v93
  %v460 = vunpack.c.l.b16 %v94
  %v461 = vunpack.c.h.b16 %v94
  %v462 = vunpack.c.l.b16 %v95
  %v463 = vunpack.c.h.b16 %v95
  %v464 = vunpack.c.l.b16 %v96
  %v465 = vunpack.c.l.b16 %v97
  %v466 = vunpack.c.h.b16 %v97
  %v467 = vunpack.c.l.b16 %v98
  %v468 = vunpack.c.h.b16 %v98
  %v469 = vunpack.c.l.b16 %v99
  %v470 = vunpack.c.h.b16 %v99
  %v471 = vunpack.c.l.b16 %v100
  %v472 = vunpack.c.h.b16 %v100
  %v473 = vunpack.c.l.b16 %v101
  %v474 = vpack.c.b16 %v339, %v330
  %v475 = vpack.c.b16 %v340, %v331
  %v476 = vpack.c.b16 %v341, %v332
  %v477 = vpack.c.b16 %v342, %v333
  %v478 = vpack.c.b16 %v343, %v334
  %v479 = vpack.c.b16 %v344, %v335
  %v480 = vpack.c.b16 %v345, %v336
  %v481 = vpack.c.b16 %v346, %v337
  %v482 = vpack.c.b16 %v347, %v338
  %v483 = vpack.c.b16 %v357, %v348
  %v484 = vpack.c.b16 %v358, %v349
  %v485 = vpack.c.b16 %v359, %v350
  %v486 = vpack.c.b16 %v360, %v351
  %v487 = vpack.c.b16 %v361, %v352
  %v488 = vpack.c.b16 %v362, %v353
  %v489 = vpack.c.b16 %v363, %v354
  %v490 = vpack.c.b16 %v364, %v355
  %v491 = vpack.c.b16 %v365, %v356
  %v492 = vpack.c.b16 %v375, %v366
  %v493 = vpack.c.b16 %v376, %v367
  %v494 = vpack.c.b16 %v377, %v368
  %v495 = vpack.c.b16 %v378, %v369
  %v496 = vpack.c.b16 %v379, %v370
  %v497 = vpack.c.b16 %v380, %v371
  %v498 = vpack.c.b16 %v381, %v372
  %v499 = vpack.c.b16 %v382, %v373
  %v500 = vpack.c.b16 %v383, %v374
  %v501 = vpack.c.b16 %v393, %v384
  %v502 = vpack.c.b16 %v394, %v385
  %v503 = vpack.c.b16 %v395, %v386
  %v504 = vpack.c.b16 %v396, %v387
  %v505 = vpack.c.b16 %v397, %v388
  %v506 = vpack.c.b16 %v398, %v389
  %v507 = vpack.c.b16 %v399, %v390
  %v508 = vpack.c.b16 %v400, %v391
  %v509 = vpack.c.b16 %v401, %v392
  %v510 = vpack.c.b16 %v411, %v402
  %v511 = vpack.c.b16 %v412, %v403
  %v512 = vpack.c.b16 %v413, %v404
  %v513 = vpack.c.b16 %v414, %v405
  %v514 = vpack.c.b16 %v415, %v406
  %v515 = vpack.c.b16 %v416, %v407
  %v516 = vpack.c.b16 %v417, %v408
  %v517 = vpack.c.b16 %v418, %v409
  %v518 = vpack.c.b16 %v419, %v410
  %v519 = vpack.c.b16 %v429, %v420
  %v520 = vpack.c.b16 %v430, %v421
  %v521 = vpack.c.b16 %v431, %v422
  %v522 = vpack.c.b16 %v432, %v423
  %v523 = vpack.c.b16 %v433, %v424
  %v524 = vpack.c.b16 %v434, %v425
  %v525 = vpack.c.b16 %v435, %v426
  %v526 = vpack.c.b16 %v436, %v427
  %v527 = vpack.c.b16 %v437, %v428
  %v528 = vpack.c.b16 %v447, %v438
  %v529 = vpack.c.b16 %v448, %v439
  %v530 = vpack.c.b16 %v449, %v440
  %v531 = vpack.c.b16 %v450, %v441
  %v532 = vpack.c.b16 %v451, %v442
  %v533 = vpack.c.b16 %v452, %v443
  %v534 = vpack.c.b16 %v453, %v444
  %v535 = vpack.c.b16 %v454, %v445
  %v536 = vpack.c.b16 %v455, %v446
  %v537 = vpack.c.b16 %v465, %v456
  %v538 = vpack.c.b16 %v466, %v457
  %v539 = vpack.c.b16 %v467, %v458
  %v540 = vpack.c.b16 %v468, %v459
  %v541 = vpack.c.b16 %v469, %v460
  %v542 = vpack.c.b16 %v470, %v461
  %v543 = vpack.c.b16 %v471, %v462
  %v544 = vpack.c.b16 %v472, %v463
  %v545 = vpack.c.b16 %v473, %v464
  %v762 = vunpack.c.l.b16 %v102
  %v763 = vunpack.c.l.b16 %v103
  %v764 = vunpack.c.l.b16 %v104
  %v765 = vunpack.c.l.b16 %v105
  %v766 = vunpack.c.l.b16 %v106
  %v767 = vunpack.c.l.b16 %v107
  %v768 = vunpack.c.l.b16 %v108
  %v769 = vunpack.c.l.b16 %v109
  %v770 = vunpack.c.l.b16 %v110
  %v771 = vunpack.c.l.b16 %v111
  %v772 = vunpack.c.l.b16 %v112
  %v773 = vunpack.c.l.b16 %v113
  %v774 = vunpack.c.l.b16 %v114
  %v775 = vunpack.c.l.b16 %v115
  %v776 = vunpack.c.l.b16 %v116
  %v777 = vunpack.c.l.b16 %v117
  %v778 = vunpack.c.l.b16 %v118
  %v779 = vunpack.c.l.b16 %v119
  %v780 = vunpack.c.l.b16 %v120
  %v781 = vunpack.c.l.b16 %v121
  %v782 = vunpack.c.l.b16 %v122
  %v783 = vunpack.c.l.b16 %v123
  %v784 = vunpack.c.l.b16 %v124
  %v785 = vunpack.c.l.b16 %v125
  %v786 = vunpack.c.l.b16 %v126
  %v787 = vunpack.c.l.b16 %v127
  %v788 = vunpack.c.l.b16 %v128
  %v789 = vunpack.c.l.b16 %v129
  %v790 = vunpack.c.l.b16 %v130
  %v791 = vunpack.c.l.b16 %v131
  %v792 = vunpack.c.l.b16 %v132
  %v793 = vunpack.c.l.b16 %v133
  %v794 = vunpack.c.l.b16 %v134
  %v795 = vunpack.c.l.b16 %v135
  %v796 = vunpack.c.l.b16 %v136
  %v797 = vunpack.c.l.b16 %v137
  %v798 = vunpack.c.l.b16 %v138
  %v799 = vunpack.c.l.b16 %v139
  %v800 = vunpack.c.l.b16 %v140
  %v801 = vunpack.c.l.b16 %v141
  %v802 = vunpack.c.l.b16 %v142
  %v803 = vunpack.c.l.b16 %v143
  %v804 = vunpack.c.l.b16 %v144
  %v805 = vunpack.c.l.b16 %v145
  %v806 = vunpack.c.l.b16 %v146
  %v807 = vunpack.c.l.b16 %v147
  %v808 = vunpack.c.l.b16 %v148
  %v809 = vunpack.c.l.b16 %v149
  %v810 = vunpack.c.l.b16 %v150
  %v811 = vunpack.c.l.b16 %v151
  %v812 = vunpack.c.l.b16 %v152
  %v813 = vunpack.c.l.b16 %v153
  %v814 = vunpack.c.l.b16 %v154
  %v815 = vunpack.c.l.b16 %v155
  %v816 = vunpack.c.l.b16 %v156
  %v817 = vunpack.c.l.b16 %v157
  %v818 = vunpack.c.l.b16 %v158
  %v819 = vunpack.c.l.b16 %v159
  %v820 = vunpack.c.l.b16 %v160
  %v821 = vunpack.c.l.b16 %v161
  %v822 = vunpack.c.l.b16 %v162
  %v823 = vunpack.c.l.b16 %v163
  %v824 = vunpack.c.l.b16 %v164
  %v825 = vunpack.c.l.b16 %v165
  %v826 = vunpack.c.l.b16 %v166
  %v827 = vunpack.c.l.b16 %v167
  %v828 = vunpack.c.l.b16 %v168
  %v829 = vunpack.c.l.b16 %v169
  %v830 = vunpack.c.l.b16 %v170
  %v831 = vunpack.c.l.b16 %v171
  %v832 = vunpack.c.l.b16 %v172
  %v833 = vunpack.c.l.b16 %v173
  %v834 = vunpack.c.l.b16 %v174
  %v835 = vunpack.c.l.b16 %v175
  %v836 = vunpack.c.l.b16 %v176
  %v837 = vunpack.c.l.b16 %v177
  %v838 = vunpack.c.l.b16 %v178
  %v839 = vunpack.c.l.b16 %v179
  %v840 = vunpack.c.l.b16 %v180
  %v841 = vunpack.c.l.b16 %v181
  %v842 = vunpack.c.l.b16 %v182
  %v843 = vunpack.c.l.b16 %v183
  %v844 = vunpack.c.l.b16 %v184
  %v845 = vunpack.c.l.b16 %v185
  %v846 = vunpack.c.l.b16 %v186
  %v847 = vunpack.c.l.b16 %v187
  %v848 = vunpack.c.l.b16 %v188
  %v849 = vunpack.c.l.b16 %v189
  %v850 = vunpack.c.l.b16 %v190
  %v851 = vunpack.c.l.b16 %v191
  %v852 = vunpack.c.l.b16 %v192
  %v853 = vunpack.c.l.b16 %v193
  %v854 = vunpack.c.l.b16 %v194
  %v855 = vunpack.c.l.b16 %v195
  %v856 = vunpack.c.l.b16 %v196
  %v857 = vunpack.c.l.b16 %v197
  %v858 = vunpack.c.l.b16 %v198
  %v859 = vunpack.c.l.b16 %v199
  %v860 = vunpack.c.l.b16 %v200
  %v861 = vunpack.c.l.b16 %v201
  %v862 = vunpack.c.l.b16 %v202
  %v863 = vunpack.c.l.b16 %v203
  %v864 = vunpack.c.l.b16 %v204
  %v865 = vunpack.c.l.b16 %v205
  %v866 = vunpack.c.l.b16 %v206
  %v867 = vunpack.c.l.b16 %v207
  %v868 = vunpack.c.l.b16 %v208
  %v869 = vunpack.c.l.b16 %v209
  %v870 = vunpack.c.l.b16 %v210
  %v871 = vunpack.c.l.b16 %v211
  %v872 = vunpack.c.l.b16 %v212
  %v873 = vunpack.c.l.b16 %v213
  %v874 = vunpack.c.l.b16 %v214
  %v875 = vunpack.c.l.b16 %v215
  %v876 = vunpack.c.l.b16 %v216
  %v877 = vunpack.c.l.b16 %v217
  %v878 = vunpack.c.l.b16 %v218
  %v879 = vunpack.c.l.b16 %v219
  %v880 = vunpack.c.l.b16 %v220
  %v881 = vunpack.c.l.b16 %v221
  %v882 = vunpack.c.l.b16 %v222
  %v883 = vunpack.c.l.b16 %v223
  %v884 = vunpack.c.l.b16 %v224
  %v885 = vunpack.c.l.b16 %v225
  %v886 = vunpack.c.l.b16 %v226
  %v887 = vunpack.c.l.b16 %v227
  %v888 = vunpack.c.l.b16 %v228
  %v889 = vunpack.c.l.b16 %v229
  %v890 = vunpack.c.l.b16 %v230
  %v891 = vunpack.c.l.b16 %v231
  %v892 = vunpack.c.l.b16 %v232
  %v893 = vunpack.c.l.b16 %v233
  %v894 = vunpack.c.l.b16 %v234
  %v895 = vunpack.c.l.b16 %v235
  %v896 = vunpack.c.l.b16 %v236
  %v897 = vunpack.c.l.b16 %v237
  %v898 = vunpack.c.l.b16 %v238
  %v899 = vunpack.c.l.b16 %v239
  %v900 = vunpack.c.l.b16 %v240
  %v901 = vunpack.c.l.b16 %v241
  %v902 = vunpack.c.l.b16 %v242
  %v903 = vunpack.c.l.b16 %v243
  %v904 = vunpack.c.l.b16 %v244
  %v905 = vunpack.c.l.b16 %v245
  %v906 = vpack.c.b16 %v763, %v762
  %v907 = vpack.c.b16 %v765, %v764
  %v908 = vpack.c.b16 %v767, %v766
  %v909 = vpack.c.b16 %v769, %v768
  %v910 = vpack.c.b16 %v771, %v770
  %v911 = vpack.c.b16 %v773, %v772
  %v912 = vpack.c.b16 %v775, %v774
  %v913 = vpack.c.b16 %v777, %v776
  %v914 = vpack.c.b16 %v779, %v778
  %v915 = vpack.c.b16 %v781, %v780
  %v916 = vpack.c.b16 %v783, %v782
  %v917 = vpack.c.b16 %v785, %v784
  %v918 = vpack.c.b16 %v787, %v786
  %v919 = vpack.c.b16 %v789, %v788
  %v920 = vpack.c.b16 %v791, %v790
  %v921 = vpack.c.b16 %v793, %v792
  %v922 = vpack.c.b16 %v795, %v794
  %v923 = vpack.c.b16 %v797, %v796
  %v924 = vpack.c.b16 %v799, %v798
  %v925 = vpack.c.b16 %v801, %v800
  %v926 = vpack.c.b16 %v803, %v802
  %v927 = vpack.c.b16 %v805, %v804
  %v928 = vpack.c.b16 %v807, %v806
  %v929 = vpack.c.b16 %v809, %v808
  %v930 = vpack.c.b16 %v811, %v810
  %v931 = vpack.c.b16 %v813, %v812
  %v932 = vpack.c.b16 %v815, %v814
  %v933 = vpack.c.b16 %v817, %v816
  %v934 = vpack.c.b16 %v819, %v818
  %v935 = vpack.c.b16 %v821, %v820
  %v936 = vpack.c.b16 %v823, %v822
  %v937 = vpack.c.b16 %v825, %v824
  %v938 = vpack.c.b16 %v827, %v826
  %v939 = vpack.c.b16 %v829, %v828
  %v940 = vpack.c.b16 %v831, %v830
  %v941 = vpack.c.b16 %v833, %v832
  %v942 = vpack.c.b16 %v835, %v834
  %v943 = vpack.c.b16 %v837, %v836
  %v944 = vpack.c.b16 %v839, %v838
  %v945 = vpack.c.b16 %v841, %v840
  %v946 = vpack.c.b16 %v843, %v842
  %v947 = vpack.c.b16 %v845, %v844
  %v948 = vpack.c.b16 %v847, %v846
  %v949 = vpack.c.b16 %v849, %v848
  %v950 = vpack.c.b16 %v851, %v850
  %v951 = vpack.c.b16 %v853, %v852
  %v952 = vpack.c.b16 %v855, %v854
  %v953 = vpack.c.b16 %v857, %v856
  %v954 = vpack.c.b16 %v859, %v858
  %v955 = vpack.c.b16 %v861, %v860
  %v956 = vpack.c.b16 %v863, %v862
  %v957 = vpack.c.b16 %v865, %v864
  %v958 = vpack.c.b16 %v867, %v866
  %v959 = vpack.c.b16 %v869, %v868
  %v960 = vpack.c.b16 %v871, %v870
  %v961 = vpack.c.b16 %v873, %v872
  %v962 = vpack.c.b16 %v875, %v874
  %v963 = vpack.c.b16 %v877, %v876
  %v964 = vpack.c.b16 %v879, %v878
  %v965 = vpack.c.b16 %v881, %v880
  %v966 = vpack.c.b16 %v883, %v882
  %v967 = vpack.c.b16 %v885, %v884
  %v968 = vpack.c.b16 %v887, %v886
  %v969 = vpack.c.b16 %v889, %v888
  %v970 = vpack.c.b16 %v891, %v890
  %v971 = vpack.c.b16 %v893, %v892
  %v972 = vpack.c.b16 %v895, %v894
  %v973 = vpack.c.b16 %v897, %v896
  %v974 = vpack.c.b16 %v899, %v898
  %v975 = vpack.c.b16 %v901, %v900
  %v976 = vpack.c.b16 %v903, %v902
  %v977 = vpack.c.b16 %v905, %v904
  %1050 = vmatpush.bf16.msra.mxu0 %v913
  %1051 = vmatpush.bf16.msra.mxu0 %v912
  %1052 = vmatpush.bf16.msra.mxu0 %v911
  %1053 = vmatpush.bf16.msra.mxu0 %v910
  %1054 = vmatpush.bf16.msra.mxu0 %v909
  %1055 = vmatpush.bf16.msra.mxu0 %v908
  %1056 = vmatpush.bf16.msra.mxu0 %v907
  %1057 = vmatpush.bf16.msra.mxu0 %v906
  %1058 = vmatmul.bf16.gmra.mxu0 %v474
  %v1059 = vpop.f32.mrf.mxu0
  %v1060 = vadd.f32 %v248, %v1059
  %v1061 = vpop.f32.mrf.mxu0
  %v1062 = vadd.f32 %v248, %v1061
  %1063 = vmatmul.bf16.gmra.mxu0 %v483
  %v1064 = vpop.f32.mrf.mxu0
  %v1065 = vadd.f32 %v248, %v1064
  %v1066 = vpop.f32.mrf.mxu0
  %v1067 = vadd.f32 %v248, %v1066
  %1068 = vmatmul.bf16.gmra.mxu0 %v492
  %v1069 = vpop.f32.mrf.mxu0
  %v1070 = vadd.f32 %v248, %v1069
  %v1071 = vpop.f32.mrf.mxu0
  %v1072 = vadd.f32 %v248, %v1071
  %1073 = vmatmul.bf16.gmra.mxu0 %v501
  %v1074 = vpop.f32.mrf.mxu0
  %v1075 = vadd.f32 %v248, %v1074
  %v1076 = vpop.f32.mrf.mxu0
  %v1077 = vadd.f32 %v248, %v1076
  %1078 = vmatmul.bf16.gmra.mxu0 %v510
  %v1079 = vpop.f32.mrf.mxu0
  %v1080 = vadd.f32 %v248, %v1079
  %v1081 = vpop.f32.mrf.mxu0
  %v1082 = vadd.f32 %v248, %v1081
  %1083 = vmatmul.bf16.gmra.mxu0 %v519
  %v1084 = vpop.f32.mrf.mxu0
  %v1085 = vadd.f32 %v248, %v1084
  %v1086 = vpop.f32.mrf.mxu0
  %v1087 = vadd.f32 %v248, %v1086
  %1088 = vmatmul.bf16.gmra.mxu0 %v528
  %v1089 = vpop.f32.mrf.mxu0
  %v1090 = vadd.f32 %v248, %v1089
  %v1091 = vpop.f32.mrf.mxu0
  %v1092 = vadd.f32 %v248, %v1091
  %1093 = vmatmul.bf16.gmra.mxu0 %v537
  %v1094 = vpop.f32.mrf.mxu0
  %v1095 = vadd.f32 %v248, %v1094
  %v1096 = vpop.f32.mrf.mxu0
  %v1097 = vadd.f32 %v248, %v1096
  %1098 = vdwg.mxu0
  %1099 = vmatpush.bf16.msra.mxu0 %v921
  %1100 = vmatpush.bf16.msra.mxu0 %v920
  %1101 = vmatpush.bf16.msra.mxu0 %v919
  %1102 = vmatpush.bf16.msra.mxu0 %v918
  %1103 = vmatpush.bf16.msra.mxu0 %v917
  %1104 = vmatpush.bf16.msra.mxu0 %v916
  %1105 = vmatpush.bf16.msra.mxu0 %v915
  %1106 = vmatpush.bf16.msra.mxu0 %v914
  %1107 = vmatmul.bf16.gmra.mxu0 %v475
  %v1108 = vpop.f32.mrf.mxu0
  %v1109 = vadd.f32 %v1060, %v1108
  %v1110 = vpop.f32.mrf.mxu0
  %v1111 = vadd.f32 %v1062, %v1110
  %1112 = vmatmul.bf16.gmra.mxu0 %v484
  %v1113 = vpop.f32.mrf.mxu0
  %v1114 = vadd.f32 %v1065, %v1113
  %v1115 = vpop.f32.mrf.mxu0
  %v1116 = vadd.f32 %v1067, %v1115
  %1117 = vmatmul.bf16.gmra.mxu0 %v493
  %v1118 = vpop.f32.mrf.mxu0
  %v1119 = vadd.f32 %v1070, %v1118
  %v1120 = vpop.f32.mrf.mxu0
  %v1121 = vadd.f32 %v1072, %v1120
  %1122 = vmatmul.bf16.gmra.mxu0 %v502
  %v1123 = vpop.f32.mrf.mxu0
  %v1124 = vadd.f32 %v1075, %v1123
  %v1125 = vpop.f32.mrf.mxu0
  %v1126 = vadd.f32 %v1077, %v1125
  %1127 = vmatmul.bf16.gmra.mxu0 %v511
  %v1128 = vpop.f32.mrf.mxu0
  %v1129 = vadd.f32 %v1080, %v1128
  %v1130 = vpop.f32.mrf.mxu0
  %v1131 = vadd.f32 %v1082, %v1130
  %1132 = vmatmul.bf16.gmra.mxu0 %v520
  %v1133 = vpop.f32.mrf.mxu0
  %v1134 = vadd.f32 %v1085, %v1133
  %v1135 = vpop.f32.mrf.mxu0
  %v1136 = vadd.f32 %v1087, %v1135
  %1137 = vmatmul.bf16.gmra.mxu0 %v529
  %v1138 = vpop.f32.mrf.mxu0
  %v1139 = vadd.f32 %v1090, %v1138
  %v1140 = vpop.f32.mrf.mxu0
  %v1141 = vadd.f32 %v1092, %v1140
  %1142 = vmatmul.bf16.gmra.mxu0 %v538
  %v1143 = vpop.f32.mrf.mxu0
  %v1144 = vadd.f32 %v1095, %v1143
  %v1145 = vpop.f32.mrf.mxu0
  %v1146 = vadd.f32 %v1097, %v1145
  %1147 = vdwg.mxu0
  %1148 = vmatpush.bf16.msra.mxu0 %v929
  %1149 = vmatpush.bf16.msra.mxu0 %v928
  %1150 = vmatpush.bf16.msra.mxu0 %v927
  %1151 = vmatpush.bf16.msra.mxu0 %v926
  %1152 = vmatpush.bf16.msra.mxu0 %v925
  %1153 = vmatpush.bf16.msra.mxu0 %v924
  %1154 = vmatpush.bf16.msra.mxu0 %v923
  %1155 = vmatpush.bf16.msra.mxu0 %v922
  %1156 = vmatmul.bf16.gmra.mxu0 %v476
  %v1157 = vpop.f32.mrf.mxu0
  %v1158 = vadd.f32 %v1109, %v1157
  %v1159 = vpop.f32.mrf.mxu0
  %v1160 = vadd.f32 %v1111, %v1159
  %1161 = vmatmul.bf16.gmra.mxu0 %v485
  %v1162 = vpop.f32.mrf.mxu0
  %v1163 = vadd.f32 %v1114, %v1162
  %v1164 = vpop.f32.mrf.mxu0
  %v1165 = vadd.f32 %v1116, %v1164
  %1166 = vmatmul.bf16.gmra.mxu0 %v494
  %v1167 = vpop.f32.mrf.mxu0
  %v1168 = vadd.f32 %v1119, %v1167
  %v1169 = vpop.f32.mrf.mxu0
  %v1170 = vadd.f32 %v1121, %v1169
  %1171 = vmatmul.bf16.gmra.mxu0 %v503
  %v1172 = vpop.f32.mrf.mxu0
  %v1173 = vadd.f32 %v1124, %v1172
  %v1174 = vpop.f32.mrf.mxu0
  %v1175 = vadd.f32 %v1126, %v1174
  %1176 = vmatmul.bf16.gmra.mxu0 %v512
  %v1177 = vpop.f32.mrf.mxu0
  %v1178 = vadd.f32 %v1129, %v1177
  %v1179 = vpop.f32.mrf.mxu0
  %v1180 = vadd.f32 %v1131, %v1179
  %1181 = vmatmul.bf16.gmra.mxu0 %v521
  %v1182 = vpop.f32.mrf.mxu0
  %v1183 = vadd.f32 %v1134, %v1182
  %v1184 = vpop.f32.mrf.mxu0
  %v1185 = vadd.f32 %v1136, %v1184
  %1186 = vmatmul.bf16.gmra.mxu0 %v530
  %v1187 = vpop.f32.mrf.mxu0
  %v1188 = vadd.f32 %v1139, %v1187
  %v1189 = vpop.f32.mrf.mxu0
  %v1190 = vadd.f32 %v1141, %v1189
  %1191 = vmatmul.bf16.gmra.mxu0 %v539
  %v1192 = vpop.f32.mrf.mxu0
  %v1193 = vadd.f32 %v1144, %v1192
  %v1194 = vpop.f32.mrf.mxu0
  %v1195 = vadd.f32 %v1146, %v1194
  %1196 = vdwg.mxu0
  %1197 = vmatpush.bf16.msra.mxu0 %v937
  %1198 = vmatpush.bf16.msra.mxu0 %v936
  %1199 = vmatpush.bf16.msra.mxu0 %v935
  %1200 = vmatpush.bf16.msra.mxu0 %v934
  %1201 = vmatpush.bf16.msra.mxu0 %v933
  %1202 = vmatpush.bf16.msra.mxu0 %v932
  %1203 = vmatpush.bf16.msra.mxu0 %v931
  %1204 = vmatpush.bf16.msra.mxu0 %v930
  %1205 = vmatmul.bf16.gmra.mxu0 %v477
  %v1206 = vpop.f32.mrf.mxu0
  %v1207 = vadd.f32 %v1158, %v1206
  %v1208 = vpop.f32.mrf.mxu0
  %v1209 = vadd.f32 %v1160, %v1208
  %1210 = vmatmul.bf16.gmra.mxu0 %v486
  %v1211 = vpop.f32.mrf.mxu0
  %v1212 = vadd.f32 %v1163, %v1211
  %v1213 = vpop.f32.mrf.mxu0
  %v1214 = vadd.f32 %v1165, %v1213
  %1215 = vmatmul.bf16.gmra.mxu0 %v495
  %v1216 = vpop.f32.mrf.mxu0
  %v1217 = vadd.f32 %v1168, %v1216
  %v1218 = vpop.f32.mrf.mxu0
  %v1219 = vadd.f32 %v1170, %v1218
  %1220 = vmatmul.bf16.gmra.mxu0 %v504
  %v1221 = vpop.f32.mrf.mxu0
  %v1222 = vadd.f32 %v1173, %v1221
  %v1223 = vpop.f32.mrf.mxu0
  %v1224 = vadd.f32 %v1175, %v1223
  %1225 = vmatmul.bf16.gmra.mxu0 %v513
  %v1226 = vpop.f32.mrf.mxu0
  %v1227 = vadd.f32 %v1178, %v1226
  %v1228 = vpop.f32.mrf.mxu0
  %v1229 = vadd.f32 %v1180, %v1228
  %1230 = vmatmul.bf16.gmra.mxu0 %v522
  %v1231 = vpop.f32.mrf.mxu0
  %v1232 = vadd.f32 %v1183, %v1231
  %v1233 = vpop.f32.mrf.mxu0
  %v1234 = vadd.f32 %v1185, %v1233
  %1235 = vmatmul.bf16.gmra.mxu0 %v531
  %v1236 = vpop.f32.mrf.mxu0
  %v1237 = vadd.f32 %v1188, %v1236
  %v1238 = vpop.f32.mrf.mxu0
  %v1239 = vadd.f32 %v1190, %v1238
  %1240 = vmatmul.bf16.gmra.mxu0 %v540
  %v1241 = vpop.f32.mrf.mxu0
  %v1242 = vadd.f32 %v1193, %v1241
  %v1243 = vpop.f32.mrf.mxu0
  %v1244 = vadd.f32 %v1195, %v1243
  %1245 = vdwg.mxu0
  %1246 = vmatpush.bf16.msra.mxu0 %v945
  %1247 = vmatpush.bf16.msra.mxu0 %v944
  %1248 = vmatpush.bf16.msra.mxu0 %v943
  %1249 = vmatpush.bf16.msra.mxu0 %v942
  %1250 = vmatpush.bf16.msra.mxu0 %v941
  %1251 = vmatpush.bf16.msra.mxu0 %v940
  %1252 = vmatpush.bf16.msra.mxu0 %v939
  %1253 = vmatpush.bf16.msra.mxu0 %v938
  %1254 = vmatmul.bf16.gmra.mxu0 %v478
  %v1255 = vpop.f32.mrf.mxu0
  %v1256 = vadd.f32 %v1207, %v1255
  %v1257 = vpop.f32.mrf.mxu0
  %v1258 = vadd.f32 %v1209, %v1257
  %1259 = vmatmul.bf16.gmra.mxu0 %v487
  %v1260 = vpop.f32.mrf.mxu0
  %v1261 = vadd.f32 %v1212, %v1260
  %v1262 = vpop.f32.mrf.mxu0
  %v1263 = vadd.f32 %v1214, %v1262
  %1264 = vmatmul.bf16.gmra.mxu0 %v496
  %v1265 = vpop.f32.mrf.mxu0
  %v1266 = vadd.f32 %v1217, %v1265
  %v1267 = vpop.f32.mrf.mxu0
  %v1268 = vadd.f32 %v1219, %v1267
  %1269 = vmatmul.bf16.gmra.mxu0 %v505
  %v1270 = vpop.f32.mrf.mxu0
  %v1271 = vadd.f32 %v1222, %v1270
  %v1272 = vpop.f32.mrf.mxu0
  %v1273 = vadd.f32 %v1224, %v1272
  %1274 = vmatmul.bf16.gmra.mxu0 %v514
  %v1275 = vpop.f32.mrf.mxu0
  %v1276 = vadd.f32 %v1227, %v1275
  %v1277 = vpop.f32.mrf.mxu0
  %v1278 = vadd.f32 %v1229, %v1277
  %1279 = vmatmul.bf16.gmra.mxu0 %v523
  %v1280 = vpop.f32.mrf.mxu0
  %v1281 = vadd.f32 %v1232, %v1280
  %v1282 = vpop.f32.mrf.mxu0
  %v1283 = vadd.f32 %v1234, %v1282
  %1284 = vmatmul.bf16.gmra.mxu0 %v532
  %v1285 = vpop.f32.mrf.mxu0
  %v1286 = vadd.f32 %v1237, %v1285
  %v1287 = vpop.f32.mrf.mxu0
  %v1288 = vadd.f32 %v1239, %v1287
  %1289 = vmatmul.bf16.gmra.mxu0 %v541
  %v1290 = vpop.f32.mrf.mxu0
  %v1291 = vadd.f32 %v1242, %v1290
  %v1292 = vpop.f32.mrf.mxu0
  %v1293 = vadd.f32 %v1244, %v1292
  %1294 = vdwg.mxu0
  %1295 = vmatpush.bf16.msra.mxu0 %v953
  %1296 = vmatpush.bf16.msra.mxu0 %v952
  %1297 = vmatpush.bf16.msra.mxu0 %v951
  %1298 = vmatpush.bf16.msra.mxu0 %v950
  %1299 = vmatpush.bf16.msra.mxu0 %v949
  %1300 = vmatpush.bf16.msra.mxu0 %v948
  %1301 = vmatpush.bf16.msra.mxu0 %v947
  %1302 = vmatpush.bf16.msra.mxu0 %v946
  %1303 = vmatmul.bf16.gmra.mxu0 %v479
  %v1304 = vpop.f32.mrf.mxu0
  %v1305 = vadd.f32 %v1256, %v1304
  %v1306 = vpop.f32.mrf.mxu0
  %v1307 = vadd.f32 %v1258, %v1306
  %1308 = vmatmul.bf16.gmra.mxu0 %v488
  %v1309 = vpop.f32.mrf.mxu0
  %v1310 = vadd.f32 %v1261, %v1309
  %v1311 = vpop.f32.mrf.mxu0
  %v1312 = vadd.f32 %v1263, %v1311
  %1313 = vmatmul.bf16.gmra.mxu0 %v497
  %v1314 = vpop.f32.mrf.mxu0
  %v1315 = vadd.f32 %v1266, %v1314
  %v1316 = vpop.f32.mrf.mxu0
  %v1317 = vadd.f32 %v1268, %v1316
  %1318 = vmatmul.bf16.gmra.mxu0 %v506
  %v1319 = vpop.f32.mrf.mxu0
  %v1320 = vadd.f32 %v1271, %v1319
  %v1321 = vpop.f32.mrf.mxu0
  %v1322 = vadd.f32 %v1273, %v1321
  %1323 = vmatmul.bf16.gmra.mxu0 %v515
  %v1324 = vpop.f32.mrf.mxu0
  %v1325 = vadd.f32 %v1276, %v1324
  %v1326 = vpop.f32.mrf.mxu0
  %v1327 = vadd.f32 %v1278, %v1326
  %1328 = vmatmul.bf16.gmra.mxu0 %v524
  %v1329 = vpop.f32.mrf.mxu0
  %v1330 = vadd.f32 %v1281, %v1329
  %v1331 = vpop.f32.mrf.mxu0
  %v1332 = vadd.f32 %v1283, %v1331
  %1333 = vmatmul.bf16.gmra.mxu0 %v533
  %v1334 = vpop.f32.mrf.mxu0
  %v1335 = vadd.f32 %v1286, %v1334
  %v1336 = vpop.f32.mrf.mxu0
  %v1337 = vadd.f32 %v1288, %v1336
  %1338 = vmatmul.bf16.gmra.mxu0 %v542
  %v1339 = vpop.f32.mrf.mxu0
  %v1340 = vadd.f32 %v1291, %v1339
  %v1341 = vpop.f32.mrf.mxu0
  %v1342 = vadd.f32 %v1293, %v1341
  %1343 = vdwg.mxu0
  %1344 = vmatpush.bf16.msra.mxu0 %v961
  %1345 = vmatpush.bf16.msra.mxu0 %v960
  %1346 = vmatpush.bf16.msra.mxu0 %v959
  %1347 = vmatpush.bf16.msra.mxu0 %v958
  %1348 = vmatpush.bf16.msra.mxu0 %v957
  %1349 = vmatpush.bf16.msra.mxu0 %v956
  %1350 = vmatpush.bf16.msra.mxu0 %v955
  %1351 = vmatpush.bf16.msra.mxu0 %v954
  %1352 = vmatmul.bf16.gmra.mxu0 %v480
  %v1353 = vpop.f32.mrf.mxu0
  %v1354 = vadd.f32 %v1305, %v1353
  %v1355 = vpop.f32.mrf.mxu0
  %v1356 = vadd.f32 %v1307, %v1355
  %1357 = vmatmul.bf16.gmra.mxu0 %v489
  %v1358 = vpop.f32.mrf.mxu0
  %v1359 = vadd.f32 %v1310, %v1358
  %v1360 = vpop.f32.mrf.mxu0
  %v1361 = vadd.f32 %v1312, %v1360
  %1362 = vmatmul.bf16.gmra.mxu0 %v498
  %v1363 = vpop.f32.mrf.mxu0
  %v1364 = vadd.f32 %v1315, %v1363
  %v1365 = vpop.f32.mrf.mxu0
  %v1366 = vadd.f32 %v1317, %v1365
  %1367 = vmatmul.bf16.gmra.mxu0 %v507
  %v1368 = vpop.f32.mrf.mxu0
  %v1369 = vadd.f32 %v1320, %v1368
  %v1370 = vpop.f32.mrf.mxu0
  %v1371 = vadd.f32 %v1322, %v1370
  %1372 = vmatmul.bf16.gmra.mxu0 %v516
  %v1373 = vpop.f32.mrf.mxu0
  %v1374 = vadd.f32 %v1325, %v1373
  %v1375 = vpop.f32.mrf.mxu0
  %v1376 = vadd.f32 %v1327, %v1375
  %1377 = vmatmul.bf16.gmra.mxu0 %v525
  %v1378 = vpop.f32.mrf.mxu0
  %v1379 = vadd.f32 %v1330, %v1378
  %v1380 = vpop.f32.mrf.mxu0
  %v1381 = vadd.f32 %v1332, %v1380
  %1382 = vmatmul.bf16.gmra.mxu0 %v534
  %v1383 = vpop.f32.mrf.mxu0
  %v1384 = vadd.f32 %v1335, %v1383
  %v1385 = vpop.f32.mrf.mxu0
  %v1386 = vadd.f32 %v1337, %v1385
  %1387 = vmatmul.bf16.gmra.mxu0 %v543
  %v1388 = vpop.f32.mrf.mxu0
  %v1389 = vadd.f32 %v1340, %v1388
  %v1390 = vpop.f32.mrf.mxu0
  %v1391 = vadd.f32 %v1342, %v1390
  %1392 = vdwg.mxu0
  %1393 = vmatpush.bf16.msra.mxu0 %v969
  %1394 = vmatpush.bf16.msra.mxu0 %v968
  %1395 = vmatpush.bf16.msra.mxu0 %v967
  %1396 = vmatpush.bf16.msra.mxu0 %v966
  %1397 = vmatpush.bf16.msra.mxu0 %v965
  %1398 = vmatpush.bf16.msra.mxu0 %v964
  %1399 = vmatpush.bf16.msra.mxu0 %v963
  %1400 = vmatpush.bf16.msra.mxu0 %v962
  %1401 = vmatmul.bf16.gmra.mxu0 %v481
  %v1402 = vpop.f32.mrf.mxu0
  %v1403 = vadd.f32 %v1354, %v1402
  %v1404 = vpop.f32.mrf.mxu0
  %v1405 = vadd.f32 %v1356, %v1404
  %1406 = vmatmul.bf16.gmra.mxu0 %v490
  %v1407 = vpop.f32.mrf.mxu0
  %v1408 = vadd.f32 %v1359, %v1407
  %v1409 = vpop.f32.mrf.mxu0
  %v1410 = vadd.f32 %v1361, %v1409
  %1411 = vmatmul.bf16.gmra.mxu0 %v499
  %v1412 = vpop.f32.mrf.mxu0
  %v1413 = vadd.f32 %v1364, %v1412
  %v1414 = vpop.f32.mrf.mxu0
  %v1415 = vadd.f32 %v1366, %v1414
  %1416 = vmatmul.bf16.gmra.mxu0 %v508
  %v1417 = vpop.f32.mrf.mxu0
  %v1418 = vadd.f32 %v1369, %v1417
  %v1419 = vpop.f32.mrf.mxu0
  %v1420 = vadd.f32 %v1371, %v1419
  %1421 = vmatmul.bf16.gmra.mxu0 %v517
  %v1422 = vpop.f32.mrf.mxu0
  %v1423 = vadd.f32 %v1374, %v1422
  %v1424 = vpop.f32.mrf.mxu0
  %v1425 = vadd.f32 %v1376, %v1424
  %1426 = vmatmul.bf16.gmra.mxu0 %v526
  %v1427 = vpop.f32.mrf.mxu0
  %v1428 = vadd.f32 %v1379, %v1427
  %v1429 = vpop.f32.mrf.mxu0
  %v1430 = vadd.f32 %v1381, %v1429
  %1431 = vmatmul.bf16.gmra.mxu0 %v535
  %v1432 = vpop.f32.mrf.mxu0
  %v1433 = vadd.f32 %v1384, %v1432
  %v1434 = vpop.f32.mrf.mxu0
  %v1435 = vadd.f32 %v1386, %v1434
  %1436 = vmatmul.bf16.gmra.mxu0 %v544
  %v1437 = vpop.f32.mrf.mxu0
  %v1438 = vadd.f32 %v1389, %v1437
  %v1439 = vpop.f32.mrf.mxu0
  %v1440 = vadd.f32 %v1391, %v1439
  %1441 = vdwg.mxu0
  %1442 = vmatpush.bf16.msra.mxu0 %v977
  %1443 = vmatpush.bf16.msra.mxu0 %v976
  %1444 = vmatpush.bf16.msra.mxu0 %v975
  %1445 = vmatpush.bf16.msra.mxu0 %v974
  %1446 = vmatpush.bf16.msra.mxu0 %v973
  %1447 = vmatpush.bf16.msra.mxu0 %v972
  %1448 = vmatpush.bf16.msra.mxu0 %v971
  %1449 = vmatpush.bf16.msra.mxu0 %v970
  %1450 = vmatmul.bf16.gmra.mxu0 %v482
  %v1451 = vpop.f32.mrf.mxu0
  %v1452 = vadd.f32 %v1403, %v1451
  %v1453 = vpop.f32.mrf.mxu0
  %v1454 = vadd.f32 %v1405, %v1453
  %1455 = vmatmul.bf16.gmra.mxu0 %v491
  %v1456 = vpop.f32.mrf.mxu0
  %v1457 = vadd.f32 %v1408, %v1456
  %v1458 = vpop.f32.mrf.mxu0
  %v1459 = vadd.f32 %v1410, %v1458
  %1460 = vmatmul.bf16.gmra.mxu0 %v500
  %v1461 = vpop.f32.mrf.mxu0
  %v1462 = vadd.f32 %v1413, %v1461
  %v1463 = vpop.f32.mrf.mxu0
  %v1464 = vadd.f32 %v1415, %v1463
  %1465 = vmatmul.bf16.gmra.mxu0 %v509
  %v1466 = vpop.f32.mrf.mxu0
  %v1467 = vadd.f32 %v1418, %v1466
  %v1468 = vpop.f32.mrf.mxu0
  %v1469 = vadd.f32 %v1420, %v1468
  %1470 = vmatmul.bf16.gmra.mxu0 %v518
  %v1471 = vpop.f32.mrf.mxu0
  %v1472 = vadd.f32 %v1423, %v1471
  %v1473 = vpop.f32.mrf.mxu0
  %v1474 = vadd.f32 %v1425, %v1473
  %1475 = vmatmul.bf16.gmra.mxu0 %v527
  %v1476 = vpop.f32.mrf.mxu0
  %v1477 = vadd.f32 %v1428, %v1476
  %v1478 = vpop.f32.mrf.mxu0
  %v1479 = vadd.f32 %v1430, %v1478
  %1480 = vmatmul.bf16.gmra.mxu0 %v536
  %v1481 = vpop.f32.mrf.mxu0
  %v1482 = vadd.f32 %v1433, %v1481
  %v1483 = vpop.f32.mrf.mxu0
  %v1484 = vadd.f32 %v1435, %v1483
  %1485 = vmatmul.bf16.gmra.mxu0 %v545
  %v1486 = vpop.f32.mrf.mxu0
  %v1487 = vadd.f32 %v1438, %v1486
  %v1488 = vpop.f32.mrf.mxu0
  %v1489 = vadd.f32 %v1440, %v1488
  %1490 = vdwg.mxu0
  %v1491 = vmax.f32 %v1452, 0.0
  %v1492 = vmax.f32 %v1454, 0.0
  %v1493 = vmax.f32 %v1457, 0.0
  %v1494 = vmax.f32 %v1459, 0.0
  %v1495 = vmax.f32 %v1462, 0.0
  %v1496 = vmax.f32 %v1464, 0.0
  %v1497 = vmax.f32 %v1467, 0.0
  %v1498 = vmax.f32 %v1469, 0.0
  %v1499 = vmax.f32 %v1472, 0.0
  %v1500 = vmax.f32 %v1474, 0.0
  %v1501 = vmax.f32 %v1477, 0.0
  %v1502 = vmax.f32 %v1479, 0.0
  %v1503 = vmax.f32 %v1482, 0.0
  %v1504 = vmax.f32 %v1484, 0.0
  %v1505 = vmax.f32 %v1487, 0.0
  %v1506 = vmax.f32 %v1489, 0.0
  %1507 = vst [vmem:[%s5] sm:$0xff] %v1491
  %1508 = vst [vmem:[%s5 + $0x8] sm:$0xff] %v1492
  %1509 = vst [vmem:[%s5 + $0x10] sm:$0xff] %v1493
  %1510 = vst [vmem:[%s5 + $0x18] sm:$0xff] %v1494
  %1511 = vst [vmem:[%s5 + $0x20] sm:$0xff] %v1495
  %1512 = vst [vmem:[%s5 + $0x28] sm:$0xff] %v1496
  %1513 = vst [vmem:[%s5 + $0x30] sm:$0xff] %v1497
  %1514 = vst [vmem:[%s5 + $0x38] sm:$0xff] %v1498
  %1515 = vst [vmem:[%s5 + $0x40] sm:$0xff] %v1499
  %1516 = vst [vmem:[%s5 + $0x48] sm:$0xff] %v1500
  %1517 = vst [vmem:[%s5 + $0x50] sm:$0xff] %v1501
  %1518 = vst [vmem:[%s5 + $0x58] sm:$0xff] %v1502
  %1519 = vst [vmem:[%s5 + $0x60] sm:$0xff] %v1503
  %1520 = vst [vmem:[%s5 + $0x68] sm:$0xff] %v1504
  %1521 = vst [vmem:[%s5 + $0x70] sm:$0xff] %v1505
  %1522 = vst [vmem:[%s5 + $0x78] sm:$0xff] %v1506
  %v1523 = vld [vmem:[%s3] sm:$0xf]
  %v1524 = vld [vmem:[%s3 + $0x4] sm:$0xf]
  %v1525 = vld [vmem:[%s3 + $0x8] sm:$0xf]
  %v1526 = vld [vmem:[%s3 + $0xc] sm:$0xf]
  %v1527 = vld [vmem:[%s3 + $0x10] sm:$0xf]
  %v1528 = vld [vmem:[%s3 + $0x14] sm:$0xf]
  %v1529 = vld [vmem:[%s3 + $0x18] sm:$0xf]
  %v1530 = vld [vmem:[%s3 + $0x1c] sm:$0xf]
  %v1531 = vld [vmem:[%s3 + $0x20] sm:$0xf]
  %v1532 = vld [vmem:[%s3 + $0x24] sm:$0xf]
  %v1533 = vld [vmem:[%s3 + $0x28] sm:$0xf]
  %v1534 = vld [vmem:[%s3 + $0x2c] sm:$0xf]
  %v1535 = vld [vmem:[%s3 + $0x30] sm:$0xf]
  %v1536 = vld [vmem:[%s3 + $0x34] sm:$0xf]
  %v1537 = vld [vmem:[%s3 + $0x38] sm:$0xf]
  %v1538 = vld [vmem:[%s3 + $0x3c] sm:$0xf]
  %v1539 = vld [vmem:[%s4] sm:$0x1]
  %v1541 = vperm.slane %v1539, 0
  %v1559 = vunpack.c.l.b16 %v1523
  %v1560 = vunpack.c.l.b16 %v1524
  %v1561 = vunpack.c.l.b16 %v1525
  %v1562 = vunpack.c.l.b16 %v1526
  %v1563 = vunpack.c.l.b16 %v1527
  %v1564 = vunpack.c.l.b16 %v1528
  %v1565 = vunpack.c.l.b16 %v1529
  %v1566 = vunpack.c.l.b16 %v1530
  %v1567 = vunpack.c.l.b16 %v1531
  %v1568 = vunpack.c.l.b16 %v1532
  %v1569 = vunpack.c.l.b16 %v1533
  %v1570 = vunpack.c.l.b16 %v1534
  %v1571 = vunpack.c.l.b16 %v1535
  %v1572 = vunpack.c.l.b16 %v1536
  %v1573 = vunpack.c.l.b16 %v1537
  %v1574 = vunpack.c.l.b16 %v1538
  %v1575 = vpack.c.b16 %v1560, %v1559
  %v1576 = vpack.c.b16 %v1562, %v1561
  %v1577 = vpack.c.b16 %v1564, %v1563
  %v1578 = vpack.c.b16 %v1566, %v1565
  %v1579 = vpack.c.b16 %v1568, %v1567
  %v1580 = vpack.c.b16 %v1570, %v1569
  %v1581 = vpack.c.b16 %v1572, %v1571
  %v1582 = vpack.c.b16 %v1574, %v1573
  %1591 = vmatpush.bf16.msra.mxu0 %v1582
  %1592 = vmatpush.bf16.msra.mxu0 %v1581
  %1593 = vmatpush.bf16.msra.mxu0 %v1580
  %1594 = vmatpush.bf16.msra.mxu0 %v1579
  %1595 = vmatpush.bf16.msra.mxu0 %v1578
  %1596 = vmatpush.bf16.msra.mxu0 %v1577
  %1597 = vmatpush.bf16.msra.mxu0 %v1576
  %1598 = vmatpush.bf16.msra.mxu0 %v1575
  %1599 = vmatmul.bf16.gmra.mxu0 %v478
  %v1600 = vpop.f32.mrf.mxu0
  %v1601 = vadd.f32 %v1541, %v1600
  %v1602 = vpop.f32.mrf.mxu0
  %v1603 = vadd.f32 %v1541, %v1602
  %1604 = vmatmul.bf16.gmra.mxu0 %v487
  %v1605 = vpop.f32.mrf.mxu0
  %v1606 = vadd.f32 %v1541, %v1605
  %v1607 = vpop.f32.mrf.mxu0
  %v1608 = vadd.f32 %v1541, %v1607
  %1609 = vmatmul.bf16.gmra.mxu0 %v496
  %v1610 = vpop.f32.mrf.mxu0
  %v1611 = vadd.f32 %v1541, %v1610
  %v1612 = vpop.f32.mrf.mxu0
  %v1613 = vadd.f32 %v1541, %v1612
  %1614 = vmatmul.bf16.gmra.mxu0 %v505
  %v1615 = vpop.f32.mrf.mxu0
  %v1616 = vadd.f32 %v1541, %v1615
  %v1617 = vpop.f32.mrf.mxu0
  %v1618 = vadd.f32 %v1541, %v1617
  %1619 = vmatmul.bf16.gmra.mxu0 %v514
  %v1620 = vpop.f32.mrf.mxu0
  %v1621 = vadd.f32 %v1541, %v1620
  %v1622 = vpop.f32.mrf.mxu0
  %v1623 = vadd.f32 %v1541, %v1622
  %1624 = vmatmul.bf16.gmra.mxu0 %v523
  %v1625 = vpop.f32.mrf.mxu0
  %v1626 = vadd.f32 %v1541, %v1625
  %v1627 = vpop.f32.mrf.mxu0
  %v1628 = vadd.f32 %v1541, %v1627
  %1629 = vmatmul.bf16.gmra.mxu0 %v532
  %v1630 = vpop.f32.mrf.mxu0
  %v1631 = vadd.f32 %v1541, %v1630
  %v1632 = vpop.f32.mrf.mxu0
  %v1633 = vadd.f32 %v1541, %v1632
  %1634 = vmatmul.bf16.gmra.mxu0 %v541
  %v1635 = vpop.f32.mrf.mxu0
  %v1636 = vadd.f32 %v1541, %v1635
  %v1637 = vpop.f32.mrf.mxu0
  %v1638 = vadd.f32 %v1541, %v1637
  %1639 = vdwg.mxu0
  %1640 = vst [vmem:[%s6] sm:$0xff] %v1601
  %1641 = vst [vmem:[%s6 + $0x8] sm:$0xff] %v1603
  %1642 = vst [vmem:[%s6 + $0x10] sm:$0xff] %v1606
  %1643 = vst [vmem:[%s6 + $0x18] sm:$0xff] %v1608
  %1644 = vst [vmem:[%s6 + $0x20] sm:$0xff] %v1611
  %1645 = vst [vmem:[%s6 + $0x28] sm:$0xff] %v1613
  %1646 = vst [vmem:[%s6 + $0x30] sm:$0xff] %v1616
  %1647 = vst [vmem:[%s6 + $0x38] sm:$0xff] %v1618
  %1648 = vst [vmem:[%s6 + $0x40] sm:$0xff] %v1621
  %1649 = vst [vmem:[%s6 + $0x48] sm:$0xff] %v1623
  %1650 = vst [vmem:[%s6 + $0x50] sm:$0xff] %v1626
  %1651 = vst [vmem:[%s6 + $0x58] sm:$0xff] %v1628
  %1652 = vst [vmem:[%s6 + $0x60] sm:$0xff] %v1631
  %1653 = vst [vmem:[%s6 + $0x68] sm:$0xff] %v1633
  %1654 = vst [vmem:[%s6 + $0x70] sm:$0xff] %v1636
  %1655 = vst [vmem:[%s6 + $0x78] sm:$0xff] %v1638
  // Predicated region
  $region22: #{_lambda_.10} parent=0 // pred_check
    _
  $region23: #{_lambda_.10} parent=0 // pred_check_branch
    %1657 = sbr.rel (0) target = $region25
  $region24: #{_lambda_.10} parent=0 // pred_region
    _
  $region25: #{_lambda_.10} parent=0 // pred_fallthru
    _
  // Predicated region
  $region26: #{_lambda_.10} parent=0 // pred_check
    _
  $region27: #{_lambda_.10} parent=0 // pred_check_branch
    %1659 = sbr.rel (0) target = $region29
  $region28: #{_lambda_.10} parent=0 // pred_region
    _
  $region29: #{_lambda_.10} parent=0 // pred_fallthru
    _
  // Predicated region
  $region30: #{_lambda_.10} parent=0 // pred_check
    _
  $region31: #{_lambda_.10} parent=0 // pred_check_branch
    %1661 = sbr.rel (0) target = $region33
  $region32: #{_lambda_.10} parent=0 // pred_region
    _
  $region33: #{_lambda_.10} parent=0 // pred_fallthru
    _
  // Predicated region
  $region34: #{_lambda_.10} parent=0 // pred_check
    _
  $region35: #{_lambda_.10} parent=0 // pred_check_branch
    %1663 = sbr.rel (0) target = $region37
  $region36: #{_lambda_.10} parent=0 // pred_region
    _
  $region37: #{_lambda_.10} parent=0 // pred_fallthru
    _

// kernel: _lambda_.11
$region0: #{_lambda_.11}
  #allocation0 [shape = 'u32[]', space=smem, size = 0x4, offset = 0x4, fixed_abs, tag = 'smem constant byte address 0x4 - core index']
  #allocation1 [shape = 'u32[72,128]{1,0:T(1,128)}', space=vmem, size = 0x9000, scoped, tag = 'internal scratch']
  %s0 = inlined_call_operand.vmem [shape: bf16[128,1152], index: 0, kind: input, shape index: {}]
  %s1 = inlined_call_operand.vmem [shape: bf16[1152,128], index: 1, kind: input, shape index: {}]
  %s2 = inlined_call_operand.vmem [shape: f32[1,128], index: 2, kind: input, shape index: {}]
  %s3 = inlined_call_operand.vmem [shape: f32[128,128], index: 3, kind: input, shape index: {}]
  %s4 = inlined_call_operand.vmem [shape: f32[128,128], index: 4, kind: output, shape index: {}]
  %s5 = sld [smem:[#allocation0]]
  $region26: #{_lambda_.11} parent=0
    _
  %s7 = ssub.s32 1, %s5
  %s8 = scalar_select 0, %s7, %s5
  // Predicated region
  $region2: #{_lambda_.11} parent=0 // pred_check
    _
  $region3: #{_lambda_.11} parent=0 // pred_check_branch
    %10 = sbr.rel (0) target = $region5
  $region4: #{_lambda_.11} parent=0 // pred_region
    _
  $region5: #{_lambda_.11} parent=0 // pred_fallthru
    _
  // Predicated region
  $region6: #{_lambda_.11} parent=0 // pred_check
    _
  $region7: #{_lambda_.11} parent=0 // pred_check_branch
    %12 = sbr.rel (0) target = $region9
  $region8: #{_lambda_.11} parent=0 // pred_region
    _
  $region9: #{_lambda_.11} parent=0 // pred_fallthru
    _
  // Predicated region
  $region10: #{_lambda_.11} parent=0 // pred_check
    _
  $region11: #{_lambda_.11} parent=0 // pred_check_branch
    %14 = sbr.rel (0) target = $region13
  $region12: #{_lambda_.11} parent=0 // pred_region
    _
  $region13: #{_lambda_.11} parent=0 // pred_fallthru
    _
  // Predicated region
  $region14: #{_lambda_.11} parent=0 // pred_check
    _
  $region15: #{_lambda_.11} parent=0 // pred_check_branch
    %16 = sbr.rel (0) target = $region17
  $region16: #{_lambda_.11} parent=0 // pred_region
    _
  $region17: #{_lambda_.11} parent=0 // pred_fallthru
    _
  %v17 = vld [vmem:[%s0] sm:$0xff]
  %v18 = vld [vmem:[%s0 + $0x8] sm:$0xff]
  %v19 = vld [vmem:[%s0 + $0x10] sm:$0xff]
  %v20 = vld [vmem:[%s0 + $0x18] sm:$0xff]
  %v21 = vld [vmem:[%s0 + $0x20] sm:$0xf]
  %v22 = vld [vmem:[%s0 + $0x24] sm:$0xff]
  %v23 = vld [vmem:[%s0 + $0x2c] sm:$0xff]
  %v24 = vld [vmem:[%s0 + $0x34] sm:$0xff]
  %v25 = vld [vmem:[%s0 + $0x3c] sm:$0xff]
  %v26 = vld [vmem:[%s0 + $0x44] sm:$0xf]
  %v27 = vld [vmem:[%s0 + $0x48] sm:$0xff]
  %v28 = vld [vmem:[%s0 + $0x50] sm:$0xff]
  %v29 = vld [vmem:[%s0 + $0x58] sm:$0xff]
  %v30 = vld [vmem:[%s0 + $0x60] sm:$0xff]
  %v31 = vld [vmem:[%s0 + $0x68] sm:$0xf]
  %v32 = vld [vmem:[%s0 + $0x6c] sm:$0xff]
  %v33 = vld [vmem:[%s0 + $0x74] sm:$0xff]
  %v34 = vld [vmem:[%s0 + $0x7c] sm:$0xff]
  %v35 = vld [vmem:[%s0 + $0x84] sm:$0xff]
  %v36 = vld [vmem:[%s0 + $0x8c] sm:$0xf]
  %v37 = vld [vmem:[%s0 + $0x90] sm:$0xff]
  %v38 = vld [vmem:[%s0 + $0x98] sm:$0xff]
  %v39 = vld [vmem:[%s0 + $0xa0] sm:$0xff]
  %v40 = vld [vmem:[%s0 + $0xa8] sm:$0xff]
  %v41 = vld [vmem:[%s0 + $0xb0] sm:$0xf]
  %v42 = vld [vmem:[%s0 + $0xb4] sm:$0xff]
  %v43 = vld [vmem:[%s0 + $0xbc] sm:$0xff]
  %v44 = vld [vmem:[%s0 + $0xc4] sm:$0xff]
  %v45 = vld [vmem:[%s0 + $0xcc] sm:$0xff]
  %v46 = vld [vmem:[%s0 + $0xd4] sm:$0xf]
  %v47 = vld [vmem:[%s0 + $0xd8] sm:$0xff]
  %v48 = vld [vmem:[%s0 + $0xe0] sm:$0xff]
  %v49 = vld [vmem:[%s0 + $0xe8] sm:$0xff]
  %v50 = vld [vmem:[%s0 + $0xf0] sm:$0xff]
  %v51 = vld [vmem:[%s0 + $0xf8] sm:$0xf]
  %v52 = vld [vmem:[%s0 + $0xfc] sm:$0xff]
  %v53 = vld [vmem:[%s0 + $0x104] sm:$0xff]
  %v54 = vld [vmem:[%s0 + $0x10c] sm:$0xff]
  %v55 = vld [vmem:[%s0 + $0x114] sm:$0xff]
  %v56 = vld [vmem:[%s0 + $0x11c] sm:$0xf]
  %v57 = vld [vmem:[%s0 + $0x120] sm:$0xff]
  %v58 = vld [vmem:[%s0 + $0x128] sm:$0xff]
  %v59 = vld [vmem:[%s0 + $0x130] sm:$0xff]
  %v60 = vld [vmem:[%s0 + $0x138] sm:$0xff]
  %v61 = vld [vmem:[%s0 + $0x140] sm:$0xf]
  %v62 = vld [vmem:[%s0 + $0x144] sm:$0xff]
  %v63 = vld [vmem:[%s0 + $0x14c] sm:$0xff]
  %v64 = vld [vmem:[%s0 + $0x154] sm:$0xff]
  %v65 = vld [vmem:[%s0 + $0x15c] sm:$0xff]
  %v66 = vld [vmem:[%s0 + $0x164] sm:$0xf]
  %v67 = vld [vmem:[%s0 + $0x168] sm:$0xff]
  %v68 = vld [vmem:[%s0 + $0x170] sm:$0xff]
  %v69 = vld [vmem:[%s0 + $0x178] sm:$0xff]
  %v70 = vld [vmem:[%s0 + $0x180] sm:$0xff]
  %v71 = vld [vmem:[%s0 + $0x188] sm:$0xf]
  %v72 = vld [vmem:[%s0 + $0x18c] sm:$0xff]
  %v73 = vld [vmem:[%s0 + $0x194] sm:$0xff]
  %v74 = vld [vmem:[%s0 + $0x19c] sm:$0xff]
  %v75 = vld [vmem:[%s0 + $0x1a4] sm:$0xff]
  %v76 = vld [vmem:[%s0 + $0x1ac] sm:$0xf]
  %v77 = vld [vmem:[%s0 + $0x1b0] sm:$0xff]
  %v78 = vld [vmem:[%s0 + $0x1b8] sm:$0xff]
  %v79 = vld [vmem:[%s0 + $0x1c0] sm:$0xff]
  %v80 = vld [vmem:[%s0 + $0x1c8] sm:$0xff]
  %v81 = vld [vmem:[%s0 + $0x1d0] sm:$0xf]
  %v82 = vld [vmem:[%s0 + $0x1d4] sm:$0xff]
  %v83 = vld [vmem:[%s0 + $0x1dc] sm:$0xff]
  %v84 = vld [vmem:[%s0 + $0x1e4] sm:$0xff]
  %v85 = vld [vmem:[%s0 + $0x1ec] sm:$0xff]
  %v86 = vld [vmem:[%s0 + $0x1f4] sm:$0xf]
  %v87 = vld [vmem:[%s0 + $0x1f8] sm:$0xff]
  %v88 = vld [vmem:[%s0 + $0x200] sm:$0xff]
  %v89 = vld [vmem:[%s0 + $0x208] sm:$0xff]
  %v90 = vld [vmem:[%s0 + $0x210] sm:$0xff]
  %v91 = vld [vmem:[%s0 + $0x218] sm:$0xf]
  %v92 = vld [vmem:[%s0 + $0x21c] sm:$0xff]
  %v93 = vld [vmem:[%s0 + $0x224] sm:$0xff]
  %v94 = vld [vmem:[%s0 + $0x22c] sm:$0xff]
  %v95 = vld [vmem:[%s0 + $0x234] sm:$0xff]
  %v96 = vld [vmem:[%s0 + $0x23c] sm:$0xf]
  %v97 = vld [vmem:[%s1] sm:$0xf]
  %v98 = vld [vmem:[%s1 + $0x4] sm:$0xf]
  %v99 = vld [vmem:[%s1 + $0x8] sm:$0xf]
  %v100 = vld [vmem:[%s1 + $0xc] sm:$0xf]
  %v101 = vld [vmem:[%s1 + $0x10] sm:$0xf]
  %v102 = vld [vmem:[%s1 + $0x14] sm:$0xf]
  %v103 = vld [vmem:[%s1 + $0x18] sm:$0xf]
  %v104 = vld [vmem:[%s1 + $0x1c] sm:$0xf]
  %v105 = vld [vmem:[%s1 + $0x20] sm:$0xf]
  %v106 = vld [vmem:[%s1 + $0x24] sm:$0xf]
  %v107 = vld [vmem:[%s1 + $0x28] sm:$0xf]
  %v108 = vld [vmem:[%s1 + $0x2c] sm:$0xf]
  %v109 = vld [vmem:[%s1 + $0x30] sm:$0xf]
  %v110 = vld [vmem:[%s1 + $0x34] sm:$0xf]
  %v111 = vld [vmem:[%s1 + $0x38] sm:$0xf]
  %v112 = vld [vmem:[%s1 + $0x3c] sm:$0xf]
  %v113 = vld [vmem:[%s1 + $0x40] sm:$0xf]
  %v114 = vld [vmem:[%s1 + $0x44] sm:$0xf]
  %v115 = vld [vmem:[%s1 + $0x48] sm:$0xf]
  %v116 = vld [vmem:[%s1 + $0x4c] sm:$0xf]
  %v117 = vld [vmem:[%s1 + $0x50] sm:$0xf]
  %v118 = vld [vmem:[%s1 + $0x54] sm:$0xf]
  %v119 = vld [vmem:[%s1 + $0x58] sm:$0xf]
  %v120 = vld [vmem:[%s1 + $0x5c] sm:$0xf]
  %v121 = vld [vmem:[%s1 + $0x60] sm:$0xf]
  %v122 = vld [vmem:[%s1 + $0x64] sm:$0xf]
  %v123 = vld [vmem:[%s1 + $0x68] sm:$0xf]
  %v124 = vld [vmem:[%s1 + $0x6c] sm:$0xf]
  %v125 = vld [vmem:[%s1 + $0x70] sm:$0xf]
  %v126 = vld [vmem:[%s1 + $0x74] sm:$0xf]
  %v127 = vld [vmem:[%s1 + $0x78] sm:$0xf]
  %v128 = vld [vmem:[%s1 + $0x7c] sm:$0xf]
  %v129 = vld [vmem:[%s1 + $0x80] sm:$0xf]
  %v130 = vld [vmem:[%s1 + $0x84] sm:$0xf]
  %v131 = vld [vmem:[%s1 + $0x88] sm:$0xf]
  %v132 = vld [vmem:[%s1 + $0x8c] sm:$0xf]
  %v133 = vld [vmem:[%s1 + $0x90] sm:$0xf]
  %v134 = vld [vmem:[%s1 + $0x94] sm:$0xf]
  %v135 = vld [vmem:[%s1 + $0x98] sm:$0xf]
  %v136 = vld [vmem:[%s1 + $0x9c] sm:$0xf]
  %v137 = vld [vmem:[%s1 + $0xa0] sm:$0xf]
  %v138 = vld [vmem:[%s1 + $0xa4] sm:$0xf]
  %v139 = vld [vmem:[%s1 + $0xa8] sm:$0xf]
  %v140 = vld [vmem:[%s1 + $0xac] sm:$0xf]
  %v141 = vld [vmem:[%s1 + $0xb0] sm:$0xf]
  %v142 = vld [vmem:[%s1 + $0xb4] sm:$0xf]
  %v143 = vld [vmem:[%s1 + $0xb8] sm:$0xf]
  %v144 = vld [vmem:[%s1 + $0xbc] sm:$0xf]
  %v145 = vld [vmem:[%s1 + $0xc0] sm:$0xf]
  %v146 = vld [vmem:[%s1 + $0xc4] sm:$0xf]
  %v147 = vld [vmem:[%s1 + $0xc8] sm:$0xf]
  %v148 = vld [vmem:[%s1 + $0xcc] sm:$0xf]
  %v149 = vld [vmem:[%s1 + $0xd0] sm:$0xf]
  %v150 = vld [vmem:[%s1 + $0xd4] sm:$0xf]
  %v151 = vld [vmem:[%s1 + $0xd8] sm:$0xf]
  %v152 = vld [vmem:[%s1 + $0xdc] sm:$0xf]
  %v153 = vld [vmem:[%s1 + $0xe0] sm:$0xf]
  %v154 = vld [vmem:[%s1 + $0xe4] sm:$0xf]
  %v155 = vld [vmem:[%s1 + $0xe8] sm:$0xf]
  %v156 = vld [vmem:[%s1 + $0xec] sm:$0xf]
  %v157 = vld [vmem:[%s1 + $0xf0] sm:$0xf]
  %v158 = vld [vmem:[%s1 + $0xf4] sm:$0xf]
  %v159 = vld [vmem:[%s1 + $0xf8] sm:$0xf]
  %v160 = vld [vmem:[%s1 + $0xfc] sm:$0xf]
  %v161 = vld [vmem:[%s1 + $0x100] sm:$0xf]
  %v162 = vld [vmem:[%s1 + $0x104] sm:$0xf]
  %v163 = vld [vmem:[%s1 + $0x108] sm:$0xf]
  %v164 = vld [vmem:[%s1 + $0x10c] sm:$0xf]
  %v165 = vld [vmem:[%s1 + $0x110] sm:$0xf]
  %v166 = vld [vmem:[%s1 + $0x114] sm:$0xf]
  %v167 = vld [vmem:[%s1 + $0x118] sm:$0xf]
  %v168 = vld [vmem:[%s1 + $0x11c] sm:$0xf]
  %v169 = vld [vmem:[%s1 + $0x120] sm:$0xf]
  %v170 = vld [vmem:[%s1 + $0x124] sm:$0xf]
  %v171 = vld [vmem:[%s1 + $0x128] sm:$0xf]
  %v172 = vld [vmem:[%s1 + $0x12c] sm:$0xf]
  %v173 = vld [vmem:[%s1 + $0x130] sm:$0xf]
  %v174 = vld [vmem:[%s1 + $0x134] sm:$0xf]
  %v175 = vld [vmem:[%s1 + $0x138] sm:$0xf]
  %v176 = vld [vmem:[%s1 + $0x13c] sm:$0xf]
  %v177 = vld [vmem:[%s1 + $0x140] sm:$0xf]
  %v178 = vld [vmem:[%s1 + $0x144] sm:$0xf]
  %v179 = vld [vmem:[%s1 + $0x148] sm:$0xf]
  %v180 = vld [vmem:[%s1 + $0x14c] sm:$0xf]
  %v181 = vld [vmem:[%s1 + $0x150] sm:$0xf]
  %v182 = vld [vmem:[%s1 + $0x154] sm:$0xf]
  %v183 = vld [vmem:[%s1 + $0x158] sm:$0xf]
  %v184 = vld [vmem:[%s1 + $0x15c] sm:$0xf]
  %v185 = vld [vmem:[%s1 + $0x160] sm:$0xf]
  %v186 = vld [vmem:[%s1 + $0x164] sm:$0xf]
  %v187 = vld [vmem:[%s1 + $0x168] sm:$0xf]
  %v188 = vld [vmem:[%s1 + $0x16c] sm:$0xf]
  %v189 = vld [vmem:[%s1 + $0x170] sm:$0xf]
  %v190 = vld [vmem:[%s1 + $0x174] sm:$0xf]
  %v191 = vld [vmem:[%s1 + $0x178] sm:$0xf]
  %v192 = vld [vmem:[%s1 + $0x17c] sm:$0xf]
  %v193 = vld [vmem:[%s1 + $0x180] sm:$0xf]
  %v194 = vld [vmem:[%s1 + $0x184] sm:$0xf]
  %v195 = vld [vmem:[%s1 + $0x188] sm:$0xf]
  %v196 = vld [vmem:[%s1 + $0x18c] sm:$0xf]
  %v197 = vld [vmem:[%s1 + $0x190] sm:$0xf]
  %v198 = vld [vmem:[%s1 + $0x194] sm:$0xf]
  %v199 = vld [vmem:[%s1 + $0x198] sm:$0xf]
  %v200 = vld [vmem:[%s1 + $0x19c] sm:$0xf]
  %v201 = vld [vmem:[%s1 + $0x1a0] sm:$0xf]
  %v202 = vld [vmem:[%s1 + $0x1a4] sm:$0xf]
  %v203 = vld [vmem:[%s1 + $0x1a8] sm:$0xf]
  %v204 = vld [vmem:[%s1 + $0x1ac] sm:$0xf]
  %v205 = vld [vmem:[%s1 + $0x1b0] sm:$0xf]
  %v206 = vld [vmem:[%s1 + $0x1b4] sm:$0xf]
  %v207 = vld [vmem:[%s1 + $0x1b8] sm:$0xf]
  %v208 = vld [vmem:[%s1 + $0x1bc] sm:$0xf]
  %v209 = vld [vmem:[%s1 + $0x1c0] sm:$0xf]
  %v210 = vld [vmem:[%s1 + $0x1c4] sm:$0xf]
  %v211 = vld [vmem:[%s1 + $0x1c8] sm:$0xf]
  %v212 = vld [vmem:[%s1 + $0x1cc] sm:$0xf]
  %v213 = vld [vmem:[%s1 + $0x1d0] sm:$0xf]
  %v214 = vld [vmem:[%s1 + $0x1d4] sm:$0xf]
  %v215 = vld [vmem:[%s1 + $0x1d8] sm:$0xf]
  %v216 = vld [vmem:[%s1 + $0x1dc] sm:$0xf]
  %v217 = vld [vmem:[%s1 + $0x1e0] sm:$0xf]
  %v218 = vld [vmem:[%s1 + $0x1e4] sm:$0xf]
  %v219 = vld [vmem:[%s1 + $0x1e8] sm:$0xf]
  %v220 = vld [vmem:[%s1 + $0x1ec] sm:$0xf]
  %v221 = vld [vmem:[%s1 + $0x1f0] sm:$0xf]
  %v222 = vld [vmem:[%s1 + $0x1f4] sm:$0xf]
  %v223 = vld [vmem:[%s1 + $0x1f8] sm:$0xf]
  %v224 = vld [vmem:[%s1 + $0x1fc] sm:$0xf]
  %v225 = vld [vmem:[%s1 + $0x200] sm:$0xf]
  %v226 = vld [vmem:[%s1 + $0x204] sm:$0xf]
  %v227 = vld [vmem:[%s1 + $0x208] sm:$0xf]
  %v228 = vld [vmem:[%s1 + $0x20c] sm:$0xf]
  %v229 = vld [vmem:[%s1 + $0x210] sm:$0xf]
  %v230 = vld [vmem:[%s1 + $0x214] sm:$0xf]
  %v231 = vld [vmem:[%s1 + $0x218] sm:$0xf]
  %v232 = vld [vmem:[%s1 + $0x21c] sm:$0xf]
  %v233 = vld [vmem:[%s1 + $0x220] sm:$0xf]
  %v234 = vld [vmem:[%s1 + $0x224] sm:$0xf]
  %v235 = vld [vmem:[%s1 + $0x228] sm:$0xf]
  %v236 = vld [vmem:[%s1 + $0x22c] sm:$0xf]
  %v237 = vld [vmem:[%s1 + $0x230] sm:$0xf]
  %v238 = vld [vmem:[%s1 + $0x234] sm:$0xf]
  %v239 = vld [vmem:[%s1 + $0x238] sm:$0xf]
  %v240 = vld [vmem:[%s1 + $0x23c] sm:$0xf]
  %v241 = vld [vmem:[%s2] sm:$0x1]
  %v243 = vperm.slane %v241, 0
  %v325 = vunpack.c.l.b16 %v17
  %v326 = vunpack.c.h.b16 %v17
  %v327 = vunpack.c.l.b16 %v18
  %v328 = vunpack.c.h.b16 %v18
  %v329 = vunpack.c.l.b16 %v19
  %v330 = vunpack.c.h.b16 %v19
  %v331 = vunpack.c.l.b16 %v20
  %v332 = vunpack.c.h.b16 %v20
  %v333 = vunpack.c.l.b16 %v21
  %v334 = vunpack.c.l.b16 %v22
  %v335 = vunpack.c.h.b16 %v22
  %v336 = vunpack.c.l.b16 %v23
  %v337 = vunpack.c.h.b16 %v23
  %v338 = vunpack.c.l.b16 %v24
  %v339 = vunpack.c.h.b16 %v24
  %v340 = vunpack.c.l.b16 %v25
  %v341 = vunpack.c.h.b16 %v25
  %v342 = vunpack.c.l.b16 %v26
  %v343 = vunpack.c.l.b16 %v27
  %v344 = vunpack.c.h.b16 %v27
  %v345 = vunpack.c.l.b16 %v28
  %v346 = vunpack.c.h.b16 %v28
  %v347 = vunpack.c.l.b16 %v29
  %v348 = vunpack.c.h.b16 %v29
  %v349 = vunpack.c.l.b16 %v30
  %v350 = vunpack.c.h.b16 %v30
  %v351 = vunpack.c.l.b16 %v31
  %v352 = vunpack.c.l.b16 %v32
  %v353 = vunpack.c.h.b16 %v32
  %v354 = vunpack.c.l.b16 %v33
  %v355 = vunpack.c.h.b16 %v33
  %v356 = vunpack.c.l.b16 %v34
  %v357 = vunpack.c.h.b16 %v34
  %v358 = vunpack.c.l.b16 %v35
  %v359 = vunpack.c.h.b16 %v35
  %v360 = vunpack.c.l.b16 %v36
  %v361 = vunpack.c.l.b16 %v37
  %v362 = vunpack.c.h.b16 %v37
  %v363 = vunpack.c.l.b16 %v38
  %v364 = vunpack.c.h.b16 %v38
  %v365 = vunpack.c.l.b16 %v39
  %v366 = vunpack.c.h.b16 %v39
  %v367 = vunpack.c.l.b16 %v40
  %v368 = vunpack.c.h.b16 %v40
  %v369 = vunpack.c.l.b16 %v41
  %v370 = vunpack.c.l.b16 %v42
  %v371 = vunpack.c.h.b16 %v42
  %v372 = vunpack.c.l.b16 %v43
  %v373 = vunpack.c.h.b16 %v43
  %v374 = vunpack.c.l.b16 %v44
  %v375 = vunpack.c.h.b16 %v44
  %v376 = vunpack.c.l.b16 %v45
  %v377 = vunpack.c.h.b16 %v45
  %v378 = vunpack.c.l.b16 %v46
  %v379 = vunpack.c.l.b16 %v47
  %v380 = vunpack.c.h.b16 %v47
  %v381 = vunpack.c.l.b16 %v48
  %v382 = vunpack.c.h.b16 %v48
  %v383 = vunpack.c.l.b16 %v49
  %v384 = vunpack.c.h.b16 %v49
  %v385 = vunpack.c.l.b16 %v50
  %v386 = vunpack.c.h.b16 %v50
  %v387 = vunpack.c.l.b16 %v51
  %v388 = vunpack.c.l.b16 %v52
  %v389 = vunpack.c.h.b16 %v52
  %v390 = vunpack.c.l.b16 %v53
  %v391 = vunpack.c.h.b16 %v53
  %v392 = vunpack.c.l.b16 %v54
  %v393 = vunpack.c.h.b16 %v54
  %v394 = vunpack.c.l.b16 %v55
  %v395 = vunpack.c.h.b16 %v55
  %v396 = vunpack.c.l.b16 %v56
  %v397 = vunpack.c.l.b16 %v57
  %v398 = vunpack.c.h.b16 %v57
  %v399 = vunpack.c.l.b16 %v58
  %v400 = vunpack.c.h.b16 %v58
  %v401 = vunpack.c.l.b16 %v59
  %v402 = vunpack.c.h.b16 %v59
  %v403 = vunpack.c.l.b16 %v60
  %v404 = vunpack.c.h.b16 %v60
  %v405 = vunpack.c.l.b16 %v61
  %v406 = vunpack.c.l.b16 %v62
  %v407 = vunpack.c.h.b16 %v62
  %v408 = vunpack.c.l.b16 %v63
  %v409 = vunpack.c.h.b16 %v63
  %v410 = vunpack.c.l.b16 %v64
  %v411 = vunpack.c.h.b16 %v64
  %v412 = vunpack.c.l.b16 %v65
  %v413 = vunpack.c.h.b16 %v65
  %v414 = vunpack.c.l.b16 %v66
  %v415 = vunpack.c.l.b16 %v67
  %v416 = vunpack.c.h.b16 %v67
  %v417 = vunpack.c.l.b16 %v68
  %v418 = vunpack.c.h.b16 %v68
  %v419 = vunpack.c.l.b16 %v69
  %v420 = vunpack.c.h.b16 %v69
  %v421 = vunpack.c.l.b16 %v70
  %v422 = vunpack.c.h.b16 %v70
  %v423 = vunpack.c.l.b16 %v71
  %v424 = vunpack.c.l.b16 %v72
  %v425 = vunpack.c.h.b16 %v72
  %v426 = vunpack.c.l.b16 %v73
  %v427 = vunpack.c.h.b16 %v73
  %v428 = vunpack.c.l.b16 %v74
  %v429 = vunpack.c.h.b16 %v74
  %v430 = vunpack.c.l.b16 %v75
  %v431 = vunpack.c.h.b16 %v75
  %v432 = vunpack.c.l.b16 %v76
  %v433 = vunpack.c.l.b16 %v77
  %v434 = vunpack.c.h.b16 %v77
  %v435 = vunpack.c.l.b16 %v78
  %v436 = vunpack.c.h.b16 %v78
  %v437 = vunpack.c.l.b16 %v79
  %v438 = vunpack.c.h.b16 %v79
  %v439 = vunpack.c.l.b16 %v80
  %v440 = vunpack.c.h.b16 %v80
  %v441 = vunpack.c.l.b16 %v81
  %v442 = vunpack.c.l.b16 %v82
  %v443 = vunpack.c.h.b16 %v82
  %v444 = vunpack.c.l.b16 %v83
  %v445 = vunpack.c.h.b16 %v83
  %v446 = vunpack.c.l.b16 %v84
  %v447 = vunpack.c.h.b16 %v84
  %v448 = vunpack.c.l.b16 %v85
  %v449 = vunpack.c.h.b16 %v85
  %v450 = vunpack.c.l.b16 %v86
  %v451 = vunpack.c.l.b16 %v87
  %v452 = vunpack.c.h.b16 %v87
  %v453 = vunpack.c.l.b16 %v88
  %v454 = vunpack.c.h.b16 %v88
  %v455 = vunpack.c.l.b16 %v89
  %v456 = vunpack.c.h.b16 %v89
  %v457 = vunpack.c.l.b16 %v90
  %v458 = vunpack.c.h.b16 %v90
  %v459 = vunpack.c.l.b16 %v91
  %v460 = vunpack.c.l.b16 %v92
  %v461 = vunpack.c.h.b16 %v92
  %v462 = vunpack.c.l.b16 %v93
  %v463 = vunpack.c.h.b16 %v93
  %v464 = vunpack.c.l.b16 %v94
  %v465 = vunpack.c.h.b16 %v94
  %v466 = vunpack.c.l.b16 %v95
  %v467 = vunpack.c.h.b16 %v95
  %v468 = vunpack.c.l.b16 %v96
  %v469 = vpack.c.b16 %v334, %v325
  %v470 = vpack.c.b16 %v335, %v326
  %v471 = vpack.c.b16 %v336, %v327
  %v472 = vpack.c.b16 %v337, %v328
  %v473 = vpack.c.b16 %v338, %v329
  %v474 = vpack.c.b16 %v339, %v330
  %v475 = vpack.c.b16 %v340, %v331
  %v476 = vpack.c.b16 %v341, %v332
  %v477 = vpack.c.b16 %v342, %v333
  %v478 = vpack.c.b16 %v352, %v343
  %v479 = vpack.c.b16 %v353, %v344
  %v480 = vpack.c.b16 %v354, %v345
  %v481 = vpack.c.b16 %v355, %v346
  %v482 = vpack.c.b16 %v356, %v347
  %v483 = vpack.c.b16 %v357, %v348
  %v484 = vpack.c.b16 %v358, %v349
  %v485 = vpack.c.b16 %v359, %v350
  %v486 = vpack.c.b16 %v360, %v351
  %v487 = vpack.c.b16 %v370, %v361
  %v488 = vpack.c.b16 %v371, %v362
  %v489 = vpack.c.b16 %v372, %v363
  %v490 = vpack.c.b16 %v373, %v364
  %v491 = vpack.c.b16 %v374, %v365
  %v492 = vpack.c.b16 %v375, %v366
  %v493 = vpack.c.b16 %v376, %v367
  %v494 = vpack.c.b16 %v377, %v368
  %v495 = vpack.c.b16 %v378, %v369
  %v496 = vpack.c.b16 %v388, %v379
  %v497 = vpack.c.b16 %v389, %v380
  %v498 = vpack.c.b16 %v390, %v381
  %v499 = vpack.c.b16 %v391, %v382
  %v500 = vpack.c.b16 %v392, %v383
  %v501 = vpack.c.b16 %v393, %v384
  %v502 = vpack.c.b16 %v394, %v385
  %v503 = vpack.c.b16 %v395, %v386
  %v504 = vpack.c.b16 %v396, %v387
  %v505 = vpack.c.b16 %v406, %v397
  %v506 = vpack.c.b16 %v407, %v398
  %v507 = vpack.c.b16 %v408, %v399
  %v508 = vpack.c.b16 %v409, %v400
  %v509 = vpack.c.b16 %v410, %v401
  %v510 = vpack.c.b16 %v411, %v402
  %v511 = vpack.c.b16 %v412, %v403
  %v512 = vpack.c.b16 %v413, %v404
  %v513 = vpack.c.b16 %v414, %v405
  %v514 = vpack.c.b16 %v424, %v415
  %v515 = vpack.c.b16 %v425, %v416
  %v516 = vpack.c.b16 %v426, %v417
  %v517 = vpack.c.b16 %v427, %v418
  %v518 = vpack.c.b16 %v428, %v419
  %v519 = vpack.c.b16 %v429, %v420
  %v520 = vpack.c.b16 %v430, %v421
  %v521 = vpack.c.b16 %v431, %v422
  %v522 = vpack.c.b16 %v432, %v423
  %v523 = vpack.c.b16 %v442, %v433
  %v524 = vpack.c.b16 %v443, %v434
  %v525 = vpack.c.b16 %v444, %v435
  %v526 = vpack.c.b16 %v445, %v436
  %v527 = vpack.c.b16 %v446, %v437
  %v528 = vpack.c.b16 %v447, %v438
  %v529 = vpack.c.b16 %v448, %v439
  %v530 = vpack.c.b16 %v449, %v440
  %v531 = vpack.c.b16 %v450, %v441
  %v532 = vpack.c.b16 %v460, %v451
  %v533 = vpack.c.b16 %v461, %v452
  %v534 = vpack.c.b16 %v462, %v453
  %v535 = vpack.c.b16 %v463, %v454
  %v536 = vpack.c.b16 %v464, %v455
  %v537 = vpack.c.b16 %v465, %v456
  %v538 = vpack.c.b16 %v466, %v457
  %v539 = vpack.c.b16 %v467, %v458
  %v540 = vpack.c.b16 %v468, %v459
  %v757 = vunpack.c.l.b16 %v97
  %v758 = vunpack.c.l.b16 %v98
  %v759 = vunpack.c.l.b16 %v99
  %v760 = vunpack.c.l.b16 %v100
  %v761 = vunpack.c.l.b16 %v101
  %v762 = vunpack.c.l.b16 %v102
  %v763 = vunpack.c.l.b16 %v103
  %v764 = vunpack.c.l.b16 %v104
  %v765 = vunpack.c.l.b16 %v105
  %v766 = vunpack.c.l.b16 %v106
  %v767 = vunpack.c.l.b16 %v107
  %v768 = vunpack.c.l.b16 %v108
  %v769 = vunpack.c.l.b16 %v109
  %v770 = vunpack.c.l.b16 %v110
  %v771 = vunpack.c.l.b16 %v111
  %v772 = vunpack.c.l.b16 %v112
  %v773 = vunpack.c.l.b16 %v113
  %v774 = vunpack.c.l.b16 %v114
  %v775 = vunpack.c.l.b16 %v115
  %v776 = vunpack.c.l.b16 %v116
  %v777 = vunpack.c.l.b16 %v117
  %v778 = vunpack.c.l.b16 %v118
  %v779 = vunpack.c.l.b16 %v119
  %v780 = vunpack.c.l.b16 %v120
  %v781 = vunpack.c.l.b16 %v121
  %v782 = vunpack.c.l.b16 %v122
  %v783 = vunpack.c.l.b16 %v123
  %v784 = vunpack.c.l.b16 %v124
  %v785 = vunpack.c.l.b16 %v125
  %v786 = vunpack.c.l.b16 %v126
  %v787 = vunpack.c.l.b16 %v127
  %v788 = vunpack.c.l.b16 %v128
  %v789 = vunpack.c.l.b16 %v129
  %v790 = vunpack.c.l.b16 %v130
  %v791 = vunpack.c.l.b16 %v131
  %v792 = vunpack.c.l.b16 %v132
  %v793 = vunpack.c.l.b16 %v133
  %v794 = vunpack.c.l.b16 %v134
  %v795 = vunpack.c.l.b16 %v135
  %v796 = vunpack.c.l.b16 %v136
  %v797 = vunpack.c.l.b16 %v137
  %v798 = vunpack.c.l.b16 %v138
  %v799 = vunpack.c.l.b16 %v139
  %v800 = vunpack.c.l.b16 %v140
  %v801 = vunpack.c.l.b16 %v141
  %v802 = vunpack.c.l.b16 %v142
  %v803 = vunpack.c.l.b16 %v143
  %v804 = vunpack.c.l.b16 %v144
  %v805 = vunpack.c.l.b16 %v145
  %v806 = vunpack.c.l.b16 %v146
  %v807 = vunpack.c.l.b16 %v147
  %v808 = vunpack.c.l.b16 %v148
  %v809 = vunpack.c.l.b16 %v149
  %v810 = vunpack.c.l.b16 %v150
  %v811 = vunpack.c.l.b16 %v151
  %v812 = vunpack.c.l.b16 %v152
  %v813 = vunpack.c.l.b16 %v153
  %v814 = vunpack.c.l.b16 %v154
  %v815 = vunpack.c.l.b16 %v155
  %v816 = vunpack.c.l.b16 %v156
  %v817 = vunpack.c.l.b16 %v157
  %v818 = vunpack.c.l.b16 %v158
  %v819 = vunpack.c.l.b16 %v159
  %v820 = vunpack.c.l.b16 %v160
  %v821 = vunpack.c.l.b16 %v161
  %v822 = vunpack.c.l.b16 %v162
  %v823 = vunpack.c.l.b16 %v163
  %v824 = vunpack.c.l.b16 %v164
  %v825 = vunpack.c.l.b16 %v165
  %v826 = vunpack.c.l.b16 %v166
  %v827 = vunpack.c.l.b16 %v167
  %v828 = vunpack.c.l.b16 %v168
  %v829 = vunpack.c.l.b16 %v169
  %v830 = vunpack.c.l.b16 %v170
  %v831 = vunpack.c.l.b16 %v171
  %v832 = vunpack.c.l.b16 %v172
  %v833 = vunpack.c.l.b16 %v173
  %v834 = vunpack.c.l.b16 %v174
  %v835 = vunpack.c.l.b16 %v175
  %v836 = vunpack.c.l.b16 %v176
  %v837 = vunpack.c.l.b16 %v177
  %v838 = vunpack.c.l.b16 %v178
  %v839 = vunpack.c.l.b16 %v179
  %v840 = vunpack.c.l.b16 %v180
  %v841 = vunpack.c.l.b16 %v181
  %v842 = vunpack.c.l.b16 %v182
  %v843 = vunpack.c.l.b16 %v183
  %v844 = vunpack.c.l.b16 %v184
  %v845 = vunpack.c.l.b16 %v185
  %v846 = vunpack.c.l.b16 %v186
  %v847 = vunpack.c.l.b16 %v187
  %v848 = vunpack.c.l.b16 %v188
  %v849 = vunpack.c.l.b16 %v189
  %v850 = vunpack.c.l.b16 %v190
  %v851 = vunpack.c.l.b16 %v191
  %v852 = vunpack.c.l.b16 %v192
  %v853 = vunpack.c.l.b16 %v193
  %v854 = vunpack.c.l.b16 %v194
  %v855 = vunpack.c.l.b16 %v195
  %v856 = vunpack.c.l.b16 %v196
  %v857 = vunpack.c.l.b16 %v197
  %v858 = vunpack.c.l.b16 %v198
  %v859 = vunpack.c.l.b16 %v199
  %v860 = vunpack.c.l.b16 %v200
  %v861 = vunpack.c.l.b16 %v201
  %v862 = vunpack.c.l.b16 %v202
  %v863 = vunpack.c.l.b16 %v203
  %v864 = vunpack.c.l.b16 %v204
  %v865 = vunpack.c.l.b16 %v205
  %v866 = vunpack.c.l.b16 %v206
  %v867 = vunpack.c.l.b16 %v207
  %v868 = vunpack.c.l.b16 %v208
  %v869 = vunpack.c.l.b16 %v209
  %v870 = vunpack.c.l.b16 %v210
  %v871 = vunpack.c.l.b16 %v211
  %v872 = vunpack.c.l.b16 %v212
  %v873 = vunpack.c.l.b16 %v213
  %v874 = vunpack.c.l.b16 %v214
  %v875 = vunpack.c.l.b16 %v215
  %v876 = vunpack.c.l.b16 %v216
  %v877 = vunpack.c.l.b16 %v217
  %v878 = vunpack.c.l.b16 %v218
  %v879 = vunpack.c.l.b16 %v219
  %v880 = vunpack.c.l.b16 %v220
  %v881 = vunpack.c.l.b16 %v221
  %v882 = vunpack.c.l.b16 %v222
  %v883 = vunpack.c.l.b16 %v223
  %v884 = vunpack.c.l.b16 %v224
  %v885 = vunpack.c.l.b16 %v225
  %v886 = vunpack.c.l.b16 %v226
  %v887 = vunpack.c.l.b16 %v227
  %v888 = vunpack.c.l.b16 %v228
  %v889 = vunpack.c.l.b16 %v229
  %v890 = vunpack.c.l.b16 %v230
  %v891 = vunpack.c.l.b16 %v231
  %v892 = vunpack.c.l.b16 %v232
  %v893 = vunpack.c.l.b16 %v233
  %v894 = vunpack.c.l.b16 %v234
  %v895 = vunpack.c.l.b16 %v235
  %v896 = vunpack.c.l.b16 %v236
  %v897 = vunpack.c.l.b16 %v237
  %v898 = vunpack.c.l.b16 %v238
  %v899 = vunpack.c.l.b16 %v239
  %v900 = vunpack.c.l.b16 %v240
  %v901 = vpack.c.b16 %v758, %v757
  %v902 = vpack.c.b16 %v760, %v759
  %v903 = vpack.c.b16 %v762, %v761
  %v904 = vpack.c.b16 %v764, %v763
  %v905 = vpack.c.b16 %v766, %v765
  %v906 = vpack.c.b16 %v768, %v767
  %v907 = vpack.c.b16 %v770, %v769
  %v908 = vpack.c.b16 %v772, %v771
  %v909 = vpack.c.b16 %v774, %v773
  %v910 = vpack.c.b16 %v776, %v775
  %v911 = vpack.c.b16 %v778, %v777
  %v912 = vpack.c.b16 %v780, %v779
  %v913 = vpack.c.b16 %v782, %v781
  %v914 = vpack.c.b16 %v784, %v783
  %v915 = vpack.c.b16 %v786, %v785
  %v916 = vpack.c.b16 %v788, %v787
  %v917 = vpack.c.b16 %v790, %v789
  %v918 = vpack.c.b16 %v792, %v791
  %v919 = vpack.c.b16 %v794, %v793
  %v920 = vpack.c.b16 %v796, %v795
  %v921 = vpack.c.b16 %v798, %v797
  %v922 = vpack.c.b16 %v800, %v799
  %v923 = vpack.c.b16 %v802, %v801
  %v924 = vpack.c.b16 %v804, %v803
  %v925 = vpack.c.b16 %v806, %v805
  %v926 = vpack.c.b16 %v808, %v807
  %v927 = vpack.c.b16 %v810, %v809
  %v928 = vpack.c.b16 %v812, %v811
  %v929 = vpack.c.b16 %v814, %v813
  %v930 = vpack.c.b16 %v816, %v815
  %v931 = vpack.c.b16 %v818, %v817
  %v932 = vpack.c.b16 %v820, %v819
  %v933 = vpack.c.b16 %v822, %v821
  %v934 = vpack.c.b16 %v824, %v823
  %v935 = vpack.c.b16 %v826, %v825
  %v936 = vpack.c.b16 %v828, %v827
  %v937 = vpack.c.b16 %v830, %v829
  %v938 = vpack.c.b16 %v832, %v831
  %v939 = vpack.c.b16 %v834, %v833
  %v940 = vpack.c.b16 %v836, %v835
  %v941 = vpack.c.b16 %v838, %v837
  %v942 = vpack.c.b16 %v840, %v839
  %v943 = vpack.c.b16 %v842, %v841
  %v944 = vpack.c.b16 %v844, %v843
  %v945 = vpack.c.b16 %v846, %v845
  %v946 = vpack.c.b16 %v848, %v847
  %v947 = vpack.c.b16 %v850, %v849
  %v948 = vpack.c.b16 %v852, %v851
  %v949 = vpack.c.b16 %v854, %v853
  %v950 = vpack.c.b16 %v856, %v855
  %v951 = vpack.c.b16 %v858, %v857
  %v952 = vpack.c.b16 %v860, %v859
  %v953 = vpack.c.b16 %v862, %v861
  %v954 = vpack.c.b16 %v864, %v863
  %v955 = vpack.c.b16 %v866, %v865
  %v956 = vpack.c.b16 %v868, %v867
  %v957 = vpack.c.b16 %v870, %v869
  %v958 = vpack.c.b16 %v872, %v871
  %v959 = vpack.c.b16 %v874, %v873
  %v960 = vpack.c.b16 %v876, %v875
  %v961 = vpack.c.b16 %v878, %v877
  %v962 = vpack.c.b16 %v880, %v879
  %v963 = vpack.c.b16 %v882, %v881
  %v964 = vpack.c.b16 %v884, %v883
  %v965 = vpack.c.b16 %v886, %v885
  %v966 = vpack.c.b16 %v888, %v887
  %v967 = vpack.c.b16 %v890, %v889
  %v968 = vpack.c.b16 %v892, %v891
  %v969 = vpack.c.b16 %v894, %v893
  %v970 = vpack.c.b16 %v896, %v895
  %v971 = vpack.c.b16 %v898, %v897
  %v972 = vpack.c.b16 %v900, %v899
  %1045 = vmatpush.bf16.msra.mxu0 %v908
  %1046 = vmatpush.bf16.msra.mxu0 %v907
  %1047 = vmatpush.bf16.msra.mxu0 %v906
  %1048 = vmatpush.bf16.msra.mxu0 %v905
  %1049 = vmatpush.bf16.msra.mxu0 %v904
  %1050 = vmatpush.bf16.msra.mxu0 %v903
  %1051 = vmatpush.bf16.msra.mxu0 %v902
  %1052 = vmatpush.bf16.msra.mxu0 %v901
  %1053 = vmatmul.bf16.gmra.mxu0 %v469
  %v1054 = vpop.f32.mrf.mxu0
  %v1055 = vadd.f32 %v243, %v1054
  %v1056 = vpop.f32.mrf.mxu0
  %v1057 = vadd.f32 %v243, %v1056
  %1058 = vmatmul.bf16.gmra.mxu0 %v478
  %v1059 = vpop.f32.mrf.mxu0
  %v1060 = vadd.f32 %v243, %v1059
  %v1061 = vpop.f32.mrf.mxu0
  %v1062 = vadd.f32 %v243, %v1061
  %1063 = vmatmul.bf16.gmra.mxu0 %v487
  %v1064 = vpop.f32.mrf.mxu0
  %v1065 = vadd.f32 %v243, %v1064
  %v1066 = vpop.f32.mrf.mxu0
  %v1067 = vadd.f32 %v243, %v1066
  %1068 = vmatmul.bf16.gmra.mxu0 %v496
  %v1069 = vpop.f32.mrf.mxu0
  %v1070 = vadd.f32 %v243, %v1069
  %v1071 = vpop.f32.mrf.mxu0
  %v1072 = vadd.f32 %v243, %v1071
  %1073 = vmatmul.bf16.gmra.mxu0 %v505
  %v1074 = vpop.f32.mrf.mxu0
  %v1075 = vadd.f32 %v243, %v1074
  %v1076 = vpop.f32.mrf.mxu0
  %v1077 = vadd.f32 %v243, %v1076
  %1078 = vmatmul.bf16.gmra.mxu0 %v514
  %v1079 = vpop.f32.mrf.mxu0
  %v1080 = vadd.f32 %v243, %v1079
  %v1081 = vpop.f32.mrf.mxu0
  %v1082 = vadd.f32 %v243, %v1081
  %1083 = vmatmul.bf16.gmra.mxu0 %v523
  %v1084 = vpop.f32.mrf.mxu0
  %v1085 = vadd.f32 %v243, %v1084
  %v1086 = vpop.f32.mrf.mxu0
  %v1087 = vadd.f32 %v243, %v1086
  %1088 = vmatmul.bf16.gmra.mxu0 %v532
  %v1089 = vpop.f32.mrf.mxu0
  %v1090 = vadd.f32 %v243, %v1089
  %v1091 = vpop.f32.mrf.mxu0
  %v1092 = vadd.f32 %v243, %v1091
  %1093 = vdwg.mxu0
  %1094 = vmatpush.bf16.msra.mxu0 %v916
  %1095 = vmatpush.bf16.msra.mxu0 %v915
  %1096 = vmatpush.bf16.msra.mxu0 %v914
  %1097 = vmatpush.bf16.msra.mxu0 %v913
  %1098 = vmatpush.bf16.msra.mxu0 %v912
  %1099 = vmatpush.bf16.msra.mxu0 %v911
  %1100 = vmatpush.bf16.msra.mxu0 %v910
  %1101 = vmatpush.bf16.msra.mxu0 %v909
  %1102 = vmatmul.bf16.gmra.mxu0 %v470
  %v1103 = vpop.f32.mrf.mxu0
  %v1104 = vadd.f32 %v1055, %v1103
  %v1105 = vpop.f32.mrf.mxu0
  %v1106 = vadd.f32 %v1057, %v1105
  %1107 = vmatmul.bf16.gmra.mxu0 %v479
  %v1108 = vpop.f32.mrf.mxu0
  %v1109 = vadd.f32 %v1060, %v1108
  %v1110 = vpop.f32.mrf.mxu0
  %v1111 = vadd.f32 %v1062, %v1110
  %1112 = vmatmul.bf16.gmra.mxu0 %v488
  %v1113 = vpop.f32.mrf.mxu0
  %v1114 = vadd.f32 %v1065, %v1113
  %v1115 = vpop.f32.mrf.mxu0
  %v1116 = vadd.f32 %v1067, %v1115
  %1117 = vmatmul.bf16.gmra.mxu0 %v497
  %v1118 = vpop.f32.mrf.mxu0
  %v1119 = vadd.f32 %v1070, %v1118
  %v1120 = vpop.f32.mrf.mxu0
  %v1121 = vadd.f32 %v1072, %v1120
  %1122 = vmatmul.bf16.gmra.mxu0 %v506
  %v1123 = vpop.f32.mrf.mxu0
  %v1124 = vadd.f32 %v1075, %v1123
  %v1125 = vpop.f32.mrf.mxu0
  %v1126 = vadd.f32 %v1077, %v1125
  %1127 = vmatmul.bf16.gmra.mxu0 %v515
  %v1128 = vpop.f32.mrf.mxu0
  %v1129 = vadd.f32 %v1080, %v1128
  %v1130 = vpop.f32.mrf.mxu0
  %v1131 = vadd.f32 %v1082, %v1130
  %1132 = vmatmul.bf16.gmra.mxu0 %v524
  %v1133 = vpop.f32.mrf.mxu0
  %v1134 = vadd.f32 %v1085, %v1133
  %v1135 = vpop.f32.mrf.mxu0
  %v1136 = vadd.f32 %v1087, %v1135
  %1137 = vmatmul.bf16.gmra.mxu0 %v533
  %v1138 = vpop.f32.mrf.mxu0
  %v1139 = vadd.f32 %v1090, %v1138
  %v1140 = vpop.f32.mrf.mxu0
  %v1141 = vadd.f32 %v1092, %v1140
  %1142 = vdwg.mxu0
  %1143 = vmatpush.bf16.msra.mxu0 %v924
  %1144 = vmatpush.bf16.msra.mxu0 %v923
  %1145 = vmatpush.bf16.msra.mxu0 %v922
  %1146 = vmatpush.bf16.msra.mxu0 %v921
  %1147 = vmatpush.bf16.msra.mxu0 %v920
  %1148 = vmatpush.bf16.msra.mxu0 %v919
  %1149 = vmatpush.bf16.msra.mxu0 %v918
  %1150 = vmatpush.bf16.msra.mxu0 %v917
  %1151 = vmatmul.bf16.gmra.mxu0 %v471
  %v1152 = vpop.f32.mrf.mxu0
  %v1153 = vadd.f32 %v1104, %v1152
  %v1154 = vpop.f32.mrf.mxu0
  %v1155 = vadd.f32 %v1106, %v1154
  %1156 = vmatmul.bf16.gmra.mxu0 %v480
  %v1157 = vpop.f32.mrf.mxu0
  %v1158 = vadd.f32 %v1109, %v1157
  %v1159 = vpop.f32.mrf.mxu0
  %v1160 = vadd.f32 %v1111, %v1159
  %1161 = vmatmul.bf16.gmra.mxu0 %v489
  %v1162 = vpop.f32.mrf.mxu0
  %v1163 = vadd.f32 %v1114, %v1162
  %v1164 = vpop.f32.mrf.mxu0
  %v1165 = vadd.f32 %v1116, %v1164
  %1166 = vmatmul.bf16.gmra.mxu0 %v498
  %v1167 = vpop.f32.mrf.mxu0
  %v1168 = vadd.f32 %v1119, %v1167
  %v1169 = vpop.f32.mrf.mxu0
  %v1170 = vadd.f32 %v1121, %v1169
  %1171 = vmatmul.bf16.gmra.mxu0 %v507
  %v1172 = vpop.f32.mrf.mxu0
  %v1173 = vadd.f32 %v1124, %v1172
  %v1174 = vpop.f32.mrf.mxu0
  %v1175 = vadd.f32 %v1126, %v1174
  %1176 = vmatmul.bf16.gmra.mxu0 %v516
  %v1177 = vpop.f32.mrf.mxu0
  %v1178 = vadd.f32 %v1129, %v1177
  %v1179 = vpop.f32.mrf.mxu0
  %v1180 = vadd.f32 %v1131, %v1179
  %1181 = vmatmul.bf16.gmra.mxu0 %v525
  %v1182 = vpop.f32.mrf.mxu0
  %v1183 = vadd.f32 %v1134, %v1182
  %v1184 = vpop.f32.mrf.mxu0
  %v1185 = vadd.f32 %v1136, %v1184
  %1186 = vmatmul.bf16.gmra.mxu0 %v534
  %v1187 = vpop.f32.mrf.mxu0
  %v1188 = vadd.f32 %v1139, %v1187
  %v1189 = vpop.f32.mrf.mxu0
  %v1190 = vadd.f32 %v1141, %v1189
  %1191 = vdwg.mxu0
  %1192 = vmatpush.bf16.msra.mxu0 %v932
  %1193 = vmatpush.bf16.msra.mxu0 %v931
  %1194 = vmatpush.bf16.msra.mxu0 %v930
  %1195 = vmatpush.bf16.msra.mxu0 %v929
  %1196 = vmatpush.bf16.msra.mxu0 %v928
  %1197 = vmatpush.bf16.msra.mxu0 %v927
  %1198 = vmatpush.bf16.msra.mxu0 %v926
  %1199 = vmatpush.bf16.msra.mxu0 %v925
  %1200 = vmatmul.bf16.gmra.mxu0 %v472
  %v1201 = vpop.f32.mrf.mxu0
  %v1202 = vadd.f32 %v1153, %v1201
  %v1203 = vpop.f32.mrf.mxu0
  %v1204 = vadd.f32 %v1155, %v1203
  %1205 = vmatmul.bf16.gmra.mxu0 %v481
  %v1206 = vpop.f32.mrf.mxu0
  %v1207 = vadd.f32 %v1158, %v1206
  %v1208 = vpop.f32.mrf.mxu0
  %v1209 = vadd.f32 %v1160, %v1208
  %1210 = vmatmul.bf16.gmra.mxu0 %v490
  %v1211 = vpop.f32.mrf.mxu0
  %v1212 = vadd.f32 %v1163, %v1211
  %v1213 = vpop.f32.mrf.mxu0
  %v1214 = vadd.f32 %v1165, %v1213
  %1215 = vmatmul.bf16.gmra.mxu0 %v499
  %v1216 = vpop.f32.mrf.mxu0
  %v1217 = vadd.f32 %v1168, %v1216
  %v1218 = vpop.f32.mrf.mxu0
  %v1219 = vadd.f32 %v1170, %v1218
  %1220 = vmatmul.bf16.gmra.mxu0 %v508
  %v1221 = vpop.f32.mrf.mxu0
  %v1222 = vadd.f32 %v1173, %v1221
  %v1223 = vpop.f32.mrf.mxu0
  %v1224 = vadd.f32 %v1175, %v1223
  %1225 = vmatmul.bf16.gmra.mxu0 %v517
  %v1226 = vpop.f32.mrf.mxu0
  %v1227 = vadd.f32 %v1178, %v1226
  %v1228 = vpop.f32.mrf.mxu0
  %v1229 = vadd.f32 %v1180, %v1228
  %1230 = vmatmul.bf16.gmra.mxu0 %v526
  %v1231 = vpop.f32.mrf.mxu0
  %v1232 = vadd.f32 %v1183, %v1231
  %v1233 = vpop.f32.mrf.mxu0
  %v1234 = vadd.f32 %v1185, %v1233
  %1235 = vmatmul.bf16.gmra.mxu0 %v535
  %v1236 = vpop.f32.mrf.mxu0
  %v1237 = vadd.f32 %v1188, %v1236
  %v1238 = vpop.f32.mrf.mxu0
  %v1239 = vadd.f32 %v1190, %v1238
  %1240 = vdwg.mxu0
  %1241 = vmatpush.bf16.msra.mxu0 %v940
  %1242 = vmatpush.bf16.msra.mxu0 %v939
  %1243 = vmatpush.bf16.msra.mxu0 %v938
  %1244 = vmatpush.bf16.msra.mxu0 %v937
  %1245 = vmatpush.bf16.msra.mxu0 %v936
  %1246 = vmatpush.bf16.msra.mxu0 %v935
  %1247 = vmatpush.bf16.msra.mxu0 %v934
  %1248 = vmatpush.bf16.msra.mxu0 %v933
  %1249 = vmatmul.bf16.gmra.mxu0 %v473
  %v1250 = vpop.f32.mrf.mxu0
  %v1251 = vadd.f32 %v1202, %v1250
  %v1252 = vpop.f32.mrf.mxu0
  %v1253 = vadd.f32 %v1204, %v1252
  %1254 = vmatmul.bf16.gmra.mxu0 %v482
  %v1255 = vpop.f32.mrf.mxu0
  %v1256 = vadd.f32 %v1207, %v1255
  %v1257 = vpop.f32.mrf.mxu0
  %v1258 = vadd.f32 %v1209, %v1257
  %1259 = vmatmul.bf16.gmra.mxu0 %v491
  %v1260 = vpop.f32.mrf.mxu0
  %v1261 = vadd.f32 %v1212, %v1260
  %v1262 = vpop.f32.mrf.mxu0
  %v1263 = vadd.f32 %v1214, %v1262
  %1264 = vmatmul.bf16.gmra.mxu0 %v500
  %v1265 = vpop.f32.mrf.mxu0
  %v1266 = vadd.f32 %v1217, %v1265
  %v1267 = vpop.f32.mrf.mxu0
  %v1268 = vadd.f32 %v1219, %v1267
  %1269 = vmatmul.bf16.gmra.mxu0 %v509
  %v1270 = vpop.f32.mrf.mxu0
  %v1271 = vadd.f32 %v1222, %v1270
  %v1272 = vpop.f32.mrf.mxu0
  %v1273 = vadd.f32 %v1224, %v1272
  %1274 = vmatmul.bf16.gmra.mxu0 %v518
  %v1275 = vpop.f32.mrf.mxu0
  %v1276 = vadd.f32 %v1227, %v1275
  %v1277 = vpop.f32.mrf.mxu0
  %v1278 = vadd.f32 %v1229, %v1277
  %1279 = vmatmul.bf16.gmra.mxu0 %v527
  %v1280 = vpop.f32.mrf.mxu0
  %v1281 = vadd.f32 %v1232, %v1280
  %v1282 = vpop.f32.mrf.mxu0
  %v1283 = vadd.f32 %v1234, %v1282
  %1284 = vmatmul.bf16.gmra.mxu0 %v536
  %v1285 = vpop.f32.mrf.mxu0
  %v1286 = vadd.f32 %v1237, %v1285
  %v1287 = vpop.f32.mrf.mxu0
  %v1288 = vadd.f32 %v1239, %v1287
  %1289 = vdwg.mxu0
  %1290 = vmatpush.bf16.msra.mxu0 %v948
  %1291 = vmatpush.bf16.msra.mxu0 %v947
  %1292 = vmatpush.bf16.msra.mxu0 %v946
  %1293 = vmatpush.bf16.msra.mxu0 %v945
  %1294 = vmatpush.bf16.msra.mxu0 %v944
  %1295 = vmatpush.bf16.msra.mxu0 %v943
  %1296 = vmatpush.bf16.msra.mxu0 %v942
  %1297 = vmatpush.bf16.msra.mxu0 %v941
  %1298 = vmatmul.bf16.gmra.mxu0 %v474
  %v1299 = vpop.f32.mrf.mxu0
  %v1300 = vadd.f32 %v1251, %v1299
  %v1301 = vpop.f32.mrf.mxu0
  %v1302 = vadd.f32 %v1253, %v1301
  %1303 = vmatmul.bf16.gmra.mxu0 %v483
  %v1304 = vpop.f32.mrf.mxu0
  %v1305 = vadd.f32 %v1256, %v1304
  %v1306 = vpop.f32.mrf.mxu0
  %v1307 = vadd.f32 %v1258, %v1306
  %1308 = vmatmul.bf16.gmra.mxu0 %v492
  %v1309 = vpop.f32.mrf.mxu0
  %v1310 = vadd.f32 %v1261, %v1309
  %v1311 = vpop.f32.mrf.mxu0
  %v1312 = vadd.f32 %v1263, %v1311
  %1313 = vmatmul.bf16.gmra.mxu0 %v501
  %v1314 = vpop.f32.mrf.mxu0
  %v1315 = vadd.f32 %v1266, %v1314
  %v1316 = vpop.f32.mrf.mxu0
  %v1317 = vadd.f32 %v1268, %v1316
  %1318 = vmatmul.bf16.gmra.mxu0 %v510
  %v1319 = vpop.f32.mrf.mxu0
  %v1320 = vadd.f32 %v1271, %v1319
  %v1321 = vpop.f32.mrf.mxu0
  %v1322 = vadd.f32 %v1273, %v1321
  %1323 = vmatmul.bf16.gmra.mxu0 %v519
  %v1324 = vpop.f32.mrf.mxu0
  %v1325 = vadd.f32 %v1276, %v1324
  %v1326 = vpop.f32.mrf.mxu0
  %v1327 = vadd.f32 %v1278, %v1326
  %1328 = vmatmul.bf16.gmra.mxu0 %v528
  %v1329 = vpop.f32.mrf.mxu0
  %v1330 = vadd.f32 %v1281, %v1329
  %v1331 = vpop.f32.mrf.mxu0
  %v1332 = vadd.f32 %v1283, %v1331
  %1333 = vmatmul.bf16.gmra.mxu0 %v537
  %v1334 = vpop.f32.mrf.mxu0
  %v1335 = vadd.f32 %v1286, %v1334
  %v1336 = vpop.f32.mrf.mxu0
  %v1337 = vadd.f32 %v1288, %v1336
  %1338 = vdwg.mxu0
  %1339 = vmatpush.bf16.msra.mxu0 %v956
  %1340 = vmatpush.bf16.msra.mxu0 %v955
  %1341 = vmatpush.bf16.msra.mxu0 %v954
  %1342 = vmatpush.bf16.msra.mxu0 %v953
  %1343 = vmatpush.bf16.msra.mxu0 %v952
  %1344 = vmatpush.bf16.msra.mxu0 %v951
  %1345 = vmatpush.bf16.msra.mxu0 %v950
  %1346 = vmatpush.bf16.msra.mxu0 %v949
  %1347 = vmatmul.bf16.gmra.mxu0 %v475
  %v1348 = vpop.f32.mrf.mxu0
  %v1349 = vadd.f32 %v1300, %v1348
  %v1350 = vpop.f32.mrf.mxu0
  %v1351 = vadd.f32 %v1302, %v1350
  %1352 = vmatmul.bf16.gmra.mxu0 %v484
  %v1353 = vpop.f32.mrf.mxu0
  %v1354 = vadd.f32 %v1305, %v1353
  %v1355 = vpop.f32.mrf.mxu0
  %v1356 = vadd.f32 %v1307, %v1355
  %1357 = vmatmul.bf16.gmra.mxu0 %v493
  %v1358 = vpop.f32.mrf.mxu0
  %v1359 = vadd.f32 %v1310, %v1358
  %v1360 = vpop.f32.mrf.mxu0
  %v1361 = vadd.f32 %v1312, %v1360
  %1362 = vmatmul.bf16.gmra.mxu0 %v502
  %v1363 = vpop.f32.mrf.mxu0
  %v1364 = vadd.f32 %v1315, %v1363
  %v1365 = vpop.f32.mrf.mxu0
  %v1366 = vadd.f32 %v1317, %v1365
  %1367 = vmatmul.bf16.gmra.mxu0 %v511
  %v1368 = vpop.f32.mrf.mxu0
  %v1369 = vadd.f32 %v1320, %v1368
  %v1370 = vpop.f32.mrf.mxu0
  %v1371 = vadd.f32 %v1322, %v1370
  %1372 = vmatmul.bf16.gmra.mxu0 %v520
  %v1373 = vpop.f32.mrf.mxu0
  %v1374 = vadd.f32 %v1325, %v1373
  %v1375 = vpop.f32.mrf.mxu0
  %v1376 = vadd.f32 %v1327, %v1375
  %1377 = vmatmul.bf16.gmra.mxu0 %v529
  %v1378 = vpop.f32.mrf.mxu0
  %v1379 = vadd.f32 %v1330, %v1378
  %v1380 = vpop.f32.mrf.mxu0
  %v1381 = vadd.f32 %v1332, %v1380
  %1382 = vmatmul.bf16.gmra.mxu0 %v538
  %v1383 = vpop.f32.mrf.mxu0
  %v1384 = vadd.f32 %v1335, %v1383
  %v1385 = vpop.f32.mrf.mxu0
  %v1386 = vadd.f32 %v1337, %v1385
  %1387 = vdwg.mxu0
  %1388 = vmatpush.bf16.msra.mxu0 %v964
  %1389 = vmatpush.bf16.msra.mxu0 %v963
  %1390 = vmatpush.bf16.msra.mxu0 %v962
  %1391 = vmatpush.bf16.msra.mxu0 %v961
  %1392 = vmatpush.bf16.msra.mxu0 %v960
  %1393 = vmatpush.bf16.msra.mxu0 %v959
  %1394 = vmatpush.bf16.msra.mxu0 %v958
  %1395 = vmatpush.bf16.msra.mxu0 %v957
  %1396 = vmatmul.bf16.gmra.mxu0 %v476
  %v1397 = vpop.f32.mrf.mxu0
  %v1398 = vadd.f32 %v1349, %v1397
  %v1399 = vpop.f32.mrf.mxu0
  %v1400 = vadd.f32 %v1351, %v1399
  %1401 = vmatmul.bf16.gmra.mxu0 %v485
  %v1402 = vpop.f32.mrf.mxu0
  %v1403 = vadd.f32 %v1354, %v1402
  %v1404 = vpop.f32.mrf.mxu0
  %v1405 = vadd.f32 %v1356, %v1404
  %1406 = vmatmul.bf16.gmra.mxu0 %v494
  %v1407 = vpop.f32.mrf.mxu0
  %v1408 = vadd.f32 %v1359, %v1407
  %v1409 = vpop.f32.mrf.mxu0
  %v1410 = vadd.f32 %v1361, %v1409
  %1411 = vmatmul.bf16.gmra.mxu0 %v503
  %v1412 = vpop.f32.mrf.mxu0
  %v1413 = vadd.f32 %v1364, %v1412
  %v1414 = vpop.f32.mrf.mxu0
  %v1415 = vadd.f32 %v1366, %v1414
  %1416 = vmatmul.bf16.gmra.mxu0 %v512
  %v1417 = vpop.f32.mrf.mxu0
  %v1418 = vadd.f32 %v1369, %v1417
  %v1419 = vpop.f32.mrf.mxu0
  %v1420 = vadd.f32 %v1371, %v1419
  %1421 = vmatmul.bf16.gmra.mxu0 %v521
  %v1422 = vpop.f32.mrf.mxu0
  %v1423 = vadd.f32 %v1374, %v1422
  %v1424 = vpop.f32.mrf.mxu0
  %v1425 = vadd.f32 %v1376, %v1424
  %1426 = vmatmul.bf16.gmra.mxu0 %v530
  %v1427 = vpop.f32.mrf.mxu0
  %v1428 = vadd.f32 %v1379, %v1427
  %v1429 = vpop.f32.mrf.mxu0
  %v1430 = vadd.f32 %v1381, %v1429
  %1431 = vmatmul.bf16.gmra.mxu0 %v539
  %v1432 = vpop.f32.mrf.mxu0
  %v1433 = vadd.f32 %v1384, %v1432
  %v1434 = vpop.f32.mrf.mxu0
  %v1435 = vadd.f32 %v1386, %v1434
  %1436 = vdwg.mxu0
  %1437 = vmatpush.bf16.msra.mxu0 %v972
  %1438 = vmatpush.bf16.msra.mxu0 %v971
  %1439 = vmatpush.bf16.msra.mxu0 %v970
  %1440 = vmatpush.bf16.msra.mxu0 %v969
  %1441 = vmatpush.bf16.msra.mxu0 %v968
  %1442 = vmatpush.bf16.msra.mxu0 %v967
  %1443 = vmatpush.bf16.msra.mxu0 %v966
  %1444 = vmatpush.bf16.msra.mxu0 %v965
  %1445 = vmatmul.bf16.gmra.mxu0 %v477
  %v1446 = vpop.f32.mrf.mxu0
  %v1447 = vadd.f32 %v1398, %v1446
  %v1448 = vpop.f32.mrf.mxu0
  %v1449 = vadd.f32 %v1400, %v1448
  %1450 = vmatmul.bf16.gmra.mxu0 %v486
  %v1451 = vpop.f32.mrf.mxu0
  %v1452 = vadd.f32 %v1403, %v1451
  %v1453 = vpop.f32.mrf.mxu0
  %v1454 = vadd.f32 %v1405, %v1453
  %1455 = vmatmul.bf16.gmra.mxu0 %v495
  %v1456 = vpop.f32.mrf.mxu0
  %v1457 = vadd.f32 %v1408, %v1456
  %v1458 = vpop.f32.mrf.mxu0
  %v1459 = vadd.f32 %v1410, %v1458
  %1460 = vmatmul.bf16.gmra.mxu0 %v504
  %v1461 = vpop.f32.mrf.mxu0
  %v1462 = vadd.f32 %v1413, %v1461
  %v1463 = vpop.f32.mrf.mxu0
  %v1464 = vadd.f32 %v1415, %v1463
  %1465 = vmatmul.bf16.gmra.mxu0 %v513
  %v1466 = vpop.f32.mrf.mxu0
  %v1467 = vadd.f32 %v1418, %v1466
  %v1468 = vpop.f32.mrf.mxu0
  %v1469 = vadd.f32 %v1420, %v1468
  %1470 = vmatmul.bf16.gmra.mxu0 %v522
  %v1471 = vpop.f32.mrf.mxu0
  %v1472 = vadd.f32 %v1423, %v1471
  %v1473 = vpop.f32.mrf.mxu0
  %v1474 = vadd.f32 %v1425, %v1473
  %1475 = vmatmul.bf16.gmra.mxu0 %v531
  %v1476 = vpop.f32.mrf.mxu0
  %v1477 = vadd.f32 %v1428, %v1476
  %v1478 = vpop.f32.mrf.mxu0
  %v1479 = vadd.f32 %v1430, %v1478
  %1480 = vmatmul.bf16.gmra.mxu0 %v540
  %v1481 = vpop.f32.mrf.mxu0
  %v1482 = vadd.f32 %v1433, %v1481
  %v1483 = vpop.f32.mrf.mxu0
  %v1484 = vadd.f32 %v1435, %v1483
  %1485 = vdwg.mxu0
  %v1486 = vld [vmem:[%s3] sm:$0xff]
  %v1487 = vld [vmem:[%s3 + $0x8] sm:$0xff]
  %v1488 = vld [vmem:[%s3 + $0x10] sm:$0xff]
  %v1489 = vld [vmem:[%s3 + $0x18] sm:$0xff]
  %v1490 = vld [vmem:[%s3 + $0x20] sm:$0xff]
  %v1491 = vld [vmem:[%s3 + $0x28] sm:$0xff]
  %v1492 = vld [vmem:[%s3 + $0x30] sm:$0xff]
  %v1493 = vld [vmem:[%s3 + $0x38] sm:$0xff]
  %v1494 = vld [vmem:[%s3 + $0x40] sm:$0xff]
  %v1495 = vld [vmem:[%s3 + $0x48] sm:$0xff]
  %v1496 = vld [vmem:[%s3 + $0x50] sm:$0xff]
  %v1497 = vld [vmem:[%s3 + $0x58] sm:$0xff]
  %v1498 = vld [vmem:[%s3 + $0x60] sm:$0xff]
  %v1499 = vld [vmem:[%s3 + $0x68] sm:$0xff]
  %v1500 = vld [vmem:[%s3 + $0x70] sm:$0xff]
  %v1501 = vld [vmem:[%s3 + $0x78] sm:$0xff]
  %v1502 = vadd.f32 %v1447, %v1486
  %v1503 = vadd.f32 %v1449, %v1487
  %v1504 = vadd.f32 %v1452, %v1488
  %v1505 = vadd.f32 %v1454, %v1489
  %v1506 = vadd.f32 %v1457, %v1490
  %v1507 = vadd.f32 %v1459, %v1491
  %v1508 = vadd.f32 %v1462, %v1492
  %v1509 = vadd.f32 %v1464, %v1493
  %v1510 = vadd.f32 %v1467, %v1494
  %v1511 = vadd.f32 %v1469, %v1495
  %v1512 = vadd.f32 %v1472, %v1496
  %v1513 = vadd.f32 %v1474, %v1497
  %v1514 = vadd.f32 %v1477, %v1498
  %v1515 = vadd.f32 %v1479, %v1499
  %v1516 = vadd.f32 %v1482, %v1500
  %v1517 = vadd.f32 %v1484, %v1501
  %v1518 = vmax.f32 %v1502, 0.0
  %v1519 = vmax.f32 %v1503, 0.0
  %v1520 = vmax.f32 %v1504, 0.0
  %v1521 = vmax.f32 %v1505, 0.0
  %v1522 = vmax.f32 %v1506, 0.0
  %v1523 = vmax.f32 %v1507, 0.0
  %v1524 = vmax.f32 %v1508, 0.0
  %v1525 = vmax.f32 %v1509, 0.0
  %v1526 = vmax.f32 %v1510, 0.0
  %v1527 = vmax.f32 %v1511, 0.0
  %v1528 = vmax.f32 %v1512, 0.0
  %v1529 = vmax.f32 %v1513, 0.0
  %v1530 = vmax.f32 %v1514, 0.0
  %v1531 = vmax.f32 %v1515, 0.0
  %v1532 = vmax.f32 %v1516, 0.0
  %v1533 = vmax.f32 %v1517, 0.0
  %1534 = vst [vmem:[%s4] sm:$0xff] %v1518
  %1535 = vst [vmem:[%s4 + $0x8] sm:$0xff] %v1519
  %1536 = vst [vmem:[%s4 + $0x10] sm:$0xff] %v1520
  %1537 = vst [vmem:[%s4 + $0x18] sm:$0xff] %v1521
  %1538 = vst [vmem:[%s4 + $0x20] sm:$0xff] %v1522
  %1539 = vst [vmem:[%s4 + $0x28] sm:$0xff] %v1523
  %1540 = vst [vmem:[%s4 + $0x30] sm:$0xff] %v1524
  %1541 = vst [vmem:[%s4 + $0x38] sm:$0xff] %v1525
  %1542 = vst [vmem:[%s4 + $0x40] sm:$0xff] %v1526
  %1543 = vst [vmem:[%s4 + $0x48] sm:$0xff] %v1527
  %1544 = vst [vmem:[%s4 + $0x50] sm:$0xff] %v1528
  %1545 = vst [vmem:[%s4 + $0x58] sm:$0xff] %v1529
  %1546 = vst [vmem:[%s4 + $0x60] sm:$0xff] %v1530
  %1547 = vst [vmem:[%s4 + $0x68] sm:$0xff] %v1531
  %1548 = vst [vmem:[%s4 + $0x70] sm:$0xff] %v1532
  %1549 = vst [vmem:[%s4 + $0x78] sm:$0xff] %v1533
  // Predicated region
  $region18: #{_lambda_.11} parent=0 // pred_check
    _
  $region19: #{_lambda_.11} parent=0 // pred_check_branch
    %1551 = sbr.rel (0) target = $region21
  $region20: #{_lambda_.11} parent=0 // pred_region
    _
  $region21: #{_lambda_.11} parent=0 // pred_fallthru
    _
  // Predicated region
  $region22: #{_lambda_.11} parent=0 // pred_check
    _
  $region23: #{_lambda_.11} parent=0 // pred_check_branch
    %1553 = sbr.rel (0) target = $region25
  $region24: #{_lambda_.11} parent=0 // pred_region
    _
  $region25: #{_lambda_.11} parent=0 // pred_fallthru
    _

// kernel: _lambda_.12
$region0: #{_lambda_.12}
  #allocation0 [shape = 'u32[]', space=smem, size = 0x4, offset = 0x4, fixed_abs, tag = 'smem constant byte address 0x4 - core index']
  #allocation1 [shape = 'u32[72,128]{1,0:T(1,128)}', space=vmem, size = 0x9000, scoped, tag = 'internal scratch']
  %s0 = inlined_call_operand.vmem [shape: bf16[32,1152], index: 0, kind: input, shape index: {}]
  %s1 = inlined_call_operand.vmem [shape: bf16[1152,128], index: 1, kind: input, shape index: {}]
  %s2 = inlined_call_operand.vmem [shape: f32[1,128], index: 2, kind: input, shape index: {}]
  %s3 = inlined_call_operand.vmem [shape: bf16[128,128], index: 3, kind: input, shape index: {}]
  %s4 = inlined_call_operand.vmem [shape: f32[1,128], index: 4, kind: input, shape index: {}]
  %s5 = inlined_call_operand.vmem [shape: f32[32,128], index: 5, kind: output, shape index: {0}]
  %s6 = inlined_call_operand.vmem [shape: f32[32,128], index: 6, kind: output, shape index: {1}]
  %7 = xla_tuple %s5, %s6
  %s8 = sld [smem:[#allocation0]]
  $region38: #{_lambda_.12} parent=0
    _
  %s10 = ssub.s32 1, %s8
  %s11 = scalar_select 0, %s10, %s8
  // Predicated region
  $region2: #{_lambda_.12} parent=0 // pred_check
    _
  $region3: #{_lambda_.12} parent=0 // pred_check_branch
    %13 = sbr.rel (0) target = $region5
  $region4: #{_lambda_.12} parent=0 // pred_region
    _
  $region5: #{_lambda_.12} parent=0 // pred_fallthru
    _
  // Predicated region
  $region6: #{_lambda_.12} parent=0 // pred_check
    _
  $region7: #{_lambda_.12} parent=0 // pred_check_branch
    %15 = sbr.rel (0) target = $region9
  $region8: #{_lambda_.12} parent=0 // pred_region
    _
  $region9: #{_lambda_.12} parent=0 // pred_fallthru
    _
  // Predicated region
  $region10: #{_lambda_.12} parent=0 // pred_check
    _
  $region11: #{_lambda_.12} parent=0 // pred_check_branch
    %17 = sbr.rel (0) target = $region13
  $region12: #{_lambda_.12} parent=0 // pred_region
    _
  $region13: #{_lambda_.12} parent=0 // pred_fallthru
    _
  // Predicated region
  $region14: #{_lambda_.12} parent=0 // pred_check
    _
  $region15: #{_lambda_.12} parent=0 // pred_check_branch
    %19 = sbr.rel (0) target = $region17
  $region16: #{_lambda_.12} parent=0 // pred_region
    _
  $region17: #{_lambda_.12} parent=0 // pred_fallthru
    _
  // Predicated region
  $region18: #{_lambda_.12} parent=0 // pred_check
    _
  $region19: #{_lambda_.12} parent=0 // pred_check_branch
    %21 = sbr.rel (0) target = $region21
  $region20: #{_lambda_.12} parent=0 // pred_region
    _
  $region21: #{_lambda_.12} parent=0 // pred_fallthru
    _
  %v22 = vld [vmem:[%s0] sm:$0xff]
  %v23 = vld [vmem:[%s0 + $0x8] sm:$0xff]
  %v24 = vld [vmem:[%s0 + $0x10] sm:$0xff]
  %v25 = vld [vmem:[%s0 + $0x18] sm:$0xff]
  %v26 = vld [vmem:[%s0 + $0x20] sm:$0xf]
  %v27 = vld [vmem:[%s0 + $0x24] sm:$0xff]
  %v28 = vld [vmem:[%s0 + $0x2c] sm:$0xff]
  %v29 = vld [vmem:[%s0 + $0x34] sm:$0xff]
  %v30 = vld [vmem:[%s0 + $0x3c] sm:$0xff]
  %v31 = vld [vmem:[%s0 + $0x44] sm:$0xf]
  %v32 = vld [vmem:[%s0 + $0x48] sm:$0xff]
  %v33 = vld [vmem:[%s0 + $0x50] sm:$0xff]
  %v34 = vld [vmem:[%s0 + $0x58] sm:$0xff]
  %v35 = vld [vmem:[%s0 + $0x60] sm:$0xff]
  %v36 = vld [vmem:[%s0 + $0x68] sm:$0xf]
  %v37 = vld [vmem:[%s0 + $0x6c] sm:$0xff]
  %v38 = vld [vmem:[%s0 + $0x74] sm:$0xff]
  %v39 = vld [vmem:[%s0 + $0x7c] sm:$0xff]
  %v40 = vld [vmem:[%s0 + $0x84] sm:$0xff]
  %v41 = vld [vmem:[%s0 + $0x8c] sm:$0xf]
  %v42 = vld [vmem:[%s1] sm:$0xf]
  %v43 = vld [vmem:[%s1 + $0x4] sm:$0xf]
  %v44 = vld [vmem:[%s1 + $0x8] sm:$0xf]
  %v45 = vld [vmem:[%s1 + $0xc] sm:$0xf]
  %v46 = vld [vmem:[%s1 + $0x10] sm:$0xf]
  %v47 = vld [vmem:[%s1 + $0x14] sm:$0xf]
  %v48 = vld [vmem:[%s1 + $0x18] sm:$0xf]
  %v49 = vld [vmem:[%s1 + $0x1c] sm:$0xf]
  %v50 = vld [vmem:[%s1 + $0x20] sm:$0xf]
  %v51 = vld [vmem:[%s1 + $0x24] sm:$0xf]
  %v52 = vld [vmem:[%s1 + $0x28] sm:$0xf]
  %v53 = vld [vmem:[%s1 + $0x2c] sm:$0xf]
  %v54 = vld [vmem:[%s1 + $0x30] sm:$0xf]
  %v55 = vld [vmem:[%s1 + $0x34] sm:$0xf]
  %v56 = vld [vmem:[%s1 + $0x38] sm:$0xf]
  %v57 = vld [vmem:[%s1 + $0x3c] sm:$0xf]
  %v58 = vld [vmem:[%s1 + $0x40] sm:$0xf]
  %v59 = vld [vmem:[%s1 + $0x44] sm:$0xf]
  %v60 = vld [vmem:[%s1 + $0x48] sm:$0xf]
  %v61 = vld [vmem:[%s1 + $0x4c] sm:$0xf]
  %v62 = vld [vmem:[%s1 + $0x50] sm:$0xf]
  %v63 = vld [vmem:[%s1 + $0x54] sm:$0xf]
  %v64 = vld [vmem:[%s1 + $0x58] sm:$0xf]
  %v65 = vld [vmem:[%s1 + $0x5c] sm:$0xf]
  %v66 = vld [vmem:[%s1 + $0x60] sm:$0xf]
  %v67 = vld [vmem:[%s1 + $0x64] sm:$0xf]
  %v68 = vld [vmem:[%s1 + $0x68] sm:$0xf]
  %v69 = vld [vmem:[%s1 + $0x6c] sm:$0xf]
  %v70 = vld [vmem:[%s1 + $0x70] sm:$0xf]
  %v71 = vld [vmem:[%s1 + $0x74] sm:$0xf]
  %v72 = vld [vmem:[%s1 + $0x78] sm:$0xf]
  %v73 = vld [vmem:[%s1 + $0x7c] sm:$0xf]
  %v74 = vld [vmem:[%s1 + $0x80] sm:$0xf]
  %v75 = vld [vmem:[%s1 + $0x84] sm:$0xf]
  %v76 = vld [vmem:[%s1 + $0x88] sm:$0xf]
  %v77 = vld [vmem:[%s1 + $0x8c] sm:$0xf]
  %v78 = vld [vmem:[%s1 + $0x90] sm:$0xf]
  %v79 = vld [vmem:[%s1 + $0x94] sm:$0xf]
  %v80 = vld [vmem:[%s1 + $0x98] sm:$0xf]
  %v81 = vld [vmem:[%s1 + $0x9c] sm:$0xf]
  %v82 = vld [vmem:[%s1 + $0xa0] sm:$0xf]
  %v83 = vld [vmem:[%s1 + $0xa4] sm:$0xf]
  %v84 = vld [vmem:[%s1 + $0xa8] sm:$0xf]
  %v85 = vld [vmem:[%s1 + $0xac] sm:$0xf]
  %v86 = vld [vmem:[%s1 + $0xb0] sm:$0xf]
  %v87 = vld [vmem:[%s1 + $0xb4] sm:$0xf]
  %v88 = vld [vmem:[%s1 + $0xb8] sm:$0xf]
  %v89 = vld [vmem:[%s1 + $0xbc] sm:$0xf]
  %v90 = vld [vmem:[%s1 + $0xc0] sm:$0xf]
  %v91 = vld [vmem:[%s1 + $0xc4] sm:$0xf]
  %v92 = vld [vmem:[%s1 + $0xc8] sm:$0xf]
  %v93 = vld [vmem:[%s1 + $0xcc] sm:$0xf]
  %v94 = vld [vmem:[%s1 + $0xd0] sm:$0xf]
  %v95 = vld [vmem:[%s1 + $0xd4] sm:$0xf]
  %v96 = vld [vmem:[%s1 + $0xd8] sm:$0xf]
  %v97 = vld [vmem:[%s1 + $0xdc] sm:$0xf]
  %v98 = vld [vmem:[%s1 + $0xe0] sm:$0xf]
  %v99 = vld [vmem:[%s1 + $0xe4] sm:$0xf]
  %v100 = vld [vmem:[%s1 + $0xe8] sm:$0xf]
  %v101 = vld [vmem:[%s1 + $0xec] sm:$0xf]
  %v102 = vld [vmem:[%s1 + $0xf0] sm:$0xf]
  %v103 = vld [vmem:[%s1 + $0xf4] sm:$0xf]
  %v104 = vld [vmem:[%s1 + $0xf8] sm:$0xf]
  %v105 = vld [vmem:[%s1 + $0xfc] sm:$0xf]
  %v106 = vld [vmem:[%s1 + $0x100] sm:$0xf]
  %v107 = vld [vmem:[%s1 + $0x104] sm:$0xf]
  %v108 = vld [vmem:[%s1 + $0x108] sm:$0xf]
  %v109 = vld [vmem:[%s1 + $0x10c] sm:$0xf]
  %v110 = vld [vmem:[%s1 + $0x110] sm:$0xf]
  %v111 = vld [vmem:[%s1 + $0x114] sm:$0xf]
  %v112 = vld [vmem:[%s1 + $0x118] sm:$0xf]
  %v113 = vld [vmem:[%s1 + $0x11c] sm:$0xf]
  %v114 = vld [vmem:[%s1 + $0x120] sm:$0xf]
  %v115 = vld [vmem:[%s1 + $0x124] sm:$0xf]
  %v116 = vld [vmem:[%s1 + $0x128] sm:$0xf]
  %v117 = vld [vmem:[%s1 + $0x12c] sm:$0xf]
  %v118 = vld [vmem:[%s1 + $0x130] sm:$0xf]
  %v119 = vld [vmem:[%s1 + $0x134] sm:$0xf]
  %v120 = vld [vmem:[%s1 + $0x138] sm:$0xf]
  %v121 = vld [vmem:[%s1 + $0x13c] sm:$0xf]
  %v122 = vld [vmem:[%s1 + $0x140] sm:$0xf]
  %v123 = vld [vmem:[%s1 + $0x144] sm:$0xf]
  %v124 = vld [vmem:[%s1 + $0x148] sm:$0xf]
  %v125 = vld [vmem:[%s1 + $0x14c] sm:$0xf]
  %v126 = vld [vmem:[%s1 + $0x150] sm:$0xf]
  %v127 = vld [vmem:[%s1 + $0x154] sm:$0xf]
  %v128 = vld [vmem:[%s1 + $0x158] sm:$0xf]
  %v129 = vld [vmem:[%s1 + $0x15c] sm:$0xf]
  %v130 = vld [vmem:[%s1 + $0x160] sm:$0xf]
  %v131 = vld [vmem:[%s1 + $0x164] sm:$0xf]
  %v132 = vld [vmem:[%s1 + $0x168] sm:$0xf]
  %v133 = vld [vmem:[%s1 + $0x16c] sm:$0xf]
  %v134 = vld [vmem:[%s1 + $0x170] sm:$0xf]
  %v135 = vld [vmem:[%s1 + $0x174] sm:$0xf]
  %v136 = vld [vmem:[%s1 + $0x178] sm:$0xf]
  %v137 = vld [vmem:[%s1 + $0x17c] sm:$0xf]
  %v138 = vld [vmem:[%s1 + $0x180] sm:$0xf]
  %v139 = vld [vmem:[%s1 + $0x184] sm:$0xf]
  %v140 = vld [vmem:[%s1 + $0x188] sm:$0xf]
  %v141 = vld [vmem:[%s1 + $0x18c] sm:$0xf]
  %v142 = vld [vmem:[%s1 + $0x190] sm:$0xf]
  %v143 = vld [vmem:[%s1 + $0x194] sm:$0xf]
  %v144 = vld [vmem:[%s1 + $0x198] sm:$0xf]
  %v145 = vld [vmem:[%s1 + $0x19c] sm:$0xf]
  %v146 = vld [vmem:[%s1 + $0x1a0] sm:$0xf]
  %v147 = vld [vmem:[%s1 + $0x1a4] sm:$0xf]
  %v148 = vld [vmem:[%s1 + $0x1a8] sm:$0xf]
  %v149 = vld [vmem:[%s1 + $0x1ac] sm:$0xf]
  %v150 = vld [vmem:[%s1 + $0x1b0] sm:$0xf]
  %v151 = vld [vmem:[%s1 + $0x1b4] sm:$0xf]
  %v152 = vld [vmem:[%s1 + $0x1b8] sm:$0xf]
  %v153 = vld [vmem:[%s1 + $0x1bc] sm:$0xf]
  %v154 = vld [vmem:[%s1 + $0x1c0] sm:$0xf]
  %v155 = vld [vmem:[%s1 + $0x1c4] sm:$0xf]
  %v156 = vld [vmem:[%s1 + $0x1c8] sm:$0xf]
  %v157 = vld [vmem:[%s1 + $0x1cc] sm:$0xf]
  %v158 = vld [vmem:[%s1 + $0x1d0] sm:$0xf]
  %v159 = vld [vmem:[%s1 + $0x1d4] sm:$0xf]
  %v160 = vld [vmem:[%s1 + $0x1d8] sm:$0xf]
  %v161 = vld [vmem:[%s1 + $0x1dc] sm:$0xf]
  %v162 = vld [vmem:[%s1 + $0x1e0] sm:$0xf]
  %v163 = vld [vmem:[%s1 + $0x1e4] sm:$0xf]
  %v164 = vld [vmem:[%s1 + $0x1e8] sm:$0xf]
  %v165 = vld [vmem:[%s1 + $0x1ec] sm:$0xf]
  %v166 = vld [vmem:[%s1 + $0x1f0] sm:$0xf]
  %v167 = vld [vmem:[%s1 + $0x1f4] sm:$0xf]
  %v168 = vld [vmem:[%s1 + $0x1f8] sm:$0xf]
  %v169 = vld [vmem:[%s1 + $0x1fc] sm:$0xf]
  %v170 = vld [vmem:[%s1 + $0x200] sm:$0xf]
  %v171 = vld [vmem:[%s1 + $0x204] sm:$0xf]
  %v172 = vld [vmem:[%s1 + $0x208] sm:$0xf]
  %v173 = vld [vmem:[%s1 + $0x20c] sm:$0xf]
  %v174 = vld [vmem:[%s1 + $0x210] sm:$0xf]
  %v175 = vld [vmem:[%s1 + $0x214] sm:$0xf]
  %v176 = vld [vmem:[%s1 + $0x218] sm:$0xf]
  %v177 = vld [vmem:[%s1 + $0x21c] sm:$0xf]
  %v178 = vld [vmem:[%s1 + $0x220] sm:$0xf]
  %v179 = vld [vmem:[%s1 + $0x224] sm:$0xf]
  %v180 = vld [vmem:[%s1 + $0x228] sm:$0xf]
  %v181 = vld [vmem:[%s1 + $0x22c] sm:$0xf]
  %v182 = vld [vmem:[%s1 + $0x230] sm:$0xf]
  %v183 = vld [vmem:[%s1 + $0x234] sm:$0xf]
  %v184 = vld [vmem:[%s1 + $0x238] sm:$0xf]
  %v185 = vld [vmem:[%s1 + $0x23c] sm:$0xf]
  %v186 = vld [vmem:[%s2] sm:$0x1]
  %v188 = vperm.slane %v186, 0
  %v210 = vunpack.c.l.b16 %v22
  %v211 = vunpack.c.h.b16 %v22
  %v212 = vunpack.c.l.b16 %v23
  %v213 = vunpack.c.h.b16 %v23
  %v214 = vunpack.c.l.b16 %v24
  %v215 = vunpack.c.h.b16 %v24
  %v216 = vunpack.c.l.b16 %v25
  %v217 = vunpack.c.h.b16 %v25
  %v218 = vunpack.c.l.b16 %v26
  %v219 = vunpack.c.l.b16 %v27
  %v220 = vunpack.c.h.b16 %v27
  %v221 = vunpack.c.l.b16 %v28
  %v222 = vunpack.c.h.b16 %v28
  %v223 = vunpack.c.l.b16 %v29
  %v224 = vunpack.c.h.b16 %v29
  %v225 = vunpack.c.l.b16 %v30
  %v226 = vunpack.c.h.b16 %v30
  %v227 = vunpack.c.l.b16 %v31
  %v228 = vunpack.c.l.b16 %v32
  %v229 = vunpack.c.h.b16 %v32
  %v230 = vunpack.c.l.b16 %v33
  %v231 = vunpack.c.h.b16 %v33
  %v232 = vunpack.c.l.b16 %v34
  %v233 = vunpack.c.h.b16 %v34
  %v234 = vunpack.c.l.b16 %v35
  %v235 = vunpack.c.h.b16 %v35
  %v236 = vunpack.c.l.b16 %v36
  %v237 = vunpack.c.l.b16 %v37
  %v238 = vunpack.c.h.b16 %v37
  %v239 = vunpack.c.l.b16 %v38
  %v240 = vunpack.c.h.b16 %v38
  %v241 = vunpack.c.l.b16 %v39
  %v242 = vunpack.c.h.b16 %v39
  %v243 = vunpack.c.l.b16 %v40
  %v244 = vunpack.c.h.b16 %v40
  %v245 = vunpack.c.l.b16 %v41
  %v246 = vpack.c.b16 %v219, %v210
  %v247 = vpack.c.b16 %v220, %v211
  %v248 = vpack.c.b16 %v221, %v212
  %v249 = vpack.c.b16 %v222, %v213
  %v250 = vpack.c.b16 %v223, %v214
  %v251 = vpack.c.b16 %v224, %v215
  %v252 = vpack.c.b16 %v225, %v216
  %v253 = vpack.c.b16 %v226, %v217
  %v254 = vpack.c.b16 %v227, %v218
  %v255 = vpack.c.b16 %v237, %v228
  %v256 = vpack.c.b16 %v238, %v229
  %v257 = vpack.c.b16 %v239, %v230
  %v258 = vpack.c.b16 %v240, %v231
  %v259 = vpack.c.b16 %v241, %v232
  %v260 = vpack.c.b16 %v242, %v233
  %v261 = vpack.c.b16 %v243, %v234
  %v262 = vpack.c.b16 %v244, %v235
  %v263 = vpack.c.b16 %v245, %v236
  %v426 = vunpack.c.l.b16 %v42
  %v427 = vunpack.c.l.b16 %v43
  %v428 = vunpack.c.l.b16 %v44
  %v429 = vunpack.c.l.b16 %v45
  %v430 = vunpack.c.l.b16 %v46
  %v431 = vunpack.c.l.b16 %v47
  %v432 = vunpack.c.l.b16 %v48
  %v433 = vunpack.c.l.b16 %v49
  %v434 = vunpack.c.l.b16 %v50
  %v435 = vunpack.c.l.b16 %v51
  %v436 = vunpack.c.l.b16 %v52
  %v437 = vunpack.c.l.b16 %v53
  %v438 = vunpack.c.l.b16 %v54
  %v439 = vunpack.c.l.b16 %v55
  %v440 = vunpack.c.l.b16 %v56
  %v441 = vunpack.c.l.b16 %v57
  %v442 = vunpack.c.l.b16 %v58
  %v443 = vunpack.c.l.b16 %v59
  %v444 = vunpack.c.l.b16 %v60
  %v445 = vunpack.c.l.b16 %v61
  %v446 = vunpack.c.l.b16 %v62
  %v447 = vunpack.c.l.b16 %v63
  %v448 = vunpack.c.l.b16 %v64
  %v449 = vunpack.c.l.b16 %v65
  %v450 = vunpack.c.l.b16 %v66
  %v451 = vunpack.c.l.b16 %v67
  %v452 = vunpack.c.l.b16 %v68
  %v453 = vunpack.c.l.b16 %v69
  %v454 = vunpack.c.l.b16 %v70
  %v455 = vunpack.c.l.b16 %v71
  %v456 = vunpack.c.l.b16 %v72
  %v457 = vunpack.c.l.b16 %v73
  %v458 = vunpack.c.l.b16 %v74
  %v459 = vunpack.c.l.b16 %v75
  %v460 = vunpack.c.l.b16 %v76
  %v461 = vunpack.c.l.b16 %v77
  %v462 = vunpack.c.l.b16 %v78
  %v463 = vunpack.c.l.b16 %v79
  %v464 = vunpack.c.l.b16 %v80
  %v465 = vunpack.c.l.b16 %v81
  %v466 = vunpack.c.l.b16 %v82
  %v467 = vunpack.c.l.b16 %v83
  %v468 = vunpack.c.l.b16 %v84
  %v469 = vunpack.c.l.b16 %v85
  %v470 = vunpack.c.l.b16 %v86
  %v471 = vunpack.c.l.b16 %v87
  %v472 = vunpack.c.l.b16 %v88
  %v473 = vunpack.c.l.b16 %v89
  %v474 = vunpack.c.l.b16 %v90
  %v475 = vunpack.c.l.b16 %v91
  %v476 = vunpack.c.l.b16 %v92
  %v477 = vunpack.c.l.b16 %v93
  %v478 = vunpack.c.l.b16 %v94
  %v479 = vunpack.c.l.b16 %v95
  %v480 = vunpack.c.l.b16 %v96
  %v481 = vunpack.c.l.b16 %v97
  %v482 = vunpack.c.l.b16 %v98
  %v483 = vunpack.c.l.b16 %v99
  %v484 = vunpack.c.l.b16 %v100
  %v485 = vunpack.c.l.b16 %v101
  %v486 = vunpack.c.l.b16 %v102
  %v487 = vunpack.c.l.b16 %v103
  %v488 = vunpack.c.l.b16 %v104
  %v489 = vunpack.c.l.b16 %v105
  %v490 = vunpack.c.l.b16 %v106
  %v491 = vunpack.c.l.b16 %v107
  %v492 = vunpack.c.l.b16 %v108
  %v493 = vunpack.c.l.b16 %v109
  %v494 = vunpack.c.l.b16 %v110
  %v495 = vunpack.c.l.b16 %v111
  %v496 = vunpack.c.l.b16 %v112
  %v497 = vunpack.c.l.b16 %v113
  %v498 = vunpack.c.l.b16 %v114
  %v499 = vunpack.c.l.b16 %v115
  %v500 = vunpack.c.l.b16 %v116
  %v501 = vunpack.c.l.b16 %v117
  %v502 = vunpack.c.l.b16 %v118
  %v503 = vunpack.c.l.b16 %v119
  %v504 = vunpack.c.l.b16 %v120
  %v505 = vunpack.c.l.b16 %v121
  %v506 = vunpack.c.l.b16 %v122
  %v507 = vunpack.c.l.b16 %v123
  %v508 = vunpack.c.l.b16 %v124
  %v509 = vunpack.c.l.b16 %v125
  %v510 = vunpack.c.l.b16 %v126
  %v511 = vunpack.c.l.b16 %v127
  %v512 = vunpack.c.l.b16 %v128
  %v513 = vunpack.c.l.b16 %v129
  %v514 = vunpack.c.l.b16 %v130
  %v515 = vunpack.c.l.b16 %v131
  %v516 = vunpack.c.l.b16 %v132
  %v517 = vunpack.c.l.b16 %v133
  %v518 = vunpack.c.l.b16 %v134
  %v519 = vunpack.c.l.b16 %v135
  %v520 = vunpack.c.l.b16 %v136
  %v521 = vunpack.c.l.b16 %v137
  %v522 = vunpack.c.l.b16 %v138
  %v523 = vunpack.c.l.b16 %v139
  %v524 = vunpack.c.l.b16 %v140
  %v525 = vunpack.c.l.b16 %v141
  %v526 = vunpack.c.l.b16 %v142
  %v527 = vunpack.c.l.b16 %v143
  %v528 = vunpack.c.l.b16 %v144
  %v529 = vunpack.c.l.b16 %v145
  %v530 = vunpack.c.l.b16 %v146
  %v531 = vunpack.c.l.b16 %v147
  %v532 = vunpack.c.l.b16 %v148
  %v533 = vunpack.c.l.b16 %v149
  %v534 = vunpack.c.l.b16 %v150
  %v535 = vunpack.c.l.b16 %v151
  %v536 = vunpack.c.l.b16 %v152
  %v537 = vunpack.c.l.b16 %v153
  %v538 = vunpack.c.l.b16 %v154
  %v539 = vunpack.c.l.b16 %v155
  %v540 = vunpack.c.l.b16 %v156
  %v541 = vunpack.c.l.b16 %v157
  %v542 = vunpack.c.l.b16 %v158
  %v543 = vunpack.c.l.b16 %v159
  %v544 = vunpack.c.l.b16 %v160
  %v545 = vunpack.c.l.b16 %v161
  %v546 = vunpack.c.l.b16 %v162
  %v547 = vunpack.c.l.b16 %v163
  %v548 = vunpack.c.l.b16 %v164
  %v549 = vunpack.c.l.b16 %v165
  %v550 = vunpack.c.l.b16 %v166
  %v551 = vunpack.c.l.b16 %v167
  %v552 = vunpack.c.l.b16 %v168
  %v553 = vunpack.c.l.b16 %v169
  %v554 = vunpack.c.l.b16 %v170
  %v555 = vunpack.c.l.b16 %v171
  %v556 = vunpack.c.l.b16 %v172
  %v557 = vunpack.c.l.b16 %v173
  %v558 = vunpack.c.l.b16 %v174
  %v559 = vunpack.c.l.b16 %v175
  %v560 = vunpack.c.l.b16 %v176
  %v561 = vunpack.c.l.b16 %v177
  %v562 = vunpack.c.l.b16 %v178
  %v563 = vunpack.c.l.b16 %v179
  %v564 = vunpack.c.l.b16 %v180
  %v565 = vunpack.c.l.b16 %v181
  %v566 = vunpack.c.l.b16 %v182
  %v567 = vunpack.c.l.b16 %v183
  %v568 = vunpack.c.l.b16 %v184
  %v569 = vunpack.c.l.b16 %v185
  %v570 = vpack.c.b16 %v427, %v426
  %v571 = vpack.c.b16 %v429, %v428
  %v572 = vpack.c.b16 %v431, %v430
  %v573 = vpack.c.b16 %v433, %v432
  %v574 = vpack.c.b16 %v435, %v434
  %v575 = vpack.c.b16 %v437, %v436
  %v576 = vpack.c.b16 %v439, %v438
  %v577 = vpack.c.b16 %v441, %v440
  %v578 = vpack.c.b16 %v443, %v442
  %v579 = vpack.c.b16 %v445, %v444
  %v580 = vpack.c.b16 %v447, %v446
  %v581 = vpack.c.b16 %v449, %v448
  %v582 = vpack.c.b16 %v451, %v450
  %v583 = vpack.c.b16 %v453, %v452
  %v584 = vpack.c.b16 %v455, %v454
  %v585 = vpack.c.b16 %v457, %v456
  %v586 = vpack.c.b16 %v459, %v458
  %v587 = vpack.c.b16 %v461, %v460
  %v588 = vpack.c.b16 %v463, %v462
  %v589 = vpack.c.b16 %v465, %v464
  %v590 = vpack.c.b16 %v467, %v466
  %v591 = vpack.c.b16 %v469, %v468
  %v592 = vpack.c.b16 %v471, %v470
  %v593 = vpack.c.b16 %v473, %v472
  %v594 = vpack.c.b16 %v475, %v474
  %v595 = vpack.c.b16 %v477, %v476
  %v596 = vpack.c.b16 %v479, %v478
  %v597 = vpack.c.b16 %v481, %v480
  %v598 = vpack.c.b16 %v483, %v482
  %v599 = vpack.c.b16 %v485, %v484
  %v600 = vpack.c.b16 %v487, %v486
  %v601 = vpack.c.b16 %v489, %v488
  %v602 = vpack.c.b16 %v491, %v490
  %v603 = vpack.c.b16 %v493, %v492
  %v604 = vpack.c.b16 %v495, %v494
  %v605 = vpack.c.b16 %v497, %v496
  %v606 = vpack.c.b16 %v499, %v498
  %v607 = vpack.c.b16 %v501, %v500
  %v608 = vpack.c.b16 %v503, %v502
  %v609 = vpack.c.b16 %v505, %v504
  %v610 = vpack.c.b16 %v507, %v506
  %v611 = vpack.c.b16 %v509, %v508
  %v612 = vpack.c.b16 %v511, %v510
  %v613 = vpack.c.b16 %v513, %v512
  %v614 = vpack.c.b16 %v515, %v514
  %v615 = vpack.c.b16 %v517, %v516
  %v616 = vpack.c.b16 %v519, %v518
  %v617 = vpack.c.b16 %v521, %v520
  %v618 = vpack.c.b16 %v523, %v522
  %v619 = vpack.c.b16 %v525, %v524
  %v620 = vpack.c.b16 %v527, %v526
  %v621 = vpack.c.b16 %v529, %v528
  %v622 = vpack.c.b16 %v531, %v530
  %v623 = vpack.c.b16 %v533, %v532
  %v624 = vpack.c.b16 %v535, %v534
  %v625 = vpack.c.b16 %v537, %v536
  %v626 = vpack.c.b16 %v539, %v538
  %v627 = vpack.c.b16 %v541, %v540
  %v628 = vpack.c.b16 %v543, %v542
  %v629 = vpack.c.b16 %v545, %v544
  %v630 = vpack.c.b16 %v547, %v546
  %v631 = vpack.c.b16 %v549, %v548
  %v632 = vpack.c.b16 %v551, %v550
  %v633 = vpack.c.b16 %v553, %v552
  %v634 = vpack.c.b16 %v555, %v554
  %v635 = vpack.c.b16 %v557, %v556
  %v636 = vpack.c.b16 %v559, %v558
  %v637 = vpack.c.b16 %v561, %v560
  %v638 = vpack.c.b16 %v563, %v562
  %v639 = vpack.c.b16 %v565, %v564
  %v640 = vpack.c.b16 %v567, %v566
  %v641 = vpack.c.b16 %v569, %v568
  %714 = vmatpush.bf16.msra.mxu0 %v577
  %715 = vmatpush.bf16.msra.mxu0 %v576
  %716 = vmatpush.bf16.msra.mxu0 %v575
  %717 = vmatpush.bf16.msra.mxu0 %v574
  %718 = vmatpush.bf16.msra.mxu0 %v573
  %719 = vmatpush.bf16.msra.mxu0 %v572
  %720 = vmatpush.bf16.msra.mxu0 %v571
  %721 = vmatpush.bf16.msra.mxu0 %v570
  %722 = vmatmul.bf16.gmra.mxu0 %v246
  %v723 = vpop.f32.mrf.mxu0
  %v724 = vadd.f32 %v188, %v723
  %v725 = vpop.f32.mrf.mxu0
  %v726 = vadd.f32 %v188, %v725
  %727 = vmatmul.bf16.gmra.mxu0 %v255
  %v728 = vpop.f32.mrf.mxu0
  %v729 = vadd.f32 %v188, %v728
  %v730 = vpop.f32.mrf.mxu0
  %v731 = vadd.f32 %v188, %v730
  %732 = vdwg.mxu0
  %733 = vmatpush.bf16.msra.mxu0 %v585
  %734 = vmatpush.bf16.msra.mxu0 %v584
  %735 = vmatpush.bf16.msra.mxu0 %v583
  %736 = vmatpush.bf16.msra.mxu0 %v582
  %737 = vmatpush.bf16.msra.mxu0 %v581
  %738 = vmatpush.bf16.msra.mxu0 %v580
  %739 = vmatpush.bf16.msra.mxu0 %v579
  %740 = vmatpush.bf16.msra.mxu0 %v578
  %741 = vmatmul.bf16.gmra.mxu0 %v247
  %v742 = vpop.f32.mrf.mxu0
  %v743 = vadd.f32 %v724, %v742
  %v744 = vpop.f32.mrf.mxu0
  %v745 = vadd.f32 %v726, %v744
  %746 = vmatmul.bf16.gmra.mxu0 %v256
  %v747 = vpop.f32.mrf.mxu0
  %v748 = vadd.f32 %v729, %v747
  %v749 = vpop.f32.mrf.mxu0
  %v750 = vadd.f32 %v731, %v749
  %751 = vdwg.mxu0
  %752 = vmatpush.bf16.msra.mxu0 %v593
  %753 = vmatpush.bf16.msra.mxu0 %v592
  %754 = vmatpush.bf16.msra.mxu0 %v591
  %755 = vmatpush.bf16.msra.mxu0 %v590
  %756 = vmatpush.bf16.msra.mxu0 %v589
  %757 = vmatpush.bf16.msra.mxu0 %v588
  %758 = vmatpush.bf16.msra.mxu0 %v587
  %759 = vmatpush.bf16.msra.mxu0 %v586
  %760 = vmatmul.bf16.gmra.mxu0 %v248
  %v761 = vpop.f32.mrf.mxu0
  %v762 = vadd.f32 %v743, %v761
  %v763 = vpop.f32.mrf.mxu0
  %v764 = vadd.f32 %v745, %v763
  %765 = vmatmul.bf16.gmra.mxu0 %v257
  %v766 = vpop.f32.mrf.mxu0
  %v767 = vadd.f32 %v748, %v766
  %v768 = vpop.f32.mrf.mxu0
  %v769 = vadd.f32 %v750, %v768
  %770 = vdwg.mxu0
  %771 = vmatpush.bf16.msra.mxu0 %v601
  %772 = vmatpush.bf16.msra.mxu0 %v600
  %773 = vmatpush.bf16.msra.mxu0 %v599
  %774 = vmatpush.bf16.msra.mxu0 %v598
  %775 = vmatpush.bf16.msra.mxu0 %v597
  %776 = vmatpush.bf16.msra.mxu0 %v596
  %777 = vmatpush.bf16.msra.mxu0 %v595
  %778 = vmatpush.bf16.msra.mxu0 %v594
  %779 = vmatmul.bf16.gmra.mxu0 %v249
  %v780 = vpop.f32.mrf.mxu0
  %v781 = vadd.f32 %v762, %v780
  %v782 = vpop.f32.mrf.mxu0
  %v783 = vadd.f32 %v764, %v782
  %784 = vmatmul.bf16.gmra.mxu0 %v258
  %v785 = vpop.f32.mrf.mxu0
  %v786 = vadd.f32 %v767, %v785
  %v787 = vpop.f32.mrf.mxu0
  %v788 = vadd.f32 %v769, %v787
  %789 = vdwg.mxu0
  %790 = vmatpush.bf16.msra.mxu0 %v609
  %791 = vmatpush.bf16.msra.mxu0 %v608
  %792 = vmatpush.bf16.msra.mxu0 %v607
  %793 = vmatpush.bf16.msra.mxu0 %v606
  %794 = vmatpush.bf16.msra.mxu0 %v605
  %795 = vmatpush.bf16.msra.mxu0 %v604
  %796 = vmatpush.bf16.msra.mxu0 %v603
  %797 = vmatpush.bf16.msra.mxu0 %v602
  %798 = vmatmul.bf16.gmra.mxu0 %v250
  %v799 = vpop.f32.mrf.mxu0
  %v800 = vadd.f32 %v781, %v799
  %v801 = vpop.f32.mrf.mxu0
  %v802 = vadd.f32 %v783, %v801
  %803 = vmatmul.bf16.gmra.mxu0 %v259
  %v804 = vpop.f32.mrf.mxu0
  %v805 = vadd.f32 %v786, %v804
  %v806 = vpop.f32.mrf.mxu0
  %v807 = vadd.f32 %v788, %v806
  %808 = vdwg.mxu0
  %809 = vmatpush.bf16.msra.mxu0 %v617
  %810 = vmatpush.bf16.msra.mxu0 %v616
  %811 = vmatpush.bf16.msra.mxu0 %v615
  %812 = vmatpush.bf16.msra.mxu0 %v614
  %813 = vmatpush.bf16.msra.mxu0 %v613
  %814 = vmatpush.bf16.msra.mxu0 %v612
  %815 = vmatpush.bf16.msra.mxu0 %v611
  %816 = vmatpush.bf16.msra.mxu0 %v610
  %817 = vmatmul.bf16.gmra.mxu0 %v251
  %v818 = vpop.f32.mrf.mxu0
  %v819 = vadd.f32 %v800, %v818
  %v820 = vpop.f32.mrf.mxu0
  %v821 = vadd.f32 %v802, %v820
  %822 = vmatmul.bf16.gmra.mxu0 %v260
  %v823 = vpop.f32.mrf.mxu0
  %v824 = vadd.f32 %v805, %v823
  %v825 = vpop.f32.mrf.mxu0
  %v826 = vadd.f32 %v807, %v825
  %827 = vdwg.mxu0
  %828 = vmatpush.bf16.msra.mxu0 %v625
  %829 = vmatpush.bf16.msra.mxu0 %v624
  %830 = vmatpush.bf16.msra.mxu0 %v623
  %831 = vmatpush.bf16.msra.mxu0 %v622
  %832 = vmatpush.bf16.msra.mxu0 %v621
  %833 = vmatpush.bf16.msra.mxu0 %v620
  %834 = vmatpush.bf16.msra.mxu0 %v619
  %835 = vmatpush.bf16.msra.mxu0 %v618
  %836 = vmatmul.bf16.gmra.mxu0 %v252
  %v837 = vpop.f32.mrf.mxu0
  %v838 = vadd.f32 %v819, %v837
  %v839 = vpop.f32.mrf.mxu0
  %v840 = vadd.f32 %v821, %v839
  %841 = vmatmul.bf16.gmra.mxu0 %v261
  %v842 = vpop.f32.mrf.mxu0
  %v843 = vadd.f32 %v824, %v842
  %v844 = vpop.f32.mrf.mxu0
  %v845 = vadd.f32 %v826, %v844
  %846 = vdwg.mxu0
  %847 = vmatpush.bf16.msra.mxu0 %v633
  %848 = vmatpush.bf16.msra.mxu0 %v632
  %849 = vmatpush.bf16.msra.mxu0 %v631
  %850 = vmatpush.bf16.msra.mxu0 %v630
  %851 = vmatpush.bf16.msra.mxu0 %v629
  %852 = vmatpush.bf16.msra.mxu0 %v628
  %853 = vmatpush.bf16.msra.mxu0 %v627
  %854 = vmatpush.bf16.msra.mxu0 %v626
  %855 = vmatmul.bf16.gmra.mxu0 %v253
  %v856 = vpop.f32.mrf.mxu0
  %v857 = vadd.f32 %v838, %v856
  %v858 = vpop.f32.mrf.mxu0
  %v859 = vadd.f32 %v840, %v858
  %860 = vmatmul.bf16.gmra.mxu0 %v262
  %v861 = vpop.f32.mrf.mxu0
  %v862 = vadd.f32 %v843, %v861
  %v863 = vpop.f32.mrf.mxu0
  %v864 = vadd.f32 %v845, %v863
  %865 = vdwg.mxu0
  %866 = vmatpush.bf16.msra.mxu0 %v641
  %867 = vmatpush.bf16.msra.mxu0 %v640
  %868 = vmatpush.bf16.msra.mxu0 %v639
  %869 = vmatpush.bf16.msra.mxu0 %v638
  %870 = vmatpush.bf16.msra.mxu0 %v637
  %871 = vmatpush.bf16.msra.mxu0 %v636
  %872 = vmatpush.bf16.msra.mxu0 %v635
  %873 = vmatpush.bf16.msra.mxu0 %v634
  %874 = vmatmul.bf16.gmra.mxu0 %v254
  %v875 = vpop.f32.mrf.mxu0
  %v876 = vadd.f32 %v857, %v875
  %v877 = vpop.f32.mrf.mxu0
  %v878 = vadd.f32 %v859, %v877
  %879 = vmatmul.bf16.gmra.mxu0 %v263
  %v880 = vpop.f32.mrf.mxu0
  %v881 = vadd.f32 %v862, %v880
  %v882 = vpop.f32.mrf.mxu0
  %v883 = vadd.f32 %v864, %v882
  %884 = vdwg.mxu0
  %v885 = vmax.f32 %v876, 0.0
  %v886 = vmax.f32 %v878, 0.0
  %v887 = vmax.f32 %v881, 0.0
  %v888 = vmax.f32 %v883, 0.0
  %889 = vst [vmem:[%s5] sm:$0xff] %v885
  %890 = vst [vmem:[%s5 + $0x8] sm:$0xff] %v886
  %891 = vst [vmem:[%s5 + $0x10] sm:$0xff] %v887
  %892 = vst [vmem:[%s5 + $0x18] sm:$0xff] %v888
  %v893 = vld [vmem:[%s3] sm:$0xf]
  %v894 = vld [vmem:[%s3 + $0x4] sm:$0xf]
  %v895 = vld [vmem:[%s3 + $0x8] sm:$0xf]
  %v896 = vld [vmem:[%s3 + $0xc] sm:$0xf]
  %v897 = vld [vmem:[%s3 + $0x10] sm:$0xf]
  %v898 = vld [vmem:[%s3 + $0x14] sm:$0xf]
  %v899 = vld [vmem:[%s3 + $0x18] sm:$0xf]
  %v900 = vld [vmem:[%s3 + $0x1c] sm:$0xf]
  %v901 = vld [vmem:[%s3 + $0x20] sm:$0xf]
  %v902 = vld [vmem:[%s3 + $0x24] sm:$0xf]
  %v903 = vld [vmem:[%s3 + $0x28] sm:$0xf]
  %v904 = vld [vmem:[%s3 + $0x2c] sm:$0xf]
  %v905 = vld [vmem:[%s3 + $0x30] sm:$0xf]
  %v906 = vld [vmem:[%s3 + $0x34] sm:$0xf]
  %v907 = vld [vmem:[%s3 + $0x38] sm:$0xf]
  %v908 = vld [vmem:[%s3 + $0x3c] sm:$0xf]
  %v909 = vld [vmem:[%s4] sm:$0x1]
  %v911 = vperm.slane %v909, 0
  %v929 = vunpack.c.l.b16 %v893
  %v930 = vunpack.c.l.b16 %v894
  %v931 = vunpack.c.l.b16 %v895
  %v932 = vunpack.c.l.b16 %v896
  %v933 = vunpack.c.l.b16 %v897
  %v934 = vunpack.c.l.b16 %v898
  %v935 = vunpack.c.l.b16 %v899
  %v936 = vunpack.c.l.b16 %v900
  %v937 = vunpack.c.l.b16 %v901
  %v938 = vunpack.c.l.b16 %v902
  %v939 = vunpack.c.l.b16 %v903
  %v940 = vunpack.c.l.b16 %v904
  %v941 = vunpack.c.l.b16 %v905
  %v942 = vunpack.c.l.b16 %v906
  %v943 = vunpack.c.l.b16 %v907
  %v944 = vunpack.c.l.b16 %v908
  %v945 = vpack.c.b16 %v930, %v929
  %v946 = vpack.c.b16 %v932, %v931
  %v947 = vpack.c.b16 %v934, %v933
  %v948 = vpack.c.b16 %v936, %v935
  %v949 = vpack.c.b16 %v938, %v937
  %v950 = vpack.c.b16 %v940, %v939
  %v951 = vpack.c.b16 %v942, %v941
  %v952 = vpack.c.b16 %v944, %v943
  %961 = vmatpush.bf16.msra.mxu0 %v952
  %962 = vmatpush.bf16.msra.mxu0 %v951
  %963 = vmatpush.bf16.msra.mxu0 %v950
  %964 = vmatpush.bf16.msra.mxu0 %v949
  %965 = vmatpush.bf16.msra.mxu0 %v948
  %966 = vmatpush.bf16.msra.mxu0 %v947
  %967 = vmatpush.bf16.msra.mxu0 %v946
  %968 = vmatpush.bf16.msra.mxu0 %v945
  %969 = vmatmul.bf16.gmra.mxu0 %v250
  %v970 = vpop.f32.mrf.mxu0
  %v971 = vadd.f32 %v911, %v970
  %v972 = vpop.f32.mrf.mxu0
  %v973 = vadd.f32 %v911, %v972
  %974 = vmatmul.bf16.gmra.mxu0 %v259
  %v975 = vpop.f32.mrf.mxu0
  %v976 = vadd.f32 %v911, %v975
  %v977 = vpop.f32.mrf.mxu0
  %v978 = vadd.f32 %v911, %v977
  %979 = vdwg.mxu0
  %980 = vst [vmem:[%s6] sm:$0xff] %v971
  %981 = vst [vmem:[%s6 + $0x8] sm:$0xff] %v973
  %982 = vst [vmem:[%s6 + $0x10] sm:$0xff] %v976
  %983 = vst [vmem:[%s6 + $0x18] sm:$0xff] %v978
  // Predicated region
  $region22: #{_lambda_.12} parent=0 // pred_check
    _
  $region23: #{_lambda_.12} parent=0 // pred_check_branch
    %985 = sbr.rel (0) target = $region25
  $region24: #{_lambda_.12} parent=0 // pred_region
    _
  $region25: #{_lambda_.12} parent=0 // pred_fallthru
    _
  // Predicated region
  $region26: #{_lambda_.12} parent=0 // pred_check
    _
  $region27: #{_lambda_.12} parent=0 // pred_check_branch
    %987 = sbr.rel (0) target = $region29
  $region28: #{_lambda_.12} parent=0 // pred_region
    _
  $region29: #{_lambda_.12} parent=0 // pred_fallthru
    _
  // Predicated region
  $region30: #{_lambda_.12} parent=0 // pred_check
    _
  $region31: #{_lambda_.12} parent=0 // pred_check_branch
    %989 = sbr.rel (0) target = $region33
  $region32: #{_lambda_.12} parent=0 // pred_region
    _
  $region33: #{_lambda_.12} parent=0 // pred_fallthru
    _
  // Predicated region
  $region34: #{_lambda_.12} parent=0 // pred_check
    _
  $region35: #{_lambda_.12} parent=0 // pred_check_branch
    %991 = sbr.rel (0) target = $region37
  $region36: #{_lambda_.12} parent=0 // pred_region
    _
  $region37: #{_lambda_.12} parent=0 // pred_fallthru
    _

// kernel: _lambda_.13
$region0: #{_lambda_.13}
  #allocation0 [shape = 'u32[]', space=smem, size = 0x4, offset = 0x4, fixed_abs, tag = 'smem constant byte address 0x4 - core index']
  #allocation1 [shape = 'u32[72,128]{1,0:T(1,128)}', space=vmem, size = 0x9000, scoped, tag = 'internal scratch']
  %s0 = inlined_call_operand.vmem [shape: bf16[32,1152], index: 0, kind: input, shape index: {}]
  %s1 = inlined_call_operand.vmem [shape: bf16[1152,128], index: 1, kind: input, shape index: {}]
  %s2 = inlined_call_operand.vmem [shape: f32[1,128], index: 2, kind: input, shape index: {}]
  %s3 = inlined_call_operand.vmem [shape: f32[32,128], index: 3, kind: input, shape index: {}]
  %s4 = inlined_call_operand.vmem [shape: f32[32,128], index: 4, kind: output, shape index: {}]
  %s5 = sld [smem:[#allocation0]]
  $region26: #{_lambda_.13} parent=0
    _
  %s7 = ssub.s32 1, %s5
  %s8 = scalar_select 0, %s7, %s5
  // Predicated region
  $region2: #{_lambda_.13} parent=0 // pred_check
    _
  $region3: #{_lambda_.13} parent=0 // pred_check_branch
    %10 = sbr.rel (0) target = $region5
  $region4: #{_lambda_.13} parent=0 // pred_region
    _
  $region5: #{_lambda_.13} parent=0 // pred_fallthru
    _
  // Predicated region
  $region6: #{_lambda_.13} parent=0 // pred_check
    _
  $region7: #{_lambda_.13} parent=0 // pred_check_branch
    %12 = sbr.rel (0) target = $region9
  $region8: #{_lambda_.13} parent=0 // pred_region
    _
  $region9: #{_lambda_.13} parent=0 // pred_fallthru
    _
  // Predicated region
  $region10: #{_lambda_.13} parent=0 // pred_check
    _
  $region11: #{_lambda_.13} parent=0 // pred_check_branch
    %14 = sbr.rel (0) target = $region13
  $region12: #{_lambda_.13} parent=0 // pred_region
    _
  $region13: #{_lambda_.13} parent=0 // pred_fallthru
    _
  // Predicated region
  $region14: #{_lambda_.13} parent=0 // pred_check
    _
  $region15: #{_lambda_.13} parent=0 // pred_check_branch
    %16 = sbr.rel (0) target = $region17
  $region16: #{_lambda_.13} parent=0 // pred_region
    _
  $region17: #{_lambda_.13} parent=0 // pred_fallthru
    _
  %v17 = vld [vmem:[%s0] sm:$0xff]
  %v18 = vld [vmem:[%s0 + $0x8] sm:$0xff]
  %v19 = vld [vmem:[%s0 + $0x10] sm:$0xff]
  %v20 = vld [vmem:[%s0 + $0x18] sm:$0xff]
  %v21 = vld [vmem:[%s0 + $0x20] sm:$0xf]
  %v22 = vld [vmem:[%s0 + $0x24] sm:$0xff]
  %v23 = vld [vmem:[%s0 + $0x2c] sm:$0xff]
  %v24 = vld [vmem:[%s0 + $0x34] sm:$0xff]
  %v25 = vld [vmem:[%s0 + $0x3c] sm:$0xff]
  %v26 = vld [vmem:[%s0 + $0x44] sm:$0xf]
  %v27 = vld [vmem:[%s0 + $0x48] sm:$0xff]
  %v28 = vld [vmem:[%s0 + $0x50] sm:$0xff]
  %v29 = vld [vmem:[%s0 + $0x58] sm:$0xff]
  %v30 = vld [vmem:[%s0 + $0x60] sm:$0xff]
  %v31 = vld [vmem:[%s0 + $0x68] sm:$0xf]
  %v32 = vld [vmem:[%s0 + $0x6c] sm:$0xff]
  %v33 = vld [vmem:[%s0 + $0x74] sm:$0xff]
  %v34 = vld [vmem:[%s0 + $0x7c] sm:$0xff]
  %v35 = vld [vmem:[%s0 + $0x84] sm:$0xff]
  %v36 = vld [vmem:[%s0 + $0x8c] sm:$0xf]
  %v37 = vld [vmem:[%s1] sm:$0xf]
  %v38 = vld [vmem:[%s1 + $0x4] sm:$0xf]
  %v39 = vld [vmem:[%s1 + $0x8] sm:$0xf]
  %v40 = vld [vmem:[%s1 + $0xc] sm:$0xf]
  %v41 = vld [vmem:[%s1 + $0x10] sm:$0xf]
  %v42 = vld [vmem:[%s1 + $0x14] sm:$0xf]
  %v43 = vld [vmem:[%s1 + $0x18] sm:$0xf]
  %v44 = vld [vmem:[%s1 + $0x1c] sm:$0xf]
  %v45 = vld [vmem:[%s1 + $0x20] sm:$0xf]
  %v46 = vld [vmem:[%s1 + $0x24] sm:$0xf]
  %v47 = vld [vmem:[%s1 + $0x28] sm:$0xf]
  %v48 = vld [vmem:[%s1 + $0x2c] sm:$0xf]
  %v49 = vld [vmem:[%s1 + $0x30] sm:$0xf]
  %v50 = vld [vmem:[%s1 + $0x34] sm:$0xf]
  %v51 = vld [vmem:[%s1 + $0x38] sm:$0xf]
  %v52 = vld [vmem:[%s1 + $0x3c] sm:$0xf]
  %v53 = vld [vmem:[%s1 + $0x40] sm:$0xf]
  %v54 = vld [vmem:[%s1 + $0x44] sm:$0xf]
  %v55 = vld [vmem:[%s1 + $0x48] sm:$0xf]
  %v56 = vld [vmem:[%s1 + $0x4c] sm:$0xf]
  %v57 = vld [vmem:[%s1 + $0x50] sm:$0xf]
  %v58 = vld [vmem:[%s1 + $0x54] sm:$0xf]
  %v59 = vld [vmem:[%s1 + $0x58] sm:$0xf]
  %v60 = vld [vmem:[%s1 + $0x5c] sm:$0xf]
  %v61 = vld [vmem:[%s1 + $0x60] sm:$0xf]
  %v62 = vld [vmem:[%s1 + $0x64] sm:$0xf]
  %v63 = vld [vmem:[%s1 + $0x68] sm:$0xf]
  %v64 = vld [vmem:[%s1 + $0x6c] sm:$0xf]
  %v65 = vld [vmem:[%s1 + $0x70] sm:$0xf]
  %v66 = vld [vmem:[%s1 + $0x74] sm:$0xf]
  %v67 = vld [vmem:[%s1 + $0x78] sm:$0xf]
  %v68 = vld [vmem:[%s1 + $0x7c] sm:$0xf]
  %v69 = vld [vmem:[%s1 + $0x80] sm:$0xf]
  %v70 = vld [vmem:[%s1 + $0x84] sm:$0xf]
  %v71 = vld [vmem:[%s1 + $0x88] sm:$0xf]
  %v72 = vld [vmem:[%s1 + $0x8c] sm:$0xf]
  %v73 = vld [vmem:[%s1 + $0x90] sm:$0xf]
  %v74 = vld [vmem:[%s1 + $0x94] sm:$0xf]
  %v75 = vld [vmem:[%s1 + $0x98] sm:$0xf]
  %v76 = vld [vmem:[%s1 + $0x9c] sm:$0xf]
  %v77 = vld [vmem:[%s1 + $0xa0] sm:$0xf]
  %v78 = vld [vmem:[%s1 + $0xa4] sm:$0xf]
  %v79 = vld [vmem:[%s1 + $0xa8] sm:$0xf]
  %v80 = vld [vmem:[%s1 + $0xac] sm:$0xf]
  %v81 = vld [vmem:[%s1 + $0xb0] sm:$0xf]
  %v82 = vld [vmem:[%s1 + $0xb4] sm:$0xf]
  %v83 = vld [vmem:[%s1 + $0xb8] sm:$0xf]
  %v84 = vld [vmem:[%s1 + $0xbc] sm:$0xf]
  %v85 = vld [vmem:[%s1 + $0xc0] sm:$0xf]
  %v86 = vld [vmem:[%s1 + $0xc4] sm:$0xf]
  %v87 = vld [vmem:[%s1 + $0xc8] sm:$0xf]
  %v88 = vld [vmem:[%s1 + $0xcc] sm:$0xf]
  %v89 = vld [vmem:[%s1 + $0xd0] sm:$0xf]
  %v90 = vld [vmem:[%s1 + $0xd4] sm:$0xf]
  %v91 = vld [vmem:[%s1 + $0xd8] sm:$0xf]
  %v92 = vld [vmem:[%s1 + $0xdc] sm:$0xf]
  %v93 = vld [vmem:[%s1 + $0xe0] sm:$0xf]
  %v94 = vld [vmem:[%s1 + $0xe4] sm:$0xf]
  %v95 = vld [vmem:[%s1 + $0xe8] sm:$0xf]
  %v96 = vld [vmem:[%s1 + $0xec] sm:$0xf]
  %v97 = vld [vmem:[%s1 + $0xf0] sm:$0xf]
  %v98 = vld [vmem:[%s1 + $0xf4] sm:$0xf]
  %v99 = vld [vmem:[%s1 + $0xf8] sm:$0xf]
  %v100 = vld [vmem:[%s1 + $0xfc] sm:$0xf]
  %v101 = vld [vmem:[%s1 + $0x100] sm:$0xf]
  %v102 = vld [vmem:[%s1 + $0x104] sm:$0xf]
  %v103 = vld [vmem:[%s1 + $0x108] sm:$0xf]
  %v104 = vld [vmem:[%s1 + $0x10c] sm:$0xf]
  %v105 = vld [vmem:[%s1 + $0x110] sm:$0xf]
  %v106 = vld [vmem:[%s1 + $0x114] sm:$0xf]
  %v107 = vld [vmem:[%s1 + $0x118] sm:$0xf]
  %v108 = vld [vmem:[%s1 + $0x11c] sm:$0xf]
  %v109 = vld [vmem:[%s1 + $0x120] sm:$0xf]
  %v110 = vld [vmem:[%s1 + $0x124] sm:$0xf]
  %v111 = vld [vmem:[%s1 + $0x128] sm:$0xf]
  %v112 = vld [vmem:[%s1 + $0x12c] sm:$0xf]
  %v113 = vld [vmem:[%s1 + $0x130] sm:$0xf]
  %v114 = vld [vmem:[%s1 + $0x134] sm:$0xf]
  %v115 = vld [vmem:[%s1 + $0x138] sm:$0xf]
  %v116 = vld [vmem:[%s1 + $0x13c] sm:$0xf]
  %v117 = vld [vmem:[%s1 + $0x140] sm:$0xf]
  %v118 = vld [vmem:[%s1 + $0x144] sm:$0xf]
  %v119 = vld [vmem:[%s1 + $0x148] sm:$0xf]
  %v120 = vld [vmem:[%s1 + $0x14c] sm:$0xf]
  %v121 = vld [vmem:[%s1 + $0x150] sm:$0xf]
  %v122 = vld [vmem:[%s1 + $0x154] sm:$0xf]
  %v123 = vld [vmem:[%s1 + $0x158] sm:$0xf]
  %v124 = vld [vmem:[%s1 + $0x15c] sm:$0xf]
  %v125 = vld [vmem:[%s1 + $0x160] sm:$0xf]
  %v126 = vld [vmem:[%s1 + $0x164] sm:$0xf]
  %v127 = vld [vmem:[%s1 + $0x168] sm:$0xf]
  %v128 = vld [vmem:[%s1 + $0x16c] sm:$0xf]
  %v129 = vld [vmem:[%s1 + $0x170] sm:$0xf]
  %v130 = vld [vmem:[%s1 + $0x174] sm:$0xf]
  %v131 = vld [vmem:[%s1 + $0x178] sm:$0xf]
  %v132 = vld [vmem:[%s1 + $0x17c] sm:$0xf]
  %v133 = vld [vmem:[%s1 + $0x180] sm:$0xf]
  %v134 = vld [vmem:[%s1 + $0x184] sm:$0xf]
  %v135 = vld [vmem:[%s1 + $0x188] sm:$0xf]
  %v136 = vld [vmem:[%s1 + $0x18c] sm:$0xf]
  %v137 = vld [vmem:[%s1 + $0x190] sm:$0xf]
  %v138 = vld [vmem:[%s1 + $0x194] sm:$0xf]
  %v139 = vld [vmem:[%s1 + $0x198] sm:$0xf]
  %v140 = vld [vmem:[%s1 + $0x19c] sm:$0xf]
  %v141 = vld [vmem:[%s1 + $0x1a0] sm:$0xf]
  %v142 = vld [vmem:[%s1 + $0x1a4] sm:$0xf]
  %v143 = vld [vmem:[%s1 + $0x1a8] sm:$0xf]
  %v144 = vld [vmem:[%s1 + $0x1ac] sm:$0xf]
  %v145 = vld [vmem:[%s1 + $0x1b0] sm:$0xf]
  %v146 = vld [vmem:[%s1 + $0x1b4] sm:$0xf]
  %v147 = vld [vmem:[%s1 + $0x1b8] sm:$0xf]
  %v148 = vld [vmem:[%s1 + $0x1bc] sm:$0xf]
  %v149 = vld [vmem:[%s1 + $0x1c0] sm:$0xf]
  %v150 = vld [vmem:[%s1 + $0x1c4] sm:$0xf]
  %v151 = vld [vmem:[%s1 + $0x1c8] sm:$0xf]
  %v152 = vld [vmem:[%s1 + $0x1cc] sm:$0xf]
  %v153 = vld [vmem:[%s1 + $0x1d0] sm:$0xf]
  %v154 = vld [vmem:[%s1 + $0x1d4] sm:$0xf]
  %v155 = vld [vmem:[%s1 + $0x1d8] sm:$0xf]
  %v156 = vld [vmem:[%s1 + $0x1dc] sm:$0xf]
  %v157 = vld [vmem:[%s1 + $0x1e0] sm:$0xf]
  %v158 = vld [vmem:[%s1 + $0x1e4] sm:$0xf]
  %v159 = vld [vmem:[%s1 + $0x1e8] sm:$0xf]
  %v160 = vld [vmem:[%s1 + $0x1ec] sm:$0xf]
  %v161 = vld [vmem:[%s1 + $0x1f0] sm:$0xf]
  %v162 = vld [vmem:[%s1 + $0x1f4] sm:$0xf]
  %v163 = vld [vmem:[%s1 + $0x1f8] sm:$0xf]
  %v164 = vld [vmem:[%s1 + $0x1fc] sm:$0xf]
  %v165 = vld [vmem:[%s1 + $0x200] sm:$0xf]
  %v166 = vld [vmem:[%s1 + $0x204] sm:$0xf]
  %v167 = vld [vmem:[%s1 + $0x208] sm:$0xf]
  %v168 = vld [vmem:[%s1 + $0x20c] sm:$0xf]
  %v169 = vld [vmem:[%s1 + $0x210] sm:$0xf]
  %v170 = vld [vmem:[%s1 + $0x214] sm:$0xf]
  %v171 = vld [vmem:[%s1 + $0x218] sm:$0xf]
  %v172 = vld [vmem:[%s1 + $0x21c] sm:$0xf]
  %v173 = vld [vmem:[%s1 + $0x220] sm:$0xf]
  %v174 = vld [vmem:[%s1 + $0x224] sm:$0xf]
  %v175 = vld [vmem:[%s1 + $0x228] sm:$0xf]
  %v176 = vld [vmem:[%s1 + $0x22c] sm:$0xf]
  %v177 = vld [vmem:[%s1 + $0x230] sm:$0xf]
  %v178 = vld [vmem:[%s1 + $0x234] sm:$0xf]
  %v179 = vld [vmem:[%s1 + $0x238] sm:$0xf]
  %v180 = vld [vmem:[%s1 + $0x23c] sm:$0xf]
  %v181 = vld [vmem:[%s2] sm:$0x1]
  %v183 = vperm.slane %v181, 0
  %v205 = vunpack.c.l.b16 %v17
  %v206 = vunpack.c.h.b16 %v17
  %v207 = vunpack.c.l.b16 %v18
  %v208 = vunpack.c.h.b16 %v18
  %v209 = vunpack.c.l.b16 %v19
  %v210 = vunpack.c.h.b16 %v19
  %v211 = vunpack.c.l.b16 %v20
  %v212 = vunpack.c.h.b16 %v20
  %v213 = vunpack.c.l.b16 %v21
  %v214 = vunpack.c.l.b16 %v22
  %v215 = vunpack.c.h.b16 %v22
  %v216 = vunpack.c.l.b16 %v23
  %v217 = vunpack.c.h.b16 %v23
  %v218 = vunpack.c.l.b16 %v24
  %v219 = vunpack.c.h.b16 %v24
  %v220 = vunpack.c.l.b16 %v25
  %v221 = vunpack.c.h.b16 %v25
  %v222 = vunpack.c.l.b16 %v26
  %v223 = vunpack.c.l.b16 %v27
  %v224 = vunpack.c.h.b16 %v27
  %v225 = vunpack.c.l.b16 %v28
  %v226 = vunpack.c.h.b16 %v28
  %v227 = vunpack.c.l.b16 %v29
  %v228 = vunpack.c.h.b16 %v29
  %v229 = vunpack.c.l.b16 %v30
  %v230 = vunpack.c.h.b16 %v30
  %v231 = vunpack.c.l.b16 %v31
  %v232 = vunpack.c.l.b16 %v32
  %v233 = vunpack.c.h.b16 %v32
  %v234 = vunpack.c.l.b16 %v33
  %v235 = vunpack.c.h.b16 %v33
  %v236 = vunpack.c.l.b16 %v34
  %v237 = vunpack.c.h.b16 %v34
  %v238 = vunpack.c.l.b16 %v35
  %v239 = vunpack.c.h.b16 %v35
  %v240 = vunpack.c.l.b16 %v36
  %v241 = vpack.c.b16 %v214, %v205
  %v242 = vpack.c.b16 %v215, %v206
  %v243 = vpack.c.b16 %v216, %v207
  %v244 = vpack.c.b16 %v217, %v208
  %v245 = vpack.c.b16 %v218, %v209
  %v246 = vpack.c.b16 %v219, %v210
  %v247 = vpack.c.b16 %v220, %v211
  %v248 = vpack.c.b16 %v221, %v212
  %v249 = vpack.c.b16 %v222, %v213
  %v250 = vpack.c.b16 %v232, %v223
  %v251 = vpack.c.b16 %v233, %v224
  %v252 = vpack.c.b16 %v234, %v225
  %v253 = vpack.c.b16 %v235, %v226
  %v254 = vpack.c.b16 %v236, %v227
  %v255 = vpack.c.b16 %v237, %v228
  %v256 = vpack.c.b16 %v238, %v229
  %v257 = vpack.c.b16 %v239, %v230
  %v258 = vpack.c.b16 %v240, %v231
  %v421 = vunpack.c.l.b16 %v37
  %v422 = vunpack.c.l.b16 %v38
  %v423 = vunpack.c.l.b16 %v39
  %v424 = vunpack.c.l.b16 %v40
  %v425 = vunpack.c.l.b16 %v41
  %v426 = vunpack.c.l.b16 %v42
  %v427 = vunpack.c.l.b16 %v43
  %v428 = vunpack.c.l.b16 %v44
  %v429 = vunpack.c.l.b16 %v45
  %v430 = vunpack.c.l.b16 %v46
  %v431 = vunpack.c.l.b16 %v47
  %v432 = vunpack.c.l.b16 %v48
  %v433 = vunpack.c.l.b16 %v49
  %v434 = vunpack.c.l.b16 %v50
  %v435 = vunpack.c.l.b16 %v51
  %v436 = vunpack.c.l.b16 %v52
  %v437 = vunpack.c.l.b16 %v53
  %v438 = vunpack.c.l.b16 %v54
  %v439 = vunpack.c.l.b16 %v55
  %v440 = vunpack.c.l.b16 %v56
  %v441 = vunpack.c.l.b16 %v57
  %v442 = vunpack.c.l.b16 %v58
  %v443 = vunpack.c.l.b16 %v59
  %v444 = vunpack.c.l.b16 %v60
  %v445 = vunpack.c.l.b16 %v61
  %v446 = vunpack.c.l.b16 %v62
  %v447 = vunpack.c.l.b16 %v63
  %v448 = vunpack.c.l.b16 %v64
  %v449 = vunpack.c.l.b16 %v65
  %v450 = vunpack.c.l.b16 %v66
  %v451 = vunpack.c.l.b16 %v67
  %v452 = vunpack.c.l.b16 %v68
  %v453 = vunpack.c.l.b16 %v69
  %v454 = vunpack.c.l.b16 %v70
  %v455 = vunpack.c.l.b16 %v71
  %v456 = vunpack.c.l.b16 %v72
  %v457 = vunpack.c.l.b16 %v73
  %v458 = vunpack.c.l.b16 %v74
  %v459 = vunpack.c.l.b16 %v75
  %v460 = vunpack.c.l.b16 %v76
  %v461 = vunpack.c.l.b16 %v77
  %v462 = vunpack.c.l.b16 %v78
  %v463 = vunpack.c.l.b16 %v79
  %v464 = vunpack.c.l.b16 %v80
  %v465 = vunpack.c.l.b16 %v81
  %v466 = vunpack.c.l.b16 %v82
  %v467 = vunpack.c.l.b16 %v83
  %v468 = vunpack.c.l.b16 %v84
  %v469 = vunpack.c.l.b16 %v85
  %v470 = vunpack.c.l.b16 %v86
  %v471 = vunpack.c.l.b16 %v87
  %v472 = vunpack.c.l.b16 %v88
  %v473 = vunpack.c.l.b16 %v89
  %v474 = vunpack.c.l.b16 %v90
  %v475 = vunpack.c.l.b16 %v91
  %v476 = vunpack.c.l.b16 %v92
  %v477 = vunpack.c.l.b16 %v93
  %v478 = vunpack.c.l.b16 %v94
  %v479 = vunpack.c.l.b16 %v95
  %v480 = vunpack.c.l.b16 %v96
  %v481 = vunpack.c.l.b16 %v97
  %v482 = vunpack.c.l.b16 %v98
  %v483 = vunpack.c.l.b16 %v99
  %v484 = vunpack.c.l.b16 %v100
  %v485 = vunpack.c.l.b16 %v101
  %v486 = vunpack.c.l.b16 %v102
  %v487 = vunpack.c.l.b16 %v103
  %v488 = vunpack.c.l.b16 %v104
  %v489 = vunpack.c.l.b16 %v105
  %v490 = vunpack.c.l.b16 %v106
  %v491 = vunpack.c.l.b16 %v107
  %v492 = vunpack.c.l.b16 %v108
  %v493 = vunpack.c.l.b16 %v109
  %v494 = vunpack.c.l.b16 %v110
  %v495 = vunpack.c.l.b16 %v111
  %v496 = vunpack.c.l.b16 %v112
  %v497 = vunpack.c.l.b16 %v113
  %v498 = vunpack.c.l.b16 %v114
  %v499 = vunpack.c.l.b16 %v115
  %v500 = vunpack.c.l.b16 %v116
  %v501 = vunpack.c.l.b16 %v117
  %v502 = vunpack.c.l.b16 %v118
  %v503 = vunpack.c.l.b16 %v119
  %v504 = vunpack.c.l.b16 %v120
  %v505 = vunpack.c.l.b16 %v121
  %v506 = vunpack.c.l.b16 %v122
  %v507 = vunpack.c.l.b16 %v123
  %v508 = vunpack.c.l.b16 %v124
  %v509 = vunpack.c.l.b16 %v125
  %v510 = vunpack.c.l.b16 %v126
  %v511 = vunpack.c.l.b16 %v127
  %v512 = vunpack.c.l.b16 %v128
  %v513 = vunpack.c.l.b16 %v129
  %v514 = vunpack.c.l.b16 %v130
  %v515 = vunpack.c.l.b16 %v131
  %v516 = vunpack.c.l.b16 %v132
  %v517 = vunpack.c.l.b16 %v133
  %v518 = vunpack.c.l.b16 %v134
  %v519 = vunpack.c.l.b16 %v135
  %v520 = vunpack.c.l.b16 %v136
  %v521 = vunpack.c.l.b16 %v137
  %v522 = vunpack.c.l.b16 %v138
  %v523 = vunpack.c.l.b16 %v139
  %v524 = vunpack.c.l.b16 %v140
  %v525 = vunpack.c.l.b16 %v141
  %v526 = vunpack.c.l.b16 %v142
  %v527 = vunpack.c.l.b16 %v143
  %v528 = vunpack.c.l.b16 %v144
  %v529 = vunpack.c.l.b16 %v145
  %v530 = vunpack.c.l.b16 %v146
  %v531 = vunpack.c.l.b16 %v147
  %v532 = vunpack.c.l.b16 %v148
  %v533 = vunpack.c.l.b16 %v149
  %v534 = vunpack.c.l.b16 %v150
  %v535 = vunpack.c.l.b16 %v151
  %v536 = vunpack.c.l.b16 %v152
  %v537 = vunpack.c.l.b16 %v153
  %v538 = vunpack.c.l.b16 %v154
  %v539 = vunpack.c.l.b16 %v155
  %v540 = vunpack.c.l.b16 %v156
  %v541 = vunpack.c.l.b16 %v157
  %v542 = vunpack.c.l.b16 %v158
  %v543 = vunpack.c.l.b16 %v159
  %v544 = vunpack.c.l.b16 %v160
  %v545 = vunpack.c.l.b16 %v161
  %v546 = vunpack.c.l.b16 %v162
  %v547 = vunpack.c.l.b16 %v163
  %v548 = vunpack.c.l.b16 %v164
  %v549 = vunpack.c.l.b16 %v165
  %v550 = vunpack.c.l.b16 %v166
  %v551 = vunpack.c.l.b16 %v167
  %v552 = vunpack.c.l.b16 %v168
  %v553 = vunpack.c.l.b16 %v169
  %v554 = vunpack.c.l.b16 %v170
  %v555 = vunpack.c.l.b16 %v171
  %v556 = vunpack.c.l.b16 %v172
  %v557 = vunpack.c.l.b16 %v173
  %v558 = vunpack.c.l.b16 %v174
  %v559 = vunpack.c.l.b16 %v175
  %v560 = vunpack.c.l.b16 %v176
  %v561 = vunpack.c.l.b16 %v177
  %v562 = vunpack.c.l.b16 %v178
  %v563 = vunpack.c.l.b16 %v179
  %v564 = vunpack.c.l.b16 %v180
  %v565 = vpack.c.b16 %v422, %v421
  %v566 = vpack.c.b16 %v424, %v423
  %v567 = vpack.c.b16 %v426, %v425
  %v568 = vpack.c.b16 %v428, %v427
  %v569 = vpack.c.b16 %v430, %v429
  %v570 = vpack.c.b16 %v432, %v431
  %v571 = vpack.c.b16 %v434, %v433
  %v572 = vpack.c.b16 %v436, %v435
  %v573 = vpack.c.b16 %v438, %v437
  %v574 = vpack.c.b16 %v440, %v439
  %v575 = vpack.c.b16 %v442, %v441
  %v576 = vpack.c.b16 %v444, %v443
  %v577 = vpack.c.b16 %v446, %v445
  %v578 = vpack.c.b16 %v448, %v447
  %v579 = vpack.c.b16 %v450, %v449
  %v580 = vpack.c.b16 %v452, %v451
  %v581 = vpack.c.b16 %v454, %v453
  %v582 = vpack.c.b16 %v456, %v455
  %v583 = vpack.c.b16 %v458, %v457
  %v584 = vpack.c.b16 %v460, %v459
  %v585 = vpack.c.b16 %v462, %v461
  %v586 = vpack.c.b16 %v464, %v463
  %v587 = vpack.c.b16 %v466, %v465
  %v588 = vpack.c.b16 %v468, %v467
  %v589 = vpack.c.b16 %v470, %v469
  %v590 = vpack.c.b16 %v472, %v471
  %v591 = vpack.c.b16 %v474, %v473
  %v592 = vpack.c.b16 %v476, %v475
  %v593 = vpack.c.b16 %v478, %v477
  %v594 = vpack.c.b16 %v480, %v479
  %v595 = vpack.c.b16 %v482, %v481
  %v596 = vpack.c.b16 %v484, %v483
  %v597 = vpack.c.b16 %v486, %v485
  %v598 = vpack.c.b16 %v488, %v487
  %v599 = vpack.c.b16 %v490, %v489
  %v600 = vpack.c.b16 %v492, %v491
  %v601 = vpack.c.b16 %v494, %v493
  %v602 = vpack.c.b16 %v496, %v495
  %v603 = vpack.c.b16 %v498, %v497
  %v604 = vpack.c.b16 %v500, %v499
  %v605 = vpack.c.b16 %v502, %v501
  %v606 = vpack.c.b16 %v504, %v503
  %v607 = vpack.c.b16 %v506, %v505
  %v608 = vpack.c.b16 %v508, %v507
  %v609 = vpack.c.b16 %v510, %v509
  %v610 = vpack.c.b16 %v512, %v511
  %v611 = vpack.c.b16 %v514, %v513
  %v612 = vpack.c.b16 %v516, %v515
  %v613 = vpack.c.b16 %v518, %v517
  %v614 = vpack.c.b16 %v520, %v519
  %v615 = vpack.c.b16 %v522, %v521
  %v616 = vpack.c.b16 %v524, %v523
  %v617 = vpack.c.b16 %v526, %v525
  %v618 = vpack.c.b16 %v528, %v527
  %v619 = vpack.c.b16 %v530, %v529
  %v620 = vpack.c.b16 %v532, %v531
  %v621 = vpack.c.b16 %v534, %v533
  %v622 = vpack.c.b16 %v536, %v535
  %v623 = vpack.c.b16 %v538, %v537
  %v624 = vpack.c.b16 %v540, %v539
  %v625 = vpack.c.b16 %v542, %v541
  %v626 = vpack.c.b16 %v544, %v543
  %v627 = vpack.c.b16 %v546, %v545
  %v628 = vpack.c.b16 %v548, %v547
  %v629 = vpack.c.b16 %v550, %v549
  %v630 = vpack.c.b16 %v552, %v551
  %v631 = vpack.c.b16 %v554, %v553
  %v632 = vpack.c.b16 %v556, %v555
  %v633 = vpack.c.b16 %v558, %v557
  %v634 = vpack.c.b16 %v560, %v559
  %v635 = vpack.c.b16 %v562, %v561
  %v636 = vpack.c.b16 %v564, %v563
  %709 = vmatpush.bf16.msra.mxu0 %v572
  %710 = vmatpush.bf16.msra.mxu0 %v571
  %711 = vmatpush.bf16.msra.mxu0 %v570
  %712 = vmatpush.bf16.msra.mxu0 %v569
  %713 = vmatpush.bf16.msra.mxu0 %v568
  %714 = vmatpush.bf16.msra.mxu0 %v567
  %715 = vmatpush.bf16.msra.mxu0 %v566
  %716 = vmatpush.bf16.msra.mxu0 %v565
  %717 = vmatmul.bf16.gmra.mxu0 %v241
  %v718 = vpop.f32.mrf.mxu0
  %v719 = vadd.f32 %v183, %v718
  %v720 = vpop.f32.mrf.mxu0
  %v721 = vadd.f32 %v183, %v720
  %722 = vmatmul.bf16.gmra.mxu0 %v250
  %v723 = vpop.f32.mrf.mxu0
  %v724 = vadd.f32 %v183, %v723
  %v725 = vpop.f32.mrf.mxu0
  %v726 = vadd.f32 %v183, %v725
  %727 = vdwg.mxu0
  %728 = vmatpush.bf16.msra.mxu0 %v580
  %729 = vmatpush.bf16.msra.mxu0 %v579
  %730 = vmatpush.bf16.msra.mxu0 %v578
  %731 = vmatpush.bf16.msra.mxu0 %v577
  %732 = vmatpush.bf16.msra.mxu0 %v576
  %733 = vmatpush.bf16.msra.mxu0 %v575
  %734 = vmatpush.bf16.msra.mxu0 %v574
  %735 = vmatpush.bf16.msra.mxu0 %v573
  %736 = vmatmul.bf16.gmra.mxu0 %v242
  %v737 = vpop.f32.mrf.mxu0
  %v738 = vadd.f32 %v719, %v737
  %v739 = vpop.f32.mrf.mxu0
  %v740 = vadd.f32 %v721, %v739
  %741 = vmatmul.bf16.gmra.mxu0 %v251
  %v742 = vpop.f32.mrf.mxu0
  %v743 = vadd.f32 %v724, %v742
  %v744 = vpop.f32.mrf.mxu0
  %v745 = vadd.f32 %v726, %v744
  %746 = vdwg.mxu0
  %747 = vmatpush.bf16.msra.mxu0 %v588
  %748 = vmatpush.bf16.msra.mxu0 %v587
  %749 = vmatpush.bf16.msra.mxu0 %v586
  %750 = vmatpush.bf16.msra.mxu0 %v585
  %751 = vmatpush.bf16.msra.mxu0 %v584
  %752 = vmatpush.bf16.msra.mxu0 %v583
  %753 = vmatpush.bf16.msra.mxu0 %v582
  %754 = vmatpush.bf16.msra.mxu0 %v581
  %755 = vmatmul.bf16.gmra.mxu0 %v243
  %v756 = vpop.f32.mrf.mxu0
  %v757 = vadd.f32 %v738, %v756
  %v758 = vpop.f32.mrf.mxu0
  %v759 = vadd.f32 %v740, %v758
  %760 = vmatmul.bf16.gmra.mxu0 %v252
  %v761 = vpop.f32.mrf.mxu0
  %v762 = vadd.f32 %v743, %v761
  %v763 = vpop.f32.mrf.mxu0
  %v764 = vadd.f32 %v745, %v763
  %765 = vdwg.mxu0
  %766 = vmatpush.bf16.msra.mxu0 %v596
  %767 = vmatpush.bf16.msra.mxu0 %v595
  %768 = vmatpush.bf16.msra.mxu0 %v594
  %769 = vmatpush.bf16.msra.mxu0 %v593
  %770 = vmatpush.bf16.msra.mxu0 %v592
  %771 = vmatpush.bf16.msra.mxu0 %v591
  %772 = vmatpush.bf16.msra.mxu0 %v590
  %773 = vmatpush.bf16.msra.mxu0 %v589
  %774 = vmatmul.bf16.gmra.mxu0 %v244
  %v775 = vpop.f32.mrf.mxu0
  %v776 = vadd.f32 %v757, %v775
  %v777 = vpop.f32.mrf.mxu0
  %v778 = vadd.f32 %v759, %v777
  %779 = vmatmul.bf16.gmra.mxu0 %v253
  %v780 = vpop.f32.mrf.mxu0
  %v781 = vadd.f32 %v762, %v780
  %v782 = vpop.f32.mrf.mxu0
  %v783 = vadd.f32 %v764, %v782
  %784 = vdwg.mxu0
  %785 = vmatpush.bf16.msra.mxu0 %v604
  %786 = vmatpush.bf16.msra.mxu0 %v603
  %787 = vmatpush.bf16.msra.mxu0 %v602
  %788 = vmatpush.bf16.msra.mxu0 %v601
  %789 = vmatpush.bf16.msra.mxu0 %v600
  %790 = vmatpush.bf16.msra.mxu0 %v599
  %791 = vmatpush.bf16.msra.mxu0 %v598
  %792 = vmatpush.bf16.msra.mxu0 %v597
  %793 = vmatmul.bf16.gmra.mxu0 %v245
  %v794 = vpop.f32.mrf.mxu0
  %v795 = vadd.f32 %v776, %v794
  %v796 = vpop.f32.mrf.mxu0
  %v797 = vadd.f32 %v778, %v796
  %798 = vmatmul.bf16.gmra.mxu0 %v254
  %v799 = vpop.f32.mrf.mxu0
  %v800 = vadd.f32 %v781, %v799
  %v801 = vpop.f32.mrf.mxu0
  %v802 = vadd.f32 %v783, %v801
  %803 = vdwg.mxu0
  %804 = vmatpush.bf16.msra.mxu0 %v612
  %805 = vmatpush.bf16.msra.mxu0 %v611
  %806 = vmatpush.bf16.msra.mxu0 %v610
  %807 = vmatpush.bf16.msra.mxu0 %v609
  %808 = vmatpush.bf16.msra.mxu0 %v608
  %809 = vmatpush.bf16.msra.mxu0 %v607
  %810 = vmatpush.bf16.msra.mxu0 %v606
  %811 = vmatpush.bf16.msra.mxu0 %v605
  %812 = vmatmul.bf16.gmra.mxu0 %v246
  %v813 = vpop.f32.mrf.mxu0
  %v814 = vadd.f32 %v795, %v813
  %v815 = vpop.f32.mrf.mxu0
  %v816 = vadd.f32 %v797, %v815
  %817 = vmatmul.bf16.gmra.mxu0 %v255
  %v818 = vpop.f32.mrf.mxu0
  %v819 = vadd.f32 %v800, %v818
  %v820 = vpop.f32.mrf.mxu0
  %v821 = vadd.f32 %v802, %v820
  %822 = vdwg.mxu0
  %823 = vmatpush.bf16.msra.mxu0 %v620
  %824 = vmatpush.bf16.msra.mxu0 %v619
  %825 = vmatpush.bf16.msra.mxu0 %v618
  %826 = vmatpush.bf16.msra.mxu0 %v617
  %827 = vmatpush.bf16.msra.mxu0 %v616
  %828 = vmatpush.bf16.msra.mxu0 %v615
  %829 = vmatpush.bf16.msra.mxu0 %v614
  %830 = vmatpush.bf16.msra.mxu0 %v613
  %831 = vmatmul.bf16.gmra.mxu0 %v247
  %v832 = vpop.f32.mrf.mxu0
  %v833 = vadd.f32 %v814, %v832
  %v834 = vpop.f32.mrf.mxu0
  %v835 = vadd.f32 %v816, %v834
  %836 = vmatmul.bf16.gmra.mxu0 %v256
  %v837 = vpop.f32.mrf.mxu0
  %v838 = vadd.f32 %v819, %v837
  %v839 = vpop.f32.mrf.mxu0
  %v840 = vadd.f32 %v821, %v839
  %841 = vdwg.mxu0
  %842 = vmatpush.bf16.msra.mxu0 %v628
  %843 = vmatpush.bf16.msra.mxu0 %v627
  %844 = vmatpush.bf16.msra.mxu0 %v626
  %845 = vmatpush.bf16.msra.mxu0 %v625
  %846 = vmatpush.bf16.msra.mxu0 %v624
  %847 = vmatpush.bf16.msra.mxu0 %v623
  %848 = vmatpush.bf16.msra.mxu0 %v622
  %849 = vmatpush.bf16.msra.mxu0 %v621
  %850 = vmatmul.bf16.gmra.mxu0 %v248
  %v851 = vpop.f32.mrf.mxu0
  %v852 = vadd.f32 %v833, %v851
  %v853 = vpop.f32.mrf.mxu0
  %v854 = vadd.f32 %v835, %v853
  %855 = vmatmul.bf16.gmra.mxu0 %v257
  %v856 = vpop.f32.mrf.mxu0
  %v857 = vadd.f32 %v838, %v856
  %v858 = vpop.f32.mrf.mxu0
  %v859 = vadd.f32 %v840, %v858
  %860 = vdwg.mxu0
  %861 = vmatpush.bf16.msra.mxu0 %v636
  %862 = vmatpush.bf16.msra.mxu0 %v635
  %863 = vmatpush.bf16.msra.mxu0 %v634
  %864 = vmatpush.bf16.msra.mxu0 %v633
  %865 = vmatpush.bf16.msra.mxu0 %v632
  %866 = vmatpush.bf16.msra.mxu0 %v631
  %867 = vmatpush.bf16.msra.mxu0 %v630
  %868 = vmatpush.bf16.msra.mxu0 %v629
  %869 = vmatmul.bf16.gmra.mxu0 %v249
  %v870 = vpop.f32.mrf.mxu0
  %v871 = vadd.f32 %v852, %v870
  %v872 = vpop.f32.mrf.mxu0
  %v873 = vadd.f32 %v854, %v872
  %874 = vmatmul.bf16.gmra.mxu0 %v258
  %v875 = vpop.f32.mrf.mxu0
  %v876 = vadd.f32 %v857, %v875
  %v877 = vpop.f32.mrf.mxu0
  %v878 = vadd.f32 %v859, %v877
  %879 = vdwg.mxu0
  %v880 = vld [vmem:[%s3] sm:$0xff]
  %v881 = vld [vmem:[%s3 + $0x8] sm:$0xff]
  %v882 = vld [vmem:[%s3 + $0x10] sm:$0xff]
  %v883 = vld [vmem:[%s3 + $0x18] sm:$0xff]
  %v884 = vadd.f32 %v871, %v880
  %v885 = vadd.f32 %v873, %v881
  %v886 = vadd.f32 %v876, %v882
  %v887 = vadd.f32 %v878, %v883
  %v888 = vmax.f32 %v884, 0.0
  %v889 = vmax.f32 %v885, 0.0
  %v890 = vmax.f32 %v886, 0.0
  %v891 = vmax.f32 %v887, 0.0
  %892 = vst [vmem:[%s4] sm:$0xff] %v888
  %893 = vst [vmem:[%s4 + $0x8] sm:$0xff] %v889
  %894 = vst [vmem:[%s4 + $0x10] sm:$0xff] %v890
  %895 = vst [vmem:[%s4 + $0x18] sm:$0xff] %v891
  // Predicated region
  $region18: #{_lambda_.13} parent=0 // pred_check
    _
  $region19: #{_lambda_.13} parent=0 // pred_check_branch
    %897 = sbr.rel (0) target = $region21
  $region20: #{_lambda_.13} parent=0 // pred_region
    _
  $region21: #{_lambda_.13} parent=0 // pred_fallthru
    _
  // Predicated region
  $region22: #{_lambda_.13} parent=0 // pred_check
    _
  $region23: #{_lambda_.13} parent=0 // pred_check_branch
    %899 = sbr.rel (0) target = $region25
  $region24: #{_lambda_.13} parent=0 // pred_region
    _
  $region25: #{_lambda_.13} parent=0 // pred_fallthru
    _

</llo_original>
